<compile_context>
chip_gen: v7x
topology: tpu7x:2x2x1
jax: 0.10.0
libtpu: 0.0.40
codegen_flags: <defaults>
</compile_context>

<pallas_src>
import jax
import jax.numpy as jnp
from jax.experimental import pallas as pl
from jax.experimental.pallas import tpu as pltpu

BOS = 2
PAD = 0


def _round_up(n, m):
    return ((n + m - 1) // m) * m


def _gru_cell(x, h, wih_ref, whh_ref, bih_ref, bhh_ref, H):
    """PyTorch GRU cell: gates ordered (r, z, n); h' = (1-z)*n + z*h."""
    gi = jnp.dot(x, wih_ref[...], preferred_element_type=jnp.float32) + bih_ref[...]
    gh = jnp.dot(h, whh_ref[...], preferred_element_type=jnp.float32) + bhh_ref[...]
    r = jax.nn.sigmoid(gi[:, 0 * H:1 * H] + gh[:, 0 * H:1 * H])
    z = jax.nn.sigmoid(gi[:, 1 * H:2 * H] + gh[:, 1 * H:2 * H])
    n = jnp.tanh(gi[:, 2 * H:3 * H] + r * gh[:, 2 * H:3 * H])
    return (1.0 - z) * n + z * h


def _make_seq2seq_kernel(T, B, H, V_out, V_out_pad, max_length, use_tf):
    def kernel(x_ids_ref, y_ids_ref,                       # SMEM scalar prefetch
               len_ref,                                     # VMEM (B,1) int32
               eemb_ref, ewih_ref, ewhh_ref, ebih_ref, ebhh_ref,
               demb_ref, dwih_ref, dwhh_ref, dbih_ref, dbhh_ref,
               ow_ref, ob_ref,
               logits_ref):                                  # (max_length, B, V_out_pad)

        # ---------------- encoder: length-masked GRU over T steps ----------------
        def enc_step(t, h):
            # Direct dynamic embedding row loads (token ids come from SMEM).
            rows = [eemb_ref[pl.ds(x_ids_ref[t, b], 1), :] for b in range(B)]
            x = jnp.concatenate(rows, axis=0)                        # (B, H)
            h_new = _gru_cell(x, h, ewih_ref, ewhh_ref, ebih_ref, ebhh_ref, H)
            # pack_padded_sequence semantics: update only rows with t < length[b].
            m = (t < len_ref[...]).astype(jnp.float32)               # (B, 1)
            return m * h_new + (1.0 - m) * h

        h0 = jnp.zeros((B, H), jnp.float32)
        h_enc = jax.lax.fori_loop(0, T, enc_step, h0, unroll=True)

        # ---------------- decoder: greedy / teacher-forced GRU loop ----------------
        col = jax.lax.broadcasted_iota(jnp.int32, (B, V_out_pad), 1)

        def dec_step(i, carry):
            x, h = carry
            h_new = _gru_cell(x, h, dwih_ref, dwhh_ref, dbih_ref, dbhh_ref, H)
            logits = jnp.dot(h_new, ow_ref[...],
                             preferred_element_type=jnp.float32) + ob_ref[...]
            # Per-step store into the resident VMEM output block.
            logits_ref[pl.ds(i, 1), :, :] = logits.reshape(1, B, V_out_pad)

            if use_tf:
                # Next input = batch_Y[i] (matches reference update ordering).
                rows = [demb_ref[pl.ds(y_ids_ref[i, b], 1), :] for b in range(B)]
                x_next = jnp.concatenate(rows, axis=0)               # (B, H)
            else:
                # Integer-index greedy argmax; padded lanes masked out.
                masked = jnp.where(col < V_out, logits, jnp.float32(-1e30))
                mx = jnp.max(masked, axis=-1, keepdims=True)
                cand = jnp.where(masked == mx, col, jnp.int32(V_out_pad))
                idx = jnp.min(cand, axis=-1, keepdims=True)          # (B, 1) first-max
                onehot = (col == idx).astype(jnp.float32)            # (B, V_out_pad)
                x_next = jnp.dot(onehot, demb_ref[...],
                                 preferred_element_type=jnp.float32)
            return (x_next, h_new)

        # Initial decoder input: BOS embedding broadcast across the batch.
        x0 = jnp.broadcast_to(demb_ref[pl.ds(BOS, 1), :], (B, H))
        jax.lax.fori_loop(0, max_length, dec_step, (x0, h_enc), unroll=True)

    return kernel


def encoder_decoder_forward(params, batch_X, lengths_X, max_length, output_size,
                            batch_Y=None, use_teacher_forcing=False):
    """batch_X: (T, B) int32; lengths_X: (B,) int32 ->
       (max_length, B, output_size) float32 decoder logits."""
    T, B = batch_X.shape
    H = params["enc_w_ih"].shape[0]
    V_out_pad = params["out_w"].shape[1]
    if batch_Y is None:
        batch_Y = jnp.zeros((max_length, B), jnp.int32)

    kernel = _make_seq2seq_kernel(T, B, H, int(output_size), V_out_pad,
                                  int(max_length), bool(use_teacher_forcing))

    len_v = lengths_X.astype(jnp.int32).reshape(B, 1)

    def full(shape):
        nd = len(shape)
        return pl.BlockSpec(shape, lambda i, xs, ys, _nd=nd: (0,) * _nd)

    grid_spec = pltpu.PrefetchScalarGridSpec(
        num_scalar_prefetch=2,                 # batch_X, batch_Y -> SMEM
        grid=(1,),                             # single program; loops unrolled in-kernel
        in_specs=[
            full((B, 1)),                      # lengths (vectorized mask)
            full(params["enc_emb"].shape),
            full(params["enc_w_ih"].shape),
            full(params["enc_w_hh"].shape),
            full(params["enc_b_ih"].shape),
            full(params["enc_b_hh"].shape),
            full(params["dec_emb"].shape),
            full(params["dec_w_ih"].shape),
            full(params["dec_w_hh"].shape),
            full(params["dec_b_ih"].shape),
            full(params["dec_b_hh"].shape),
            full(params["out_w"].shape),
            full(params["out_b"].shape),
        ],
        out_specs=pl.BlockSpec((max_length, B, V_out_pad),
                               lambda i, xs, ys: (0, 0, 0)),
    )

    logits_pad = pl.pallas_call(
        kernel,
        out_shape=jax.ShapeDtypeStruct((max_length, B, V_out_pad), jnp.float32),
        grid_spec=grid_spec,
        compiler_params=pltpu.CompilerParams(
            dimension_semantics=("arbitrary",)),
    )(batch_X.astype(jnp.int32), batch_Y.astype(jnp.int32),
      len_v,
      params["enc_emb"], params["enc_w_ih"], params["enc_w_hh"],
      params["enc_b_ih"], params["enc_b_hh"],
      params["dec_emb"], params["dec_w_ih"], params["dec_w_hh"],
      params["dec_b_ih"], params["dec_b_hh"],
      params["out_w"], params["out_b"])

    # Drop padded vocab lanes -> (max_length, B, output_size).
    return logits_pad[:, :, :output_size]


# ------------------------- parameters -------------------------

def init_params(key, input_size, output_size, hidden_size):
    H = hidden_size
    Vin_pad = _round_up(input_size, 128)
    Vout_pad = _round_up(output_size, 128)
    ks = jax.random.split(key, 12)
    s = 1.0 / jnp.sqrt(jnp.float32(H))

    def uni(k, shape):
        return jax.random.uniform(k, shape, jnp.float32, -s, s)

    enc_emb = jnp.zeros((Vin_pad, H), jnp.float32)
    enc_emb = enc_emb.at[:input_size].set(
        jax.random.normal(ks[0], (input_size, H), jnp.float32))
    enc_emb = enc_emb.at[PAD].set(0.0)            # padding_idx=PAD

    dec_emb = jnp.zeros((Vout_pad, H), jnp.float32)
    dec_emb = dec_emb.at[:output_size].set(
        jax.random.normal(ks[1], (output_size, H), jnp.float32))
    dec_emb = dec_emb.at[PAD].set(0.0)

    # Padded vocab columns/lanes are ZERO (argmax masks them in-kernel).
    out_w = jnp.zeros((H, Vout_pad), jnp.float32)
    out_w = out_w.at[:, :output_size].set(uni(ks[10], (H, output_size)))
    out_b = jnp.zeros((1, Vout_pad), jnp.float32)
    out_b = out_b.at[:, :output_size].set(uni(ks[11], (1, output_size)))

    return {
        "enc_emb": enc_emb,
        "enc_w_ih": uni(ks[2], (H, 3 * H)),
        "enc_w_hh": uni(ks[3], (H, 3 * H)),
        "enc_b_ih": uni(ks[4], (1, 3 * H)),
        "enc_b_hh": uni(ks[5], (1, 3 * H)),
        "dec_emb": dec_emb,
        "dec_w_ih": uni(ks[6], (H, 3 * H)),
        "dec_w_hh": uni(ks[7], (H, 3 * H)),
        "dec_b_ih": uni(ks[8], (1, 3 * H)),
        "dec_b_hh": uni(ks[9], (1, 3 * H)),
        "out_w": out_w,
        "out_b": out_b,
    }


# ------------------------- driver -------------------------

if __name__ == "__main__":
    input_size = 17      # source vocab
    output_size = 13     # target vocab
    hidden_size = 128    # lane-aligned hidden (gate slices on vreg boundaries)
    T, B = 8, 2
    max_length = 5

    key = jax.random.PRNGKey(0)
    k_par, k_tok = jax.random.split(key)
    params = init_params(k_par, input_size, output_size, hidden_size)

    # Source batch (T, B), lengths sorted descending (pack_padded convention).
    lengths_X = jnp.array([8, 5], dtype=jnp.int32)
    tokens = jax.random.randint(k_tok, (T, B), 1, input_size, dtype=jnp.int32)
    pad_mask = (jnp.arange(T)[:, None] < lengths_X[None, :])
    batch_X = jnp.where(pad_mask, tokens, PAD).astype(jnp.int32)

    fwd = jax.jit(encoder_decoder_forward, static_argnums=(3, 4, 6))
    decoder_outputs = fwd(params, batch_X, lengths_X, max_length, output_size,
                          None, False)
    jax.block_until_ready(decoder_outputs)

    assert decoder_outputs.shape == (max_length, B, output_size)
    assert decoder_outputs.dtype == jnp.float32
    assert bool(jnp.all(jnp.isfinite(decoder_outputs)))
    print("KERNEL_OK")
</pallas_src>

<mosaic_0001>
module attributes {stable_mosaic.version = 11 : i64} {
  func.func @kernel(%arg0: i32, %arg1: memref<8x2xi32, #tpu.memory_space<smem>>, %arg2: memref<5x2xi32, #tpu.memory_space<smem>>, %arg3: memref<2x1xi32, #tpu.memory_space<vmem>>, %arg4: memref<128x128xf32, #tpu.memory_space<vmem>>, %arg5: memref<128x384xf32, #tpu.memory_space<vmem>>, %arg6: memref<128x384xf32, #tpu.memory_space<vmem>>, %arg7: memref<1x384xf32, #tpu.memory_space<vmem>>, %arg8: memref<1x384xf32, #tpu.memory_space<vmem>>, %arg9: memref<128x128xf32, #tpu.memory_space<vmem>>, %arg10: memref<128x384xf32, #tpu.memory_space<vmem>>, %arg11: memref<128x384xf32, #tpu.memory_space<vmem>>, %arg12: memref<1x384xf32, #tpu.memory_space<vmem>>, %arg13: memref<1x384xf32, #tpu.memory_space<vmem>>, %arg14: memref<128x128xf32, #tpu.memory_space<vmem>>, %arg15: memref<1x128xf32, #tpu.memory_space<vmem>>, %arg16: memref<5x2x128xf32, #tpu.memory_space<vmem>>) attributes {dimension_semantics = [#tpu.dimension_semantics<arbitrary>], iteration_bounds = array<i64: 1>, scalar_prefetch = 2 : i64, scratch_operands = 0 : i64, tpu.core_type = #tpu.core_type<tc>, window_params = [{pipeline_mode = #tpu.pipeline_mode<synchronous>, transform_indices = @transform_0, window_bounds = array<i64: 2, 1>}, {pipeline_mode = #tpu.pipeline_mode<synchronous>, transform_indices = @transform_1, window_bounds = array<i64: 128, 128>}, {pipeline_mode = #tpu.pipeline_mode<synchronous>, transform_indices = @transform_2, window_bounds = array<i64: 128, 384>}, {pipeline_mode = #tpu.pipeline_mode<synchronous>, transform_indices = @transform_3, window_bounds = array<i64: 128, 384>}, {pipeline_mode = #tpu.pipeline_mode<synchronous>, transform_indices = @transform_4, window_bounds = array<i64: 1, 384>}, {pipeline_mode = #tpu.pipeline_mode<synchronous>, transform_indices = @transform_5, window_bounds = array<i64: 1, 384>}, {pipeline_mode = #tpu.pipeline_mode<synchronous>, transform_indices = @transform_6, window_bounds = array<i64: 128, 128>}, {pipeline_mode = #tpu.pipeline_mode<synchronous>, transform_indices = @transform_7, window_bounds = array<i64: 128, 384>}, {pipeline_mode = #tpu.pipeline_mode<synchronous>, transform_indices = @transform_8, window_bounds = array<i64: 128, 384>}, {pipeline_mode = #tpu.pipeline_mode<synchronous>, transform_indices = @transform_9, window_bounds = array<i64: 1, 384>}, {pipeline_mode = #tpu.pipeline_mode<synchronous>, transform_indices = @transform_10, window_bounds = array<i64: 1, 384>}, {pipeline_mode = #tpu.pipeline_mode<synchronous>, transform_indices = @transform_11, window_bounds = array<i64: 128, 128>}, {pipeline_mode = #tpu.pipeline_mode<synchronous>, transform_indices = @transform_12, window_bounds = array<i64: 1, 128>}, {pipeline_mode = #tpu.pipeline_mode<synchronous>, transform_indices = @transform_13, window_bounds = array<i64: 5, 2, 128>}]} {
    %cst = arith.constant 0.000000e+00 : f32
    %0 = vector.broadcast %cst : f32 to vector<2x128xf32>
    %c0_i32 = arith.constant 0 : i32
    %1 = arith.index_cast %c0_i32 : i32 to index
    %c0 = arith.constant 0 : index
    %2 = memref.load %arg1[%1, %c0] : memref<8x2xi32, #tpu.memory_space<smem>>
    %3 = arith.index_cast %2 : i32 to index
    %c0_0 = arith.constant 0 : index
    %4 = vector.load %arg4[%3, %c0_0] : memref<128x128xf32, #tpu.memory_space<vmem>>, vector<1x128xf32>
    %5 = arith.index_cast %c0_i32 : i32 to index
    %c1 = arith.constant 1 : index
    %6 = memref.load %arg1[%5, %c1] : memref<8x2xi32, #tpu.memory_space<smem>>
    %7 = arith.index_cast %6 : i32 to index
    %c0_1 = arith.constant 0 : index
    %8 = vector.load %arg4[%7, %c0_1] : memref<128x128xf32, #tpu.memory_space<vmem>>, vector<1x128xf32>
    %9 = tpu.concatenate %4, %8 in 0 : vector<1x128xf32>, vector<1x128xf32> -> vector<2x128xf32>
    %c0_2 = arith.constant 0 : index
    %c0_3 = arith.constant 0 : index
    %10 = vector.load %arg5[%c0_2, %c0_3] : memref<128x384xf32, #tpu.memory_space<vmem>>, vector<128x384xf32>
    %cst_4 = arith.constant dense<0.000000e+00> : vector<2x384xf32>
    %11 = tpu.matmul %9, %10, %cst_4 {dimension_numbers = #tpu.dot_dimension_numbers<[1], [0], [0], [1], [0, 0, 1, 1], [], []>} : vector<2x128xf32>, vector<128x384xf32>, vector<2x384xf32> -> vector<2x384xf32>
    %c0_5 = arith.constant 0 : index
    %c0_6 = arith.constant 0 : index
    %12 = vector.load %arg7[%c0_5, %c0_6] : memref<1x384xf32, #tpu.memory_space<vmem>>, vector<1x384xf32>
    %13 = vector.broadcast %12 : vector<1x384xf32> to vector<2x384xf32>
    %14 = arith.addf %11, %13 : vector<2x384xf32>
    %c0_7 = arith.constant 0 : index
    %c0_8 = arith.constant 0 : index
    %15 = vector.load %arg6[%c0_7, %c0_8] : memref<128x384xf32, #tpu.memory_space<vmem>>, vector<128x384xf32>
    %cst_9 = arith.constant dense<0.000000e+00> : vector<2x384xf32>
    %16 = tpu.matmul %0, %15, %cst_9 {dimension_numbers = #tpu.dot_dimension_numbers<[1], [0], [0], [1], [0, 0, 1, 1], [], []>} : vector<2x128xf32>, vector<128x384xf32>, vector<2x384xf32> -> vector<2x384xf32>
    %c0_10 = arith.constant 0 : index
    %c0_11 = arith.constant 0 : index
    %17 = vector.load %arg8[%c0_10, %c0_11] : memref<1x384xf32, #tpu.memory_space<vmem>>, vector<1x384xf32>
    %18 = vector.broadcast %17 : vector<1x384xf32> to vector<2x384xf32>
    %19 = arith.addf %16, %18 : vector<2x384xf32>
    %20 = vector.extract_strided_slice %14 {offsets = [0, 0], sizes = [2, 128], strides = [1, 1]} : vector<2x384xf32> to vector<2x128xf32>
    %21 = vector.extract_strided_slice %19 {offsets = [0, 0], sizes = [2, 128], strides = [1, 1]} : vector<2x384xf32> to vector<2x128xf32>
    %22 = arith.addf %20, %21 : vector<2x128xf32>
    %23 = arith.negf %22 : vector<2x128xf32>
    %24 = math.exp %23 : vector<2x128xf32>
    %cst_12 = arith.constant 1.000000e+00 : f32
    %25 = vector.broadcast %cst_12 : f32 to vector<2x128xf32>
    %26 = arith.addf %25, %24 : vector<2x128xf32>
    %27 = arith.divf %25, %26 : vector<2x128xf32>
    %28 = vector.extract_strided_slice %14 {offsets = [0, 128], sizes = [2, 128], strides = [1, 1]} : vector<2x384xf32> to vector<2x128xf32>
    %29 = vector.extract_strided_slice %19 {offsets = [0, 128], sizes = [2, 128], strides = [1, 1]} : vector<2x384xf32> to vector<2x128xf32>
    %30 = arith.addf %28, %29 : vector<2x128xf32>
    %31 = arith.negf %30 : vector<2x128xf32>
    %32 = math.exp %31 : vector<2x128xf32>
    %cst_13 = arith.constant 1.000000e+00 : f32
    %33 = vector.broadcast %cst_13 : f32 to vector<2x128xf32>
    %34 = arith.addf %33, %32 : vector<2x128xf32>
    %35 = arith.divf %33, %34 : vector<2x128xf32>
    %36 = vector.extract_strided_slice %14 {offsets = [0, 256], sizes = [2, 128], strides = [1, 1]} : vector<2x384xf32> to vector<2x128xf32>
    %37 = vector.extract_strided_slice %19 {offsets = [0, 256], sizes = [2, 128], strides = [1, 1]} : vector<2x384xf32> to vector<2x128xf32>
    %38 = arith.mulf %27, %37 : vector<2x128xf32>
    %39 = arith.addf %36, %38 : vector<2x128xf32>
    %40 = math.tanh %39 : vector<2x128xf32>
    %cst_14 = arith.constant 1.000000e+00 : f32
    %41 = vector.broadcast %cst_14 : f32 to vector<2x128xf32>
    %42 = arith.subf %41, %35 : vector<2x128xf32>
    %43 = arith.mulf %42, %40 : vector<2x128xf32>
    %44 = arith.mulf %35, %0 : vector<2x128xf32>
    %45 = arith.addf %43, %44 : vector<2x128xf32>
    %c0_15 = arith.constant 0 : index
    %c0_16 = arith.constant 0 : index
    %46 = vector.load %arg3[%c0_15, %c0_16] : memref<2x1xi32, #tpu.memory_space<vmem>>, vector<2x1xi32>
    %47 = vector.broadcast %c0_i32 : i32 to vector<2x1xi32>
    %48 = arith.cmpi slt, %47, %46 : vector<2x1xi32>
    %49 = arith.extui %48 : vector<2x1xi1> to vector<2x1xi32>
    %50 = arith.sitofp %49 : vector<2x1xi32> to vector<2x1xf32>
    %51 = vector.broadcast %50 : vector<2x1xf32> to vector<2x128xf32>
    %52 = arith.mulf %51, %45 : vector<2x128xf32>
    %cst_17 = arith.constant 1.000000e+00 : f32
    %53 = vector.broadcast %cst_17 : f32 to vector<2x1xf32>
    %54 = arith.subf %53, %50 : vector<2x1xf32>
    %55 = vector.broadcast %54 : vector<2x1xf32> to vector<2x128xf32>
    %56 = arith.mulf %55, %0 : vector<2x128xf32>
    %57 = arith.addf %52, %56 : vector<2x128xf32>
    %c1_i32 = arith.constant 1 : i32
    %58 = arith.index_cast %c1_i32 : i32 to index
    %c0_18 = arith.constant 0 : index
    %59 = memref.load %arg1[%58, %c0_18] : memref<8x2xi32, #tpu.memory_space<smem>>
    %60 = arith.index_cast %59 : i32 to index
    %c0_19 = arith.constant 0 : index
    %61 = vector.load %arg4[%60, %c0_19] : memref<128x128xf32, #tpu.memory_space<vmem>>, vector<1x128xf32>
    %62 = arith.index_cast %c1_i32 : i32 to index
    %c1_20 = arith.constant 1 : index
    %63 = memref.load %arg1[%62, %c1_20] : memref<8x2xi32, #tpu.memory_space<smem>>
    %64 = arith.index_cast %63 : i32 to index
    %c0_21 = arith.constant 0 : index
    %65 = vector.load %arg4[%64, %c0_21] : memref<128x128xf32, #tpu.memory_space<vmem>>, vector<1x128xf32>
    %66 = tpu.concatenate %61, %65 in 0 : vector<1x128xf32>, vector<1x128xf32> -> vector<2x128xf32>
    %c0_22 = arith.constant 0 : index
    %c0_23 = arith.constant 0 : index
    %67 = vector.load %arg5[%c0_22, %c0_23] : memref<128x384xf32, #tpu.memory_space<vmem>>, vector<128x384xf32>
    %cst_24 = arith.constant dense<0.000000e+00> : vector<2x384xf32>
    %68 = tpu.matmul %66, %67, %cst_24 {dimension_numbers = #tpu.dot_dimension_numbers<[1], [0], [0], [1], [0, 0, 1, 1], [], []>} : vector<2x128xf32>, vector<128x384xf32>, vector<2x384xf32> -> vector<2x384xf32>
    %c0_25 = arith.constant 0 : index
    %c0_26 = arith.constant 0 : index
    %69 = vector.load %arg7[%c0_25, %c0_26] : memref<1x384xf32, #tpu.memory_space<vmem>>, vector<1x384xf32>
    %70 = vector.broadcast %69 : vector<1x384xf32> to vector<2x384xf32>
    %71 = arith.addf %68, %70 : vector<2x384xf32>
    %c0_27 = arith.constant 0 : index
    %c0_28 = arith.constant 0 : index
    %72 = vector.load %arg6[%c0_27, %c0_28] : memref<128x384xf32, #tpu.memory_space<vmem>>, vector<128x384xf32>
    %cst_29 = arith.constant dense<0.000000e+00> : vector<2x384xf32>
    %73 = tpu.matmul %57, %72, %cst_29 {dimension_numbers = #tpu.dot_dimension_numbers<[1], [0], [0], [1], [0, 0, 1, 1], [], []>} : vector<2x128xf32>, vector<128x384xf32>, vector<2x384xf32> -> vector<2x384xf32>
    %c0_30 = arith.constant 0 : index
    %c0_31 = arith.constant 0 : index
    %74 = vector.load %arg8[%c0_30, %c0_31] : memref<1x384xf32, #tpu.memory_space<vmem>>, vector<1x384xf32>
    %75 = vector.broadcast %74 : vector<1x384xf32> to vector<2x384xf32>
    %76 = arith.addf %73, %75 : vector<2x384xf32>
    %77 = vector.extract_strided_slice %71 {offsets = [0, 0], sizes = [2, 128], strides = [1, 1]} : vector<2x384xf32> to vector<2x128xf32>
    %78 = vector.extract_strided_slice %76 {offsets = [0, 0], sizes = [2, 128], strides = [1, 1]} : vector<2x384xf32> to vector<2x128xf32>
    %79 = arith.addf %77, %78 : vector<2x128xf32>
    %80 = arith.negf %79 : vector<2x128xf32>
    %81 = math.exp %80 : vector<2x128xf32>
    %cst_32 = arith.constant 1.000000e+00 : f32
    %82 = vector.broadcast %cst_32 : f32 to vector<2x128xf32>
    %83 = arith.addf %82, %81 : vector<2x128xf32>
    %84 = arith.divf %82, %83 : vector<2x128xf32>
    %85 = vector.extract_strided_slice %71 {offsets = [0, 128], sizes = [2, 128], strides = [1, 1]} : vector<2x384xf32> to vector<2x128xf32>
    %86 = vector.extract_strided_slice %76 {offsets = [0, 128], sizes = [2, 128], strides = [1, 1]} : vector<2x384xf32> to vector<2x128xf32>
    %87 = arith.addf %85, %86 : vector<2x128xf32>
    %88 = arith.negf %87 : vector<2x128xf32>
    %89 = math.exp %88 : vector<2x128xf32>
    %cst_33 = arith.constant 1.000000e+00 : f32
    %90 = vector.broadcast %cst_33 : f32 to vector<2x128xf32>
    %91 = arith.addf %90, %89 : vector<2x128xf32>
    %92 = arith.divf %90, %91 : vector<2x128xf32>
    %93 = vector.extract_strided_slice %71 {offsets = [0, 256], sizes = [2, 128], strides = [1, 1]} : vector<2x384xf32> to vector<2x128xf32>
    %94 = vector.extract_strided_slice %76 {offsets = [0, 256], sizes = [2, 128], strides = [1, 1]} : vector<2x384xf32> to vector<2x128xf32>
    %95 = arith.mulf %84, %94 : vector<2x128xf32>
    %96 = arith.addf %93, %95 : vector<2x128xf32>
    %97 = math.tanh %96 : vector<2x128xf32>
    %cst_34 = arith.constant 1.000000e+00 : f32
    %98 = vector.broadcast %cst_34 : f32 to vector<2x128xf32>
    %99 = arith.subf %98, %92 : vector<2x128xf32>
    %100 = arith.mulf %99, %97 : vector<2x128xf32>
    %101 = arith.mulf %92, %57 : vector<2x128xf32>
    %102 = arith.addf %100, %101 : vector<2x128xf32>
    %c0_35 = arith.constant 0 : index
    %c0_36 = arith.constant 0 : index
    %103 = vector.load %arg3[%c0_35, %c0_36] : memref<2x1xi32, #tpu.memory_space<vmem>>, vector<2x1xi32>
    %104 = vector.broadcast %c1_i32 : i32 to vector<2x1xi32>
    %105 = arith.cmpi slt, %104, %103 : vector<2x1xi32>
    %106 = arith.extui %105 : vector<2x1xi1> to vector<2x1xi32>
    %107 = arith.sitofp %106 : vector<2x1xi32> to vector<2x1xf32>
    %108 = vector.broadcast %107 : vector<2x1xf32> to vector<2x128xf32>
    %109 = arith.mulf %108, %102 : vector<2x128xf32>
    %cst_37 = arith.constant 1.000000e+00 : f32
    %110 = vector.broadcast %cst_37 : f32 to vector<2x1xf32>
    %111 = arith.subf %110, %107 : vector<2x1xf32>
    %112 = vector.broadcast %111 : vector<2x1xf32> to vector<2x128xf32>
    %113 = arith.mulf %112, %57 : vector<2x128xf32>
    %114 = arith.addf %109, %113 : vector<2x128xf32>
    %c2_i32 = arith.constant 2 : i32
    %115 = arith.index_cast %c2_i32 : i32 to index
    %c0_38 = arith.constant 0 : index
    %116 = memref.load %arg1[%115, %c0_38] : memref<8x2xi32, #tpu.memory_space<smem>>
    %117 = arith.index_cast %116 : i32 to index
    %c0_39 = arith.constant 0 : index
    %118 = vector.load %arg4[%117, %c0_39] : memref<128x128xf32, #tpu.memory_space<vmem>>, vector<1x128xf32>
    %119 = arith.index_cast %c2_i32 : i32 to index
    %c1_40 = arith.constant 1 : index
    %120 = memref.load %arg1[%119, %c1_40] : memref<8x2xi32, #tpu.memory_space<smem>>
    %121 = arith.index_cast %120 : i32 to index
    %c0_41 = arith.constant 0 : index
    %122 = vector.load %arg4[%121, %c0_41] : memref<128x128xf32, #tpu.memory_space<vmem>>, vector<1x128xf32>
    %123 = tpu.concatenate %118, %122 in 0 : vector<1x128xf32>, vector<1x128xf32> -> vector<2x128xf32>
    %c0_42 = arith.constant 0 : index
    %c0_43 = arith.constant 0 : index
    %124 = vector.load %arg5[%c0_42, %c0_43] : memref<128x384xf32, #tpu.memory_space<vmem>>, vector<128x384xf32>
    %cst_44 = arith.constant dense<0.000000e+00> : vector<2x384xf32>
    %125 = tpu.matmul %123, %124, %cst_44 {dimension_numbers = #tpu.dot_dimension_numbers<[1], [0], [0], [1], [0, 0, 1, 1], [], []>} : vector<2x128xf32>, vector<128x384xf32>, vector<2x384xf32> -> vector<2x384xf32>
    %c0_45 = arith.constant 0 : index
    %c0_46 = arith.constant 0 : index
    %126 = vector.load %arg7[%c0_45, %c0_46] : memref<1x384xf32, #tpu.memory_space<vmem>>, vector<1x384xf32>
    %127 = vector.broadcast %126 : vector<1x384xf32> to vector<2x384xf32>
    %128 = arith.addf %125, %127 : vector<2x384xf32>
    %c0_47 = arith.constant 0 : index
    %c0_48 = arith.constant 0 : index
    %129 = vector.load %arg6[%c0_47, %c0_48] : memref<128x384xf32, #tpu.memory_space<vmem>>, vector<128x384xf32>
    %cst_49 = arith.constant dense<0.000000e+00> : vector<2x384xf32>
    %130 = tpu.matmul %114, %129, %cst_49 {dimension_numbers = #tpu.dot_dimension_numbers<[1], [0], [0], [1], [0, 0, 1, 1], [], []>} : vector<2x128xf32>, vector<128x384xf32>, vector<2x384xf32> -> vector<2x384xf32>
    %c0_50 = arith.constant 0 : index
    %c0_51 = arith.constant 0 : index
    %131 = vector.load %arg8[%c0_50, %c0_51] : memref<1x384xf32, #tpu.memory_space<vmem>>, vector<1x384xf32>
    %132 = vector.broadcast %131 : vector<1x384xf32> to vector<2x384xf32>
    %133 = arith.addf %130, %132 : vector<2x384xf32>
    %134 = vector.extract_strided_slice %128 {offsets = [0, 0], sizes = [2, 128], strides = [1, 1]} : vector<2x384xf32> to vector<2x128xf32>
    %135 = vector.extract_strided_slice %133 {offsets = [0, 0], sizes = [2, 128], strides = [1, 1]} : vector<2x384xf32> to vector<2x128xf32>
    %136 = arith.addf %134, %135 : vector<2x128xf32>
    %137 = arith.negf %136 : vector<2x128xf32>
    %138 = math.exp %137 : vector<2x128xf32>
    %cst_52 = arith.constant 1.000000e+00 : f32
    %139 = vector.broadcast %cst_52 : f32 to vector<2x128xf32>
    %140 = arith.addf %139, %138 : vector<2x128xf32>
    %141 = arith.divf %139, %140 : vector<2x128xf32>
    %142 = vector.extract_strided_slice %128 {offsets = [0, 128], sizes = [2, 128], strides = [1, 1]} : vector<2x384xf32> to vector<2x128xf32>
    %143 = vector.extract_strided_slice %133 {offsets = [0, 128], sizes = [2, 128], strides = [1, 1]} : vector<2x384xf32> to vector<2x128xf32>
    %144 = arith.addf %142, %143 : vector<2x128xf32>
    %145 = arith.negf %144 : vector<2x128xf32>
    %146 = math.exp %145 : vector<2x128xf32>
    %cst_53 = arith.constant 1.000000e+00 : f32
    %147 = vector.broadcast %cst_53 : f32 to vector<2x128xf32>
    %148 = arith.addf %147, %146 : vector<2x128xf32>
    %149 = arith.divf %147, %148 : vector<2x128xf32>
    %150 = vector.extract_strided_slice %128 {offsets = [0, 256], sizes = [2, 128], strides = [1, 1]} : vector<2x384xf32> to vector<2x128xf32>
    %151 = vector.extract_strided_slice %133 {offsets = [0, 256], sizes = [2, 128], strides = [1, 1]} : vector<2x384xf32> to vector<2x128xf32>
    %152 = arith.mulf %141, %151 : vector<2x128xf32>
    %153 = arith.addf %150, %152 : vector<2x128xf32>
    %154 = math.tanh %153 : vector<2x128xf32>
    %cst_54 = arith.constant 1.000000e+00 : f32
    %155 = vector.broadcast %cst_54 : f32 to vector<2x128xf32>
    %156 = arith.subf %155, %149 : vector<2x128xf32>
    %157 = arith.mulf %156, %154 : vector<2x128xf32>
    %158 = arith.mulf %149, %114 : vector<2x128xf32>
    %159 = arith.addf %157, %158 : vector<2x128xf32>
    %c0_55 = arith.constant 0 : index
    %c0_56 = arith.constant 0 : index
    %160 = vector.load %arg3[%c0_55, %c0_56] : memref<2x1xi32, #tpu.memory_space<vmem>>, vector<2x1xi32>
    %161 = vector.broadcast %c2_i32 : i32 to vector<2x1xi32>
    %162 = arith.cmpi slt, %161, %160 : vector<2x1xi32>
    %163 = arith.extui %162 : vector<2x1xi1> to vector<2x1xi32>
    %164 = arith.sitofp %163 : vector<2x1xi32> to vector<2x1xf32>
    %165 = vector.broadcast %164 : vector<2x1xf32> to vector<2x128xf32>
    %166 = arith.mulf %165, %159 : vector<2x128xf32>
    %cst_57 = arith.constant 1.000000e+00 : f32
    %167 = vector.broadcast %cst_57 : f32 to vector<2x1xf32>
    %168 = arith.subf %167, %164 : vector<2x1xf32>
    %169 = vector.broadcast %168 : vector<2x1xf32> to vector<2x128xf32>
    %170 = arith.mulf %169, %114 : vector<2x128xf32>
    %171 = arith.addf %166, %170 : vector<2x128xf32>
    %c3_i32 = arith.constant 3 : i32
    %172 = arith.index_cast %c3_i32 : i32 to index
    %c0_58 = arith.constant 0 : index
    %173 = memref.load %arg1[%172, %c0_58] : memref<8x2xi32, #tpu.memory_space<smem>>
    %174 = arith.index_cast %173 : i32 to index
    %c0_59 = arith.constant 0 : index
    %175 = vector.load %arg4[%174, %c0_59] : memref<128x128xf32, #tpu.memory_space<vmem>>, vector<1x128xf32>
    %176 = arith.index_cast %c3_i32 : i32 to index
    %c1_60 = arith.constant 1 : index
    %177 = memref.load %arg1[%176, %c1_60] : memref<8x2xi32, #tpu.memory_space<smem>>
    %178 = arith.index_cast %177 : i32 to index
    %c0_61 = arith.constant 0 : index
    %179 = vector.load %arg4[%178, %c0_61] : memref<128x128xf32, #tpu.memory_space<vmem>>, vector<1x128xf32>
    %180 = tpu.concatenate %175, %179 in 0 : vector<1x128xf32>, vector<1x128xf32> -> vector<2x128xf32>
    %c0_62 = arith.constant 0 : index
    %c0_63 = arith.constant 0 : index
    %181 = vector.load %arg5[%c0_62, %c0_63] : memref<128x384xf32, #tpu.memory_space<vmem>>, vector<128x384xf32>
    %cst_64 = arith.constant dense<0.000000e+00> : vector<2x384xf32>
    %182 = tpu.matmul %180, %181, %cst_64 {dimension_numbers = #tpu.dot_dimension_numbers<[1], [0], [0], [1], [0, 0, 1, 1], [], []>} : vector<2x128xf32>, vector<128x384xf32>, vector<2x384xf32> -> vector<2x384xf32>
    %c0_65 = arith.constant 0 : index
    %c0_66 = arith.constant 0 : index
    %183 = vector.load %arg7[%c0_65, %c0_66] : memref<1x384xf32, #tpu.memory_space<vmem>>, vector<1x384xf32>
    %184 = vector.broadcast %183 : vector<1x384xf32> to vector<2x384xf32>
    %185 = arith.addf %182, %184 : vector<2x384xf32>
    %c0_67 = arith.constant 0 : index
    %c0_68 = arith.constant 0 : index
    %186 = vector.load %arg6[%c0_67, %c0_68] : memref<128x384xf32, #tpu.memory_space<vmem>>, vector<128x384xf32>
    %cst_69 = arith.constant dense<0.000000e+00> : vector<2x384xf32>
    %187 = tpu.matmul %171, %186, %cst_69 {dimension_numbers = #tpu.dot_dimension_numbers<[1], [0], [0], [1], [0, 0, 1, 1], [], []>} : vector<2x128xf32>, vector<128x384xf32>, vector<2x384xf32> -> vector<2x384xf32>
    %c0_70 = arith.constant 0 : index
    %c0_71 = arith.constant 0 : index
    %188 = vector.load %arg8[%c0_70, %c0_71] : memref<1x384xf32, #tpu.memory_space<vmem>>, vector<1x384xf32>
    %189 = vector.broadcast %188 : vector<1x384xf32> to vector<2x384xf32>
    %190 = arith.addf %187, %189 : vector<2x384xf32>
    %191 = vector.extract_strided_slice %185 {offsets = [0, 0], sizes = [2, 128], strides = [1, 1]} : vector<2x384xf32> to vector<2x128xf32>
    %192 = vector.extract_strided_slice %190 {offsets = [0, 0], sizes = [2, 128], strides = [1, 1]} : vector<2x384xf32> to vector<2x128xf32>
    %193 = arith.addf %191, %192 : vector<2x128xf32>
    %194 = arith.negf %193 : vector<2x128xf32>
    %195 = math.exp %194 : vector<2x128xf32>
    %cst_72 = arith.constant 1.000000e+00 : f32
    %196 = vector.broadcast %cst_72 : f32 to vector<2x128xf32>
    %197 = arith.addf %196, %195 : vector<2x128xf32>
    %198 = arith.divf %196, %197 : vector<2x128xf32>
    %199 = vector.extract_strided_slice %185 {offsets = [0, 128], sizes = [2, 128], strides = [1, 1]} : vector<2x384xf32> to vector<2x128xf32>
    %200 = vector.extract_strided_slice %190 {offsets = [0, 128], sizes = [2, 128], strides = [1, 1]} : vector<2x384xf32> to vector<2x128xf32>
    %201 = arith.addf %199, %200 : vector<2x128xf32>
    %202 = arith.negf %201 : vector<2x128xf32>
    %203 = math.exp %202 : vector<2x128xf32>
    %cst_73 = arith.constant 1.000000e+00 : f32
    %204 = vector.broadcast %cst_73 : f32 to vector<2x128xf32>
    %205 = arith.addf %204, %203 : vector<2x128xf32>
    %206 = arith.divf %204, %205 : vector<2x128xf32>
    %207 = vector.extract_strided_slice %185 {offsets = [0, 256], sizes = [2, 128], strides = [1, 1]} : vector<2x384xf32> to vector<2x128xf32>
    %208 = vector.extract_strided_slice %190 {offsets = [0, 256], sizes = [2, 128], strides = [1, 1]} : vector<2x384xf32> to vector<2x128xf32>
    %209 = arith.mulf %198, %208 : vector<2x128xf32>
    %210 = arith.addf %207, %209 : vector<2x128xf32>
    %211 = math.tanh %210 : vector<2x128xf32>
    %cst_74 = arith.constant 1.000000e+00 : f32
    %212 = vector.broadcast %cst_74 : f32 to vector<2x128xf32>
    %213 = arith.subf %212, %206 : vector<2x128xf32>
    %214 = arith.mulf %213, %211 : vector<2x128xf32>
    %215 = arith.mulf %206, %171 : vector<2x128xf32>
    %216 = arith.addf %214, %215 : vector<2x128xf32>
    %c0_75 = arith.constant 0 : index
    %c0_76 = arith.constant 0 : index
    %217 = vector.load %arg3[%c0_75, %c0_76] : memref<2x1xi32, #tpu.memory_space<vmem>>, vector<2x1xi32>
    %218 = vector.broadcast %c3_i32 : i32 to vector<2x1xi32>
    %219 = arith.cmpi slt, %218, %217 : vector<2x1xi32>
    %220 = arith.extui %219 : vector<2x1xi1> to vector<2x1xi32>
    %221 = arith.sitofp %220 : vector<2x1xi32> to vector<2x1xf32>
    %222 = vector.broadcast %221 : vector<2x1xf32> to vector<2x128xf32>
    %223 = arith.mulf %222, %216 : vector<2x128xf32>
    %cst_77 = arith.constant 1.000000e+00 : f32
    %224 = vector.broadcast %cst_77 : f32 to vector<2x1xf32>
    %225 = arith.subf %224, %221 : vector<2x1xf32>
    %226 = vector.broadcast %225 : vector<2x1xf32> to vector<2x128xf32>
    %227 = arith.mulf %226, %171 : vector<2x128xf32>
    %228 = arith.addf %223, %227 : vector<2x128xf32>
    %c4_i32 = arith.constant 4 : i32
    %229 = arith.index_cast %c4_i32 : i32 to index
    %c0_78 = arith.constant 0 : index
    %230 = memref.load %arg1[%229, %c0_78] : memref<8x2xi32, #tpu.memory_space<smem>>
    %231 = arith.index_cast %230 : i32 to index
    %c0_79 = arith.constant 0 : index
    %232 = vector.load %arg4[%231, %c0_79] : memref<128x128xf32, #tpu.memory_space<vmem>>, vector<1x128xf32>
    %233 = arith.index_cast %c4_i32 : i32 to index
    %c1_80 = arith.constant 1 : index
    %234 = memref.load %arg1[%233, %c1_80] : memref<8x2xi32, #tpu.memory_space<smem>>
    %235 = arith.index_cast %234 : i32 to index
    %c0_81 = arith.constant 0 : index
    %236 = vector.load %arg4[%235, %c0_81] : memref<128x128xf32, #tpu.memory_space<vmem>>, vector<1x128xf32>
    %237 = tpu.concatenate %232, %236 in 0 : vector<1x128xf32>, vector<1x128xf32> -> vector<2x128xf32>
    %c0_82 = arith.constant 0 : index
    %c0_83 = arith.constant 0 : index
    %238 = vector.load %arg5[%c0_82, %c0_83] : memref<128x384xf32, #tpu.memory_space<vmem>>, vector<128x384xf32>
    %cst_84 = arith.constant dense<0.000000e+00> : vector<2x384xf32>
    %239 = tpu.matmul %237, %238, %cst_84 {dimension_numbers = #tpu.dot_dimension_numbers<[1], [0], [0], [1], [0, 0, 1, 1], [], []>} : vector<2x128xf32>, vector<128x384xf32>, vector<2x384xf32> -> vector<2x384xf32>
    %c0_85 = arith.constant 0 : index
    %c0_86 = arith.constant 0 : index
    %240 = vector.load %arg7[%c0_85, %c0_86] : memref<1x384xf32, #tpu.memory_space<vmem>>, vector<1x384xf32>
    %241 = vector.broadcast %240 : vector<1x384xf32> to vector<2x384xf32>
    %242 = arith.addf %239, %241 : vector<2x384xf32>
    %c0_87 = arith.constant 0 : index
    %c0_88 = arith.constant 0 : index
    %243 = vector.load %arg6[%c0_87, %c0_88] : memref<128x384xf32, #tpu.memory_space<vmem>>, vector<128x384xf32>
    %cst_89 = arith.constant dense<0.000000e+00> : vector<2x384xf32>
    %244 = tpu.matmul %228, %243, %cst_89 {dimension_numbers = #tpu.dot_dimension_numbers<[1], [0], [0], [1], [0, 0, 1, 1], [], []>} : vector<2x128xf32>, vector<128x384xf32>, vector<2x384xf32> -> vector<2x384xf32>
    %c0_90 = arith.constant 0 : index
    %c0_91 = arith.constant 0 : index
    %245 = vector.load %arg8[%c0_90, %c0_91] : memref<1x384xf32, #tpu.memory_space<vmem>>, vector<1x384xf32>
    %246 = vector.broadcast %245 : vector<1x384xf32> to vector<2x384xf32>
    %247 = arith.addf %244, %246 : vector<2x384xf32>
    %248 = vector.extract_strided_slice %242 {offsets = [0, 0], sizes = [2, 128], strides = [1, 1]} : vector<2x384xf32> to vector<2x128xf32>
    %249 = vector.extract_strided_slice %247 {offsets = [0, 0], sizes = [2, 128], strides = [1, 1]} : vector<2x384xf32> to vector<2x128xf32>
    %250 = arith.addf %248, %249 : vector<2x128xf32>
    %251 = arith.negf %250 : vector<2x128xf32>
    %252 = math.exp %251 : vector<2x128xf32>
    %cst_92 = arith.constant 1.000000e+00 : f32
    %253 = vector.broadcast %cst_92 : f32 to vector<2x128xf32>
    %254 = arith.addf %253, %252 : vector<2x128xf32>
    %255 = arith.divf %253, %254 : vector<2x128xf32>
    %256 = vector.extract_strided_slice %242 {offsets = [0, 128], sizes = [2, 128], strides = [1, 1]} : vector<2x384xf32> to vector<2x128xf32>
    %257 = vector.extract_strided_slice %247 {offsets = [0, 128], sizes = [2, 128], strides = [1, 1]} : vector<2x384xf32> to vector<2x128xf32>
    %258 = arith.addf %256, %257 : vector<2x128xf32>
    %259 = arith.negf %258 : vector<2x128xf32>
    %260 = math.exp %259 : vector<2x128xf32>
    %cst_93 = arith.constant 1.000000e+00 : f32
    %261 = vector.broadcast %cst_93 : f32 to vector<2x128xf32>
    %262 = arith.addf %261, %260 : vector<2x128xf32>
    %263 = arith.divf %261, %262 : vector<2x128xf32>
    %264 = vector.extract_strided_slice %242 {offsets = [0, 256], sizes = [2, 128], strides = [1, 1]} : vector<2x384xf32> to vector<2x128xf32>
    %265 = vector.extract_strided_slice %247 {offsets = [0, 256], sizes = [2, 128], strides = [1, 1]} : vector<2x384xf32> to vector<2x128xf32>
    %266 = arith.mulf %255, %265 : vector<2x128xf32>
    %267 = arith.addf %264, %266 : vector<2x128xf32>
    %268 = math.tanh %267 : vector<2x128xf32>
    %cst_94 = arith.constant 1.000000e+00 : f32
    %269 = vector.broadcast %cst_94 : f32 to vector<2x128xf32>
    %270 = arith.subf %269, %263 : vector<2x128xf32>
    %271 = arith.mulf %270, %268 : vector<2x128xf32>
    %272 = arith.mulf %263, %228 : vector<2x128xf32>
    %273 = arith.addf %271, %272 : vector<2x128xf32>
    %c0_95 = arith.constant 0 : index
    %c0_96 = arith.constant 0 : index
    %274 = vector.load %arg3[%c0_95, %c0_96] : memref<2x1xi32, #tpu.memory_space<vmem>>, vector<2x1xi32>
    %275 = vector.broadcast %c4_i32 : i32 to vector<2x1xi32>
    %276 = arith.cmpi slt, %275, %274 : vector<2x1xi32>
    %277 = arith.extui %276 : vector<2x1xi1> to vector<2x1xi32>
    %278 = arith.sitofp %277 : vector<2x1xi32> to vector<2x1xf32>
    %279 = vector.broadcast %278 : vector<2x1xf32> to vector<2x128xf32>
    %280 = arith.mulf %279, %273 : vector<2x128xf32>
    %cst_97 = arith.constant 1.000000e+00 : f32
    %281 = vector.broadcast %cst_97 : f32 to vector<2x1xf32>
    %282 = arith.subf %281, %278 : vector<2x1xf32>
    %283 = vector.broadcast %282 : vector<2x1xf32> to vector<2x128xf32>
    %284 = arith.mulf %283, %228 : vector<2x128xf32>
    %285 = arith.addf %280, %284 : vector<2x128xf32>
    %c5_i32 = arith.constant 5 : i32
    %286 = arith.index_cast %c5_i32 : i32 to index
    %c0_98 = arith.constant 0 : index
    %287 = memref.load %arg1[%286, %c0_98] : memref<8x2xi32, #tpu.memory_space<smem>>
    %288 = arith.index_cast %287 : i32 to index
    %c0_99 = arith.constant 0 : index
    %289 = vector.load %arg4[%288, %c0_99] : memref<128x128xf32, #tpu.memory_space<vmem>>, vector<1x128xf32>
    %290 = arith.index_cast %c5_i32 : i32 to index
    %c1_100 = arith.constant 1 : index
    %291 = memref.load %arg1[%290, %c1_100] : memref<8x2xi32, #tpu.memory_space<smem>>
    %292 = arith.index_cast %291 : i32 to index
    %c0_101 = arith.constant 0 : index
    %293 = vector.load %arg4[%292, %c0_101] : memref<128x128xf32, #tpu.memory_space<vmem>>, vector<1x128xf32>
    %294 = tpu.concatenate %289, %293 in 0 : vector<1x128xf32>, vector<1x128xf32> -> vector<2x128xf32>
    %c0_102 = arith.constant 0 : index
    %c0_103 = arith.constant 0 : index
    %295 = vector.load %arg5[%c0_102, %c0_103] : memref<128x384xf32, #tpu.memory_space<vmem>>, vector<128x384xf32>
    %cst_104 = arith.constant dense<0.000000e+00> : vector<2x384xf32>
    %296 = tpu.matmul %294, %295, %cst_104 {dimension_numbers = #tpu.dot_dimension_numbers<[1], [0], [0], [1], [0, 0, 1, 1], [], []>} : vector<2x128xf32>, vector<128x384xf32>, vector<2x384xf32> -> vector<2x384xf32>
    %c0_105 = arith.constant 0 : index
    %c0_106 = arith.constant 0 : index
    %297 = vector.load %arg7[%c0_105, %c0_106] : memref<1x384xf32, #tpu.memory_space<vmem>>, vector<1x384xf32>
    %298 = vector.broadcast %297 : vector<1x384xf32> to vector<2x384xf32>
    %299 = arith.addf %296, %298 : vector<2x384xf32>
    %c0_107 = arith.constant 0 : index
    %c0_108 = arith.constant 0 : index
    %300 = vector.load %arg6[%c0_107, %c0_108] : memref<128x384xf32, #tpu.memory_space<vmem>>, vector<128x384xf32>
    %cst_109 = arith.constant dense<0.000000e+00> : vector<2x384xf32>
    %301 = tpu.matmul %285, %300, %cst_109 {dimension_numbers = #tpu.dot_dimension_numbers<[1], [0], [0], [1], [0, 0, 1, 1], [], []>} : vector<2x128xf32>, vector<128x384xf32>, vector<2x384xf32> -> vector<2x384xf32>
    %c0_110 = arith.constant 0 : index
    %c0_111 = arith.constant 0 : index
    %302 = vector.load %arg8[%c0_110, %c0_111] : memref<1x384xf32, #tpu.memory_space<vmem>>, vector<1x384xf32>
    %303 = vector.broadcast %302 : vector<1x384xf32> to vector<2x384xf32>
    %304 = arith.addf %301, %303 : vector<2x384xf32>
    %305 = vector.extract_strided_slice %299 {offsets = [0, 0], sizes = [2, 128], strides = [1, 1]} : vector<2x384xf32> to vector<2x128xf32>
    %306 = vector.extract_strided_slice %304 {offsets = [0, 0], sizes = [2, 128], strides = [1, 1]} : vector<2x384xf32> to vector<2x128xf32>
    %307 = arith.addf %305, %306 : vector<2x128xf32>
    %308 = arith.negf %307 : vector<2x128xf32>
    %309 = math.exp %308 : vector<2x128xf32>
    %cst_112 = arith.constant 1.000000e+00 : f32
    %310 = vector.broadcast %cst_112 : f32 to vector<2x128xf32>
    %311 = arith.addf %310, %309 : vector<2x128xf32>
    %312 = arith.divf %310, %311 : vector<2x128xf32>
    %313 = vector.extract_strided_slice %299 {offsets = [0, 128], sizes = [2, 128], strides = [1, 1]} : vector<2x384xf32> to vector<2x128xf32>
    %314 = vector.extract_strided_slice %304 {offsets = [0, 128], sizes = [2, 128], strides = [1, 1]} : vector<2x384xf32> to vector<2x128xf32>
    %315 = arith.addf %313, %314 : vector<2x128xf32>
    %316 = arith.negf %315 : vector<2x128xf32>
    %317 = math.exp %316 : vector<2x128xf32>
    %cst_113 = arith.constant 1.000000e+00 : f32
    %318 = vector.broadcast %cst_113 : f32 to vector<2x128xf32>
    %319 = arith.addf %318, %317 : vector<2x128xf32>
    %320 = arith.divf %318, %319 : vector<2x128xf32>
    %321 = vector.extract_strided_slice %299 {offsets = [0, 256], sizes = [2, 128], strides = [1, 1]} : vector<2x384xf32> to vector<2x128xf32>
    %322 = vector.extract_strided_slice %304 {offsets = [0, 256], sizes = [2, 128], strides = [1, 1]} : vector<2x384xf32> to vector<2x128xf32>
    %323 = arith.mulf %312, %322 : vector<2x128xf32>
    %324 = arith.addf %321, %323 : vector<2x128xf32>
    %325 = math.tanh %324 : vector<2x128xf32>
    %cst_114 = arith.constant 1.000000e+00 : f32
    %326 = vector.broadcast %cst_114 : f32 to vector<2x128xf32>
    %327 = arith.subf %326, %320 : vector<2x128xf32>
    %328 = arith.mulf %327, %325 : vector<2x128xf32>
    %329 = arith.mulf %320, %285 : vector<2x128xf32>
    %330 = arith.addf %328, %329 : vector<2x128xf32>
    %c0_115 = arith.constant 0 : index
    %c0_116 = arith.constant 0 : index
    %331 = vector.load %arg3[%c0_115, %c0_116] : memref<2x1xi32, #tpu.memory_space<vmem>>, vector<2x1xi32>
    %332 = vector.broadcast %c5_i32 : i32 to vector<2x1xi32>
    %333 = arith.cmpi slt, %332, %331 : vector<2x1xi32>
    %334 = arith.extui %333 : vector<2x1xi1> to vector<2x1xi32>
    %335 = arith.sitofp %334 : vector<2x1xi32> to vector<2x1xf32>
    %336 = vector.broadcast %335 : vector<2x1xf32> to vector<2x128xf32>
    %337 = arith.mulf %336, %330 : vector<2x128xf32>
    %cst_117 = arith.constant 1.000000e+00 : f32
    %338 = vector.broadcast %cst_117 : f32 to vector<2x1xf32>
    %339 = arith.subf %338, %335 : vector<2x1xf32>
    %340 = vector.broadcast %339 : vector<2x1xf32> to vector<2x128xf32>
    %341 = arith.mulf %340, %285 : vector<2x128xf32>
    %342 = arith.addf %337, %341 : vector<2x128xf32>
    %c6_i32 = arith.constant 6 : i32
    %343 = arith.index_cast %c6_i32 : i32 to index
    %c0_118 = arith.constant 0 : index
    %344 = memref.load %arg1[%343, %c0_118] : memref<8x2xi32, #tpu.memory_space<smem>>
    %345 = arith.index_cast %344 : i32 to index
    %c0_119 = arith.constant 0 : index
    %346 = vector.load %arg4[%345, %c0_119] : memref<128x128xf32, #tpu.memory_space<vmem>>, vector<1x128xf32>
    %347 = arith.index_cast %c6_i32 : i32 to index
    %c1_120 = arith.constant 1 : index
    %348 = memref.load %arg1[%347, %c1_120] : memref<8x2xi32, #tpu.memory_space<smem>>
    %349 = arith.index_cast %348 : i32 to index
    %c0_121 = arith.constant 0 : index
    %350 = vector.load %arg4[%349, %c0_121] : memref<128x128xf32, #tpu.memory_space<vmem>>, vector<1x128xf32>
    %351 = tpu.concatenate %346, %350 in 0 : vector<1x128xf32>, vector<1x128xf32> -> vector<2x128xf32>
    %c0_122 = arith.constant 0 : index
    %c0_123 = arith.constant 0 : index
    %352 = vector.load %arg5[%c0_122, %c0_123] : memref<128x384xf32, #tpu.memory_space<vmem>>, vector<128x384xf32>
    %cst_124 = arith.constant dense<0.000000e+00> : vector<2x384xf32>
    %353 = tpu.matmul %351, %352, %cst_124 {dimension_numbers = #tpu.dot_dimension_numbers<[1], [0], [0], [1], [0, 0, 1, 1], [], []>} : vector<2x128xf32>, vector<128x384xf32>, vector<2x384xf32> -> vector<2x384xf32>
    %c0_125 = arith.constant 0 : index
    %c0_126 = arith.constant 0 : index
    %354 = vector.load %arg7[%c0_125, %c0_126] : memref<1x384xf32, #tpu.memory_space<vmem>>, vector<1x384xf32>
    %355 = vector.broadcast %354 : vector<1x384xf32> to vector<2x384xf32>
    %356 = arith.addf %353, %355 : vector<2x384xf32>
    %c0_127 = arith.constant 0 : index
    %c0_128 = arith.constant 0 : index
    %357 = vector.load %arg6[%c0_127, %c0_128] : memref<128x384xf32, #tpu.memory_space<vmem>>, vector<128x384xf32>
    %cst_129 = arith.constant dense<0.000000e+00> : vector<2x384xf32>
    %358 = tpu.matmul %342, %357, %cst_129 {dimension_numbers = #tpu.dot_dimension_numbers<[1], [0], [0], [1], [0, 0, 1, 1], [], []>} : vector<2x128xf32>, vector<128x384xf32>, vector<2x384xf32> -> vector<2x384xf32>
    %c0_130 = arith.constant 0 : index
    %c0_131 = arith.constant 0 : index
    %359 = vector.load %arg8[%c0_130, %c0_131] : memref<1x384xf32, #tpu.memory_space<vmem>>, vector<1x384xf32>
    %360 = vector.broadcast %359 : vector<1x384xf32> to vector<2x384xf32>
    %361 = arith.addf %358, %360 : vector<2x384xf32>
    %362 = vector.extract_strided_slice %356 {offsets = [0, 0], sizes = [2, 128], strides = [1, 1]} : vector<2x384xf32> to vector<2x128xf32>
    %363 = vector.extract_strided_slice %361 {offsets = [0, 0], sizes = [2, 128], strides = [1, 1]} : vector<2x384xf32> to vector<2x128xf32>
    %364 = arith.addf %362, %363 : vector<2x128xf32>
    %365 = arith.negf %364 : vector<2x128xf32>
    %366 = math.exp %365 : vector<2x128xf32>
    %cst_132 = arith.constant 1.000000e+00 : f32
    %367 = vector.broadcast %cst_132 : f32 to vector<2x128xf32>
    %368 = arith.addf %367, %366 : vector<2x128xf32>
    %369 = arith.divf %367, %368 : vector<2x128xf32>
    %370 = vector.extract_strided_slice %356 {offsets = [0, 128], sizes = [2, 128], strides = [1, 1]} : vector<2x384xf32> to vector<2x128xf32>
    %371 = vector.extract_strided_slice %361 {offsets = [0, 128], sizes = [2, 128], strides = [1, 1]} : vector<2x384xf32> to vector<2x128xf32>
    %372 = arith.addf %370, %371 : vector<2x128xf32>
    %373 = arith.negf %372 : vector<2x128xf32>
    %374 = math.exp %373 : vector<2x128xf32>
    %cst_133 = arith.constant 1.000000e+00 : f32
    %375 = vector.broadcast %cst_133 : f32 to vector<2x128xf32>
    %376 = arith.addf %375, %374 : vector<2x128xf32>
    %377 = arith.divf %375, %376 : vector<2x128xf32>
    %378 = vector.extract_strided_slice %356 {offsets = [0, 256], sizes = [2, 128], strides = [1, 1]} : vector<2x384xf32> to vector<2x128xf32>
    %379 = vector.extract_strided_slice %361 {offsets = [0, 256], sizes = [2, 128], strides = [1, 1]} : vector<2x384xf32> to vector<2x128xf32>
    %380 = arith.mulf %369, %379 : vector<2x128xf32>
    %381 = arith.addf %378, %380 : vector<2x128xf32>
    %382 = math.tanh %381 : vector<2x128xf32>
    %cst_134 = arith.constant 1.000000e+00 : f32
    %383 = vector.broadcast %cst_134 : f32 to vector<2x128xf32>
    %384 = arith.subf %383, %377 : vector<2x128xf32>
    %385 = arith.mulf %384, %382 : vector<2x128xf32>
    %386 = arith.mulf %377, %342 : vector<2x128xf32>
    %387 = arith.addf %385, %386 : vector<2x128xf32>
    %c0_135 = arith.constant 0 : index
    %c0_136 = arith.constant 0 : index
    %388 = vector.load %arg3[%c0_135, %c0_136] : memref<2x1xi32, #tpu.memory_space<vmem>>, vector<2x1xi32>
    %389 = vector.broadcast %c6_i32 : i32 to vector<2x1xi32>
    %390 = arith.cmpi slt, %389, %388 : vector<2x1xi32>
    %391 = arith.extui %390 : vector<2x1xi1> to vector<2x1xi32>
    %392 = arith.sitofp %391 : vector<2x1xi32> to vector<2x1xf32>
    %393 = vector.broadcast %392 : vector<2x1xf32> to vector<2x128xf32>
    %394 = arith.mulf %393, %387 : vector<2x128xf32>
    %cst_137 = arith.constant 1.000000e+00 : f32
    %395 = vector.broadcast %cst_137 : f32 to vector<2x1xf32>
    %396 = arith.subf %395, %392 : vector<2x1xf32>
    %397 = vector.broadcast %396 : vector<2x1xf32> to vector<2x128xf32>
    %398 = arith.mulf %397, %342 : vector<2x128xf32>
    %399 = arith.addf %394, %398 : vector<2x128xf32>
    %c7_i32 = arith.constant 7 : i32
    %400 = arith.index_cast %c7_i32 : i32 to index
    %c0_138 = arith.constant 0 : index
    %401 = memref.load %arg1[%400, %c0_138] : memref<8x2xi32, #tpu.memory_space<smem>>
    %402 = arith.index_cast %401 : i32 to index
    %c0_139 = arith.constant 0 : index
    %403 = vector.load %arg4[%402, %c0_139] : memref<128x128xf32, #tpu.memory_space<vmem>>, vector<1x128xf32>
    %404 = arith.index_cast %c7_i32 : i32 to index
    %c1_140 = arith.constant 1 : index
    %405 = memref.load %arg1[%404, %c1_140] : memref<8x2xi32, #tpu.memory_space<smem>>
    %406 = arith.index_cast %405 : i32 to index
    %c0_141 = arith.constant 0 : index
    %407 = vector.load %arg4[%406, %c0_141] : memref<128x128xf32, #tpu.memory_space<vmem>>, vector<1x128xf32>
    %408 = tpu.concatenate %403, %407 in 0 : vector<1x128xf32>, vector<1x128xf32> -> vector<2x128xf32>
    %c0_142 = arith.constant 0 : index
    %c0_143 = arith.constant 0 : index
    %409 = vector.load %arg5[%c0_142, %c0_143] : memref<128x384xf32, #tpu.memory_space<vmem>>, vector<128x384xf32>
    %cst_144 = arith.constant dense<0.000000e+00> : vector<2x384xf32>
    %410 = tpu.matmul %408, %409, %cst_144 {dimension_numbers = #tpu.dot_dimension_numbers<[1], [0], [0], [1], [0, 0, 1, 1], [], []>} : vector<2x128xf32>, vector<128x384xf32>, vector<2x384xf32> -> vector<2x384xf32>
    %c0_145 = arith.constant 0 : index
    %c0_146 = arith.constant 0 : index
    %411 = vector.load %arg7[%c0_145, %c0_146] : memref<1x384xf32, #tpu.memory_space<vmem>>, vector<1x384xf32>
    %412 = vector.broadcast %411 : vector<1x384xf32> to vector<2x384xf32>
    %413 = arith.addf %410, %412 : vector<2x384xf32>
    %c0_147 = arith.constant 0 : index
    %c0_148 = arith.constant 0 : index
    %414 = vector.load %arg6[%c0_147, %c0_148] : memref<128x384xf32, #tpu.memory_space<vmem>>, vector<128x384xf32>
    %cst_149 = arith.constant dense<0.000000e+00> : vector<2x384xf32>
    %415 = tpu.matmul %399, %414, %cst_149 {dimension_numbers = #tpu.dot_dimension_numbers<[1], [0], [0], [1], [0, 0, 1, 1], [], []>} : vector<2x128xf32>, vector<128x384xf32>, vector<2x384xf32> -> vector<2x384xf32>
    %c0_150 = arith.constant 0 : index
    %c0_151 = arith.constant 0 : index
    %416 = vector.load %arg8[%c0_150, %c0_151] : memref<1x384xf32, #tpu.memory_space<vmem>>, vector<1x384xf32>
    %417 = vector.broadcast %416 : vector<1x384xf32> to vector<2x384xf32>
    %418 = arith.addf %415, %417 : vector<2x384xf32>
    %419 = vector.extract_strided_slice %413 {offsets = [0, 0], sizes = [2, 128], strides = [1, 1]} : vector<2x384xf32> to vector<2x128xf32>
    %420 = vector.extract_strided_slice %418 {offsets = [0, 0], sizes = [2, 128], strides = [1, 1]} : vector<2x384xf32> to vector<2x128xf32>
    %421 = arith.addf %419, %420 : vector<2x128xf32>
    %422 = arith.negf %421 : vector<2x128xf32>
    %423 = math.exp %422 : vector<2x128xf32>
    %cst_152 = arith.constant 1.000000e+00 : f32
    %424 = vector.broadcast %cst_152 : f32 to vector<2x128xf32>
    %425 = arith.addf %424, %423 : vector<2x128xf32>
    %426 = arith.divf %424, %425 : vector<2x128xf32>
    %427 = vector.extract_strided_slice %413 {offsets = [0, 128], sizes = [2, 128], strides = [1, 1]} : vector<2x384xf32> to vector<2x128xf32>
    %428 = vector.extract_strided_slice %418 {offsets = [0, 128], sizes = [2, 128], strides = [1, 1]} : vector<2x384xf32> to vector<2x128xf32>
    %429 = arith.addf %427, %428 : vector<2x128xf32>
    %430 = arith.negf %429 : vector<2x128xf32>
    %431 = math.exp %430 : vector<2x128xf32>
    %cst_153 = arith.constant 1.000000e+00 : f32
    %432 = vector.broadcast %cst_153 : f32 to vector<2x128xf32>
    %433 = arith.addf %432, %431 : vector<2x128xf32>
    %434 = arith.divf %432, %433 : vector<2x128xf32>
    %435 = vector.extract_strided_slice %413 {offsets = [0, 256], sizes = [2, 128], strides = [1, 1]} : vector<2x384xf32> to vector<2x128xf32>
    %436 = vector.extract_strided_slice %418 {offsets = [0, 256], sizes = [2, 128], strides = [1, 1]} : vector<2x384xf32> to vector<2x128xf32>
    %437 = arith.mulf %426, %436 : vector<2x128xf32>
    %438 = arith.addf %435, %437 : vector<2x128xf32>
    %439 = math.tanh %438 : vector<2x128xf32>
    %cst_154 = arith.constant 1.000000e+00 : f32
    %440 = vector.broadcast %cst_154 : f32 to vector<2x128xf32>
    %441 = arith.subf %440, %434 : vector<2x128xf32>
    %442 = arith.mulf %441, %439 : vector<2x128xf32>
    %443 = arith.mulf %434, %399 : vector<2x128xf32>
    %444 = arith.addf %442, %443 : vector<2x128xf32>
    %c0_155 = arith.constant 0 : index
    %c0_156 = arith.constant 0 : index
    %445 = vector.load %arg3[%c0_155, %c0_156] : memref<2x1xi32, #tpu.memory_space<vmem>>, vector<2x1xi32>
    %446 = vector.broadcast %c7_i32 : i32 to vector<2x1xi32>
    %447 = arith.cmpi slt, %446, %445 : vector<2x1xi32>
    %448 = arith.extui %447 : vector<2x1xi1> to vector<2x1xi32>
    %449 = arith.sitofp %448 : vector<2x1xi32> to vector<2x1xf32>
    %450 = vector.broadcast %449 : vector<2x1xf32> to vector<2x128xf32>
    %451 = arith.mulf %450, %444 : vector<2x128xf32>
    %cst_157 = arith.constant 1.000000e+00 : f32
    %452 = vector.broadcast %cst_157 : f32 to vector<2x1xf32>
    %453 = arith.subf %452, %449 : vector<2x1xf32>
    %454 = vector.broadcast %453 : vector<2x1xf32> to vector<2x128xf32>
    %455 = arith.mulf %454, %399 : vector<2x128xf32>
    %456 = arith.addf %451, %455 : vector<2x128xf32>
    %c8_i32 = arith.constant 8 : i32
    %457 = tpu.iota {dimensions = array<i32: 1>} : vector<2x128xi32>
    %c2 = arith.constant 2 : index
    %c0_158 = arith.constant 0 : index
    %458 = vector.load %arg9[%c2, %c0_158] : memref<128x128xf32, #tpu.memory_space<vmem>>, vector<1x128xf32>
    %459 = vector.shape_cast %458 : vector<1x128xf32> to vector<1x128xf32>
    %460 = vector.broadcast %459 : vector<1x128xf32> to vector<2x128xf32>
    %c0_i32_159 = arith.constant 0 : i32
    %c0_160 = arith.constant 0 : index
    %c0_161 = arith.constant 0 : index
    %461 = vector.load %arg10[%c0_160, %c0_161] : memref<128x384xf32, #tpu.memory_space<vmem>>, vector<128x384xf32>
    %cst_162 = arith.constant dense<0.000000e+00> : vector<2x384xf32>
    %462 = tpu.matmul %460, %461, %cst_162 {dimension_numbers = #tpu.dot_dimension_numbers<[1], [0], [0], [1], [0, 0, 1, 1], [], []>} : vector<2x128xf32>, vector<128x384xf32>, vector<2x384xf32> -> vector<2x384xf32>
    %c0_163 = arith.constant 0 : index
    %c0_164 = arith.constant 0 : index
    %463 = vector.load %arg12[%c0_163, %c0_164] : memref<1x384xf32, #tpu.memory_space<vmem>>, vector<1x384xf32>
    %464 = vector.broadcast %463 : vector<1x384xf32> to vector<2x384xf32>
    %465 = arith.addf %462, %464 : vector<2x384xf32>
    %c0_165 = arith.constant 0 : index
    %c0_166 = arith.constant 0 : index
    %466 = vector.load %arg11[%c0_165, %c0_166] : memref<128x384xf32, #tpu.memory_space<vmem>>, vector<128x384xf32>
    %cst_167 = arith.constant dense<0.000000e+00> : vector<2x384xf32>
    %467 = tpu.matmul %456, %466, %cst_167 {dimension_numbers = #tpu.dot_dimension_numbers<[1], [0], [0], [1], [0, 0, 1, 1], [], []>} : vector<2x128xf32>, vector<128x384xf32>, vector<2x384xf32> -> vector<2x384xf32>
    %c0_168 = arith.constant 0 : index
    %c0_169 = arith.constant 0 : index
    %468 = vector.load %arg13[%c0_168, %c0_169] : memref<1x384xf32, #tpu.memory_space<vmem>>, vector<1x384xf32>
    %469 = vector.broadcast %468 : vector<1x384xf32> to vector<2x384xf32>
    %470 = arith.addf %467, %469 : vector<2x384xf32>
    %471 = vector.extract_strided_slice %465 {offsets = [0, 0], sizes = [2, 128], strides = [1, 1]} : vector<2x384xf32> to vector<2x128xf32>
    %472 = vector.extract_strided_slice %470 {offsets = [0, 0], sizes = [2, 128], strides = [1, 1]} : vector<2x384xf32> to vector<2x128xf32>
    %473 = arith.addf %471, %472 : vector<2x128xf32>
    %474 = arith.negf %473 : vector<2x128xf32>
    %475 = math.exp %474 : vector<2x128xf32>
    %cst_170 = arith.constant 1.000000e+00 : f32
    %476 = vector.broadcast %cst_170 : f32 to vector<2x128xf32>
    %477 = arith.addf %476, %475 : vector<2x128xf32>
    %478 = arith.divf %476, %477 : vector<2x128xf32>
    %479 = vector.extract_strided_slice %465 {offsets = [0, 128], sizes = [2, 128], strides = [1, 1]} : vector<2x384xf32> to vector<2x128xf32>
    %480 = vector.extract_strided_slice %470 {offsets = [0, 128], sizes = [2, 128], strides = [1, 1]} : vector<2x384xf32> to vector<2x128xf32>
    %481 = arith.addf %479, %480 : vector<2x128xf32>
    %482 = arith.negf %481 : vector<2x128xf32>
    %483 = math.exp %482 : vector<2x128xf32>
    %cst_171 = arith.constant 1.000000e+00 : f32
    %484 = vector.broadcast %cst_171 : f32 to vector<2x128xf32>
    %485 = arith.addf %484, %483 : vector<2x128xf32>
    %486 = arith.divf %484, %485 : vector<2x128xf32>
    %487 = vector.extract_strided_slice %465 {offsets = [0, 256], sizes = [2, 128], strides = [1, 1]} : vector<2x384xf32> to vector<2x128xf32>
    %488 = vector.extract_strided_slice %470 {offsets = [0, 256], sizes = [2, 128], strides = [1, 1]} : vector<2x384xf32> to vector<2x128xf32>
    %489 = arith.mulf %478, %488 : vector<2x128xf32>
    %490 = arith.addf %487, %489 : vector<2x128xf32>
    %491 = math.tanh %490 : vector<2x128xf32>
    %cst_172 = arith.constant 1.000000e+00 : f32
    %492 = vector.broadcast %cst_172 : f32 to vector<2x128xf32>
    %493 = arith.subf %492, %486 : vector<2x128xf32>
    %494 = arith.mulf %493, %491 : vector<2x128xf32>
    %495 = arith.mulf %486, %456 : vector<2x128xf32>
    %496 = arith.addf %494, %495 : vector<2x128xf32>
    %c0_173 = arith.constant 0 : index
    %c0_174 = arith.constant 0 : index
    %497 = vector.load %arg14[%c0_173, %c0_174] : memref<128x128xf32, #tpu.memory_space<vmem>>, vector<128x128xf32>
    %cst_175 = arith.constant dense<0.000000e+00> : vector<2x128xf32>
    %498 = tpu.matmul %496, %497, %cst_175 {dimension_numbers = #tpu.dot_dimension_numbers<[1], [0], [0], [1], [0, 0, 1, 1], [], []>} : vector<2x128xf32>, vector<128x128xf32>, vector<2x128xf32> -> vector<2x128xf32>
    %c0_176 = arith.constant 0 : index
    %c0_177 = arith.constant 0 : index
    %499 = vector.load %arg15[%c0_176, %c0_177] : memref<1x128xf32, #tpu.memory_space<vmem>>, vector<1x128xf32>
    %500 = vector.broadcast %499 : vector<1x128xf32> to vector<2x128xf32>
    %501 = arith.addf %498, %500 : vector<2x128xf32>
    %502 = vector.shape_cast %501 : vector<2x128xf32> to vector<1x2x128xf32>
    %503 = arith.index_cast %c0_i32_159 : i32 to index
    %c0_178 = arith.constant 0 : index
    %c0_179 = arith.constant 0 : index
    %504 = vector.load %arg16[%503, %c0_178, %c0_179] : memref<5x2x128xf32, #tpu.memory_space<vmem>>, vector<1x2x128xf32>
    tpu.vector_store %arg16[%503, %c0_178, %c0_179], %502 {strides = array<i32>} : memref<5x2x128xf32, #tpu.memory_space<vmem>>, vector<1x2x128xf32>,
    %c13_i32 = arith.constant 13 : i32
    %505 = vector.broadcast %c13_i32 : i32 to vector<2x128xi32>
    %506 = arith.cmpi slt, %457, %505 : vector<2x128xi32>
    %cst_180 = arith.constant -1.000000e+30 : f32
    %507 = vector.broadcast %cst_180 : f32 to vector<2x128xf32>
    %508 = arith.select %506, %501, %507 : vector<2x128xi1>, vector<2x128xf32>
    %cst_181 = arith.constant dense<0xFF800000> : vector<2xf32>
    %509 = vector.multi_reduction <maximumf>, %508, %cst_181 [1] : vector<2x128xf32> to vector<2xf32>
    %510 = vector.shape_cast %509 : vector<2xf32> to vector<2x1xf32>
    %511 = vector.broadcast %510 : vector<2x1xf32> to vector<2x128xf32>
    %512 = arith.cmpf oeq, %508, %511 : vector<2x128xf32>
    %c128_i32 = arith.constant 128 : i32
    %513 = vector.broadcast %c128_i32 : i32 to vector<2x128xi32>
    %514 = arith.select %512, %457, %513 : vector<2x128xi1>, vector<2x128xi32>
    %cst_182 = arith.constant dense<2147483647> : vector<2xi32>
    %515 = vector.multi_reduction <minsi>, %514, %cst_182 [1] : vector<2x128xi32> to vector<2xi32>
    %516 = vector.shape_cast %515 : vector<2xi32> to vector<2x1xi32>
    %517 = vector.broadcast %516 : vector<2x1xi32> to vector<2x128xi32>
    %518 = arith.cmpi eq, %457, %517 : vector<2x128xi32>
    %519 = arith.extui %518 : vector<2x128xi1> to vector<2x128xi32>
    %520 = arith.sitofp %519 : vector<2x128xi32> to vector<2x128xf32>
    %c0_183 = arith.constant 0 : index
    %c0_184 = arith.constant 0 : index
    %521 = vector.load %arg9[%c0_183, %c0_184] : memref<128x128xf32, #tpu.memory_space<vmem>>, vector<128x128xf32>
    %cst_185 = arith.constant dense<0.000000e+00> : vector<2x128xf32>
    %522 = tpu.matmul %520, %521, %cst_185 {dimension_numbers = #tpu.dot_dimension_numbers<[1], [0], [0], [1], [0, 0, 1, 1], [], []>} : vector<2x128xf32>, vector<128x128xf32>, vector<2x128xf32> -> vector<2x128xf32>
    %c1_i32_186 = arith.constant 1 : i32
    %c0_187 = arith.constant 0 : index
    %c0_188 = arith.constant 0 : index
    %523 = vector.load %arg10[%c0_187, %c0_188] : memref<128x384xf32, #tpu.memory_space<vmem>>, vector<128x384xf32>
    %cst_189 = arith.constant dense<0.000000e+00> : vector<2x384xf32>
    %524 = tpu.matmul %522, %523, %cst_189 {dimension_numbers = #tpu.dot_dimension_numbers<[1], [0], [0], [1], [0, 0, 1, 1], [], []>} : vector<2x128xf32>, vector<128x384xf32>, vector<2x384xf32> -> vector<2x384xf32>
    %c0_190 = arith.constant 0 : index
    %c0_191 = arith.constant 0 : index
    %525 = vector.load %arg12[%c0_190, %c0_191] : memref<1x384xf32, #tpu.memory_space<vmem>>, vector<1x384xf32>
    %526 = vector.broadcast %525 : vector<1x384xf32> to vector<2x384xf32>
    %527 = arith.addf %524, %526 : vector<2x384xf32>
    %c0_192 = arith.constant 0 : index
    %c0_193 = arith.constant 0 : index
    %528 = vector.load %arg11[%c0_192, %c0_193] : memref<128x384xf32, #tpu.memory_space<vmem>>, vector<128x384xf32>
    %cst_194 = arith.constant dense<0.000000e+00> : vector<2x384xf32>
    %529 = tpu.matmul %496, %528, %cst_194 {dimension_numbers = #tpu.dot_dimension_numbers<[1], [0], [0], [1], [0, 0, 1, 1], [], []>} : vector<2x128xf32>, vector<128x384xf32>, vector<2x384xf32> -> vector<2x384xf32>
    %c0_195 = arith.constant 0 : index
    %c0_196 = arith.constant 0 : index
    %530 = vector.load %arg13[%c0_195, %c0_196] : memref<1x384xf32, #tpu.memory_space<vmem>>, vector<1x384xf32>
    %531 = vector.broadcast %530 : vector<1x384xf32> to vector<2x384xf32>
    %532 = arith.addf %529, %531 : vector<2x384xf32>
    %533 = vector.extract_strided_slice %527 {offsets = [0, 0], sizes = [2, 128], strides = [1, 1]} : vector<2x384xf32> to vector<2x128xf32>
    %534 = vector.extract_strided_slice %532 {offsets = [0, 0], sizes = [2, 128], strides = [1, 1]} : vector<2x384xf32> to vector<2x128xf32>
    %535 = arith.addf %533, %534 : vector<2x128xf32>
    %536 = arith.negf %535 : vector<2x128xf32>
    %537 = math.exp %536 : vector<2x128xf32>
    %cst_197 = arith.constant 1.000000e+00 : f32
    %538 = vector.broadcast %cst_197 : f32 to vector<2x128xf32>
    %539 = arith.addf %538, %537 : vector<2x128xf32>
    %540 = arith.divf %538, %539 : vector<2x128xf32>
    %541 = vector.extract_strided_slice %527 {offsets = [0, 128], sizes = [2, 128], strides = [1, 1]} : vector<2x384xf32> to vector<2x128xf32>
    %542 = vector.extract_strided_slice %532 {offsets = [0, 128], sizes = [2, 128], strides = [1, 1]} : vector<2x384xf32> to vector<2x128xf32>
    %543 = arith.addf %541, %542 : vector<2x128xf32>
    %544 = arith.negf %543 : vector<2x128xf32>
    %545 = math.exp %544 : vector<2x128xf32>
    %cst_198 = arith.constant 1.000000e+00 : f32
    %546 = vector.broadcast %cst_198 : f32 to vector<2x128xf32>
    %547 = arith.addf %546, %545 : vector<2x128xf32>
    %548 = arith.divf %546, %547 : vector<2x128xf32>
    %549 = vector.extract_strided_slice %527 {offsets = [0, 256], sizes = [2, 128], strides = [1, 1]} : vector<2x384xf32> to vector<2x128xf32>
    %550 = vector.extract_strided_slice %532 {offsets = [0, 256], sizes = [2, 128], strides = [1, 1]} : vector<2x384xf32> to vector<2x128xf32>
    %551 = arith.mulf %540, %550 : vector<2x128xf32>
    %552 = arith.addf %549, %551 : vector<2x128xf32>
    %553 = math.tanh %552 : vector<2x128xf32>
    %cst_199 = arith.constant 1.000000e+00 : f32
    %554 = vector.broadcast %cst_199 : f32 to vector<2x128xf32>
    %555 = arith.subf %554, %548 : vector<2x128xf32>
    %556 = arith.mulf %555, %553 : vector<2x128xf32>
    %557 = arith.mulf %548, %496 : vector<2x128xf32>
    %558 = arith.addf %556, %557 : vector<2x128xf32>
    %c0_200 = arith.constant 0 : index
    %c0_201 = arith.constant 0 : index
    %559 = vector.load %arg14[%c0_200, %c0_201] : memref<128x128xf32, #tpu.memory_space<vmem>>, vector<128x128xf32>
    %cst_202 = arith.constant dense<0.000000e+00> : vector<2x128xf32>
    %560 = tpu.matmul %558, %559, %cst_202 {dimension_numbers = #tpu.dot_dimension_numbers<[1], [0], [0], [1], [0, 0, 1, 1], [], []>} : vector<2x128xf32>, vector<128x128xf32>, vector<2x128xf32> -> vector<2x128xf32>
    %c0_203 = arith.constant 0 : index
    %c0_204 = arith.constant 0 : index
    %561 = vector.load %arg15[%c0_203, %c0_204] : memref<1x128xf32, #tpu.memory_space<vmem>>, vector<1x128xf32>
    %562 = vector.broadcast %561 : vector<1x128xf32> to vector<2x128xf32>
    %563 = arith.addf %560, %562 : vector<2x128xf32>
    %564 = vector.shape_cast %563 : vector<2x128xf32> to vector<1x2x128xf32>
    %565 = arith.index_cast %c1_i32_186 : i32 to index
    %c0_205 = arith.constant 0 : index
    %c0_206 = arith.constant 0 : index
    %566 = vector.load %arg16[%565, %c0_205, %c0_206] : memref<5x2x128xf32, #tpu.memory_space<vmem>>, vector<1x2x128xf32>
    tpu.vector_store %arg16[%565, %c0_205, %c0_206], %564 {strides = array<i32>} : memref<5x2x128xf32, #tpu.memory_space<vmem>>, vector<1x2x128xf32>,
    %c13_i32_207 = arith.constant 13 : i32
    %567 = vector.broadcast %c13_i32_207 : i32 to vector<2x128xi32>
    %568 = arith.cmpi slt, %457, %567 : vector<2x128xi32>
    %cst_208 = arith.constant -1.000000e+30 : f32
    %569 = vector.broadcast %cst_208 : f32 to vector<2x128xf32>
    %570 = arith.select %568, %563, %569 : vector<2x128xi1>, vector<2x128xf32>
    %cst_209 = arith.constant dense<0xFF800000> : vector<2xf32>
    %571 = vector.multi_reduction <maximumf>, %570, %cst_209 [1] : vector<2x128xf32> to vector<2xf32>
    %572 = vector.shape_cast %571 : vector<2xf32> to vector<2x1xf32>
    %573 = vector.broadcast %572 : vector<2x1xf32> to vector<2x128xf32>
    %574 = arith.cmpf oeq, %570, %573 : vector<2x128xf32>
    %c128_i32_210 = arith.constant 128 : i32
    %575 = vector.broadcast %c128_i32_210 : i32 to vector<2x128xi32>
    %576 = arith.select %574, %457, %575 : vector<2x128xi1>, vector<2x128xi32>
    %cst_211 = arith.constant dense<2147483647> : vector<2xi32>
    %577 = vector.multi_reduction <minsi>, %576, %cst_211 [1] : vector<2x128xi32> to vector<2xi32>
    %578 = vector.shape_cast %577 : vector<2xi32> to vector<2x1xi32>
    %579 = vector.broadcast %578 : vector<2x1xi32> to vector<2x128xi32>
    %580 = arith.cmpi eq, %457, %579 : vector<2x128xi32>
    %581 = arith.extui %580 : vector<2x128xi1> to vector<2x128xi32>
    %582 = arith.sitofp %581 : vector<2x128xi32> to vector<2x128xf32>
    %c0_212 = arith.constant 0 : index
    %c0_213 = arith.constant 0 : index
    %583 = vector.load %arg9[%c0_212, %c0_213] : memref<128x128xf32, #tpu.memory_space<vmem>>, vector<128x128xf32>
    %cst_214 = arith.constant dense<0.000000e+00> : vector<2x128xf32>
    %584 = tpu.matmul %582, %583, %cst_214 {dimension_numbers = #tpu.dot_dimension_numbers<[1], [0], [0], [1], [0, 0, 1, 1], [], []>} : vector<2x128xf32>, vector<128x128xf32>, vector<2x128xf32> -> vector<2x128xf32>
    %c2_i32_215 = arith.constant 2 : i32
    %c0_216 = arith.constant 0 : index
    %c0_217 = arith.constant 0 : index
    %585 = vector.load %arg10[%c0_216, %c0_217] : memref<128x384xf32, #tpu.memory_space<vmem>>, vector<128x384xf32>
    %cst_218 = arith.constant dense<0.000000e+00> : vector<2x384xf32>
    %586 = tpu.matmul %584, %585, %cst_218 {dimension_numbers = #tpu.dot_dimension_numbers<[1], [0], [0], [1], [0, 0, 1, 1], [], []>} : vector<2x128xf32>, vector<128x384xf32>, vector<2x384xf32> -> vector<2x384xf32>
    %c0_219 = arith.constant 0 : index
    %c0_220 = arith.constant 0 : index
    %587 = vector.load %arg12[%c0_219, %c0_220] : memref<1x384xf32, #tpu.memory_space<vmem>>, vector<1x384xf32>
    %588 = vector.broadcast %587 : vector<1x384xf32> to vector<2x384xf32>
    %589 = arith.addf %586, %588 : vector<2x384xf32>
    %c0_221 = arith.constant 0 : index
    %c0_222 = arith.constant 0 : index
    %590 = vector.load %arg11[%c0_221, %c0_222] : memref<128x384xf32, #tpu.memory_space<vmem>>, vector<128x384xf32>
    %cst_223 = arith.constant dense<0.000000e+00> : vector<2x384xf32>
    %591 = tpu.matmul %558, %590, %cst_223 {dimension_numbers = #tpu.dot_dimension_numbers<[1], [0], [0], [1], [0, 0, 1, 1], [], []>} : vector<2x128xf32>, vector<128x384xf32>, vector<2x384xf32> -> vector<2x384xf32>
    %c0_224 = arith.constant 0 : index
    %c0_225 = arith.constant 0 : index
    %592 = vector.load %arg13[%c0_224, %c0_225] : memref<1x384xf32, #tpu.memory_space<vmem>>, vector<1x384xf32>
    %593 = vector.broadcast %592 : vector<1x384xf32> to vector<2x384xf32>
    %594 = arith.addf %591, %593 : vector<2x384xf32>
    %595 = vector.extract_strided_slice %589 {offsets = [0, 0], sizes = [2, 128], strides = [1, 1]} : vector<2x384xf32> to vector<2x128xf32>
    %596 = vector.extract_strided_slice %594 {offsets = [0, 0], sizes = [2, 128], strides = [1, 1]} : vector<2x384xf32> to vector<2x128xf32>
    %597 = arith.addf %595, %596 : vector<2x128xf32>
    %598 = arith.negf %597 : vector<2x128xf32>
    %599 = math.exp %598 : vector<2x128xf32>
    %cst_226 = arith.constant 1.000000e+00 : f32
    %600 = vector.broadcast %cst_226 : f32 to vector<2x128xf32>
    %601 = arith.addf %600, %599 : vector<2x128xf32>
    %602 = arith.divf %600, %601 : vector<2x128xf32>
    %603 = vector.extract_strided_slice %589 {offsets = [0, 128], sizes = [2, 128], strides = [1, 1]} : vector<2x384xf32> to vector<2x128xf32>
    %604 = vector.extract_strided_slice %594 {offsets = [0, 128], sizes = [2, 128], strides = [1, 1]} : vector<2x384xf32> to vector<2x128xf32>
    %605 = arith.addf %603, %604 : vector<2x128xf32>
    %606 = arith.negf %605 : vector<2x128xf32>
    %607 = math.exp %606 : vector<2x128xf32>
    %cst_227 = arith.constant 1.000000e+00 : f32
    %608 = vector.broadcast %cst_227 : f32 to vector<2x128xf32>
    %609 = arith.addf %608, %607 : vector<2x128xf32>
    %610 = arith.divf %608, %609 : vector<2x128xf32>
    %611 = vector.extract_strided_slice %589 {offsets = [0, 256], sizes = [2, 128], strides = [1, 1]} : vector<2x384xf32> to vector<2x128xf32>
    %612 = vector.extract_strided_slice %594 {offsets = [0, 256], sizes = [2, 128], strides = [1, 1]} : vector<2x384xf32> to vector<2x128xf32>
    %613 = arith.mulf %602, %612 : vector<2x128xf32>
    %614 = arith.addf %611, %613 : vector<2x128xf32>
    %615 = math.tanh %614 : vector<2x128xf32>
    %cst_228 = arith.constant 1.000000e+00 : f32
    %616 = vector.broadcast %cst_228 : f32 to vector<2x128xf32>
    %617 = arith.subf %616, %610 : vector<2x128xf32>
    %618 = arith.mulf %617, %615 : vector<2x128xf32>
    %619 = arith.mulf %610, %558 : vector<2x128xf32>
    %620 = arith.addf %618, %619 : vector<2x128xf32>
    %c0_229 = arith.constant 0 : index
    %c0_230 = arith.constant 0 : index
    %621 = vector.load %arg14[%c0_229, %c0_230] : memref<128x128xf32, #tpu.memory_space<vmem>>, vector<128x128xf32>
    %cst_231 = arith.constant dense<0.000000e+00> : vector<2x128xf32>
    %622 = tpu.matmul %620, %621, %cst_231 {dimension_numbers = #tpu.dot_dimension_numbers<[1], [0], [0], [1], [0, 0, 1, 1], [], []>} : vector<2x128xf32>, vector<128x128xf32>, vector<2x128xf32> -> vector<2x128xf32>
    %c0_232 = arith.constant 0 : index
    %c0_233 = arith.constant 0 : index
    %623 = vector.load %arg15[%c0_232, %c0_233] : memref<1x128xf32, #tpu.memory_space<vmem>>, vector<1x128xf32>
    %624 = vector.broadcast %623 : vector<1x128xf32> to vector<2x128xf32>
    %625 = arith.addf %622, %624 : vector<2x128xf32>
    %626 = vector.shape_cast %625 : vector<2x128xf32> to vector<1x2x128xf32>
    %627 = arith.index_cast %c2_i32_215 : i32 to index
    %c0_234 = arith.constant 0 : index
    %c0_235 = arith.constant 0 : index
    %628 = vector.load %arg16[%627, %c0_234, %c0_235] : memref<5x2x128xf32, #tpu.memory_space<vmem>>, vector<1x2x128xf32>
    tpu.vector_store %arg16[%627, %c0_234, %c0_235], %626 {strides = array<i32>} : memref<5x2x128xf32, #tpu.memory_space<vmem>>, vector<1x2x128xf32>,
    %c13_i32_236 = arith.constant 13 : i32
    %629 = vector.broadcast %c13_i32_236 : i32 to vector<2x128xi32>
    %630 = arith.cmpi slt, %457, %629 : vector<2x128xi32>
    %cst_237 = arith.constant -1.000000e+30 : f32
    %631 = vector.broadcast %cst_237 : f32 to vector<2x128xf32>
    %632 = arith.select %630, %625, %631 : vector<2x128xi1>, vector<2x128xf32>
    %cst_238 = arith.constant dense<0xFF800000> : vector<2xf32>
    %633 = vector.multi_reduction <maximumf>, %632, %cst_238 [1] : vector<2x128xf32> to vector<2xf32>
    %634 = vector.shape_cast %633 : vector<2xf32> to vector<2x1xf32>
    %635 = vector.broadcast %634 : vector<2x1xf32> to vector<2x128xf32>
    %636 = arith.cmpf oeq, %632, %635 : vector<2x128xf32>
    %c128_i32_239 = arith.constant 128 : i32
    %637 = vector.broadcast %c128_i32_239 : i32 to vector<2x128xi32>
    %638 = arith.select %636, %457, %637 : vector<2x128xi1>, vector<2x128xi32>
    %cst_240 = arith.constant dense<2147483647> : vector<2xi32>
    %639 = vector.multi_reduction <minsi>, %638, %cst_240 [1] : vector<2x128xi32> to vector<2xi32>
    %640 = vector.shape_cast %639 : vector<2xi32> to vector<2x1xi32>
    %641 = vector.broadcast %640 : vector<2x1xi32> to vector<2x128xi32>
    %642 = arith.cmpi eq, %457, %641 : vector<2x128xi32>
    %643 = arith.extui %642 : vector<2x128xi1> to vector<2x128xi32>
    %644 = arith.sitofp %643 : vector<2x128xi32> to vector<2x128xf32>
    %c0_241 = arith.constant 0 : index
    %c0_242 = arith.constant 0 : index
    %645 = vector.load %arg9[%c0_241, %c0_242] : memref<128x128xf32, #tpu.memory_space<vmem>>, vector<128x128xf32>
    %cst_243 = arith.constant dense<0.000000e+00> : vector<2x128xf32>
    %646 = tpu.matmul %644, %645, %cst_243 {dimension_numbers = #tpu.dot_dimension_numbers<[1], [0], [0], [1], [0, 0, 1, 1], [], []>} : vector<2x128xf32>, vector<128x128xf32>, vector<2x128xf32> -> vector<2x128xf32>
    %c3_i32_244 = arith.constant 3 : i32
    %c0_245 = arith.constant 0 : index
    %c0_246 = arith.constant 0 : index
    %647 = vector.load %arg10[%c0_245, %c0_246] : memref<128x384xf32, #tpu.memory_space<vmem>>, vector<128x384xf32>
    %cst_247 = arith.constant dense<0.000000e+00> : vector<2x384xf32>
    %648 = tpu.matmul %646, %647, %cst_247 {dimension_numbers = #tpu.dot_dimension_numbers<[1], [0], [0], [1], [0, 0, 1, 1], [], []>} : vector<2x128xf32>, vector<128x384xf32>, vector<2x384xf32> -> vector<2x384xf32>
    %c0_248 = arith.constant 0 : index
    %c0_249 = arith.constant 0 : index
    %649 = vector.load %arg12[%c0_248, %c0_249] : memref<1x384xf32, #tpu.memory_space<vmem>>, vector<1x384xf32>
    %650 = vector.broadcast %649 : vector<1x384xf32> to vector<2x384xf32>
    %651 = arith.addf %648, %650 : vector<2x384xf32>
    %c0_250 = arith.constant 0 : index
    %c0_251 = arith.constant 0 : index
    %652 = vector.load %arg11[%c0_250, %c0_251] : memref<128x384xf32, #tpu.memory_space<vmem>>, vector<128x384xf32>
    %cst_252 = arith.constant dense<0.000000e+00> : vector<2x384xf32>
    %653 = tpu.matmul %620, %652, %cst_252 {dimension_numbers = #tpu.dot_dimension_numbers<[1], [0], [0], [1], [0, 0, 1, 1], [], []>} : vector<2x128xf32>, vector<128x384xf32>, vector<2x384xf32> -> vector<2x384xf32>
    %c0_253 = arith.constant 0 : index
    %c0_254 = arith.constant 0 : index
    %654 = vector.load %arg13[%c0_253, %c0_254] : memref<1x384xf32, #tpu.memory_space<vmem>>, vector<1x384xf32>
    %655 = vector.broadcast %654 : vector<1x384xf32> to vector<2x384xf32>
    %656 = arith.addf %653, %655 : vector<2x384xf32>
    %657 = vector.extract_strided_slice %651 {offsets = [0, 0], sizes = [2, 128], strides = [1, 1]} : vector<2x384xf32> to vector<2x128xf32>
    %658 = vector.extract_strided_slice %656 {offsets = [0, 0], sizes = [2, 128], strides = [1, 1]} : vector<2x384xf32> to vector<2x128xf32>
    %659 = arith.addf %657, %658 : vector<2x128xf32>
    %660 = arith.negf %659 : vector<2x128xf32>
    %661 = math.exp %660 : vector<2x128xf32>
    %cst_255 = arith.constant 1.000000e+00 : f32
    %662 = vector.broadcast %cst_255 : f32 to vector<2x128xf32>
    %663 = arith.addf %662, %661 : vector<2x128xf32>
    %664 = arith.divf %662, %663 : vector<2x128xf32>
    %665 = vector.extract_strided_slice %651 {offsets = [0, 128], sizes = [2, 128], strides = [1, 1]} : vector<2x384xf32> to vector<2x128xf32>
    %666 = vector.extract_strided_slice %656 {offsets = [0, 128], sizes = [2, 128], strides = [1, 1]} : vector<2x384xf32> to vector<2x128xf32>
    %667 = arith.addf %665, %666 : vector<2x128xf32>
    %668 = arith.negf %667 : vector<2x128xf32>
    %669 = math.exp %668 : vector<2x128xf32>
    %cst_256 = arith.constant 1.000000e+00 : f32
    %670 = vector.broadcast %cst_256 : f32 to vector<2x128xf32>
    %671 = arith.addf %670, %669 : vector<2x128xf32>
    %672 = arith.divf %670, %671 : vector<2x128xf32>
    %673 = vector.extract_strided_slice %651 {offsets = [0, 256], sizes = [2, 128], strides = [1, 1]} : vector<2x384xf32> to vector<2x128xf32>
    %674 = vector.extract_strided_slice %656 {offsets = [0, 256], sizes = [2, 128], strides = [1, 1]} : vector<2x384xf32> to vector<2x128xf32>
    %675 = arith.mulf %664, %674 : vector<2x128xf32>
    %676 = arith.addf %673, %675 : vector<2x128xf32>
    %677 = math.tanh %676 : vector<2x128xf32>
    %cst_257 = arith.constant 1.000000e+00 : f32
    %678 = vector.broadcast %cst_257 : f32 to vector<2x128xf32>
    %679 = arith.subf %678, %672 : vector<2x128xf32>
    %680 = arith.mulf %679, %677 : vector<2x128xf32>
    %681 = arith.mulf %672, %620 : vector<2x128xf32>
    %682 = arith.addf %680, %681 : vector<2x128xf32>
    %c0_258 = arith.constant 0 : index
    %c0_259 = arith.constant 0 : index
    %683 = vector.load %arg14[%c0_258, %c0_259] : memref<128x128xf32, #tpu.memory_space<vmem>>, vector<128x128xf32>
    %cst_260 = arith.constant dense<0.000000e+00> : vector<2x128xf32>
    %684 = tpu.matmul %682, %683, %cst_260 {dimension_numbers = #tpu.dot_dimension_numbers<[1], [0], [0], [1], [0, 0, 1, 1], [], []>} : vector<2x128xf32>, vector<128x128xf32>, vector<2x128xf32> -> vector<2x128xf32>
    %c0_261 = arith.constant 0 : index
    %c0_262 = arith.constant 0 : index
    %685 = vector.load %arg15[%c0_261, %c0_262] : memref<1x128xf32, #tpu.memory_space<vmem>>, vector<1x128xf32>
    %686 = vector.broadcast %685 : vector<1x128xf32> to vector<2x128xf32>
    %687 = arith.addf %684, %686 : vector<2x128xf32>
    %688 = vector.shape_cast %687 : vector<2x128xf32> to vector<1x2x128xf32>
    %689 = arith.index_cast %c3_i32_244 : i32 to index
    %c0_263 = arith.constant 0 : index
    %c0_264 = arith.constant 0 : index
    %690 = vector.load %arg16[%689, %c0_263, %c0_264] : memref<5x2x128xf32, #tpu.memory_space<vmem>>, vector<1x2x128xf32>
    tpu.vector_store %arg16[%689, %c0_263, %c0_264], %688 {strides = array<i32>} : memref<5x2x128xf32, #tpu.memory_space<vmem>>, vector<1x2x128xf32>,
    %c13_i32_265 = arith.constant 13 : i32
    %691 = vector.broadcast %c13_i32_265 : i32 to vector<2x128xi32>
    %692 = arith.cmpi slt, %457, %691 : vector<2x128xi32>
    %cst_266 = arith.constant -1.000000e+30 : f32
    %693 = vector.broadcast %cst_266 : f32 to vector<2x128xf32>
    %694 = arith.select %692, %687, %693 : vector<2x128xi1>, vector<2x128xf32>
    %cst_267 = arith.constant dense<0xFF800000> : vector<2xf32>
    %695 = vector.multi_reduction <maximumf>, %694, %cst_267 [1] : vector<2x128xf32> to vector<2xf32>
    %696 = vector.shape_cast %695 : vector<2xf32> to vector<2x1xf32>
    %697 = vector.broadcast %696 : vector<2x1xf32> to vector<2x128xf32>
    %698 = arith.cmpf oeq, %694, %697 : vector<2x128xf32>
    %c128_i32_268 = arith.constant 128 : i32
    %699 = vector.broadcast %c128_i32_268 : i32 to vector<2x128xi32>
    %700 = arith.select %698, %457, %699 : vector<2x128xi1>, vector<2x128xi32>
    %cst_269 = arith.constant dense<2147483647> : vector<2xi32>
    %701 = vector.multi_reduction <minsi>, %700, %cst_269 [1] : vector<2x128xi32> to vector<2xi32>
    %702 = vector.shape_cast %701 : vector<2xi32> to vector<2x1xi32>
    %703 = vector.broadcast %702 : vector<2x1xi32> to vector<2x128xi32>
    %704 = arith.cmpi eq, %457, %703 : vector<2x128xi32>
    %705 = arith.extui %704 : vector<2x128xi1> to vector<2x128xi32>
    %706 = arith.sitofp %705 : vector<2x128xi32> to vector<2x128xf32>
    %c0_270 = arith.constant 0 : index
    %c0_271 = arith.constant 0 : index
    %707 = vector.load %arg9[%c0_270, %c0_271] : memref<128x128xf32, #tpu.memory_space<vmem>>, vector<128x128xf32>
    %cst_272 = arith.constant dense<0.000000e+00> : vector<2x128xf32>
    %708 = tpu.matmul %706, %707, %cst_272 {dimension_numbers = #tpu.dot_dimension_numbers<[1], [0], [0], [1], [0, 0, 1, 1], [], []>} : vector<2x128xf32>, vector<128x128xf32>, vector<2x128xf32> -> vector<2x128xf32>
    %c4_i32_273 = arith.constant 4 : i32
    %c0_274 = arith.constant 0 : index
    %c0_275 = arith.constant 0 : index
    %709 = vector.load %arg10[%c0_274, %c0_275] : memref<128x384xf32, #tpu.memory_space<vmem>>, vector<128x384xf32>
    %cst_276 = arith.constant dense<0.000000e+00> : vector<2x384xf32>
    %710 = tpu.matmul %708, %709, %cst_276 {dimension_numbers = #tpu.dot_dimension_numbers<[1], [0], [0], [1], [0, 0, 1, 1], [], []>} : vector<2x128xf32>, vector<128x384xf32>, vector<2x384xf32> -> vector<2x384xf32>
    %c0_277 = arith.constant 0 : index
    %c0_278 = arith.constant 0 : index
    %711 = vector.load %arg12[%c0_277, %c0_278] : memref<1x384xf32, #tpu.memory_space<vmem>>, vector<1x384xf32>
    %712 = vector.broadcast %711 : vector<1x384xf32> to vector<2x384xf32>
    %713 = arith.addf %710, %712 : vector<2x384xf32>
    %c0_279 = arith.constant 0 : index
    %c0_280 = arith.constant 0 : index
    %714 = vector.load %arg11[%c0_279, %c0_280] : memref<128x384xf32, #tpu.memory_space<vmem>>, vector<128x384xf32>
    %cst_281 = arith.constant dense<0.000000e+00> : vector<2x384xf32>
    %715 = tpu.matmul %682, %714, %cst_281 {dimension_numbers = #tpu.dot_dimension_numbers<[1], [0], [0], [1], [0, 0, 1, 1], [], []>} : vector<2x128xf32>, vector<128x384xf32>, vector<2x384xf32> -> vector<2x384xf32>
    %c0_282 = arith.constant 0 : index
    %c0_283 = arith.constant 0 : index
    %716 = vector.load %arg13[%c0_282, %c0_283] : memref<1x384xf32, #tpu.memory_space<vmem>>, vector<1x384xf32>
    %717 = vector.broadcast %716 : vector<1x384xf32> to vector<2x384xf32>
    %718 = arith.addf %715, %717 : vector<2x384xf32>
    %719 = vector.extract_strided_slice %713 {offsets = [0, 0], sizes = [2, 128], strides = [1, 1]} : vector<2x384xf32> to vector<2x128xf32>
    %720 = vector.extract_strided_slice %718 {offsets = [0, 0], sizes = [2, 128], strides = [1, 1]} : vector<2x384xf32> to vector<2x128xf32>
    %721 = arith.addf %719, %720 : vector<2x128xf32>
    %722 = arith.negf %721 : vector<2x128xf32>
    %723 = math.exp %722 : vector<2x128xf32>
    %cst_284 = arith.constant 1.000000e+00 : f32
    %724 = vector.broadcast %cst_284 : f32 to vector<2x128xf32>
    %725 = arith.addf %724, %723 : vector<2x128xf32>
    %726 = arith.divf %724, %725 : vector<2x128xf32>
    %727 = vector.extract_strided_slice %713 {offsets = [0, 128], sizes = [2, 128], strides = [1, 1]} : vector<2x384xf32> to vector<2x128xf32>
    %728 = vector.extract_strided_slice %718 {offsets = [0, 128], sizes = [2, 128], strides = [1, 1]} : vector<2x384xf32> to vector<2x128xf32>
    %729 = arith.addf %727, %728 : vector<2x128xf32>
    %730 = arith.negf %729 : vector<2x128xf32>
    %731 = math.exp %730 : vector<2x128xf32>
    %cst_285 = arith.constant 1.000000e+00 : f32
    %732 = vector.broadcast %cst_285 : f32 to vector<2x128xf32>
    %733 = arith.addf %732, %731 : vector<2x128xf32>
    %734 = arith.divf %732, %733 : vector<2x128xf32>
    %735 = vector.extract_strided_slice %713 {offsets = [0, 256], sizes = [2, 128], strides = [1, 1]} : vector<2x384xf32> to vector<2x128xf32>
    %736 = vector.extract_strided_slice %718 {offsets = [0, 256], sizes = [2, 128], strides = [1, 1]} : vector<2x384xf32> to vector<2x128xf32>
    %737 = arith.mulf %726, %736 : vector<2x128xf32>
    %738 = arith.addf %735, %737 : vector<2x128xf32>
    %739 = math.tanh %738 : vector<2x128xf32>
    %cst_286 = arith.constant 1.000000e+00 : f32
    %740 = vector.broadcast %cst_286 : f32 to vector<2x128xf32>
    %741 = arith.subf %740, %734 : vector<2x128xf32>
    %742 = arith.mulf %741, %739 : vector<2x128xf32>
    %743 = arith.mulf %734, %682 : vector<2x128xf32>
    %744 = arith.addf %742, %743 : vector<2x128xf32>
    %c0_287 = arith.constant 0 : index
    %c0_288 = arith.constant 0 : index
    %745 = vector.load %arg14[%c0_287, %c0_288] : memref<128x128xf32, #tpu.memory_space<vmem>>, vector<128x128xf32>
    %cst_289 = arith.constant dense<0.000000e+00> : vector<2x128xf32>
    %746 = tpu.matmul %744, %745, %cst_289 {dimension_numbers = #tpu.dot_dimension_numbers<[1], [0], [0], [1], [0, 0, 1, 1], [], []>} : vector<2x128xf32>, vector<128x128xf32>, vector<2x128xf32> -> vector<2x128xf32>
    %c0_290 = arith.constant 0 : index
    %c0_291 = arith.constant 0 : index
    %747 = vector.load %arg15[%c0_290, %c0_291] : memref<1x128xf32, #tpu.memory_space<vmem>>, vector<1x128xf32>
    %748 = vector.broadcast %747 : vector<1x128xf32> to vector<2x128xf32>
    %749 = arith.addf %746, %748 : vector<2x128xf32>
    %750 = vector.shape_cast %749 : vector<2x128xf32> to vector<1x2x128xf32>
    %751 = arith.index_cast %c4_i32_273 : i32 to index
    %c0_292 = arith.constant 0 : index
    %c0_293 = arith.constant 0 : index
    %752 = vector.load %arg16[%751, %c0_292, %c0_293] : memref<5x2x128xf32, #tpu.memory_space<vmem>>, vector<1x2x128xf32>
    tpu.vector_store %arg16[%751, %c0_292, %c0_293], %750 {strides = array<i32>} : memref<5x2x128xf32, #tpu.memory_space<vmem>>, vector<1x2x128xf32>,
    %c13_i32_294 = arith.constant 13 : i32
    %753 = vector.broadcast %c13_i32_294 : i32 to vector<2x128xi32>
    %754 = arith.cmpi slt, %457, %753 : vector<2x128xi32>
    %cst_295 = arith.constant -1.000000e+30 : f32
    %755 = vector.broadcast %cst_295 : f32 to vector<2x128xf32>
    %756 = arith.select %754, %749, %755 : vector<2x128xi1>, vector<2x128xf32>
    %cst_296 = arith.constant dense<0xFF800000> : vector<2xf32>
    %757 = vector.multi_reduction <maximumf>, %756, %cst_296 [1] : vector<2x128xf32> to vector<2xf32>
    %758 = vector.shape_cast %757 : vector<2xf32> to vector<2x1xf32>
    %759 = vector.broadcast %758 : vector<2x1xf32> to vector<2x128xf32>
    %760 = arith.cmpf oeq, %756, %759 : vector<2x128xf32>
    %c128_i32_297 = arith.constant 128 : i32
    %761 = vector.broadcast %c128_i32_297 : i32 to vector<2x128xi32>
    %762 = arith.select %760, %457, %761 : vector<2x128xi1>, vector<2x128xi32>
    %cst_298 = arith.constant dense<2147483647> : vector<2xi32>
    %763 = vector.multi_reduction <minsi>, %762, %cst_298 [1] : vector<2x128xi32> to vector<2xi32>
    %764 = vector.shape_cast %763 : vector<2xi32> to vector<2x1xi32>
    %765 = vector.broadcast %764 : vector<2x1xi32> to vector<2x128xi32>
    %766 = arith.cmpi eq, %457, %765 : vector<2x128xi32>
    %767 = arith.extui %766 : vector<2x128xi1> to vector<2x128xi32>
    %768 = arith.sitofp %767 : vector<2x128xi32> to vector<2x128xf32>
    %c0_299 = arith.constant 0 : index
    %c0_300 = arith.constant 0 : index
    %769 = vector.load %arg9[%c0_299, %c0_300] : memref<128x128xf32, #tpu.memory_space<vmem>>, vector<128x128xf32>
    %cst_301 = arith.constant dense<0.000000e+00> : vector<2x128xf32>
    %770 = tpu.matmul %768, %769, %cst_301 {dimension_numbers = #tpu.dot_dimension_numbers<[1], [0], [0], [1], [0, 0, 1, 1], [], []>} : vector<2x128xf32>, vector<128x128xf32>, vector<2x128xf32> -> vector<2x128xf32>
    %c5_i32_302 = arith.constant 5 : i32
    return
  }
  func.func @transform_0(%arg0: i32, %arg1: memref<8x2xi32, #tpu.memory_space<smem>>, %arg2: memref<5x2xi32, #tpu.memory_space<smem>>) -> (i32, i32) {
    %c0_i32 = arith.constant 0 : i32
    %c0_i32_0 = arith.constant 0 : i32
    %c0_i32_1 = arith.constant 0 : i32
    return %c0_i32, %c0_i32_0 : i32, i32
  }
  func.func @transform_1(%arg0: i32, %arg1: memref<8x2xi32, #tpu.memory_space<smem>>, %arg2: memref<5x2xi32, #tpu.memory_space<smem>>) -> (i32, i32) {
    %c0_i32 = arith.constant 0 : i32
    %c0_i32_0 = arith.constant 0 : i32
    %c0_i32_1 = arith.constant 0 : i32
    return %c0_i32, %c0_i32_0 : i32, i32
  }
  func.func @transform_2(%arg0: i32, %arg1: memref<8x2xi32, #tpu.memory_space<smem>>, %arg2: memref<5x2xi32, #tpu.memory_space<smem>>) -> (i32, i32) {
    %c0_i32 = arith.constant 0 : i32
    %c0_i32_0 = arith.constant 0 : i32
    %c0_i32_1 = arith.constant 0 : i32
    return %c0_i32, %c0_i32_0 : i32, i32
  }
  func.func @transform_3(%arg0: i32, %arg1: memref<8x2xi32, #tpu.memory_space<smem>>, %arg2: memref<5x2xi32, #tpu.memory_space<smem>>) -> (i32, i32) {
    %c0_i32 = arith.constant 0 : i32
    %c0_i32_0 = arith.constant 0 : i32
    %c0_i32_1 = arith.constant 0 : i32
    return %c0_i32, %c0_i32_0 : i32, i32
  }
  func.func @transform_4(%arg0: i32, %arg1: memref<8x2xi32, #tpu.memory_space<smem>>, %arg2: memref<5x2xi32, #tpu.memory_space<smem>>) -> (i32, i32) {
    %c0_i32 = arith.constant 0 : i32
    %c0_i32_0 = arith.constant 0 : i32
    %c0_i32_1 = arith.constant 0 : i32
    return %c0_i32, %c0_i32_0 : i32, i32
  }
  func.func @transform_5(%arg0: i32, %arg1: memref<8x2xi32, #tpu.memory_space<smem>>, %arg2: memref<5x2xi32, #tpu.memory_space<smem>>) -> (i32, i32) {
    %c0_i32 = arith.constant 0 : i32
    %c0_i32_0 = arith.constant 0 : i32
    %c0_i32_1 = arith.constant 0 : i32
    return %c0_i32, %c0_i32_0 : i32, i32
  }
  func.func @transform_6(%arg0: i32, %arg1: memref<8x2xi32, #tpu.memory_space<smem>>, %arg2: memref<5x2xi32, #tpu.memory_space<smem>>) -> (i32, i32) {
    %c0_i32 = arith.constant 0 : i32
    %c0_i32_0 = arith.constant 0 : i32
    %c0_i32_1 = arith.constant 0 : i32
    return %c0_i32, %c0_i32_0 : i32, i32
  }
  func.func @transform_7(%arg0: i32, %arg1: memref<8x2xi32, #tpu.memory_space<smem>>, %arg2: memref<5x2xi32, #tpu.memory_space<smem>>) -> (i32, i32) {
    %c0_i32 = arith.constant 0 : i32
    %c0_i32_0 = arith.constant 0 : i32
    %c0_i32_1 = arith.constant 0 : i32
    return %c0_i32, %c0_i32_0 : i32, i32
  }
  func.func @transform_8(%arg0: i32, %arg1: memref<8x2xi32, #tpu.memory_space<smem>>, %arg2: memref<5x2xi32, #tpu.memory_space<smem>>) -> (i32, i32) {
    %c0_i32 = arith.constant 0 : i32
    %c0_i32_0 = arith.constant 0 : i32
    %c0_i32_1 = arith.constant 0 : i32
    return %c0_i32, %c0_i32_0 : i32, i32
  }
  func.func @transform_9(%arg0: i32, %arg1: memref<8x2xi32, #tpu.memory_space<smem>>, %arg2: memref<5x2xi32, #tpu.memory_space<smem>>) -> (i32, i32) {
    %c0_i32 = arith.constant 0 : i32
    %c0_i32_0 = arith.constant 0 : i32
    %c0_i32_1 = arith.constant 0 : i32
    return %c0_i32, %c0_i32_0 : i32, i32
  }
  func.func @transform_10(%arg0: i32, %arg1: memref<8x2xi32, #tpu.memory_space<smem>>, %arg2: memref<5x2xi32, #tpu.memory_space<smem>>) -> (i32, i32) {
    %c0_i32 = arith.constant 0 : i32
    %c0_i32_0 = arith.constant 0 : i32
    %c0_i32_1 = arith.constant 0 : i32
    return %c0_i32, %c0_i32_0 : i32, i32
  }
  func.func @transform_11(%arg0: i32, %arg1: memref<8x2xi32, #tpu.memory_space<smem>>, %arg2: memref<5x2xi32, #tpu.memory_space<smem>>) -> (i32, i32) {
    %c0_i32 = arith.constant 0 : i32
    %c0_i32_0 = arith.constant 0 : i32
    %c0_i32_1 = arith.constant 0 : i32
    return %c0_i32, %c0_i32_0 : i32, i32
  }
  func.func @transform_12(%arg0: i32, %arg1: memref<8x2xi32, #tpu.memory_space<smem>>, %arg2: memref<5x2xi32, #tpu.memory_space<smem>>) -> (i32, i32) {
    %c0_i32 = arith.constant 0 : i32
    %c0_i32_0 = arith.constant 0 : i32
    %c0_i32_1 = arith.constant 0 : i32
    return %c0_i32, %c0_i32_0 : i32, i32
  }
  func.func @transform_13(%arg0: i32, %arg1: memref<8x2xi32, #tpu.memory_space<smem>>, %arg2: memref<5x2xi32, #tpu.memory_space<smem>>) -> (i32, i32, i32) {
    %c0_i32 = arith.constant 0 : i32
    %c0_i32_0 = arith.constant 0 : i32
    %c0_i32_1 = arith.constant 0 : i32
    %c0_i32_2 = arith.constant 0 : i32
    return %c0_i32, %c0_i32_0, %c0_i32_1 : i32, i32, i32
  }
}

</mosaic_0001>

<llo_original>
// kernel: encoder_decoder_forward.1
$region0: #{encoder_decoder_forward.1}
  #allocation0 [shape = 'u32[]', space=smem, size = 0x4, offset = 0x4, fixed_abs, tag = 'smem constant byte address 0x4 - core index']
  #allocation1 [shape = 'u32[144,128]{1,0:T(1,128)}', space=vmem, size = 0x12000, scoped, tag = 'internal scratch']
  #allocation2 [shape = 's32[1]{0}', space=sflag, size = 0x4, scoped, tag = 'scoped memory for encoder_decoder_forward.1']
  #allocation3 [shape = 'u8[4096]{0}', space=smem, size = 0x1000, scoped, tag = 'prefetched SMEM operand 0']
  #allocation4 [shape = 'u8[4096]{0}', space=smem, size = 0x1000, scoped, tag = 'prefetched SMEM operand 1']
  %s0 = inlined_call_operand.vmem [shape: s32[8,2], index: 0, kind: input, shape index: {}]
  %s1 = inlined_call_operand.vmem [shape: s32[5,2], index: 1, kind: input, shape index: {}]
  %s2 = inlined_call_operand.vmem [shape: s32[2,1], index: 2, kind: input, shape index: {}]
  %s3 = inlined_call_operand.hbm [shape: f32[128,128], index: 3, kind: input, shape index: {}]
  %s4 = inlined_call_operand.hbm [shape: f32[128,384], index: 4, kind: input, shape index: {}]
  %s5 = inlined_call_operand.hbm [shape: f32[128,384], index: 5, kind: input, shape index: {}]
  %s6 = inlined_call_operand.vmem [shape: f32[1,384], index: 6, kind: input, shape index: {}]
  %s7 = inlined_call_operand.vmem [shape: f32[1,384], index: 7, kind: input, shape index: {}]
  %s8 = inlined_call_operand.hbm [shape: f32[128,128], index: 8, kind: input, shape index: {}]
  %s9 = inlined_call_operand.hbm [shape: f32[128,384], index: 9, kind: input, shape index: {}]
  %s10 = inlined_call_operand.hbm [shape: f32[128,384], index: 10, kind: input, shape index: {}]
  %s11 = inlined_call_operand.vmem [shape: f32[1,384], index: 11, kind: input, shape index: {}]
  %s12 = inlined_call_operand.vmem [shape: f32[1,384], index: 12, kind: input, shape index: {}]
  %s13 = inlined_call_operand.hbm [shape: f32[128,128], index: 13, kind: input, shape index: {}]
  %s14 = inlined_call_operand.vmem [shape: f32[1,128], index: 14, kind: input, shape index: {}]
  %s15 = inlined_call_operand.hbm [shape: f32[5,2,128], index: 15, kind: output, shape index: {}]
  %s16 = sld [smem:[#allocation0]]
  $region90: #{encoder_decoder_forward.1} parent=0
    _
  %s18 = ssub.s32 1, %s16
  %s19 = scalar_select 0, %s18, %s16
  %s20 = sshll.u32 %s0, 4
  %s21 = int_to_ptr.vmem [resolvable:$true] %s20
  %23 = dma.vmem_to_smem %s21, 128, [#allocation3], [#allocation2]
  %s24 = sshll.u32 %s1, 4
  %s25 = int_to_ptr.vmem [resolvable:$true] %s24
  %27 = dma.vmem_to_smem %s25, 128, [#allocation4], [#allocation2]
  %28 = dma.done [#allocation2], 256
  %29 = sfence
  $region1: #{encoder_decoder_forward.1} parent=0
    #allocation5 [shape = 'u8[65536]{0}', space=vmem, size = 0x10000, scoped, tag = 'input window, operand 3, single buffered']
    #allocation6 [shape = 's32[1]{0}', space=sflag, size = 0x4, scoped, tag = 'scoped memory for encoder_decoder_forward.1']
    #allocation7 [shape = 's32[1]{0}', space=sflag, size = 0x4, scoped, tag = 'scoped memory for encoder_decoder_forward.1']
    #allocation8 [shape = 'u8[196608]{0}', space=vmem, size = 0x30000, scoped, tag = 'input window, operand 4, single buffered']
    #allocation9 [shape = 's32[1]{0}', space=sflag, size = 0x4, scoped, tag = 'scoped memory for encoder_decoder_forward.1']
    #allocation10 [shape = 'u8[196608]{0}', space=vmem, size = 0x30000, scoped, tag = 'input window, operand 5, single buffered']
    #allocation11 [shape = 'u8[65536]{0}', space=vmem, size = 0x10000, scoped, tag = 'input window, operand 8, single buffered']
    #allocation12 [shape = 's32[1]{0}', space=sflag, size = 0x4, scoped, tag = 'scoped memory for encoder_decoder_forward.1']
    #allocation13 [shape = 'u8[196608]{0}', space=vmem, size = 0x30000, scoped, tag = 'input window, operand 9, single buffered']
    #allocation14 [shape = 'u8[196608]{0}', space=vmem, size = 0x30000, scoped, tag = 'input window, operand 10, single buffered']
    #allocation15 [shape = 's32[1]{0}', space=sflag, size = 0x4, scoped, tag = 'scoped memory for encoder_decoder_forward.1']
    #allocation16 [shape = 'u8[65536]{0}', space=vmem, size = 0x10000, scoped, tag = 'input window, operand 13, single buffered']
    #allocation17 [shape = 'u8[5120]{0}', space=vmem, size = 0x1400, scoped, tag = 'output window, operand 0, single buffered']
    %30 = vsyncpa [#allocation6], 0
    %31 = vsyncpa [#allocation9], 0
    %32 = vsyncpa [#allocation12], 0
    %33 = vsyncpa [#allocation15], 0
    %34 = vsyncpa [#allocation7], 0
    // Predicated region
    $region2: #{encoder_decoder_forward.1} parent=1 // pred_check
      _
    $region3: #{encoder_decoder_forward.1} parent=1 // pred_check_branch
      %36 = sbr.rel (0) target = $region5
    $region4: #{encoder_decoder_forward.1} parent=1 // pred_region
      _
    $region5: #{encoder_decoder_forward.1} parent=1 // pred_fallthru
      _
    // Predicated region
    $region6: #{encoder_decoder_forward.1} parent=1 // pred_check
      _
    $region7: #{encoder_decoder_forward.1} parent=1 // pred_check_branch
      %38 = sbr.rel (0) target = $region9
    $region8: #{encoder_decoder_forward.1} parent=1 // pred_region
      %s40 = ssub.s32 2048, 2048
      %41 = vsyncadd [#allocation6], %s40
      %s42 = sshll.u32 [#allocation5], 4
      %s43 = int_to_ptr.vmem [resolvable:$true] %s42
      %48 = dma.hbm_to_vmem [thread:$0]  %s3, 2048, %s43, [#allocation6], 128, 128, 8
    $region9: #{encoder_decoder_forward.1} parent=1 // pred_fallthru
      _
    // Predicated region
    $region10: #{encoder_decoder_forward.1} parent=1 // pred_check
      _
    $region11: #{encoder_decoder_forward.1} parent=1 // pred_check_branch
      %50 = sbr.rel (0) target = $region13
    $region12: #{encoder_decoder_forward.1} parent=1 // pred_region
      %s52 = ssub.s32 6144, 6144
      %53 = vsyncadd [#allocation9], %s52
      %s54 = sshll.u32 [#allocation8], 4
      %s55 = int_to_ptr.vmem [resolvable:$true] %s54
      %60 = dma.hbm_to_vmem [thread:$0]  %s4, 6144, %s55, [#allocation9], 384, 384, 24
    $region13: #{encoder_decoder_forward.1} parent=1 // pred_fallthru
      _
    // Predicated region
    $region14: #{encoder_decoder_forward.1} parent=1 // pred_check
      _
    $region15: #{encoder_decoder_forward.1} parent=1 // pred_check_branch
      %62 = sbr.rel (0) target = $region17
    $region16: #{encoder_decoder_forward.1} parent=1 // pred_region
      %s64 = ssub.s32 6144, 6144
      %65 = vsyncadd [#allocation9], %s64
      %s66 = sshll.u32 [#allocation10], 4
      %s67 = int_to_ptr.vmem [resolvable:$true] %s66
      %72 = dma.hbm_to_vmem [thread:$0]  %s5, 6144, %s67, [#allocation9], 384, 384, 24
    $region17: #{encoder_decoder_forward.1} parent=1 // pred_fallthru
      _
    // Predicated region
    $region18: #{encoder_decoder_forward.1} parent=1 // pred_check
      _
    $region19: #{encoder_decoder_forward.1} parent=1 // pred_check_branch
      %74 = sbr.rel (0) target = $region21
    $region20: #{encoder_decoder_forward.1} parent=1 // pred_region
      _
    $region21: #{encoder_decoder_forward.1} parent=1 // pred_fallthru
      _
    // Predicated region
    $region22: #{encoder_decoder_forward.1} parent=1 // pred_check
      _
    $region23: #{encoder_decoder_forward.1} parent=1 // pred_check_branch
      %76 = sbr.rel (0) target = $region25
    $region24: #{encoder_decoder_forward.1} parent=1 // pred_region
      _
    $region25: #{encoder_decoder_forward.1} parent=1 // pred_fallthru
      _
    // Predicated region
    $region26: #{encoder_decoder_forward.1} parent=1 // pred_check
      _
    $region27: #{encoder_decoder_forward.1} parent=1 // pred_check_branch
      %78 = sbr.rel (0) target = $region29
    $region28: #{encoder_decoder_forward.1} parent=1 // pred_region
      %s80 = ssub.s32 2048, 2048
      %81 = vsyncadd [#allocation12], %s80
      %s82 = sshll.u32 [#allocation11], 4
      %s83 = int_to_ptr.vmem [resolvable:$true] %s82
      %88 = dma.hbm_to_vmem [thread:$0]  %s8, 2048, %s83, [#allocation12], 128, 128, 8
    $region29: #{encoder_decoder_forward.1} parent=1 // pred_fallthru
      _
    // Predicated region
    $region30: #{encoder_decoder_forward.1} parent=1 // pred_check
      _
    $region31: #{encoder_decoder_forward.1} parent=1 // pred_check_branch
      %90 = sbr.rel (0) target = $region33
    $region32: #{encoder_decoder_forward.1} parent=1 // pred_region
      %s92 = ssub.s32 6144, 6144
      %93 = vsyncadd [#allocation12], %s92
      %s94 = sshll.u32 [#allocation13], 4
      %s95 = int_to_ptr.vmem [resolvable:$true] %s94
      %100 = dma.hbm_to_vmem [thread:$0]  %s9, 6144, %s95, [#allocation12], 384, 384, 24
    $region33: #{encoder_decoder_forward.1} parent=1 // pred_fallthru
      _
    // Predicated region
    $region34: #{encoder_decoder_forward.1} parent=1 // pred_check
      _
    $region35: #{encoder_decoder_forward.1} parent=1 // pred_check_branch
      %102 = sbr.rel (0) target = $region37
    $region36: #{encoder_decoder_forward.1} parent=1 // pred_region
      %s104 = ssub.s32 6144, 6144
      %105 = vsyncadd [#allocation15], %s104
      %s106 = sshll.u32 [#allocation14], 4
      %s107 = int_to_ptr.vmem [resolvable:$true] %s106
      %112 = dma.hbm_to_vmem [thread:$0]  %s10, 6144, %s107, [#allocation15], 384, 384, 24
    $region37: #{encoder_decoder_forward.1} parent=1 // pred_fallthru
      _
    // Predicated region
    $region38: #{encoder_decoder_forward.1} parent=1 // pred_check
      _
    $region39: #{encoder_decoder_forward.1} parent=1 // pred_check_branch
      %114 = sbr.rel (0) target = $region41
    $region40: #{encoder_decoder_forward.1} parent=1 // pred_region
      _
    $region41: #{encoder_decoder_forward.1} parent=1 // pred_fallthru
      _
    // Predicated region
    $region42: #{encoder_decoder_forward.1} parent=1 // pred_check
      _
    $region43: #{encoder_decoder_forward.1} parent=1 // pred_check_branch
      %116 = sbr.rel (0) target = $region45
    $region44: #{encoder_decoder_forward.1} parent=1 // pred_region
      _
    $region45: #{encoder_decoder_forward.1} parent=1 // pred_fallthru
      _
    // Predicated region
    $region46: #{encoder_decoder_forward.1} parent=1 // pred_check
      _
    $region47: #{encoder_decoder_forward.1} parent=1 // pred_check_branch
      %118 = sbr.rel (0) target = $region49
    $region48: #{encoder_decoder_forward.1} parent=1 // pred_region
      %s120 = ssub.s32 2048, 2048
      %121 = vsyncadd [#allocation15], %s120
      %s122 = sshll.u32 [#allocation16], 4
      %s123 = int_to_ptr.vmem [resolvable:$true] %s122
      %128 = dma.hbm_to_vmem [thread:$0]  %s13, 2048, %s123, [#allocation15], 128, 128, 8
    $region49: #{encoder_decoder_forward.1} parent=1 // pred_fallthru
      _
    // Predicated region
    $region50: #{encoder_decoder_forward.1} parent=1 // pred_check
      _
    $region51: #{encoder_decoder_forward.1} parent=1 // pred_check_branch
      %130 = sbr.rel (0) target = $region53
    $region52: #{encoder_decoder_forward.1} parent=1 // pred_region
      _
    $region53: #{encoder_decoder_forward.1} parent=1 // pred_fallthru
      _
    // Predicated region
    $region54: #{encoder_decoder_forward.1} parent=1 // pred_check
      _
    $region55: #{encoder_decoder_forward.1} parent=1 // pred_check_branch
      %132 = sbr.rel (0) target = $region57
    $region56: #{encoder_decoder_forward.1} parent=1 // pred_region
      %133 = dma.done [#allocation6], 2048
    $region57: #{encoder_decoder_forward.1} parent=1 // pred_fallthru
      _
    // Predicated region
    $region58: #{encoder_decoder_forward.1} parent=1 // pred_check
      _
    $region59: #{encoder_decoder_forward.1} parent=1 // pred_check_branch
      %135 = sbr.rel (0) target = $region61
    $region60: #{encoder_decoder_forward.1} parent=1 // pred_region
      %136 = dma.done [#allocation9], 6144
    $region61: #{encoder_decoder_forward.1} parent=1 // pred_fallthru
      _
    // Predicated region
    $region62: #{encoder_decoder_forward.1} parent=1 // pred_check
      _
    $region63: #{encoder_decoder_forward.1} parent=1 // pred_check_branch
      %138 = sbr.rel (0) target = $region65
    $region64: #{encoder_decoder_forward.1} parent=1 // pred_region
      %139 = dma.done [#allocation9], 6144
    $region65: #{encoder_decoder_forward.1} parent=1 // pred_fallthru
      _
    // Predicated region
    $region66: #{encoder_decoder_forward.1} parent=1 // pred_check
      _
    $region67: #{encoder_decoder_forward.1} parent=1 // pred_check_branch
      %141 = sbr.rel (0) target = $region69
    $region68: #{encoder_decoder_forward.1} parent=1 // pred_region
      %142 = dma.done [#allocation12], 2048
    $region69: #{encoder_decoder_forward.1} parent=1 // pred_fallthru
      _
    // Predicated region
    $region70: #{encoder_decoder_forward.1} parent=1 // pred_check
      _
    $region71: #{encoder_decoder_forward.1} parent=1 // pred_check_branch
      %144 = sbr.rel (0) target = $region73
    $region72: #{encoder_decoder_forward.1} parent=1 // pred_region
      %145 = dma.done [#allocation12], 6144
    $region73: #{encoder_decoder_forward.1} parent=1 // pred_fallthru
      _
    // Predicated region
    $region74: #{encoder_decoder_forward.1} parent=1 // pred_check
      _
    $region75: #{encoder_decoder_forward.1} parent=1 // pred_check_branch
      %147 = sbr.rel (0) target = $region77
    $region76: #{encoder_decoder_forward.1} parent=1 // pred_region
      %148 = dma.done [#allocation15], 6144
    $region77: #{encoder_decoder_forward.1} parent=1 // pred_fallthru
      _
    // Predicated region
    $region78: #{encoder_decoder_forward.1} parent=1 // pred_check
      _
    $region79: #{encoder_decoder_forward.1} parent=1 // pred_check_branch
      %150 = sbr.rel (0) target = $region81
    $region80: #{encoder_decoder_forward.1} parent=1 // pred_region
      %151 = dma.done [#allocation15], 2048
    $region81: #{encoder_decoder_forward.1} parent=1 // pred_fallthru
      _
    %s152 = sld [smem:[#allocation3]]
    %s153 = scalar_lea.vmem [#allocation5], %s152
    %v154 = vld [vmem:[%s153] sm:$0x1]
    %s155 = sld [smem:[#allocation3 + $0x1]]
    %s156 = scalar_lea.vmem [#allocation5], %s155
    %v157 = vld [vmem:[%s156] sm:$0x1]
    %v159 = vrot.slane %v157, 7
    %vm161 = vcmask 1040384
    %v162 = vsel %vm161, %v154, %v159
    %v163 = vld [vmem:[#allocation8] sm:$0xff]
    %v164 = vld [vmem:[#allocation8 + $0x8] sm:$0xff]
    %v165 = vld [vmem:[#allocation8 + $0x10] sm:$0xff]
    %v166 = vld [vmem:[#allocation8 + $0x18] sm:$0xff]
    %v167 = vld [vmem:[#allocation8 + $0x20] sm:$0xff]
    %v168 = vld [vmem:[#allocation8 + $0x28] sm:$0xff]
    %v169 = vld [vmem:[#allocation8 + $0x30] sm:$0xff]
    %v170 = vld [vmem:[#allocation8 + $0x38] sm:$0xff]
    %v171 = vld [vmem:[#allocation8 + $0x40] sm:$0xff]
    %v172 = vld [vmem:[#allocation8 + $0x48] sm:$0xff]
    %v173 = vld [vmem:[#allocation8 + $0x50] sm:$0xff]
    %v174 = vld [vmem:[#allocation8 + $0x58] sm:$0xff]
    %v175 = vld [vmem:[#allocation8 + $0x60] sm:$0xff]
    %v176 = vld [vmem:[#allocation8 + $0x68] sm:$0xff]
    %v177 = vld [vmem:[#allocation8 + $0x70] sm:$0xff]
    %v178 = vld [vmem:[#allocation8 + $0x78] sm:$0xff]
    %v179 = vld [vmem:[#allocation8 + $0x80] sm:$0xff]
    %v180 = vld [vmem:[#allocation8 + $0x88] sm:$0xff]
    %v181 = vld [vmem:[#allocation8 + $0x90] sm:$0xff]
    %v182 = vld [vmem:[#allocation8 + $0x98] sm:$0xff]
    %v183 = vld [vmem:[#allocation8 + $0xa0] sm:$0xff]
    %v184 = vld [vmem:[#allocation8 + $0xa8] sm:$0xff]
    %v185 = vld [vmem:[#allocation8 + $0xb0] sm:$0xff]
    %v186 = vld [vmem:[#allocation8 + $0xb8] sm:$0xff]
    %v187 = vld [vmem:[#allocation8 + $0xc0] sm:$0xff]
    %v188 = vld [vmem:[#allocation8 + $0xc8] sm:$0xff]
    %v189 = vld [vmem:[#allocation8 + $0xd0] sm:$0xff]
    %v190 = vld [vmem:[#allocation8 + $0xd8] sm:$0xff]
    %v191 = vld [vmem:[#allocation8 + $0xe0] sm:$0xff]
    %v192 = vld [vmem:[#allocation8 + $0xe8] sm:$0xff]
    %v193 = vld [vmem:[#allocation8 + $0xf0] sm:$0xff]
    %v194 = vld [vmem:[#allocation8 + $0xf8] sm:$0xff]
    %v195 = vld [vmem:[#allocation8 + $0x100] sm:$0xff]
    %v196 = vld [vmem:[#allocation8 + $0x108] sm:$0xff]
    %v197 = vld [vmem:[#allocation8 + $0x110] sm:$0xff]
    %v198 = vld [vmem:[#allocation8 + $0x118] sm:$0xff]
    %v199 = vld [vmem:[#allocation8 + $0x120] sm:$0xff]
    %v200 = vld [vmem:[#allocation8 + $0x128] sm:$0xff]
    %v201 = vld [vmem:[#allocation8 + $0x130] sm:$0xff]
    %v202 = vld [vmem:[#allocation8 + $0x138] sm:$0xff]
    %v203 = vld [vmem:[#allocation8 + $0x140] sm:$0xff]
    %v204 = vld [vmem:[#allocation8 + $0x148] sm:$0xff]
    %v205 = vld [vmem:[#allocation8 + $0x150] sm:$0xff]
    %v206 = vld [vmem:[#allocation8 + $0x158] sm:$0xff]
    %v207 = vld [vmem:[#allocation8 + $0x160] sm:$0xff]
    %v208 = vld [vmem:[#allocation8 + $0x168] sm:$0xff]
    %v209 = vld [vmem:[#allocation8 + $0x170] sm:$0xff]
    %v210 = vld [vmem:[#allocation8 + $0x178] sm:$0xff]
    %v211 = vld [vmem:[%s6] sm:$0x7]
    %v213 = vlaneseq
    %v214 = vshrl.u32 %v213, 7
    %v215 = vsub.s32 0, %v214
    %v216 = vrot.slane %v211, %v215
    %v217 = vlaneseq
    %v218 = vshrl.u32 %v217, 7
    %v219 = vsub.s32 1, %v218
    %v220 = vrot.slane %v211, %v219
    %v221 = vlaneseq
    %v222 = vshrl.u32 %v221, 7
    %v223 = vsub.s32 2, %v222
    %v224 = vrot.slane %v211, %v223
    %228 = vmatprep.subr.mxu0 %v164
    %229 = vmatpush1.msra.mxu0 %v163
    %230 = vmatprep.subr.mxu0 %v167
    %231 = vmatpush1.msra.mxu0 %v166
    %232 = vmatprep.subr.mxu0 %v170
    %233 = vmatpush1.msra.mxu0 %v169
    %234 = vmatprep.subr.mxu0 %v173
    %235 = vmatpush1.msra.mxu0 %v172
    %236 = vmatprep.subr.mxu0 %v176
    %237 = vmatpush1.msra.mxu0 %v175
    %238 = vmatprep.subr.mxu0 %v179
    %239 = vmatpush1.msra.mxu0 %v178
    %240 = vmatprep.subr.mxu0 %v182
    %241 = vmatpush1.msra.mxu0 %v181
    %242 = vmatprep.subr.mxu0 %v185
    %243 = vmatpush1.msra.mxu0 %v184
    %244 = vmatprep.subr.mxu0 %v188
    %245 = vmatpush1.msra.mxu0 %v187
    %246 = vmatprep.subr.mxu0 %v191
    %247 = vmatpush1.msra.mxu0 %v190
    %248 = vmatprep.subr.mxu0 %v194
    %249 = vmatpush1.msra.mxu0 %v193
    %250 = vmatprep.subr.mxu0 %v197
    %251 = vmatpush1.msra.mxu0 %v196
    %252 = vmatprep.subr.mxu0 %v200
    %253 = vmatpush1.msra.mxu0 %v199
    %254 = vmatprep.subr.mxu0 %v203
    %255 = vmatpush1.msra.mxu0 %v202
    %256 = vmatprep.subr.mxu0 %v206
    %257 = vmatpush1.msra.mxu0 %v205
    %258 = vmatprep.subr.mxu0 %v209
    %259 = vmatpush1.msra.mxu0 %v208
    %260 = vmatprep.subr.mxu0 0.0
    %261 = vmatpush1.msra.mxu0 0.0
    %262 = vmatprep.subr.mxu0 0.0
    %263 = vmatpush1.msra.mxu0 0.0
    %264 = vmatprep.subr.mxu0 0.0
    %265 = vmatpush1.msra.mxu0 0.0
    %266 = vmatprep.subr.mxu0 0.0
    %267 = vmatpush1.msra.mxu0 0.0
    %268 = vmatprep.subr.mxu0 0.0
    %269 = vmatpush1.msra.mxu0 0.0
    %270 = vmatprep.subr.mxu0 0.0
    %271 = vmatpush1.msra.mxu0 0.0
    %272 = vmatprep.subr.mxu0 0.0
    %273 = vmatpush1.msra.mxu0 0.0
    %274 = vmatprep.subr.mxu0 0.0
    %275 = vmatpush1.msra.mxu0 0.0
    %276 = vmatprep.subr.mxu0 0.0
    %277 = vmatpush1.msra.mxu0 0.0
    %278 = vmatprep.subr.mxu0 0.0
    %279 = vmatpush1.msra.mxu0 0.0
    %280 = vmatprep.subr.mxu0 0.0
    %281 = vmatpush1.msra.mxu0 0.0
    %282 = vmatprep.subr.mxu0 0.0
    %283 = vmatpush1.msra.mxu0 0.0
    %284 = vmatprep.subr.mxu0 0.0
    %285 = vmatpush1.msra.mxu0 0.0
    %286 = vmatprep.subr.mxu0 0.0
    %287 = vmatpush1.msra.mxu0 0.0
    %288 = vmatprep.subr.mxu0 0.0
    %289 = vmatpush1.msra.mxu0 0.0
    %290 = vmatprep.subr.mxu0 0.0
    %291 = vmatpush1.msra.mxu0 0.0
    %292 = vmatprep.mubr.f32.mxu0 0.0
    %293 = vmatmul.mubr.f32.gmra.mrb[0].mxu0 %v162
    %v294 = vpop.f32.mrb[0].mxu0
    %v295 = vadd.f32 %v216, %v294
    %v296 = vpop.f32.mrb[0].mxu0
    %v297 = vadd.f32 %v220, %v296
    %298 = vdwg.mxu0
    %299 = vmatprep.subr.mxu0 0.0
    %300 = vmatpush1.msra.mxu0 %v165
    %301 = vmatprep.subr.mxu0 0.0
    %302 = vmatpush1.msra.mxu0 %v168
    %303 = vmatprep.subr.mxu0 0.0
    %304 = vmatpush1.msra.mxu0 %v171
    %305 = vmatprep.subr.mxu0 0.0
    %306 = vmatpush1.msra.mxu0 %v174
    %307 = vmatprep.subr.mxu0 0.0
    %308 = vmatpush1.msra.mxu0 %v177
    %309 = vmatprep.subr.mxu0 0.0
    %310 = vmatpush1.msra.mxu0 %v180
    %311 = vmatprep.subr.mxu0 0.0
    %312 = vmatpush1.msra.mxu0 %v183
    %313 = vmatprep.subr.mxu0 0.0
    %314 = vmatpush1.msra.mxu0 %v186
    %315 = vmatprep.subr.mxu0 0.0
    %316 = vmatpush1.msra.mxu0 %v189
    %317 = vmatprep.subr.mxu0 0.0
    %318 = vmatpush1.msra.mxu0 %v192
    %319 = vmatprep.subr.mxu0 0.0
    %320 = vmatpush1.msra.mxu0 %v195
    %321 = vmatprep.subr.mxu0 0.0
    %322 = vmatpush1.msra.mxu0 %v198
    %323 = vmatprep.subr.mxu0 0.0
    %324 = vmatpush1.msra.mxu0 %v201
    %325 = vmatprep.subr.mxu0 0.0
    %326 = vmatpush1.msra.mxu0 %v204
    %327 = vmatprep.subr.mxu0 0.0
    %328 = vmatpush1.msra.mxu0 %v207
    %329 = vmatprep.subr.mxu0 0.0
    %330 = vmatpush1.msra.mxu0 %v210
    %331 = vmatprep.subr.mxu0 0.0
    %332 = vmatpush1.msra.mxu0 0.0
    %333 = vmatprep.subr.mxu0 0.0
    %334 = vmatpush1.msra.mxu0 0.0
    %335 = vmatprep.subr.mxu0 0.0
    %336 = vmatpush1.msra.mxu0 0.0
    %337 = vmatprep.subr.mxu0 0.0
    %338 = vmatpush1.msra.mxu0 0.0
    %339 = vmatprep.subr.mxu0 0.0
    %340 = vmatpush1.msra.mxu0 0.0
    %341 = vmatprep.subr.mxu0 0.0
    %342 = vmatpush1.msra.mxu0 0.0
    %343 = vmatprep.subr.mxu0 0.0
    %344 = vmatpush1.msra.mxu0 0.0
    %345 = vmatprep.subr.mxu0 0.0
    %346 = vmatpush1.msra.mxu0 0.0
    %347 = vmatprep.subr.mxu0 0.0
    %348 = vmatpush1.msra.mxu0 0.0
    %349 = vmatprep.subr.mxu0 0.0
    %350 = vmatpush1.msra.mxu0 0.0
    %351 = vmatprep.subr.mxu0 0.0
    %352 = vmatpush1.msra.mxu0 0.0
    %353 = vmatprep.subr.mxu0 0.0
    %354 = vmatpush1.msra.mxu0 0.0
    %355 = vmatprep.subr.mxu0 0.0
    %356 = vmatpush1.msra.mxu0 0.0
    %357 = vmatprep.subr.mxu0 0.0
    %358 = vmatpush1.msra.mxu0 0.0
    %359 = vmatprep.subr.mxu0 0.0
    %360 = vmatpush1.msra.mxu0 0.0
    %361 = vmatprep.subr.mxu0 0.0
    %362 = vmatpush1.msra.mxu0 0.0
    %363 = vmatprep.mubr.f32.mxu0 0.0
    %364 = vmatmul.mubr.f32.gmra.mrb[0].mxu0 %v162
    %v365 = vpop.f32.mrb[0].mxu0
    %v366 = vadd.f32 %v224, %v365
    %v367 = vpop.f32.mrb[0].mxu0
    %368 = vdwg.mxu0
    %v369 = vld [vmem:[#allocation10] sm:$0xff]
    %v370 = vld [vmem:[#allocation10 + $0x8] sm:$0xff]
    %v371 = vld [vmem:[#allocation10 + $0x10] sm:$0xff]
    %v372 = vld [vmem:[#allocation10 + $0x18] sm:$0xff]
    %v373 = vld [vmem:[#allocation10 + $0x20] sm:$0xff]
    %v374 = vld [vmem:[#allocation10 + $0x28] sm:$0xff]
    %v375 = vld [vmem:[#allocation10 + $0x30] sm:$0xff]
    %v376 = vld [vmem:[#allocation10 + $0x38] sm:$0xff]
    %v377 = vld [vmem:[#allocation10 + $0x40] sm:$0xff]
    %v378 = vld [vmem:[#allocation10 + $0x48] sm:$0xff]
    %v379 = vld [vmem:[#allocation10 + $0x50] sm:$0xff]
    %v380 = vld [vmem:[#allocation10 + $0x58] sm:$0xff]
    %v381 = vld [vmem:[#allocation10 + $0x60] sm:$0xff]
    %v382 = vld [vmem:[#allocation10 + $0x68] sm:$0xff]
    %v383 = vld [vmem:[#allocation10 + $0x70] sm:$0xff]
    %v384 = vld [vmem:[#allocation10 + $0x78] sm:$0xff]
    %v385 = vld [vmem:[#allocation10 + $0x80] sm:$0xff]
    %v386 = vld [vmem:[#allocation10 + $0x88] sm:$0xff]
    %v387 = vld [vmem:[#allocation10 + $0x90] sm:$0xff]
    %v388 = vld [vmem:[#allocation10 + $0x98] sm:$0xff]
    %v389 = vld [vmem:[#allocation10 + $0xa0] sm:$0xff]
    %v390 = vld [vmem:[#allocation10 + $0xa8] sm:$0xff]
    %v391 = vld [vmem:[#allocation10 + $0xb0] sm:$0xff]
    %v392 = vld [vmem:[#allocation10 + $0xb8] sm:$0xff]
    %v393 = vld [vmem:[#allocation10 + $0xc0] sm:$0xff]
    %v394 = vld [vmem:[#allocation10 + $0xc8] sm:$0xff]
    %v395 = vld [vmem:[#allocation10 + $0xd0] sm:$0xff]
    %v396 = vld [vmem:[#allocation10 + $0xd8] sm:$0xff]
    %v397 = vld [vmem:[#allocation10 + $0xe0] sm:$0xff]
    %v398 = vld [vmem:[#allocation10 + $0xe8] sm:$0xff]
    %v399 = vld [vmem:[#allocation10 + $0xf0] sm:$0xff]
    %v400 = vld [vmem:[#allocation10 + $0xf8] sm:$0xff]
    %v401 = vld [vmem:[#allocation10 + $0x100] sm:$0xff]
    %v402 = vld [vmem:[#allocation10 + $0x108] sm:$0xff]
    %v403 = vld [vmem:[#allocation10 + $0x110] sm:$0xff]
    %v404 = vld [vmem:[#allocation10 + $0x118] sm:$0xff]
    %v405 = vld [vmem:[#allocation10 + $0x120] sm:$0xff]
    %v406 = vld [vmem:[#allocation10 + $0x128] sm:$0xff]
    %v407 = vld [vmem:[#allocation10 + $0x130] sm:$0xff]
    %v408 = vld [vmem:[#allocation10 + $0x138] sm:$0xff]
    %v409 = vld [vmem:[#allocation10 + $0x140] sm:$0xff]
    %v410 = vld [vmem:[#allocation10 + $0x148] sm:$0xff]
    %v411 = vld [vmem:[#allocation10 + $0x150] sm:$0xff]
    %v412 = vld [vmem:[#allocation10 + $0x158] sm:$0xff]
    %v413 = vld [vmem:[#allocation10 + $0x160] sm:$0xff]
    %v414 = vld [vmem:[#allocation10 + $0x168] sm:$0xff]
    %v415 = vld [vmem:[#allocation10 + $0x170] sm:$0xff]
    %v416 = vld [vmem:[#allocation10 + $0x178] sm:$0xff]
    %v417 = vld [vmem:[%s7] sm:$0x7]
    %v419 = vlaneseq
    %v420 = vshrl.u32 %v419, 7
    %v421 = vsub.s32 0, %v420
    %v422 = vrot.slane %v417, %v421
    %v423 = vlaneseq
    %v424 = vshrl.u32 %v423, 7
    %v425 = vsub.s32 1, %v424
    %v426 = vrot.slane %v417, %v425
    %v427 = vlaneseq
    %v428 = vshrl.u32 %v427, 7
    %v429 = vsub.s32 2, %v428
    %v430 = vrot.slane %v417, %v429
    %434 = vmatprep.subr.mxu0 %v370
    %435 = vmatpush1.msra.mxu0 %v369
    %436 = vmatprep.subr.mxu0 %v373
    %437 = vmatpush1.msra.mxu0 %v372
    %438 = vmatprep.subr.mxu0 %v376
    %439 = vmatpush1.msra.mxu0 %v375
    %440 = vmatprep.subr.mxu0 %v379
    %441 = vmatpush1.msra.mxu0 %v378
    %442 = vmatprep.subr.mxu0 %v382
    %443 = vmatpush1.msra.mxu0 %v381
    %444 = vmatprep.subr.mxu0 %v385
    %445 = vmatpush1.msra.mxu0 %v384
    %446 = vmatprep.subr.mxu0 %v388
    %447 = vmatpush1.msra.mxu0 %v387
    %448 = vmatprep.subr.mxu0 %v391
    %449 = vmatpush1.msra.mxu0 %v390
    %450 = vmatprep.subr.mxu0 %v394
    %451 = vmatpush1.msra.mxu0 %v393
    %452 = vmatprep.subr.mxu0 %v397
    %453 = vmatpush1.msra.mxu0 %v396
    %454 = vmatprep.subr.mxu0 %v400
    %455 = vmatpush1.msra.mxu0 %v399
    %456 = vmatprep.subr.mxu0 %v403
    %457 = vmatpush1.msra.mxu0 %v402
    %458 = vmatprep.subr.mxu0 %v406
    %459 = vmatpush1.msra.mxu0 %v405
    %460 = vmatprep.subr.mxu0 %v409
    %461 = vmatpush1.msra.mxu0 %v408
    %462 = vmatprep.subr.mxu0 %v412
    %463 = vmatpush1.msra.mxu0 %v411
    %464 = vmatprep.subr.mxu0 %v415
    %465 = vmatpush1.msra.mxu0 %v414
    %466 = vmatprep.subr.mxu0 0.0
    %467 = vmatpush1.msra.mxu0 0.0
    %468 = vmatprep.subr.mxu0 0.0
    %469 = vmatpush1.msra.mxu0 0.0
    %470 = vmatprep.subr.mxu0 0.0
    %471 = vmatpush1.msra.mxu0 0.0
    %472 = vmatprep.subr.mxu0 0.0
    %473 = vmatpush1.msra.mxu0 0.0
    %474 = vmatprep.subr.mxu0 0.0
    %475 = vmatpush1.msra.mxu0 0.0
    %476 = vmatprep.subr.mxu0 0.0
    %477 = vmatpush1.msra.mxu0 0.0
    %478 = vmatprep.subr.mxu0 0.0
    %479 = vmatpush1.msra.mxu0 0.0
    %480 = vmatprep.subr.mxu0 0.0
    %481 = vmatpush1.msra.mxu0 0.0
    %482 = vmatprep.subr.mxu0 0.0
    %483 = vmatpush1.msra.mxu0 0.0
    %484 = vmatprep.subr.mxu0 0.0
    %485 = vmatpush1.msra.mxu0 0.0
    %486 = vmatprep.subr.mxu0 0.0
    %487 = vmatpush1.msra.mxu0 0.0
    %488 = vmatprep.subr.mxu0 0.0
    %489 = vmatpush1.msra.mxu0 0.0
    %490 = vmatprep.subr.mxu0 0.0
    %491 = vmatpush1.msra.mxu0 0.0
    %492 = vmatprep.subr.mxu0 0.0
    %493 = vmatpush1.msra.mxu0 0.0
    %494 = vmatprep.subr.mxu0 0.0
    %495 = vmatpush1.msra.mxu0 0.0
    %496 = vmatprep.subr.mxu0 0.0
    %497 = vmatpush1.msra.mxu0 0.0
    %498 = vmatprep.mubr.f32.mxu0 0.0
    %499 = vmatmul.mubr.f32.gmra.mrb[0].mxu0 0.0
    %v500 = vpop.f32.mrb[0].mxu0
    %v501 = vadd.f32 %v422, %v500
    %v502 = vpop.f32.mrb[0].mxu0
    %v503 = vadd.f32 %v426, %v502
    %504 = vdwg.mxu0
    %505 = vmatprep.subr.mxu0 0.0
    %506 = vmatpush1.msra.mxu0 %v371
    %507 = vmatprep.subr.mxu0 0.0
    %508 = vmatpush1.msra.mxu0 %v374
    %509 = vmatprep.subr.mxu0 0.0
    %510 = vmatpush1.msra.mxu0 %v377
    %511 = vmatprep.subr.mxu0 0.0
    %512 = vmatpush1.msra.mxu0 %v380
    %513 = vmatprep.subr.mxu0 0.0
    %514 = vmatpush1.msra.mxu0 %v383
    %515 = vmatprep.subr.mxu0 0.0
    %516 = vmatpush1.msra.mxu0 %v386
    %517 = vmatprep.subr.mxu0 0.0
    %518 = vmatpush1.msra.mxu0 %v389
    %519 = vmatprep.subr.mxu0 0.0
    %520 = vmatpush1.msra.mxu0 %v392
    %521 = vmatprep.subr.mxu0 0.0
    %522 = vmatpush1.msra.mxu0 %v395
    %523 = vmatprep.subr.mxu0 0.0
    %524 = vmatpush1.msra.mxu0 %v398
    %525 = vmatprep.subr.mxu0 0.0
    %526 = vmatpush1.msra.mxu0 %v401
    %527 = vmatprep.subr.mxu0 0.0
    %528 = vmatpush1.msra.mxu0 %v404
    %529 = vmatprep.subr.mxu0 0.0
    %530 = vmatpush1.msra.mxu0 %v407
    %531 = vmatprep.subr.mxu0 0.0
    %532 = vmatpush1.msra.mxu0 %v410
    %533 = vmatprep.subr.mxu0 0.0
    %534 = vmatpush1.msra.mxu0 %v413
    %535 = vmatprep.subr.mxu0 0.0
    %536 = vmatpush1.msra.mxu0 %v416
    %537 = vmatprep.subr.mxu0 0.0
    %538 = vmatpush1.msra.mxu0 0.0
    %539 = vmatprep.subr.mxu0 0.0
    %540 = vmatpush1.msra.mxu0 0.0
    %541 = vmatprep.subr.mxu0 0.0
    %542 = vmatpush1.msra.mxu0 0.0
    %543 = vmatprep.subr.mxu0 0.0
    %544 = vmatpush1.msra.mxu0 0.0
    %545 = vmatprep.subr.mxu0 0.0
    %546 = vmatpush1.msra.mxu0 0.0
    %547 = vmatprep.subr.mxu0 0.0
    %548 = vmatpush1.msra.mxu0 0.0
    %549 = vmatprep.subr.mxu0 0.0
    %550 = vmatpush1.msra.mxu0 0.0
    %551 = vmatprep.subr.mxu0 0.0
    %552 = vmatpush1.msra.mxu0 0.0
    %553 = vmatprep.subr.mxu0 0.0
    %554 = vmatpush1.msra.mxu0 0.0
    %555 = vmatprep.subr.mxu0 0.0
    %556 = vmatpush1.msra.mxu0 0.0
    %557 = vmatprep.subr.mxu0 0.0
    %558 = vmatpush1.msra.mxu0 0.0
    %559 = vmatprep.subr.mxu0 0.0
    %560 = vmatpush1.msra.mxu0 0.0
    %561 = vmatprep.subr.mxu0 0.0
    %562 = vmatpush1.msra.mxu0 0.0
    %563 = vmatprep.subr.mxu0 0.0
    %564 = vmatpush1.msra.mxu0 0.0
    %565 = vmatprep.subr.mxu0 0.0
    %566 = vmatpush1.msra.mxu0 0.0
    %567 = vmatprep.subr.mxu0 0.0
    %568 = vmatpush1.msra.mxu0 0.0
    %569 = vmatprep.mubr.f32.mxu0 0.0
    %570 = vmatmul.mubr.f32.gmra.mrb[0].mxu0 0.0
    %v571 = vpop.f32.mrb[0].mxu0
    %v572 = vadd.f32 %v430, %v571
    %v573 = vpop.f32.mrb[0].mxu0
    %574 = vdwg.mxu0
    %v575 = vadd.f32 %v295, %v501
    %v576 = vxor.u32 %v575, 2147483648
    %v577 = vmul.f32 %v576, 1.442695
    %v578 = vpow.pop %v577
    %v579 = vadd.f32 %v578, 1.0
    %v580 = vrcp.pop %v579
    %v581 = vmul.f32 1.0, %v580
    %v582 = vadd.f32 %v297, %v503
    %v583 = vxor.u32 %v582, 2147483648
    %v584 = vmul.f32 %v583, 1.442695
    %v585 = vpow.pop %v584
    %v586 = vadd.f32 %v585, 1.0
    %v587 = vrcp.pop %v586
    %v588 = vmul.f32 1.0, %v587
    %v589 = vmul.f32 %v581, %v572
    %v590 = vadd.f32 %v366, %v589
    %v591 = vtanh.pop %v590
    %v592 = vsub.f32 1.0, %v588
    %v593 = vmul.f32 %v592, %v591
    %v594 = vmul.f32 %v588, 0.0
    %v595 = vadd.f32 %v593, %v594
    %v596 = vld [vmem:[%s2] sm:$0x3]
    %vm597 = vcmp.gt.s32.totalorder %v596, 0
    %v598 = vsel %vm597, 1, 0
    %v599 = vcvt.s32.f32 %v598
    %601 = vset.pattern.permute.xlu0 0
    %602 = vperm.xlu0 %601, %v599
    %v603 = vpop.permute.xlu0 %602
    %v605 = vmul.f32 %v603, %v595
    %v606 = vsub.f32 1.0, %v599
    %608 = vset.pattern.permute.xlu0 0
    %609 = vperm.xlu0 %608, %v606
    %v610 = vpop.permute.xlu0 %609
    %v612 = vmul.f32 %v610, 0.0
    %v613 = vadd.f32 %v605, %v612
    %s614 = sld [smem:[#allocation3 + $0x80]]
    %s615 = scalar_lea.vmem [#allocation5], %s614
    %v616 = vld [vmem:[%s615] sm:$0x1]
    %s617 = sld [smem:[#allocation3 + $0x81]]
    %s618 = scalar_lea.vmem [#allocation5], %s617
    %v619 = vld [vmem:[%s618] sm:$0x1]
    %v621 = vrot.slane %v619, 7
    %v623 = vsel %vm161, %v616, %v621
    %624 = vmatprep.subr.mxu0 %v164
    %625 = vmatpush1.msra.mxu0 %v163
    %626 = vmatprep.subr.mxu0 %v167
    %627 = vmatpush1.msra.mxu0 %v166
    %628 = vmatprep.subr.mxu0 %v170
    %629 = vmatpush1.msra.mxu0 %v169
    %630 = vmatprep.subr.mxu0 %v173
    %631 = vmatpush1.msra.mxu0 %v172
    %632 = vmatprep.subr.mxu0 %v176
    %633 = vmatpush1.msra.mxu0 %v175
    %634 = vmatprep.subr.mxu0 %v179
    %635 = vmatpush1.msra.mxu0 %v178
    %636 = vmatprep.subr.mxu0 %v182
    %637 = vmatpush1.msra.mxu0 %v181
    %638 = vmatprep.subr.mxu0 %v185
    %639 = vmatpush1.msra.mxu0 %v184
    %640 = vmatprep.subr.mxu0 %v188
    %641 = vmatpush1.msra.mxu0 %v187
    %642 = vmatprep.subr.mxu0 %v191
    %643 = vmatpush1.msra.mxu0 %v190
    %644 = vmatprep.subr.mxu0 %v194
    %645 = vmatpush1.msra.mxu0 %v193
    %646 = vmatprep.subr.mxu0 %v197
    %647 = vmatpush1.msra.mxu0 %v196
    %648 = vmatprep.subr.mxu0 %v200
    %649 = vmatpush1.msra.mxu0 %v199
    %650 = vmatprep.subr.mxu0 %v203
    %651 = vmatpush1.msra.mxu0 %v202
    %652 = vmatprep.subr.mxu0 %v206
    %653 = vmatpush1.msra.mxu0 %v205
    %654 = vmatprep.subr.mxu0 %v209
    %655 = vmatpush1.msra.mxu0 %v208
    %656 = vmatprep.subr.mxu0 0.0
    %657 = vmatpush1.msra.mxu0 0.0
    %658 = vmatprep.subr.mxu0 0.0
    %659 = vmatpush1.msra.mxu0 0.0
    %660 = vmatprep.subr.mxu0 0.0
    %661 = vmatpush1.msra.mxu0 0.0
    %662 = vmatprep.subr.mxu0 0.0
    %663 = vmatpush1.msra.mxu0 0.0
    %664 = vmatprep.subr.mxu0 0.0
    %665 = vmatpush1.msra.mxu0 0.0
    %666 = vmatprep.subr.mxu0 0.0
    %667 = vmatpush1.msra.mxu0 0.0
    %668 = vmatprep.subr.mxu0 0.0
    %669 = vmatpush1.msra.mxu0 0.0
    %670 = vmatprep.subr.mxu0 0.0
    %671 = vmatpush1.msra.mxu0 0.0
    %672 = vmatprep.subr.mxu0 0.0
    %673 = vmatpush1.msra.mxu0 0.0
    %674 = vmatprep.subr.mxu0 0.0
    %675 = vmatpush1.msra.mxu0 0.0
    %676 = vmatprep.subr.mxu0 0.0
    %677 = vmatpush1.msra.mxu0 0.0
    %678 = vmatprep.subr.mxu0 0.0
    %679 = vmatpush1.msra.mxu0 0.0
    %680 = vmatprep.subr.mxu0 0.0
    %681 = vmatpush1.msra.mxu0 0.0
    %682 = vmatprep.subr.mxu0 0.0
    %683 = vmatpush1.msra.mxu0 0.0
    %684 = vmatprep.subr.mxu0 0.0
    %685 = vmatpush1.msra.mxu0 0.0
    %686 = vmatprep.subr.mxu0 0.0
    %687 = vmatpush1.msra.mxu0 0.0
    %688 = vmatprep.mubr.f32.mxu0 0.0
    %689 = vmatmul.mubr.f32.gmra.mrb[0].mxu0 %v623
    %v690 = vpop.f32.mrb[0].mxu0
    %v691 = vadd.f32 %v216, %v690
    %v692 = vpop.f32.mrb[0].mxu0
    %v693 = vadd.f32 %v220, %v692
    %694 = vdwg.mxu0
    %695 = vmatprep.subr.mxu0 0.0
    %696 = vmatpush1.msra.mxu0 %v165
    %697 = vmatprep.subr.mxu0 0.0
    %698 = vmatpush1.msra.mxu0 %v168
    %699 = vmatprep.subr.mxu0 0.0
    %700 = vmatpush1.msra.mxu0 %v171
    %701 = vmatprep.subr.mxu0 0.0
    %702 = vmatpush1.msra.mxu0 %v174
    %703 = vmatprep.subr.mxu0 0.0
    %704 = vmatpush1.msra.mxu0 %v177
    %705 = vmatprep.subr.mxu0 0.0
    %706 = vmatpush1.msra.mxu0 %v180
    %707 = vmatprep.subr.mxu0 0.0
    %708 = vmatpush1.msra.mxu0 %v183
    %709 = vmatprep.subr.mxu0 0.0
    %710 = vmatpush1.msra.mxu0 %v186
    %711 = vmatprep.subr.mxu0 0.0
    %712 = vmatpush1.msra.mxu0 %v189
    %713 = vmatprep.subr.mxu0 0.0
    %714 = vmatpush1.msra.mxu0 %v192
    %715 = vmatprep.subr.mxu0 0.0
    %716 = vmatpush1.msra.mxu0 %v195
    %717 = vmatprep.subr.mxu0 0.0
    %718 = vmatpush1.msra.mxu0 %v198
    %719 = vmatprep.subr.mxu0 0.0
    %720 = vmatpush1.msra.mxu0 %v201
    %721 = vmatprep.subr.mxu0 0.0
    %722 = vmatpush1.msra.mxu0 %v204
    %723 = vmatprep.subr.mxu0 0.0
    %724 = vmatpush1.msra.mxu0 %v207
    %725 = vmatprep.subr.mxu0 0.0
    %726 = vmatpush1.msra.mxu0 %v210
    %727 = vmatprep.subr.mxu0 0.0
    %728 = vmatpush1.msra.mxu0 0.0
    %729 = vmatprep.subr.mxu0 0.0
    %730 = vmatpush1.msra.mxu0 0.0
    %731 = vmatprep.subr.mxu0 0.0
    %732 = vmatpush1.msra.mxu0 0.0
    %733 = vmatprep.subr.mxu0 0.0
    %734 = vmatpush1.msra.mxu0 0.0
    %735 = vmatprep.subr.mxu0 0.0
    %736 = vmatpush1.msra.mxu0 0.0
    %737 = vmatprep.subr.mxu0 0.0
    %738 = vmatpush1.msra.mxu0 0.0
    %739 = vmatprep.subr.mxu0 0.0
    %740 = vmatpush1.msra.mxu0 0.0
    %741 = vmatprep.subr.mxu0 0.0
    %742 = vmatpush1.msra.mxu0 0.0
    %743 = vmatprep.subr.mxu0 0.0
    %744 = vmatpush1.msra.mxu0 0.0
    %745 = vmatprep.subr.mxu0 0.0
    %746 = vmatpush1.msra.mxu0 0.0
    %747 = vmatprep.subr.mxu0 0.0
    %748 = vmatpush1.msra.mxu0 0.0
    %749 = vmatprep.subr.mxu0 0.0
    %750 = vmatpush1.msra.mxu0 0.0
    %751 = vmatprep.subr.mxu0 0.0
    %752 = vmatpush1.msra.mxu0 0.0
    %753 = vmatprep.subr.mxu0 0.0
    %754 = vmatpush1.msra.mxu0 0.0
    %755 = vmatprep.subr.mxu0 0.0
    %756 = vmatpush1.msra.mxu0 0.0
    %757 = vmatprep.subr.mxu0 0.0
    %758 = vmatpush1.msra.mxu0 0.0
    %759 = vmatprep.mubr.f32.mxu0 0.0
    %760 = vmatmul.mubr.f32.gmra.mrb[0].mxu0 %v623
    %v761 = vpop.f32.mrb[0].mxu0
    %v762 = vadd.f32 %v224, %v761
    %v763 = vpop.f32.mrb[0].mxu0
    %764 = vdwg.mxu0
    %765 = vmatprep.subr.mxu0 %v370
    %766 = vmatpush1.msra.mxu0 %v369
    %767 = vmatprep.subr.mxu0 %v373
    %768 = vmatpush1.msra.mxu0 %v372
    %769 = vmatprep.subr.mxu0 %v376
    %770 = vmatpush1.msra.mxu0 %v375
    %771 = vmatprep.subr.mxu0 %v379
    %772 = vmatpush1.msra.mxu0 %v378
    %773 = vmatprep.subr.mxu0 %v382
    %774 = vmatpush1.msra.mxu0 %v381
    %775 = vmatprep.subr.mxu0 %v385
    %776 = vmatpush1.msra.mxu0 %v384
    %777 = vmatprep.subr.mxu0 %v388
    %778 = vmatpush1.msra.mxu0 %v387
    %779 = vmatprep.subr.mxu0 %v391
    %780 = vmatpush1.msra.mxu0 %v390
    %781 = vmatprep.subr.mxu0 %v394
    %782 = vmatpush1.msra.mxu0 %v393
    %783 = vmatprep.subr.mxu0 %v397
    %784 = vmatpush1.msra.mxu0 %v396
    %785 = vmatprep.subr.mxu0 %v400
    %786 = vmatpush1.msra.mxu0 %v399
    %787 = vmatprep.subr.mxu0 %v403
    %788 = vmatpush1.msra.mxu0 %v402
    %789 = vmatprep.subr.mxu0 %v406
    %790 = vmatpush1.msra.mxu0 %v405
    %791 = vmatprep.subr.mxu0 %v409
    %792 = vmatpush1.msra.mxu0 %v408
    %793 = vmatprep.subr.mxu0 %v412
    %794 = vmatpush1.msra.mxu0 %v411
    %795 = vmatprep.subr.mxu0 %v415
    %796 = vmatpush1.msra.mxu0 %v414
    %797 = vmatprep.subr.mxu0 0.0
    %798 = vmatpush1.msra.mxu0 0.0
    %799 = vmatprep.subr.mxu0 0.0
    %800 = vmatpush1.msra.mxu0 0.0
    %801 = vmatprep.subr.mxu0 0.0
    %802 = vmatpush1.msra.mxu0 0.0
    %803 = vmatprep.subr.mxu0 0.0
    %804 = vmatpush1.msra.mxu0 0.0
    %805 = vmatprep.subr.mxu0 0.0
    %806 = vmatpush1.msra.mxu0 0.0
    %807 = vmatprep.subr.mxu0 0.0
    %808 = vmatpush1.msra.mxu0 0.0
    %809 = vmatprep.subr.mxu0 0.0
    %810 = vmatpush1.msra.mxu0 0.0
    %811 = vmatprep.subr.mxu0 0.0
    %812 = vmatpush1.msra.mxu0 0.0
    %813 = vmatprep.subr.mxu0 0.0
    %814 = vmatpush1.msra.mxu0 0.0
    %815 = vmatprep.subr.mxu0 0.0
    %816 = vmatpush1.msra.mxu0 0.0
    %817 = vmatprep.subr.mxu0 0.0
    %818 = vmatpush1.msra.mxu0 0.0
    %819 = vmatprep.subr.mxu0 0.0
    %820 = vmatpush1.msra.mxu0 0.0
    %821 = vmatprep.subr.mxu0 0.0
    %822 = vmatpush1.msra.mxu0 0.0
    %823 = vmatprep.subr.mxu0 0.0
    %824 = vmatpush1.msra.mxu0 0.0
    %825 = vmatprep.subr.mxu0 0.0
    %826 = vmatpush1.msra.mxu0 0.0
    %827 = vmatprep.subr.mxu0 0.0
    %828 = vmatpush1.msra.mxu0 0.0
    %829 = vmatprep.mubr.f32.mxu0 0.0
    %830 = vmatmul.mubr.f32.gmra.mrb[0].mxu0 %v613
    %v831 = vpop.f32.mrb[0].mxu0
    %v832 = vadd.f32 %v422, %v831
    %v833 = vpop.f32.mrb[0].mxu0
    %v834 = vadd.f32 %v426, %v833
    %835 = vdwg.mxu0
    %836 = vmatprep.subr.mxu0 0.0
    %837 = vmatpush1.msra.mxu0 %v371
    %838 = vmatprep.subr.mxu0 0.0
    %839 = vmatpush1.msra.mxu0 %v374
    %840 = vmatprep.subr.mxu0 0.0
    %841 = vmatpush1.msra.mxu0 %v377
    %842 = vmatprep.subr.mxu0 0.0
    %843 = vmatpush1.msra.mxu0 %v380
    %844 = vmatprep.subr.mxu0 0.0
    %845 = vmatpush1.msra.mxu0 %v383
    %846 = vmatprep.subr.mxu0 0.0
    %847 = vmatpush1.msra.mxu0 %v386
    %848 = vmatprep.subr.mxu0 0.0
    %849 = vmatpush1.msra.mxu0 %v389
    %850 = vmatprep.subr.mxu0 0.0
    %851 = vmatpush1.msra.mxu0 %v392
    %852 = vmatprep.subr.mxu0 0.0
    %853 = vmatpush1.msra.mxu0 %v395
    %854 = vmatprep.subr.mxu0 0.0
    %855 = vmatpush1.msra.mxu0 %v398
    %856 = vmatprep.subr.mxu0 0.0
    %857 = vmatpush1.msra.mxu0 %v401
    %858 = vmatprep.subr.mxu0 0.0
    %859 = vmatpush1.msra.mxu0 %v404
    %860 = vmatprep.subr.mxu0 0.0
    %861 = vmatpush1.msra.mxu0 %v407
    %862 = vmatprep.subr.mxu0 0.0
    %863 = vmatpush1.msra.mxu0 %v410
    %864 = vmatprep.subr.mxu0 0.0
    %865 = vmatpush1.msra.mxu0 %v413
    %866 = vmatprep.subr.mxu0 0.0
    %867 = vmatpush1.msra.mxu0 %v416
    %868 = vmatprep.subr.mxu0 0.0
    %869 = vmatpush1.msra.mxu0 0.0
    %870 = vmatprep.subr.mxu0 0.0
    %871 = vmatpush1.msra.mxu0 0.0
    %872 = vmatprep.subr.mxu0 0.0
    %873 = vmatpush1.msra.mxu0 0.0
    %874 = vmatprep.subr.mxu0 0.0
    %875 = vmatpush1.msra.mxu0 0.0
    %876 = vmatprep.subr.mxu0 0.0
    %877 = vmatpush1.msra.mxu0 0.0
    %878 = vmatprep.subr.mxu0 0.0
    %879 = vmatpush1.msra.mxu0 0.0
    %880 = vmatprep.subr.mxu0 0.0
    %881 = vmatpush1.msra.mxu0 0.0
    %882 = vmatprep.subr.mxu0 0.0
    %883 = vmatpush1.msra.mxu0 0.0
    %884 = vmatprep.subr.mxu0 0.0
    %885 = vmatpush1.msra.mxu0 0.0
    %886 = vmatprep.subr.mxu0 0.0
    %887 = vmatpush1.msra.mxu0 0.0
    %888 = vmatprep.subr.mxu0 0.0
    %889 = vmatpush1.msra.mxu0 0.0
    %890 = vmatprep.subr.mxu0 0.0
    %891 = vmatpush1.msra.mxu0 0.0
    %892 = vmatprep.subr.mxu0 0.0
    %893 = vmatpush1.msra.mxu0 0.0
    %894 = vmatprep.subr.mxu0 0.0
    %895 = vmatpush1.msra.mxu0 0.0
    %896 = vmatprep.subr.mxu0 0.0
    %897 = vmatpush1.msra.mxu0 0.0
    %898 = vmatprep.subr.mxu0 0.0
    %899 = vmatpush1.msra.mxu0 0.0
    %900 = vmatprep.mubr.f32.mxu0 0.0
    %901 = vmatmul.mubr.f32.gmra.mrb[0].mxu0 %v613
    %v902 = vpop.f32.mrb[0].mxu0
    %v903 = vadd.f32 %v430, %v902
    %v904 = vpop.f32.mrb[0].mxu0
    %905 = vdwg.mxu0
    %v906 = vadd.f32 %v691, %v832
    %v907 = vxor.u32 %v906, 2147483648
    %v908 = vmul.f32 %v907, 1.442695
    %v909 = vpow.pop %v908
    %v910 = vadd.f32 %v909, 1.0
    %v911 = vrcp.pop %v910
    %v912 = vmul.f32 1.0, %v911
    %v913 = vadd.f32 %v693, %v834
    %v914 = vxor.u32 %v913, 2147483648
    %v915 = vmul.f32 %v914, 1.442695
    %v916 = vpow.pop %v915
    %v917 = vadd.f32 %v916, 1.0
    %v918 = vrcp.pop %v917
    %v919 = vmul.f32 1.0, %v918
    %v920 = vmul.f32 %v912, %v903
    %v921 = vadd.f32 %v762, %v920
    %v922 = vtanh.pop %v921
    %v923 = vsub.f32 1.0, %v919
    %v924 = vmul.f32 %v923, %v922
    %v925 = vmul.f32 %v919, %v613
    %v926 = vadd.f32 %v924, %v925
    %vm927 = vcmp.gt.s32.totalorder %v596, 1
    %v928 = vsel %vm927, 1, 0
    %v929 = vcvt.s32.f32 %v928
    %931 = vset.pattern.permute.xlu0 0
    %932 = vperm.xlu0 %931, %v929
    %v933 = vpop.permute.xlu0 %932
    %v935 = vmul.f32 %v933, %v926
    %v936 = vsub.f32 1.0, %v929
    %938 = vset.pattern.permute.xlu0 0
    %939 = vperm.xlu0 %938, %v936
    %v940 = vpop.permute.xlu0 %939
    %v942 = vmul.f32 %v940, %v613
    %v943 = vadd.f32 %v935, %v942
    %s944 = sld [smem:[#allocation3 + $0x100]]
    %s945 = scalar_lea.vmem [#allocation5], %s944
    %v946 = vld [vmem:[%s945] sm:$0x1]
    %s947 = sld [smem:[#allocation3 + $0x101]]
    %s948 = scalar_lea.vmem [#allocation5], %s947
    %v949 = vld [vmem:[%s948] sm:$0x1]
    %v951 = vrot.slane %v949, 7
    %v953 = vsel %vm161, %v946, %v951
    %954 = vmatprep.subr.mxu0 %v164
    %955 = vmatpush1.msra.mxu0 %v163
    %956 = vmatprep.subr.mxu0 %v167
    %957 = vmatpush1.msra.mxu0 %v166
    %958 = vmatprep.subr.mxu0 %v170
    %959 = vmatpush1.msra.mxu0 %v169
    %960 = vmatprep.subr.mxu0 %v173
    %961 = vmatpush1.msra.mxu0 %v172
    %962 = vmatprep.subr.mxu0 %v176
    %963 = vmatpush1.msra.mxu0 %v175
    %964 = vmatprep.subr.mxu0 %v179
    %965 = vmatpush1.msra.mxu0 %v178
    %966 = vmatprep.subr.mxu0 %v182
    %967 = vmatpush1.msra.mxu0 %v181
    %968 = vmatprep.subr.mxu0 %v185
    %969 = vmatpush1.msra.mxu0 %v184
    %970 = vmatprep.subr.mxu0 %v188
    %971 = vmatpush1.msra.mxu0 %v187
    %972 = vmatprep.subr.mxu0 %v191
    %973 = vmatpush1.msra.mxu0 %v190
    %974 = vmatprep.subr.mxu0 %v194
    %975 = vmatpush1.msra.mxu0 %v193
    %976 = vmatprep.subr.mxu0 %v197
    %977 = vmatpush1.msra.mxu0 %v196
    %978 = vmatprep.subr.mxu0 %v200
    %979 = vmatpush1.msra.mxu0 %v199
    %980 = vmatprep.subr.mxu0 %v203
    %981 = vmatpush1.msra.mxu0 %v202
    %982 = vmatprep.subr.mxu0 %v206
    %983 = vmatpush1.msra.mxu0 %v205
    %984 = vmatprep.subr.mxu0 %v209
    %985 = vmatpush1.msra.mxu0 %v208
    %986 = vmatprep.subr.mxu0 0.0
    %987 = vmatpush1.msra.mxu0 0.0
    %988 = vmatprep.subr.mxu0 0.0
    %989 = vmatpush1.msra.mxu0 0.0
    %990 = vmatprep.subr.mxu0 0.0
    %991 = vmatpush1.msra.mxu0 0.0
    %992 = vmatprep.subr.mxu0 0.0
    %993 = vmatpush1.msra.mxu0 0.0
    %994 = vmatprep.subr.mxu0 0.0
    %995 = vmatpush1.msra.mxu0 0.0
    %996 = vmatprep.subr.mxu0 0.0
    %997 = vmatpush1.msra.mxu0 0.0
    %998 = vmatprep.subr.mxu0 0.0
    %999 = vmatpush1.msra.mxu0 0.0
    %1000 = vmatprep.subr.mxu0 0.0
    %1001 = vmatpush1.msra.mxu0 0.0
    %1002 = vmatprep.subr.mxu0 0.0
    %1003 = vmatpush1.msra.mxu0 0.0
    %1004 = vmatprep.subr.mxu0 0.0
    %1005 = vmatpush1.msra.mxu0 0.0
    %1006 = vmatprep.subr.mxu0 0.0
    %1007 = vmatpush1.msra.mxu0 0.0
    %1008 = vmatprep.subr.mxu0 0.0
    %1009 = vmatpush1.msra.mxu0 0.0
    %1010 = vmatprep.subr.mxu0 0.0
    %1011 = vmatpush1.msra.mxu0 0.0
    %1012 = vmatprep.subr.mxu0 0.0
    %1013 = vmatpush1.msra.mxu0 0.0
    %1014 = vmatprep.subr.mxu0 0.0
    %1015 = vmatpush1.msra.mxu0 0.0
    %1016 = vmatprep.subr.mxu0 0.0
    %1017 = vmatpush1.msra.mxu0 0.0
    %1018 = vmatprep.mubr.f32.mxu0 0.0
    %1019 = vmatmul.mubr.f32.gmra.mrb[0].mxu0 %v953
    %v1020 = vpop.f32.mrb[0].mxu0
    %v1021 = vadd.f32 %v216, %v1020
    %v1022 = vpop.f32.mrb[0].mxu0
    %v1023 = vadd.f32 %v220, %v1022
    %1024 = vdwg.mxu0
    %1025 = vmatprep.subr.mxu0 0.0
    %1026 = vmatpush1.msra.mxu0 %v165
    %1027 = vmatprep.subr.mxu0 0.0
    %1028 = vmatpush1.msra.mxu0 %v168
    %1029 = vmatprep.subr.mxu0 0.0
    %1030 = vmatpush1.msra.mxu0 %v171
    %1031 = vmatprep.subr.mxu0 0.0
    %1032 = vmatpush1.msra.mxu0 %v174
    %1033 = vmatprep.subr.mxu0 0.0
    %1034 = vmatpush1.msra.mxu0 %v177
    %1035 = vmatprep.subr.mxu0 0.0
    %1036 = vmatpush1.msra.mxu0 %v180
    %1037 = vmatprep.subr.mxu0 0.0
    %1038 = vmatpush1.msra.mxu0 %v183
    %1039 = vmatprep.subr.mxu0 0.0
    %1040 = vmatpush1.msra.mxu0 %v186
    %1041 = vmatprep.subr.mxu0 0.0
    %1042 = vmatpush1.msra.mxu0 %v189
    %1043 = vmatprep.subr.mxu0 0.0
    %1044 = vmatpush1.msra.mxu0 %v192
    %1045 = vmatprep.subr.mxu0 0.0
    %1046 = vmatpush1.msra.mxu0 %v195
    %1047 = vmatprep.subr.mxu0 0.0
    %1048 = vmatpush1.msra.mxu0 %v198
    %1049 = vmatprep.subr.mxu0 0.0
    %1050 = vmatpush1.msra.mxu0 %v201
    %1051 = vmatprep.subr.mxu0 0.0
    %1052 = vmatpush1.msra.mxu0 %v204
    %1053 = vmatprep.subr.mxu0 0.0
    %1054 = vmatpush1.msra.mxu0 %v207
    %1055 = vmatprep.subr.mxu0 0.0
    %1056 = vmatpush1.msra.mxu0 %v210
    %1057 = vmatprep.subr.mxu0 0.0
    %1058 = vmatpush1.msra.mxu0 0.0
    %1059 = vmatprep.subr.mxu0 0.0
    %1060 = vmatpush1.msra.mxu0 0.0
    %1061 = vmatprep.subr.mxu0 0.0
    %1062 = vmatpush1.msra.mxu0 0.0
    %1063 = vmatprep.subr.mxu0 0.0
    %1064 = vmatpush1.msra.mxu0 0.0
    %1065 = vmatprep.subr.mxu0 0.0
    %1066 = vmatpush1.msra.mxu0 0.0
    %1067 = vmatprep.subr.mxu0 0.0
    %1068 = vmatpush1.msra.mxu0 0.0
    %1069 = vmatprep.subr.mxu0 0.0
    %1070 = vmatpush1.msra.mxu0 0.0
    %1071 = vmatprep.subr.mxu0 0.0
    %1072 = vmatpush1.msra.mxu0 0.0
    %1073 = vmatprep.subr.mxu0 0.0
    %1074 = vmatpush1.msra.mxu0 0.0
    %1075 = vmatprep.subr.mxu0 0.0
    %1076 = vmatpush1.msra.mxu0 0.0
    %1077 = vmatprep.subr.mxu0 0.0
    %1078 = vmatpush1.msra.mxu0 0.0
    %1079 = vmatprep.subr.mxu0 0.0
    %1080 = vmatpush1.msra.mxu0 0.0
    %1081 = vmatprep.subr.mxu0 0.0
    %1082 = vmatpush1.msra.mxu0 0.0
    %1083 = vmatprep.subr.mxu0 0.0
    %1084 = vmatpush1.msra.mxu0 0.0
    %1085 = vmatprep.subr.mxu0 0.0
    %1086 = vmatpush1.msra.mxu0 0.0
    %1087 = vmatprep.subr.mxu0 0.0
    %1088 = vmatpush1.msra.mxu0 0.0
    %1089 = vmatprep.mubr.f32.mxu0 0.0
    %1090 = vmatmul.mubr.f32.gmra.mrb[0].mxu0 %v953
    %v1091 = vpop.f32.mrb[0].mxu0
    %v1092 = vadd.f32 %v224, %v1091
    %v1093 = vpop.f32.mrb[0].mxu0
    %1094 = vdwg.mxu0
    %1095 = vmatprep.subr.mxu0 %v370
    %1096 = vmatpush1.msra.mxu0 %v369
    %1097 = vmatprep.subr.mxu0 %v373
    %1098 = vmatpush1.msra.mxu0 %v372
    %1099 = vmatprep.subr.mxu0 %v376
    %1100 = vmatpush1.msra.mxu0 %v375
    %1101 = vmatprep.subr.mxu0 %v379
    %1102 = vmatpush1.msra.mxu0 %v378
    %1103 = vmatprep.subr.mxu0 %v382
    %1104 = vmatpush1.msra.mxu0 %v381
    %1105 = vmatprep.subr.mxu0 %v385
    %1106 = vmatpush1.msra.mxu0 %v384
    %1107 = vmatprep.subr.mxu0 %v388
    %1108 = vmatpush1.msra.mxu0 %v387
    %1109 = vmatprep.subr.mxu0 %v391
    %1110 = vmatpush1.msra.mxu0 %v390
    %1111 = vmatprep.subr.mxu0 %v394
    %1112 = vmatpush1.msra.mxu0 %v393
    %1113 = vmatprep.subr.mxu0 %v397
    %1114 = vmatpush1.msra.mxu0 %v396
    %1115 = vmatprep.subr.mxu0 %v400
    %1116 = vmatpush1.msra.mxu0 %v399
    %1117 = vmatprep.subr.mxu0 %v403
    %1118 = vmatpush1.msra.mxu0 %v402
    %1119 = vmatprep.subr.mxu0 %v406
    %1120 = vmatpush1.msra.mxu0 %v405
    %1121 = vmatprep.subr.mxu0 %v409
    %1122 = vmatpush1.msra.mxu0 %v408
    %1123 = vmatprep.subr.mxu0 %v412
    %1124 = vmatpush1.msra.mxu0 %v411
    %1125 = vmatprep.subr.mxu0 %v415
    %1126 = vmatpush1.msra.mxu0 %v414
    %1127 = vmatprep.subr.mxu0 0.0
    %1128 = vmatpush1.msra.mxu0 0.0
    %1129 = vmatprep.subr.mxu0 0.0
    %1130 = vmatpush1.msra.mxu0 0.0
    %1131 = vmatprep.subr.mxu0 0.0
    %1132 = vmatpush1.msra.mxu0 0.0
    %1133 = vmatprep.subr.mxu0 0.0
    %1134 = vmatpush1.msra.mxu0 0.0
    %1135 = vmatprep.subr.mxu0 0.0
    %1136 = vmatpush1.msra.mxu0 0.0
    %1137 = vmatprep.subr.mxu0 0.0
    %1138 = vmatpush1.msra.mxu0 0.0
    %1139 = vmatprep.subr.mxu0 0.0
    %1140 = vmatpush1.msra.mxu0 0.0
    %1141 = vmatprep.subr.mxu0 0.0
    %1142 = vmatpush1.msra.mxu0 0.0
    %1143 = vmatprep.subr.mxu0 0.0
    %1144 = vmatpush1.msra.mxu0 0.0
    %1145 = vmatprep.subr.mxu0 0.0
    %1146 = vmatpush1.msra.mxu0 0.0
    %1147 = vmatprep.subr.mxu0 0.0
    %1148 = vmatpush1.msra.mxu0 0.0
    %1149 = vmatprep.subr.mxu0 0.0
    %1150 = vmatpush1.msra.mxu0 0.0
    %1151 = vmatprep.subr.mxu0 0.0
    %1152 = vmatpush1.msra.mxu0 0.0
    %1153 = vmatprep.subr.mxu0 0.0
    %1154 = vmatpush1.msra.mxu0 0.0
    %1155 = vmatprep.subr.mxu0 0.0
    %1156 = vmatpush1.msra.mxu0 0.0
    %1157 = vmatprep.subr.mxu0 0.0
    %1158 = vmatpush1.msra.mxu0 0.0
    %1159 = vmatprep.mubr.f32.mxu0 0.0
    %1160 = vmatmul.mubr.f32.gmra.mrb[0].mxu0 %v943
    %v1161 = vpop.f32.mrb[0].mxu0
    %v1162 = vadd.f32 %v422, %v1161
    %v1163 = vpop.f32.mrb[0].mxu0
    %v1164 = vadd.f32 %v426, %v1163
    %1165 = vdwg.mxu0
    %1166 = vmatprep.subr.mxu0 0.0
    %1167 = vmatpush1.msra.mxu0 %v371
    %1168 = vmatprep.subr.mxu0 0.0
    %1169 = vmatpush1.msra.mxu0 %v374
    %1170 = vmatprep.subr.mxu0 0.0
    %1171 = vmatpush1.msra.mxu0 %v377
    %1172 = vmatprep.subr.mxu0 0.0
    %1173 = vmatpush1.msra.mxu0 %v380
    %1174 = vmatprep.subr.mxu0 0.0
    %1175 = vmatpush1.msra.mxu0 %v383
    %1176 = vmatprep.subr.mxu0 0.0
    %1177 = vmatpush1.msra.mxu0 %v386
    %1178 = vmatprep.subr.mxu0 0.0
    %1179 = vmatpush1.msra.mxu0 %v389
    %1180 = vmatprep.subr.mxu0 0.0
    %1181 = vmatpush1.msra.mxu0 %v392
    %1182 = vmatprep.subr.mxu0 0.0
    %1183 = vmatpush1.msra.mxu0 %v395
    %1184 = vmatprep.subr.mxu0 0.0
    %1185 = vmatpush1.msra.mxu0 %v398
    %1186 = vmatprep.subr.mxu0 0.0
    %1187 = vmatpush1.msra.mxu0 %v401
    %1188 = vmatprep.subr.mxu0 0.0
    %1189 = vmatpush1.msra.mxu0 %v404
    %1190 = vmatprep.subr.mxu0 0.0
    %1191 = vmatpush1.msra.mxu0 %v407
    %1192 = vmatprep.subr.mxu0 0.0
    %1193 = vmatpush1.msra.mxu0 %v410
    %1194 = vmatprep.subr.mxu0 0.0
    %1195 = vmatpush1.msra.mxu0 %v413
    %1196 = vmatprep.subr.mxu0 0.0
    %1197 = vmatpush1.msra.mxu0 %v416
    %1198 = vmatprep.subr.mxu0 0.0
    %1199 = vmatpush1.msra.mxu0 0.0
    %1200 = vmatprep.subr.mxu0 0.0
    %1201 = vmatpush1.msra.mxu0 0.0
    %1202 = vmatprep.subr.mxu0 0.0
    %1203 = vmatpush1.msra.mxu0 0.0
    %1204 = vmatprep.subr.mxu0 0.0
    %1205 = vmatpush1.msra.mxu0 0.0
    %1206 = vmatprep.subr.mxu0 0.0
    %1207 = vmatpush1.msra.mxu0 0.0
    %1208 = vmatprep.subr.mxu0 0.0
    %1209 = vmatpush1.msra.mxu0 0.0
    %1210 = vmatprep.subr.mxu0 0.0
    %1211 = vmatpush1.msra.mxu0 0.0
    %1212 = vmatprep.subr.mxu0 0.0
    %1213 = vmatpush1.msra.mxu0 0.0
    %1214 = vmatprep.subr.mxu0 0.0
    %1215 = vmatpush1.msra.mxu0 0.0
    %1216 = vmatprep.subr.mxu0 0.0
    %1217 = vmatpush1.msra.mxu0 0.0
    %1218 = vmatprep.subr.mxu0 0.0
    %1219 = vmatpush1.msra.mxu0 0.0
    %1220 = vmatprep.subr.mxu0 0.0
    %1221 = vmatpush1.msra.mxu0 0.0
    %1222 = vmatprep.subr.mxu0 0.0
    %1223 = vmatpush1.msra.mxu0 0.0
    %1224 = vmatprep.subr.mxu0 0.0
    %1225 = vmatpush1.msra.mxu0 0.0
    %1226 = vmatprep.subr.mxu0 0.0
    %1227 = vmatpush1.msra.mxu0 0.0
    %1228 = vmatprep.subr.mxu0 0.0
    %1229 = vmatpush1.msra.mxu0 0.0
    %1230 = vmatprep.mubr.f32.mxu0 0.0
    %1231 = vmatmul.mubr.f32.gmra.mrb[0].mxu0 %v943
    %v1232 = vpop.f32.mrb[0].mxu0
    %v1233 = vadd.f32 %v430, %v1232
    %v1234 = vpop.f32.mrb[0].mxu0
    %1235 = vdwg.mxu0
    %v1236 = vadd.f32 %v1021, %v1162
    %v1237 = vxor.u32 %v1236, 2147483648
    %v1238 = vmul.f32 %v1237, 1.442695
    %v1239 = vpow.pop %v1238
    %v1240 = vadd.f32 %v1239, 1.0
    %v1241 = vrcp.pop %v1240
    %v1242 = vmul.f32 1.0, %v1241
    %v1243 = vadd.f32 %v1023, %v1164
    %v1244 = vxor.u32 %v1243, 2147483648
    %v1245 = vmul.f32 %v1244, 1.442695
    %v1246 = vpow.pop %v1245
    %v1247 = vadd.f32 %v1246, 1.0
    %v1248 = vrcp.pop %v1247
    %v1249 = vmul.f32 1.0, %v1248
    %v1250 = vmul.f32 %v1242, %v1233
    %v1251 = vadd.f32 %v1092, %v1250
    %v1252 = vtanh.pop %v1251
    %v1253 = vsub.f32 1.0, %v1249
    %v1254 = vmul.f32 %v1253, %v1252
    %v1255 = vmul.f32 %v1249, %v943
    %v1256 = vadd.f32 %v1254, %v1255
    %vm1257 = vcmp.gt.s32.totalorder %v596, 2
    %v1258 = vsel %vm1257, 1, 0
    %v1259 = vcvt.s32.f32 %v1258
    %1261 = vset.pattern.permute.xlu0 0
    %1262 = vperm.xlu0 %1261, %v1259
    %v1263 = vpop.permute.xlu0 %1262
    %v1265 = vmul.f32 %v1263, %v1256
    %v1266 = vsub.f32 1.0, %v1259
    %1268 = vset.pattern.permute.xlu0 0
    %1269 = vperm.xlu0 %1268, %v1266
    %v1270 = vpop.permute.xlu0 %1269
    %v1272 = vmul.f32 %v1270, %v943
    %v1273 = vadd.f32 %v1265, %v1272
    %s1274 = sld [smem:[#allocation3 + $0x180]]
    %s1275 = scalar_lea.vmem [#allocation5], %s1274
    %v1276 = vld [vmem:[%s1275] sm:$0x1]
    %s1277 = sld [smem:[#allocation3 + $0x181]]
    %s1278 = scalar_lea.vmem [#allocation5], %s1277
    %v1279 = vld [vmem:[%s1278] sm:$0x1]
    %v1281 = vrot.slane %v1279, 7
    %v1283 = vsel %vm161, %v1276, %v1281
    %1284 = vmatprep.subr.mxu0 %v164
    %1285 = vmatpush1.msra.mxu0 %v163
    %1286 = vmatprep.subr.mxu0 %v167
    %1287 = vmatpush1.msra.mxu0 %v166
    %1288 = vmatprep.subr.mxu0 %v170
    %1289 = vmatpush1.msra.mxu0 %v169
    %1290 = vmatprep.subr.mxu0 %v173
    %1291 = vmatpush1.msra.mxu0 %v172
    %1292 = vmatprep.subr.mxu0 %v176
    %1293 = vmatpush1.msra.mxu0 %v175
    %1294 = vmatprep.subr.mxu0 %v179
    %1295 = vmatpush1.msra.mxu0 %v178
    %1296 = vmatprep.subr.mxu0 %v182
    %1297 = vmatpush1.msra.mxu0 %v181
    %1298 = vmatprep.subr.mxu0 %v185
    %1299 = vmatpush1.msra.mxu0 %v184
    %1300 = vmatprep.subr.mxu0 %v188
    %1301 = vmatpush1.msra.mxu0 %v187
    %1302 = vmatprep.subr.mxu0 %v191
    %1303 = vmatpush1.msra.mxu0 %v190
    %1304 = vmatprep.subr.mxu0 %v194
    %1305 = vmatpush1.msra.mxu0 %v193
    %1306 = vmatprep.subr.mxu0 %v197
    %1307 = vmatpush1.msra.mxu0 %v196
    %1308 = vmatprep.subr.mxu0 %v200
    %1309 = vmatpush1.msra.mxu0 %v199
    %1310 = vmatprep.subr.mxu0 %v203
    %1311 = vmatpush1.msra.mxu0 %v202
    %1312 = vmatprep.subr.mxu0 %v206
    %1313 = vmatpush1.msra.mxu0 %v205
    %1314 = vmatprep.subr.mxu0 %v209
    %1315 = vmatpush1.msra.mxu0 %v208
    %1316 = vmatprep.subr.mxu0 0.0
    %1317 = vmatpush1.msra.mxu0 0.0
    %1318 = vmatprep.subr.mxu0 0.0
    %1319 = vmatpush1.msra.mxu0 0.0
    %1320 = vmatprep.subr.mxu0 0.0
    %1321 = vmatpush1.msra.mxu0 0.0
    %1322 = vmatprep.subr.mxu0 0.0
    %1323 = vmatpush1.msra.mxu0 0.0
    %1324 = vmatprep.subr.mxu0 0.0
    %1325 = vmatpush1.msra.mxu0 0.0
    %1326 = vmatprep.subr.mxu0 0.0
    %1327 = vmatpush1.msra.mxu0 0.0
    %1328 = vmatprep.subr.mxu0 0.0
    %1329 = vmatpush1.msra.mxu0 0.0
    %1330 = vmatprep.subr.mxu0 0.0
    %1331 = vmatpush1.msra.mxu0 0.0
    %1332 = vmatprep.subr.mxu0 0.0
    %1333 = vmatpush1.msra.mxu0 0.0
    %1334 = vmatprep.subr.mxu0 0.0
    %1335 = vmatpush1.msra.mxu0 0.0
    %1336 = vmatprep.subr.mxu0 0.0
    %1337 = vmatpush1.msra.mxu0 0.0
    %1338 = vmatprep.subr.mxu0 0.0
    %1339 = vmatpush1.msra.mxu0 0.0
    %1340 = vmatprep.subr.mxu0 0.0
    %1341 = vmatpush1.msra.mxu0 0.0
    %1342 = vmatprep.subr.mxu0 0.0
    %1343 = vmatpush1.msra.mxu0 0.0
    %1344 = vmatprep.subr.mxu0 0.0
    %1345 = vmatpush1.msra.mxu0 0.0
    %1346 = vmatprep.subr.mxu0 0.0
    %1347 = vmatpush1.msra.mxu0 0.0
    %1348 = vmatprep.mubr.f32.mxu0 0.0
    %1349 = vmatmul.mubr.f32.gmra.mrb[0].mxu0 %v1283
    %v1350 = vpop.f32.mrb[0].mxu0
    %v1351 = vadd.f32 %v216, %v1350
    %v1352 = vpop.f32.mrb[0].mxu0
    %v1353 = vadd.f32 %v220, %v1352
    %1354 = vdwg.mxu0
    %1355 = vmatprep.subr.mxu0 0.0
    %1356 = vmatpush1.msra.mxu0 %v165
    %1357 = vmatprep.subr.mxu0 0.0
    %1358 = vmatpush1.msra.mxu0 %v168
    %1359 = vmatprep.subr.mxu0 0.0
    %1360 = vmatpush1.msra.mxu0 %v171
    %1361 = vmatprep.subr.mxu0 0.0
    %1362 = vmatpush1.msra.mxu0 %v174
    %1363 = vmatprep.subr.mxu0 0.0
    %1364 = vmatpush1.msra.mxu0 %v177
    %1365 = vmatprep.subr.mxu0 0.0
    %1366 = vmatpush1.msra.mxu0 %v180
    %1367 = vmatprep.subr.mxu0 0.0
    %1368 = vmatpush1.msra.mxu0 %v183
    %1369 = vmatprep.subr.mxu0 0.0
    %1370 = vmatpush1.msra.mxu0 %v186
    %1371 = vmatprep.subr.mxu0 0.0
    %1372 = vmatpush1.msra.mxu0 %v189
    %1373 = vmatprep.subr.mxu0 0.0
    %1374 = vmatpush1.msra.mxu0 %v192
    %1375 = vmatprep.subr.mxu0 0.0
    %1376 = vmatpush1.msra.mxu0 %v195
    %1377 = vmatprep.subr.mxu0 0.0
    %1378 = vmatpush1.msra.mxu0 %v198
    %1379 = vmatprep.subr.mxu0 0.0
    %1380 = vmatpush1.msra.mxu0 %v201
    %1381 = vmatprep.subr.mxu0 0.0
    %1382 = vmatpush1.msra.mxu0 %v204
    %1383 = vmatprep.subr.mxu0 0.0
    %1384 = vmatpush1.msra.mxu0 %v207
    %1385 = vmatprep.subr.mxu0 0.0
    %1386 = vmatpush1.msra.mxu0 %v210
    %1387 = vmatprep.subr.mxu0 0.0
    %1388 = vmatpush1.msra.mxu0 0.0
    %1389 = vmatprep.subr.mxu0 0.0
    %1390 = vmatpush1.msra.mxu0 0.0
    %1391 = vmatprep.subr.mxu0 0.0
    %1392 = vmatpush1.msra.mxu0 0.0
    %1393 = vmatprep.subr.mxu0 0.0
    %1394 = vmatpush1.msra.mxu0 0.0
    %1395 = vmatprep.subr.mxu0 0.0
    %1396 = vmatpush1.msra.mxu0 0.0
    %1397 = vmatprep.subr.mxu0 0.0
    %1398 = vmatpush1.msra.mxu0 0.0
    %1399 = vmatprep.subr.mxu0 0.0
    %1400 = vmatpush1.msra.mxu0 0.0
    %1401 = vmatprep.subr.mxu0 0.0
    %1402 = vmatpush1.msra.mxu0 0.0
    %1403 = vmatprep.subr.mxu0 0.0
    %1404 = vmatpush1.msra.mxu0 0.0
    %1405 = vmatprep.subr.mxu0 0.0
    %1406 = vmatpush1.msra.mxu0 0.0
    %1407 = vmatprep.subr.mxu0 0.0
    %1408 = vmatpush1.msra.mxu0 0.0
    %1409 = vmatprep.subr.mxu0 0.0
    %1410 = vmatpush1.msra.mxu0 0.0
    %1411 = vmatprep.subr.mxu0 0.0
    %1412 = vmatpush1.msra.mxu0 0.0
    %1413 = vmatprep.subr.mxu0 0.0
    %1414 = vmatpush1.msra.mxu0 0.0
    %1415 = vmatprep.subr.mxu0 0.0
    %1416 = vmatpush1.msra.mxu0 0.0
    %1417 = vmatprep.subr.mxu0 0.0
    %1418 = vmatpush1.msra.mxu0 0.0
    %1419 = vmatprep.mubr.f32.mxu0 0.0
    %1420 = vmatmul.mubr.f32.gmra.mrb[0].mxu0 %v1283
    %v1421 = vpop.f32.mrb[0].mxu0
    %v1422 = vadd.f32 %v224, %v1421
    %v1423 = vpop.f32.mrb[0].mxu0
    %1424 = vdwg.mxu0
    %1425 = vmatprep.subr.mxu0 %v370
    %1426 = vmatpush1.msra.mxu0 %v369
    %1427 = vmatprep.subr.mxu0 %v373
    %1428 = vmatpush1.msra.mxu0 %v372
    %1429 = vmatprep.subr.mxu0 %v376
    %1430 = vmatpush1.msra.mxu0 %v375
    %1431 = vmatprep.subr.mxu0 %v379
    %1432 = vmatpush1.msra.mxu0 %v378
    %1433 = vmatprep.subr.mxu0 %v382
    %1434 = vmatpush1.msra.mxu0 %v381
    %1435 = vmatprep.subr.mxu0 %v385
    %1436 = vmatpush1.msra.mxu0 %v384
    %1437 = vmatprep.subr.mxu0 %v388
    %1438 = vmatpush1.msra.mxu0 %v387
    %1439 = vmatprep.subr.mxu0 %v391
    %1440 = vmatpush1.msra.mxu0 %v390
    %1441 = vmatprep.subr.mxu0 %v394
    %1442 = vmatpush1.msra.mxu0 %v393
    %1443 = vmatprep.subr.mxu0 %v397
    %1444 = vmatpush1.msra.mxu0 %v396
    %1445 = vmatprep.subr.mxu0 %v400
    %1446 = vmatpush1.msra.mxu0 %v399
    %1447 = vmatprep.subr.mxu0 %v403
    %1448 = vmatpush1.msra.mxu0 %v402
    %1449 = vmatprep.subr.mxu0 %v406
    %1450 = vmatpush1.msra.mxu0 %v405
    %1451 = vmatprep.subr.mxu0 %v409
    %1452 = vmatpush1.msra.mxu0 %v408
    %1453 = vmatprep.subr.mxu0 %v412
    %1454 = vmatpush1.msra.mxu0 %v411
    %1455 = vmatprep.subr.mxu0 %v415
    %1456 = vmatpush1.msra.mxu0 %v414
    %1457 = vmatprep.subr.mxu0 0.0
    %1458 = vmatpush1.msra.mxu0 0.0
    %1459 = vmatprep.subr.mxu0 0.0
    %1460 = vmatpush1.msra.mxu0 0.0
    %1461 = vmatprep.subr.mxu0 0.0
    %1462 = vmatpush1.msra.mxu0 0.0
    %1463 = vmatprep.subr.mxu0 0.0
    %1464 = vmatpush1.msra.mxu0 0.0
    %1465 = vmatprep.subr.mxu0 0.0
    %1466 = vmatpush1.msra.mxu0 0.0
    %1467 = vmatprep.subr.mxu0 0.0
    %1468 = vmatpush1.msra.mxu0 0.0
    %1469 = vmatprep.subr.mxu0 0.0
    %1470 = vmatpush1.msra.mxu0 0.0
    %1471 = vmatprep.subr.mxu0 0.0
    %1472 = vmatpush1.msra.mxu0 0.0
    %1473 = vmatprep.subr.mxu0 0.0
    %1474 = vmatpush1.msra.mxu0 0.0
    %1475 = vmatprep.subr.mxu0 0.0
    %1476 = vmatpush1.msra.mxu0 0.0
    %1477 = vmatprep.subr.mxu0 0.0
    %1478 = vmatpush1.msra.mxu0 0.0
    %1479 = vmatprep.subr.mxu0 0.0
    %1480 = vmatpush1.msra.mxu0 0.0
    %1481 = vmatprep.subr.mxu0 0.0
    %1482 = vmatpush1.msra.mxu0 0.0
    %1483 = vmatprep.subr.mxu0 0.0
    %1484 = vmatpush1.msra.mxu0 0.0
    %1485 = vmatprep.subr.mxu0 0.0
    %1486 = vmatpush1.msra.mxu0 0.0
    %1487 = vmatprep.subr.mxu0 0.0
    %1488 = vmatpush1.msra.mxu0 0.0
    %1489 = vmatprep.mubr.f32.mxu0 0.0
    %1490 = vmatmul.mubr.f32.gmra.mrb[0].mxu0 %v1273
    %v1491 = vpop.f32.mrb[0].mxu0
    %v1492 = vadd.f32 %v422, %v1491
    %v1493 = vpop.f32.mrb[0].mxu0
    %v1494 = vadd.f32 %v426, %v1493
    %1495 = vdwg.mxu0
    %1496 = vmatprep.subr.mxu0 0.0
    %1497 = vmatpush1.msra.mxu0 %v371
    %1498 = vmatprep.subr.mxu0 0.0
    %1499 = vmatpush1.msra.mxu0 %v374
    %1500 = vmatprep.subr.mxu0 0.0
    %1501 = vmatpush1.msra.mxu0 %v377
    %1502 = vmatprep.subr.mxu0 0.0
    %1503 = vmatpush1.msra.mxu0 %v380
    %1504 = vmatprep.subr.mxu0 0.0
    %1505 = vmatpush1.msra.mxu0 %v383
    %1506 = vmatprep.subr.mxu0 0.0
    %1507 = vmatpush1.msra.mxu0 %v386
    %1508 = vmatprep.subr.mxu0 0.0
    %1509 = vmatpush1.msra.mxu0 %v389
    %1510 = vmatprep.subr.mxu0 0.0
    %1511 = vmatpush1.msra.mxu0 %v392
    %1512 = vmatprep.subr.mxu0 0.0
    %1513 = vmatpush1.msra.mxu0 %v395
    %1514 = vmatprep.subr.mxu0 0.0
    %1515 = vmatpush1.msra.mxu0 %v398
    %1516 = vmatprep.subr.mxu0 0.0
    %1517 = vmatpush1.msra.mxu0 %v401
    %1518 = vmatprep.subr.mxu0 0.0
    %1519 = vmatpush1.msra.mxu0 %v404
    %1520 = vmatprep.subr.mxu0 0.0
    %1521 = vmatpush1.msra.mxu0 %v407
    %1522 = vmatprep.subr.mxu0 0.0
    %1523 = vmatpush1.msra.mxu0 %v410
    %1524 = vmatprep.subr.mxu0 0.0
    %1525 = vmatpush1.msra.mxu0 %v413
    %1526 = vmatprep.subr.mxu0 0.0
    %1527 = vmatpush1.msra.mxu0 %v416
    %1528 = vmatprep.subr.mxu0 0.0
    %1529 = vmatpush1.msra.mxu0 0.0
    %1530 = vmatprep.subr.mxu0 0.0
    %1531 = vmatpush1.msra.mxu0 0.0
    %1532 = vmatprep.subr.mxu0 0.0
    %1533 = vmatpush1.msra.mxu0 0.0
    %1534 = vmatprep.subr.mxu0 0.0
    %1535 = vmatpush1.msra.mxu0 0.0
    %1536 = vmatprep.subr.mxu0 0.0
    %1537 = vmatpush1.msra.mxu0 0.0
    %1538 = vmatprep.subr.mxu0 0.0
    %1539 = vmatpush1.msra.mxu0 0.0
    %1540 = vmatprep.subr.mxu0 0.0
    %1541 = vmatpush1.msra.mxu0 0.0
    %1542 = vmatprep.subr.mxu0 0.0
    %1543 = vmatpush1.msra.mxu0 0.0
    %1544 = vmatprep.subr.mxu0 0.0
    %1545 = vmatpush1.msra.mxu0 0.0
    %1546 = vmatprep.subr.mxu0 0.0
    %1547 = vmatpush1.msra.mxu0 0.0
    %1548 = vmatprep.subr.mxu0 0.0
    %1549 = vmatpush1.msra.mxu0 0.0
    %1550 = vmatprep.subr.mxu0 0.0
    %1551 = vmatpush1.msra.mxu0 0.0
    %1552 = vmatprep.subr.mxu0 0.0
    %1553 = vmatpush1.msra.mxu0 0.0
    %1554 = vmatprep.subr.mxu0 0.0
    %1555 = vmatpush1.msra.mxu0 0.0
    %1556 = vmatprep.subr.mxu0 0.0
    %1557 = vmatpush1.msra.mxu0 0.0
    %1558 = vmatprep.subr.mxu0 0.0
    %1559 = vmatpush1.msra.mxu0 0.0
    %1560 = vmatprep.mubr.f32.mxu0 0.0
    %1561 = vmatmul.mubr.f32.gmra.mrb[0].mxu0 %v1273
    %v1562 = vpop.f32.mrb[0].mxu0
    %v1563 = vadd.f32 %v430, %v1562
    %v1564 = vpop.f32.mrb[0].mxu0
    %1565 = vdwg.mxu0
    %v1566 = vadd.f32 %v1351, %v1492
    %v1567 = vxor.u32 %v1566, 2147483648
    %v1568 = vmul.f32 %v1567, 1.442695
    %v1569 = vpow.pop %v1568
    %v1570 = vadd.f32 %v1569, 1.0
    %v1571 = vrcp.pop %v1570
    %v1572 = vmul.f32 1.0, %v1571
    %v1573 = vadd.f32 %v1353, %v1494
    %v1574 = vxor.u32 %v1573, 2147483648
    %v1575 = vmul.f32 %v1574, 1.442695
    %v1576 = vpow.pop %v1575
    %v1577 = vadd.f32 %v1576, 1.0
    %v1578 = vrcp.pop %v1577
    %v1579 = vmul.f32 1.0, %v1578
    %v1580 = vmul.f32 %v1572, %v1563
    %v1581 = vadd.f32 %v1422, %v1580
    %v1582 = vtanh.pop %v1581
    %v1583 = vsub.f32 1.0, %v1579
    %v1584 = vmul.f32 %v1583, %v1582
    %v1585 = vmul.f32 %v1579, %v1273
    %v1586 = vadd.f32 %v1584, %v1585
    %vm1587 = vcmp.gt.s32.totalorder %v596, 3
    %v1588 = vsel %vm1587, 1, 0
    %v1589 = vcvt.s32.f32 %v1588
    %1591 = vset.pattern.permute.xlu0 0
    %1592 = vperm.xlu0 %1591, %v1589
    %v1593 = vpop.permute.xlu0 %1592
    %v1595 = vmul.f32 %v1593, %v1586
    %v1596 = vsub.f32 1.0, %v1589
    %1598 = vset.pattern.permute.xlu0 0
    %1599 = vperm.xlu0 %1598, %v1596
    %v1600 = vpop.permute.xlu0 %1599
    %v1602 = vmul.f32 %v1600, %v1273
    %v1603 = vadd.f32 %v1595, %v1602
    %s1604 = sld [smem:[#allocation3 + $0x200]]
    %s1605 = scalar_lea.vmem [#allocation5], %s1604
    %v1606 = vld [vmem:[%s1605] sm:$0x1]
    %s1607 = sld [smem:[#allocation3 + $0x201]]
    %s1608 = scalar_lea.vmem [#allocation5], %s1607
    %v1609 = vld [vmem:[%s1608] sm:$0x1]
    %v1611 = vrot.slane %v1609, 7
    %v1613 = vsel %vm161, %v1606, %v1611
    %1614 = vmatprep.subr.mxu0 %v164
    %1615 = vmatpush1.msra.mxu0 %v163
    %1616 = vmatprep.subr.mxu0 %v167
    %1617 = vmatpush1.msra.mxu0 %v166
    %1618 = vmatprep.subr.mxu0 %v170
    %1619 = vmatpush1.msra.mxu0 %v169
    %1620 = vmatprep.subr.mxu0 %v173
    %1621 = vmatpush1.msra.mxu0 %v172
    %1622 = vmatprep.subr.mxu0 %v176
    %1623 = vmatpush1.msra.mxu0 %v175
    %1624 = vmatprep.subr.mxu0 %v179
    %1625 = vmatpush1.msra.mxu0 %v178
    %1626 = vmatprep.subr.mxu0 %v182
    %1627 = vmatpush1.msra.mxu0 %v181
    %1628 = vmatprep.subr.mxu0 %v185
    %1629 = vmatpush1.msra.mxu0 %v184
    %1630 = vmatprep.subr.mxu0 %v188
    %1631 = vmatpush1.msra.mxu0 %v187
    %1632 = vmatprep.subr.mxu0 %v191
    %1633 = vmatpush1.msra.mxu0 %v190
    %1634 = vmatprep.subr.mxu0 %v194
    %1635 = vmatpush1.msra.mxu0 %v193
    %1636 = vmatprep.subr.mxu0 %v197
    %1637 = vmatpush1.msra.mxu0 %v196
    %1638 = vmatprep.subr.mxu0 %v200
    %1639 = vmatpush1.msra.mxu0 %v199
    %1640 = vmatprep.subr.mxu0 %v203
    %1641 = vmatpush1.msra.mxu0 %v202
    %1642 = vmatprep.subr.mxu0 %v206
    %1643 = vmatpush1.msra.mxu0 %v205
    %1644 = vmatprep.subr.mxu0 %v209
    %1645 = vmatpush1.msra.mxu0 %v208
    %1646 = vmatprep.subr.mxu0 0.0
    %1647 = vmatpush1.msra.mxu0 0.0
    %1648 = vmatprep.subr.mxu0 0.0
    %1649 = vmatpush1.msra.mxu0 0.0
    %1650 = vmatprep.subr.mxu0 0.0
    %1651 = vmatpush1.msra.mxu0 0.0
    %1652 = vmatprep.subr.mxu0 0.0
    %1653 = vmatpush1.msra.mxu0 0.0
    %1654 = vmatprep.subr.mxu0 0.0
    %1655 = vmatpush1.msra.mxu0 0.0
    %1656 = vmatprep.subr.mxu0 0.0
    %1657 = vmatpush1.msra.mxu0 0.0
    %1658 = vmatprep.subr.mxu0 0.0
    %1659 = vmatpush1.msra.mxu0 0.0
    %1660 = vmatprep.subr.mxu0 0.0
    %1661 = vmatpush1.msra.mxu0 0.0
    %1662 = vmatprep.subr.mxu0 0.0
    %1663 = vmatpush1.msra.mxu0 0.0
    %1664 = vmatprep.subr.mxu0 0.0
    %1665 = vmatpush1.msra.mxu0 0.0
    %1666 = vmatprep.subr.mxu0 0.0
    %1667 = vmatpush1.msra.mxu0 0.0
    %1668 = vmatprep.subr.mxu0 0.0
    %1669 = vmatpush1.msra.mxu0 0.0
    %1670 = vmatprep.subr.mxu0 0.0
    %1671 = vmatpush1.msra.mxu0 0.0
    %1672 = vmatprep.subr.mxu0 0.0
    %1673 = vmatpush1.msra.mxu0 0.0
    %1674 = vmatprep.subr.mxu0 0.0
    %1675 = vmatpush1.msra.mxu0 0.0
    %1676 = vmatprep.subr.mxu0 0.0
    %1677 = vmatpush1.msra.mxu0 0.0
    %1678 = vmatprep.mubr.f32.mxu0 0.0
    %1679 = vmatmul.mubr.f32.gmra.mrb[0].mxu0 %v1613
    %v1680 = vpop.f32.mrb[0].mxu0
    %v1681 = vadd.f32 %v216, %v1680
    %v1682 = vpop.f32.mrb[0].mxu0
    %v1683 = vadd.f32 %v220, %v1682
    %1684 = vdwg.mxu0
    %1685 = vmatprep.subr.mxu0 0.0
    %1686 = vmatpush1.msra.mxu0 %v165
    %1687 = vmatprep.subr.mxu0 0.0
    %1688 = vmatpush1.msra.mxu0 %v168
    %1689 = vmatprep.subr.mxu0 0.0
    %1690 = vmatpush1.msra.mxu0 %v171
    %1691 = vmatprep.subr.mxu0 0.0
    %1692 = vmatpush1.msra.mxu0 %v174
    %1693 = vmatprep.subr.mxu0 0.0
    %1694 = vmatpush1.msra.mxu0 %v177
    %1695 = vmatprep.subr.mxu0 0.0
    %1696 = vmatpush1.msra.mxu0 %v180
    %1697 = vmatprep.subr.mxu0 0.0
    %1698 = vmatpush1.msra.mxu0 %v183
    %1699 = vmatprep.subr.mxu0 0.0
    %1700 = vmatpush1.msra.mxu0 %v186
    %1701 = vmatprep.subr.mxu0 0.0
    %1702 = vmatpush1.msra.mxu0 %v189
    %1703 = vmatprep.subr.mxu0 0.0
    %1704 = vmatpush1.msra.mxu0 %v192
    %1705 = vmatprep.subr.mxu0 0.0
    %1706 = vmatpush1.msra.mxu0 %v195
    %1707 = vmatprep.subr.mxu0 0.0
    %1708 = vmatpush1.msra.mxu0 %v198
    %1709 = vmatprep.subr.mxu0 0.0
    %1710 = vmatpush1.msra.mxu0 %v201
    %1711 = vmatprep.subr.mxu0 0.0
    %1712 = vmatpush1.msra.mxu0 %v204
    %1713 = vmatprep.subr.mxu0 0.0
    %1714 = vmatpush1.msra.mxu0 %v207
    %1715 = vmatprep.subr.mxu0 0.0
    %1716 = vmatpush1.msra.mxu0 %v210
    %1717 = vmatprep.subr.mxu0 0.0
    %1718 = vmatpush1.msra.mxu0 0.0
    %1719 = vmatprep.subr.mxu0 0.0
    %1720 = vmatpush1.msra.mxu0 0.0
    %1721 = vmatprep.subr.mxu0 0.0
    %1722 = vmatpush1.msra.mxu0 0.0
    %1723 = vmatprep.subr.mxu0 0.0
    %1724 = vmatpush1.msra.mxu0 0.0
    %1725 = vmatprep.subr.mxu0 0.0
    %1726 = vmatpush1.msra.mxu0 0.0
    %1727 = vmatprep.subr.mxu0 0.0
    %1728 = vmatpush1.msra.mxu0 0.0
    %1729 = vmatprep.subr.mxu0 0.0
    %1730 = vmatpush1.msra.mxu0 0.0
    %1731 = vmatprep.subr.mxu0 0.0
    %1732 = vmatpush1.msra.mxu0 0.0
    %1733 = vmatprep.subr.mxu0 0.0
    %1734 = vmatpush1.msra.mxu0 0.0
    %1735 = vmatprep.subr.mxu0 0.0
    %1736 = vmatpush1.msra.mxu0 0.0
    %1737 = vmatprep.subr.mxu0 0.0
    %1738 = vmatpush1.msra.mxu0 0.0
    %1739 = vmatprep.subr.mxu0 0.0
    %1740 = vmatpush1.msra.mxu0 0.0
    %1741 = vmatprep.subr.mxu0 0.0
    %1742 = vmatpush1.msra.mxu0 0.0
    %1743 = vmatprep.subr.mxu0 0.0
    %1744 = vmatpush1.msra.mxu0 0.0
    %1745 = vmatprep.subr.mxu0 0.0
    %1746 = vmatpush1.msra.mxu0 0.0
    %1747 = vmatprep.subr.mxu0 0.0
    %1748 = vmatpush1.msra.mxu0 0.0
    %1749 = vmatprep.mubr.f32.mxu0 0.0
    %1750 = vmatmul.mubr.f32.gmra.mrb[0].mxu0 %v1613
    %v1751 = vpop.f32.mrb[0].mxu0
    %v1752 = vadd.f32 %v224, %v1751
    %v1753 = vpop.f32.mrb[0].mxu0
    %1754 = vdwg.mxu0
    %1755 = vmatprep.subr.mxu0 %v370
    %1756 = vmatpush1.msra.mxu0 %v369
    %1757 = vmatprep.subr.mxu0 %v373
    %1758 = vmatpush1.msra.mxu0 %v372
    %1759 = vmatprep.subr.mxu0 %v376
    %1760 = vmatpush1.msra.mxu0 %v375
    %1761 = vmatprep.subr.mxu0 %v379
    %1762 = vmatpush1.msra.mxu0 %v378
    %1763 = vmatprep.subr.mxu0 %v382
    %1764 = vmatpush1.msra.mxu0 %v381
    %1765 = vmatprep.subr.mxu0 %v385
    %1766 = vmatpush1.msra.mxu0 %v384
    %1767 = vmatprep.subr.mxu0 %v388
    %1768 = vmatpush1.msra.mxu0 %v387
    %1769 = vmatprep.subr.mxu0 %v391
    %1770 = vmatpush1.msra.mxu0 %v390
    %1771 = vmatprep.subr.mxu0 %v394
    %1772 = vmatpush1.msra.mxu0 %v393
    %1773 = vmatprep.subr.mxu0 %v397
    %1774 = vmatpush1.msra.mxu0 %v396
    %1775 = vmatprep.subr.mxu0 %v400
    %1776 = vmatpush1.msra.mxu0 %v399
    %1777 = vmatprep.subr.mxu0 %v403
    %1778 = vmatpush1.msra.mxu0 %v402
    %1779 = vmatprep.subr.mxu0 %v406
    %1780 = vmatpush1.msra.mxu0 %v405
    %1781 = vmatprep.subr.mxu0 %v409
    %1782 = vmatpush1.msra.mxu0 %v408
    %1783 = vmatprep.subr.mxu0 %v412
    %1784 = vmatpush1.msra.mxu0 %v411
    %1785 = vmatprep.subr.mxu0 %v415
    %1786 = vmatpush1.msra.mxu0 %v414
    %1787 = vmatprep.subr.mxu0 0.0
    %1788 = vmatpush1.msra.mxu0 0.0
    %1789 = vmatprep.subr.mxu0 0.0
    %1790 = vmatpush1.msra.mxu0 0.0
    %1791 = vmatprep.subr.mxu0 0.0
    %1792 = vmatpush1.msra.mxu0 0.0
    %1793 = vmatprep.subr.mxu0 0.0
    %1794 = vmatpush1.msra.mxu0 0.0
    %1795 = vmatprep.subr.mxu0 0.0
    %1796 = vmatpush1.msra.mxu0 0.0
    %1797 = vmatprep.subr.mxu0 0.0
    %1798 = vmatpush1.msra.mxu0 0.0
    %1799 = vmatprep.subr.mxu0 0.0
    %1800 = vmatpush1.msra.mxu0 0.0
    %1801 = vmatprep.subr.mxu0 0.0
    %1802 = vmatpush1.msra.mxu0 0.0
    %1803 = vmatprep.subr.mxu0 0.0
    %1804 = vmatpush1.msra.mxu0 0.0
    %1805 = vmatprep.subr.mxu0 0.0
    %1806 = vmatpush1.msra.mxu0 0.0
    %1807 = vmatprep.subr.mxu0 0.0
    %1808 = vmatpush1.msra.mxu0 0.0
    %1809 = vmatprep.subr.mxu0 0.0
    %1810 = vmatpush1.msra.mxu0 0.0
    %1811 = vmatprep.subr.mxu0 0.0
    %1812 = vmatpush1.msra.mxu0 0.0
    %1813 = vmatprep.subr.mxu0 0.0
    %1814 = vmatpush1.msra.mxu0 0.0
    %1815 = vmatprep.subr.mxu0 0.0
    %1816 = vmatpush1.msra.mxu0 0.0
    %1817 = vmatprep.subr.mxu0 0.0
    %1818 = vmatpush1.msra.mxu0 0.0
    %1819 = vmatprep.mubr.f32.mxu0 0.0
    %1820 = vmatmul.mubr.f32.gmra.mrb[0].mxu0 %v1603
    %v1821 = vpop.f32.mrb[0].mxu0
    %v1822 = vadd.f32 %v422, %v1821
    %v1823 = vpop.f32.mrb[0].mxu0
    %v1824 = vadd.f32 %v426, %v1823
    %1825 = vdwg.mxu0
    %1826 = vmatprep.subr.mxu0 0.0
    %1827 = vmatpush1.msra.mxu0 %v371
    %1828 = vmatprep.subr.mxu0 0.0
    %1829 = vmatpush1.msra.mxu0 %v374
    %1830 = vmatprep.subr.mxu0 0.0
    %1831 = vmatpush1.msra.mxu0 %v377
    %1832 = vmatprep.subr.mxu0 0.0
    %1833 = vmatpush1.msra.mxu0 %v380
    %1834 = vmatprep.subr.mxu0 0.0
    %1835 = vmatpush1.msra.mxu0 %v383
    %1836 = vmatprep.subr.mxu0 0.0
    %1837 = vmatpush1.msra.mxu0 %v386
    %1838 = vmatprep.subr.mxu0 0.0
    %1839 = vmatpush1.msra.mxu0 %v389
    %1840 = vmatprep.subr.mxu0 0.0
    %1841 = vmatpush1.msra.mxu0 %v392
    %1842 = vmatprep.subr.mxu0 0.0
    %1843 = vmatpush1.msra.mxu0 %v395
    %1844 = vmatprep.subr.mxu0 0.0
    %1845 = vmatpush1.msra.mxu0 %v398
    %1846 = vmatprep.subr.mxu0 0.0
    %1847 = vmatpush1.msra.mxu0 %v401
    %1848 = vmatprep.subr.mxu0 0.0
    %1849 = vmatpush1.msra.mxu0 %v404
    %1850 = vmatprep.subr.mxu0 0.0
    %1851 = vmatpush1.msra.mxu0 %v407
    %1852 = vmatprep.subr.mxu0 0.0
    %1853 = vmatpush1.msra.mxu0 %v410
    %1854 = vmatprep.subr.mxu0 0.0
    %1855 = vmatpush1.msra.mxu0 %v413
    %1856 = vmatprep.subr.mxu0 0.0
    %1857 = vmatpush1.msra.mxu0 %v416
    %1858 = vmatprep.subr.mxu0 0.0
    %1859 = vmatpush1.msra.mxu0 0.0
    %1860 = vmatprep.subr.mxu0 0.0
    %1861 = vmatpush1.msra.mxu0 0.0
    %1862 = vmatprep.subr.mxu0 0.0
    %1863 = vmatpush1.msra.mxu0 0.0
    %1864 = vmatprep.subr.mxu0 0.0
    %1865 = vmatpush1.msra.mxu0 0.0
    %1866 = vmatprep.subr.mxu0 0.0
    %1867 = vmatpush1.msra.mxu0 0.0
    %1868 = vmatprep.subr.mxu0 0.0
    %1869 = vmatpush1.msra.mxu0 0.0
    %1870 = vmatprep.subr.mxu0 0.0
    %1871 = vmatpush1.msra.mxu0 0.0
    %1872 = vmatprep.subr.mxu0 0.0
    %1873 = vmatpush1.msra.mxu0 0.0
    %1874 = vmatprep.subr.mxu0 0.0
    %1875 = vmatpush1.msra.mxu0 0.0
    %1876 = vmatprep.subr.mxu0 0.0
    %1877 = vmatpush1.msra.mxu0 0.0
    %1878 = vmatprep.subr.mxu0 0.0
    %1879 = vmatpush1.msra.mxu0 0.0
    %1880 = vmatprep.subr.mxu0 0.0
    %1881 = vmatpush1.msra.mxu0 0.0
    %1882 = vmatprep.subr.mxu0 0.0
    %1883 = vmatpush1.msra.mxu0 0.0
    %1884 = vmatprep.subr.mxu0 0.0
    %1885 = vmatpush1.msra.mxu0 0.0
    %1886 = vmatprep.subr.mxu0 0.0
    %1887 = vmatpush1.msra.mxu0 0.0
    %1888 = vmatprep.subr.mxu0 0.0
    %1889 = vmatpush1.msra.mxu0 0.0
    %1890 = vmatprep.mubr.f32.mxu0 0.0
    %1891 = vmatmul.mubr.f32.gmra.mrb[0].mxu0 %v1603
    %v1892 = vpop.f32.mrb[0].mxu0
    %v1893 = vadd.f32 %v430, %v1892
    %v1894 = vpop.f32.mrb[0].mxu0
    %1895 = vdwg.mxu0
    %v1896 = vadd.f32 %v1681, %v1822
    %v1897 = vxor.u32 %v1896, 2147483648
    %v1898 = vmul.f32 %v1897, 1.442695
    %v1899 = vpow.pop %v1898
    %v1900 = vadd.f32 %v1899, 1.0
    %v1901 = vrcp.pop %v1900
    %v1902 = vmul.f32 1.0, %v1901
    %v1903 = vadd.f32 %v1683, %v1824
    %v1904 = vxor.u32 %v1903, 2147483648
    %v1905 = vmul.f32 %v1904, 1.442695
    %v1906 = vpow.pop %v1905
    %v1907 = vadd.f32 %v1906, 1.0
    %v1908 = vrcp.pop %v1907
    %v1909 = vmul.f32 1.0, %v1908
    %v1910 = vmul.f32 %v1902, %v1893
    %v1911 = vadd.f32 %v1752, %v1910
    %v1912 = vtanh.pop %v1911
    %v1913 = vsub.f32 1.0, %v1909
    %v1914 = vmul.f32 %v1913, %v1912
    %v1915 = vmul.f32 %v1909, %v1603
    %v1916 = vadd.f32 %v1914, %v1915
    %vm1917 = vcmp.gt.s32.totalorder %v596, 4
    %v1918 = vsel %vm1917, 1, 0
    %v1919 = vcvt.s32.f32 %v1918
    %1921 = vset.pattern.permute.xlu0 0
    %1922 = vperm.xlu0 %1921, %v1919
    %v1923 = vpop.permute.xlu0 %1922
    %v1925 = vmul.f32 %v1923, %v1916
    %v1926 = vsub.f32 1.0, %v1919
    %1928 = vset.pattern.permute.xlu0 0
    %1929 = vperm.xlu0 %1928, %v1926
    %v1930 = vpop.permute.xlu0 %1929
    %v1932 = vmul.f32 %v1930, %v1603
    %v1933 = vadd.f32 %v1925, %v1932
    %s1934 = sld [smem:[#allocation3 + $0x280]]
    %s1935 = scalar_lea.vmem [#allocation5], %s1934
    %v1936 = vld [vmem:[%s1935] sm:$0x1]
    %s1937 = sld [smem:[#allocation3 + $0x281]]
    %s1938 = scalar_lea.vmem [#allocation5], %s1937
    %v1939 = vld [vmem:[%s1938] sm:$0x1]
    %v1941 = vrot.slane %v1939, 7
    %v1943 = vsel %vm161, %v1936, %v1941
    %1944 = vmatprep.subr.mxu0 %v164
    %1945 = vmatpush1.msra.mxu0 %v163
    %1946 = vmatprep.subr.mxu0 %v167
    %1947 = vmatpush1.msra.mxu0 %v166
    %1948 = vmatprep.subr.mxu0 %v170
    %1949 = vmatpush1.msra.mxu0 %v169
    %1950 = vmatprep.subr.mxu0 %v173
    %1951 = vmatpush1.msra.mxu0 %v172
    %1952 = vmatprep.subr.mxu0 %v176
    %1953 = vmatpush1.msra.mxu0 %v175
    %1954 = vmatprep.subr.mxu0 %v179
    %1955 = vmatpush1.msra.mxu0 %v178
    %1956 = vmatprep.subr.mxu0 %v182
    %1957 = vmatpush1.msra.mxu0 %v181
    %1958 = vmatprep.subr.mxu0 %v185
    %1959 = vmatpush1.msra.mxu0 %v184
    %1960 = vmatprep.subr.mxu0 %v188
    %1961 = vmatpush1.msra.mxu0 %v187
    %1962 = vmatprep.subr.mxu0 %v191
    %1963 = vmatpush1.msra.mxu0 %v190
    %1964 = vmatprep.subr.mxu0 %v194
    %1965 = vmatpush1.msra.mxu0 %v193
    %1966 = vmatprep.subr.mxu0 %v197
    %1967 = vmatpush1.msra.mxu0 %v196
    %1968 = vmatprep.subr.mxu0 %v200
    %1969 = vmatpush1.msra.mxu0 %v199
    %1970 = vmatprep.subr.mxu0 %v203
    %1971 = vmatpush1.msra.mxu0 %v202
    %1972 = vmatprep.subr.mxu0 %v206
    %1973 = vmatpush1.msra.mxu0 %v205
    %1974 = vmatprep.subr.mxu0 %v209
    %1975 = vmatpush1.msra.mxu0 %v208
    %1976 = vmatprep.subr.mxu0 0.0
    %1977 = vmatpush1.msra.mxu0 0.0
    %1978 = vmatprep.subr.mxu0 0.0
    %1979 = vmatpush1.msra.mxu0 0.0
    %1980 = vmatprep.subr.mxu0 0.0
    %1981 = vmatpush1.msra.mxu0 0.0
    %1982 = vmatprep.subr.mxu0 0.0
    %1983 = vmatpush1.msra.mxu0 0.0
    %1984 = vmatprep.subr.mxu0 0.0
    %1985 = vmatpush1.msra.mxu0 0.0
    %1986 = vmatprep.subr.mxu0 0.0
    %1987 = vmatpush1.msra.mxu0 0.0
    %1988 = vmatprep.subr.mxu0 0.0
    %1989 = vmatpush1.msra.mxu0 0.0
    %1990 = vmatprep.subr.mxu0 0.0
    %1991 = vmatpush1.msra.mxu0 0.0
    %1992 = vmatprep.subr.mxu0 0.0
    %1993 = vmatpush1.msra.mxu0 0.0
    %1994 = vmatprep.subr.mxu0 0.0
    %1995 = vmatpush1.msra.mxu0 0.0
    %1996 = vmatprep.subr.mxu0 0.0
    %1997 = vmatpush1.msra.mxu0 0.0
    %1998 = vmatprep.subr.mxu0 0.0
    %1999 = vmatpush1.msra.mxu0 0.0
    %2000 = vmatprep.subr.mxu0 0.0
    %2001 = vmatpush1.msra.mxu0 0.0
    %2002 = vmatprep.subr.mxu0 0.0
    %2003 = vmatpush1.msra.mxu0 0.0
    %2004 = vmatprep.subr.mxu0 0.0
    %2005 = vmatpush1.msra.mxu0 0.0
    %2006 = vmatprep.subr.mxu0 0.0
    %2007 = vmatpush1.msra.mxu0 0.0
    %2008 = vmatprep.mubr.f32.mxu0 0.0
    %2009 = vmatmul.mubr.f32.gmra.mrb[0].mxu0 %v1943
    %v2010 = vpop.f32.mrb[0].mxu0
    %v2011 = vadd.f32 %v216, %v2010
    %v2012 = vpop.f32.mrb[0].mxu0
    %v2013 = vadd.f32 %v220, %v2012
    %2014 = vdwg.mxu0
    %2015 = vmatprep.subr.mxu0 0.0
    %2016 = vmatpush1.msra.mxu0 %v165
    %2017 = vmatprep.subr.mxu0 0.0
    %2018 = vmatpush1.msra.mxu0 %v168
    %2019 = vmatprep.subr.mxu0 0.0
    %2020 = vmatpush1.msra.mxu0 %v171
    %2021 = vmatprep.subr.mxu0 0.0
    %2022 = vmatpush1.msra.mxu0 %v174
    %2023 = vmatprep.subr.mxu0 0.0
    %2024 = vmatpush1.msra.mxu0 %v177
    %2025 = vmatprep.subr.mxu0 0.0
    %2026 = vmatpush1.msra.mxu0 %v180
    %2027 = vmatprep.subr.mxu0 0.0
    %2028 = vmatpush1.msra.mxu0 %v183
    %2029 = vmatprep.subr.mxu0 0.0
    %2030 = vmatpush1.msra.mxu0 %v186
    %2031 = vmatprep.subr.mxu0 0.0
    %2032 = vmatpush1.msra.mxu0 %v189
    %2033 = vmatprep.subr.mxu0 0.0
    %2034 = vmatpush1.msra.mxu0 %v192
    %2035 = vmatprep.subr.mxu0 0.0
    %2036 = vmatpush1.msra.mxu0 %v195
    %2037 = vmatprep.subr.mxu0 0.0
    %2038 = vmatpush1.msra.mxu0 %v198
    %2039 = vmatprep.subr.mxu0 0.0
    %2040 = vmatpush1.msra.mxu0 %v201
    %2041 = vmatprep.subr.mxu0 0.0
    %2042 = vmatpush1.msra.mxu0 %v204
    %2043 = vmatprep.subr.mxu0 0.0
    %2044 = vmatpush1.msra.mxu0 %v207
    %2045 = vmatprep.subr.mxu0 0.0
    %2046 = vmatpush1.msra.mxu0 %v210
    %2047 = vmatprep.subr.mxu0 0.0
    %2048 = vmatpush1.msra.mxu0 0.0
    %2049 = vmatprep.subr.mxu0 0.0
    %2050 = vmatpush1.msra.mxu0 0.0
    %2051 = vmatprep.subr.mxu0 0.0
    %2052 = vmatpush1.msra.mxu0 0.0
    %2053 = vmatprep.subr.mxu0 0.0
    %2054 = vmatpush1.msra.mxu0 0.0
    %2055 = vmatprep.subr.mxu0 0.0
    %2056 = vmatpush1.msra.mxu0 0.0
    %2057 = vmatprep.subr.mxu0 0.0
    %2058 = vmatpush1.msra.mxu0 0.0
    %2059 = vmatprep.subr.mxu0 0.0
    %2060 = vmatpush1.msra.mxu0 0.0
    %2061 = vmatprep.subr.mxu0 0.0
    %2062 = vmatpush1.msra.mxu0 0.0
    %2063 = vmatprep.subr.mxu0 0.0
    %2064 = vmatpush1.msra.mxu0 0.0
    %2065 = vmatprep.subr.mxu0 0.0
    %2066 = vmatpush1.msra.mxu0 0.0
    %2067 = vmatprep.subr.mxu0 0.0
    %2068 = vmatpush1.msra.mxu0 0.0
    %2069 = vmatprep.subr.mxu0 0.0
    %2070 = vmatpush1.msra.mxu0 0.0
    %2071 = vmatprep.subr.mxu0 0.0
    %2072 = vmatpush1.msra.mxu0 0.0
    %2073 = vmatprep.subr.mxu0 0.0
    %2074 = vmatpush1.msra.mxu0 0.0
    %2075 = vmatprep.subr.mxu0 0.0
    %2076 = vmatpush1.msra.mxu0 0.0
    %2077 = vmatprep.subr.mxu0 0.0
    %2078 = vmatpush1.msra.mxu0 0.0
    %2079 = vmatprep.mubr.f32.mxu0 0.0
    %2080 = vmatmul.mubr.f32.gmra.mrb[0].mxu0 %v1943
    %v2081 = vpop.f32.mrb[0].mxu0
    %v2082 = vadd.f32 %v224, %v2081
    %v2083 = vpop.f32.mrb[0].mxu0
    %2084 = vdwg.mxu0
    %2085 = vmatprep.subr.mxu0 %v370
    %2086 = vmatpush1.msra.mxu0 %v369
    %2087 = vmatprep.subr.mxu0 %v373
    %2088 = vmatpush1.msra.mxu0 %v372
    %2089 = vmatprep.subr.mxu0 %v376
    %2090 = vmatpush1.msra.mxu0 %v375
    %2091 = vmatprep.subr.mxu0 %v379
    %2092 = vmatpush1.msra.mxu0 %v378
    %2093 = vmatprep.subr.mxu0 %v382
    %2094 = vmatpush1.msra.mxu0 %v381
    %2095 = vmatprep.subr.mxu0 %v385
    %2096 = vmatpush1.msra.mxu0 %v384
    %2097 = vmatprep.subr.mxu0 %v388
    %2098 = vmatpush1.msra.mxu0 %v387
    %2099 = vmatprep.subr.mxu0 %v391
    %2100 = vmatpush1.msra.mxu0 %v390
    %2101 = vmatprep.subr.mxu0 %v394
    %2102 = vmatpush1.msra.mxu0 %v393
    %2103 = vmatprep.subr.mxu0 %v397
    %2104 = vmatpush1.msra.mxu0 %v396
    %2105 = vmatprep.subr.mxu0 %v400
    %2106 = vmatpush1.msra.mxu0 %v399
    %2107 = vmatprep.subr.mxu0 %v403
    %2108 = vmatpush1.msra.mxu0 %v402
    %2109 = vmatprep.subr.mxu0 %v406
    %2110 = vmatpush1.msra.mxu0 %v405
    %2111 = vmatprep.subr.mxu0 %v409
    %2112 = vmatpush1.msra.mxu0 %v408
    %2113 = vmatprep.subr.mxu0 %v412
    %2114 = vmatpush1.msra.mxu0 %v411
    %2115 = vmatprep.subr.mxu0 %v415
    %2116 = vmatpush1.msra.mxu0 %v414
    %2117 = vmatprep.subr.mxu0 0.0
    %2118 = vmatpush1.msra.mxu0 0.0
    %2119 = vmatprep.subr.mxu0 0.0
    %2120 = vmatpush1.msra.mxu0 0.0
    %2121 = vmatprep.subr.mxu0 0.0
    %2122 = vmatpush1.msra.mxu0 0.0
    %2123 = vmatprep.subr.mxu0 0.0
    %2124 = vmatpush1.msra.mxu0 0.0
    %2125 = vmatprep.subr.mxu0 0.0
    %2126 = vmatpush1.msra.mxu0 0.0
    %2127 = vmatprep.subr.mxu0 0.0
    %2128 = vmatpush1.msra.mxu0 0.0
    %2129 = vmatprep.subr.mxu0 0.0
    %2130 = vmatpush1.msra.mxu0 0.0
    %2131 = vmatprep.subr.mxu0 0.0
    %2132 = vmatpush1.msra.mxu0 0.0
    %2133 = vmatprep.subr.mxu0 0.0
    %2134 = vmatpush1.msra.mxu0 0.0
    %2135 = vmatprep.subr.mxu0 0.0
    %2136 = vmatpush1.msra.mxu0 0.0
    %2137 = vmatprep.subr.mxu0 0.0
    %2138 = vmatpush1.msra.mxu0 0.0
    %2139 = vmatprep.subr.mxu0 0.0
    %2140 = vmatpush1.msra.mxu0 0.0
    %2141 = vmatprep.subr.mxu0 0.0
    %2142 = vmatpush1.msra.mxu0 0.0
    %2143 = vmatprep.subr.mxu0 0.0
    %2144 = vmatpush1.msra.mxu0 0.0
    %2145 = vmatprep.subr.mxu0 0.0
    %2146 = vmatpush1.msra.mxu0 0.0
    %2147 = vmatprep.subr.mxu0 0.0
    %2148 = vmatpush1.msra.mxu0 0.0
    %2149 = vmatprep.mubr.f32.mxu0 0.0
    %2150 = vmatmul.mubr.f32.gmra.mrb[0].mxu0 %v1933
    %v2151 = vpop.f32.mrb[0].mxu0
    %v2152 = vadd.f32 %v422, %v2151
    %v2153 = vpop.f32.mrb[0].mxu0
    %v2154 = vadd.f32 %v426, %v2153
    %2155 = vdwg.mxu0
    %2156 = vmatprep.subr.mxu0 0.0
    %2157 = vmatpush1.msra.mxu0 %v371
    %2158 = vmatprep.subr.mxu0 0.0
    %2159 = vmatpush1.msra.mxu0 %v374
    %2160 = vmatprep.subr.mxu0 0.0
    %2161 = vmatpush1.msra.mxu0 %v377
    %2162 = vmatprep.subr.mxu0 0.0
    %2163 = vmatpush1.msra.mxu0 %v380
    %2164 = vmatprep.subr.mxu0 0.0
    %2165 = vmatpush1.msra.mxu0 %v383
    %2166 = vmatprep.subr.mxu0 0.0
    %2167 = vmatpush1.msra.mxu0 %v386
    %2168 = vmatprep.subr.mxu0 0.0
    %2169 = vmatpush1.msra.mxu0 %v389
    %2170 = vmatprep.subr.mxu0 0.0
    %2171 = vmatpush1.msra.mxu0 %v392
    %2172 = vmatprep.subr.mxu0 0.0
    %2173 = vmatpush1.msra.mxu0 %v395
    %2174 = vmatprep.subr.mxu0 0.0
    %2175 = vmatpush1.msra.mxu0 %v398
    %2176 = vmatprep.subr.mxu0 0.0
    %2177 = vmatpush1.msra.mxu0 %v401
    %2178 = vmatprep.subr.mxu0 0.0
    %2179 = vmatpush1.msra.mxu0 %v404
    %2180 = vmatprep.subr.mxu0 0.0
    %2181 = vmatpush1.msra.mxu0 %v407
    %2182 = vmatprep.subr.mxu0 0.0
    %2183 = vmatpush1.msra.mxu0 %v410
    %2184 = vmatprep.subr.mxu0 0.0
    %2185 = vmatpush1.msra.mxu0 %v413
    %2186 = vmatprep.subr.mxu0 0.0
    %2187 = vmatpush1.msra.mxu0 %v416
    %2188 = vmatprep.subr.mxu0 0.0
    %2189 = vmatpush1.msra.mxu0 0.0
    %2190 = vmatprep.subr.mxu0 0.0
    %2191 = vmatpush1.msra.mxu0 0.0
    %2192 = vmatprep.subr.mxu0 0.0
    %2193 = vmatpush1.msra.mxu0 0.0
    %2194 = vmatprep.subr.mxu0 0.0
    %2195 = vmatpush1.msra.mxu0 0.0
    %2196 = vmatprep.subr.mxu0 0.0
    %2197 = vmatpush1.msra.mxu0 0.0
    %2198 = vmatprep.subr.mxu0 0.0
    %2199 = vmatpush1.msra.mxu0 0.0
    %2200 = vmatprep.subr.mxu0 0.0
    %2201 = vmatpush1.msra.mxu0 0.0
    %2202 = vmatprep.subr.mxu0 0.0
    %2203 = vmatpush1.msra.mxu0 0.0
    %2204 = vmatprep.subr.mxu0 0.0
    %2205 = vmatpush1.msra.mxu0 0.0
    %2206 = vmatprep.subr.mxu0 0.0
    %2207 = vmatpush1.msra.mxu0 0.0
    %2208 = vmatprep.subr.mxu0 0.0
    %2209 = vmatpush1.msra.mxu0 0.0
    %2210 = vmatprep.subr.mxu0 0.0
    %2211 = vmatpush1.msra.mxu0 0.0
    %2212 = vmatprep.subr.mxu0 0.0
    %2213 = vmatpush1.msra.mxu0 0.0
    %2214 = vmatprep.subr.mxu0 0.0
    %2215 = vmatpush1.msra.mxu0 0.0
    %2216 = vmatprep.subr.mxu0 0.0
    %2217 = vmatpush1.msra.mxu0 0.0
    %2218 = vmatprep.subr.mxu0 0.0
    %2219 = vmatpush1.msra.mxu0 0.0
    %2220 = vmatprep.mubr.f32.mxu0 0.0
    %2221 = vmatmul.mubr.f32.gmra.mrb[0].mxu0 %v1933
    %v2222 = vpop.f32.mrb[0].mxu0
    %v2223 = vadd.f32 %v430, %v2222
    %v2224 = vpop.f32.mrb[0].mxu0
    %2225 = vdwg.mxu0
    %v2226 = vadd.f32 %v2011, %v2152
    %v2227 = vxor.u32 %v2226, 2147483648
    %v2228 = vmul.f32 %v2227, 1.442695
    %v2229 = vpow.pop %v2228
    %v2230 = vadd.f32 %v2229, 1.0
    %v2231 = vrcp.pop %v2230
    %v2232 = vmul.f32 1.0, %v2231
    %v2233 = vadd.f32 %v2013, %v2154
    %v2234 = vxor.u32 %v2233, 2147483648
    %v2235 = vmul.f32 %v2234, 1.442695
    %v2236 = vpow.pop %v2235
    %v2237 = vadd.f32 %v2236, 1.0
    %v2238 = vrcp.pop %v2237
    %v2239 = vmul.f32 1.0, %v2238
    %v2240 = vmul.f32 %v2232, %v2223
    %v2241 = vadd.f32 %v2082, %v2240
    %v2242 = vtanh.pop %v2241
    %v2243 = vsub.f32 1.0, %v2239
    %v2244 = vmul.f32 %v2243, %v2242
    %v2245 = vmul.f32 %v2239, %v1933
    %v2246 = vadd.f32 %v2244, %v2245
    %vm2247 = vcmp.gt.s32.totalorder %v596, 5
    %v2248 = vsel %vm2247, 1, 0
    %v2249 = vcvt.s32.f32 %v2248
    %2251 = vset.pattern.permute.xlu0 0
    %2252 = vperm.xlu0 %2251, %v2249
    %v2253 = vpop.permute.xlu0 %2252
    %v2255 = vmul.f32 %v2253, %v2246
    %v2256 = vsub.f32 1.0, %v2249
    %2258 = vset.pattern.permute.xlu0 0
    %2259 = vperm.xlu0 %2258, %v2256
    %v2260 = vpop.permute.xlu0 %2259
    %v2262 = vmul.f32 %v2260, %v1933
    %v2263 = vadd.f32 %v2255, %v2262
    %s2264 = sld [smem:[#allocation3 + $0x300]]
    %s2265 = scalar_lea.vmem [#allocation5], %s2264
    %v2266 = vld [vmem:[%s2265] sm:$0x1]
    %s2267 = sld [smem:[#allocation3 + $0x301]]
    %s2268 = scalar_lea.vmem [#allocation5], %s2267
    %v2269 = vld [vmem:[%s2268] sm:$0x1]
    %v2271 = vrot.slane %v2269, 7
    %v2273 = vsel %vm161, %v2266, %v2271
    %2274 = vmatprep.subr.mxu0 %v164
    %2275 = vmatpush1.msra.mxu0 %v163
    %2276 = vmatprep.subr.mxu0 %v167
    %2277 = vmatpush1.msra.mxu0 %v166
    %2278 = vmatprep.subr.mxu0 %v170
    %2279 = vmatpush1.msra.mxu0 %v169
    %2280 = vmatprep.subr.mxu0 %v173
    %2281 = vmatpush1.msra.mxu0 %v172
    %2282 = vmatprep.subr.mxu0 %v176
    %2283 = vmatpush1.msra.mxu0 %v175
    %2284 = vmatprep.subr.mxu0 %v179
    %2285 = vmatpush1.msra.mxu0 %v178
    %2286 = vmatprep.subr.mxu0 %v182
    %2287 = vmatpush1.msra.mxu0 %v181
    %2288 = vmatprep.subr.mxu0 %v185
    %2289 = vmatpush1.msra.mxu0 %v184
    %2290 = vmatprep.subr.mxu0 %v188
    %2291 = vmatpush1.msra.mxu0 %v187
    %2292 = vmatprep.subr.mxu0 %v191
    %2293 = vmatpush1.msra.mxu0 %v190
    %2294 = vmatprep.subr.mxu0 %v194
    %2295 = vmatpush1.msra.mxu0 %v193
    %2296 = vmatprep.subr.mxu0 %v197
    %2297 = vmatpush1.msra.mxu0 %v196
    %2298 = vmatprep.subr.mxu0 %v200
    %2299 = vmatpush1.msra.mxu0 %v199
    %2300 = vmatprep.subr.mxu0 %v203
    %2301 = vmatpush1.msra.mxu0 %v202
    %2302 = vmatprep.subr.mxu0 %v206
    %2303 = vmatpush1.msra.mxu0 %v205
    %2304 = vmatprep.subr.mxu0 %v209
    %2305 = vmatpush1.msra.mxu0 %v208
    %2306 = vmatprep.subr.mxu0 0.0
    %2307 = vmatpush1.msra.mxu0 0.0
    %2308 = vmatprep.subr.mxu0 0.0
    %2309 = vmatpush1.msra.mxu0 0.0
    %2310 = vmatprep.subr.mxu0 0.0
    %2311 = vmatpush1.msra.mxu0 0.0
    %2312 = vmatprep.subr.mxu0 0.0
    %2313 = vmatpush1.msra.mxu0 0.0
    %2314 = vmatprep.subr.mxu0 0.0
    %2315 = vmatpush1.msra.mxu0 0.0
    %2316 = vmatprep.subr.mxu0 0.0
    %2317 = vmatpush1.msra.mxu0 0.0
    %2318 = vmatprep.subr.mxu0 0.0
    %2319 = vmatpush1.msra.mxu0 0.0
    %2320 = vmatprep.subr.mxu0 0.0
    %2321 = vmatpush1.msra.mxu0 0.0
    %2322 = vmatprep.subr.mxu0 0.0
    %2323 = vmatpush1.msra.mxu0 0.0
    %2324 = vmatprep.subr.mxu0 0.0
    %2325 = vmatpush1.msra.mxu0 0.0
    %2326 = vmatprep.subr.mxu0 0.0
    %2327 = vmatpush1.msra.mxu0 0.0
    %2328 = vmatprep.subr.mxu0 0.0
    %2329 = vmatpush1.msra.mxu0 0.0
    %2330 = vmatprep.subr.mxu0 0.0
    %2331 = vmatpush1.msra.mxu0 0.0
    %2332 = vmatprep.subr.mxu0 0.0
    %2333 = vmatpush1.msra.mxu0 0.0
    %2334 = vmatprep.subr.mxu0 0.0
    %2335 = vmatpush1.msra.mxu0 0.0
    %2336 = vmatprep.subr.mxu0 0.0
    %2337 = vmatpush1.msra.mxu0 0.0
    %2338 = vmatprep.mubr.f32.mxu0 0.0
    %2339 = vmatmul.mubr.f32.gmra.mrb[0].mxu0 %v2273
    %v2340 = vpop.f32.mrb[0].mxu0
    %v2341 = vadd.f32 %v216, %v2340
    %v2342 = vpop.f32.mrb[0].mxu0
    %v2343 = vadd.f32 %v220, %v2342
    %2344 = vdwg.mxu0
    %2345 = vmatprep.subr.mxu0 0.0
    %2346 = vmatpush1.msra.mxu0 %v165
    %2347 = vmatprep.subr.mxu0 0.0
    %2348 = vmatpush1.msra.mxu0 %v168
    %2349 = vmatprep.subr.mxu0 0.0
    %2350 = vmatpush1.msra.mxu0 %v171
    %2351 = vmatprep.subr.mxu0 0.0
    %2352 = vmatpush1.msra.mxu0 %v174
    %2353 = vmatprep.subr.mxu0 0.0
    %2354 = vmatpush1.msra.mxu0 %v177
    %2355 = vmatprep.subr.mxu0 0.0
    %2356 = vmatpush1.msra.mxu0 %v180
    %2357 = vmatprep.subr.mxu0 0.0
    %2358 = vmatpush1.msra.mxu0 %v183
    %2359 = vmatprep.subr.mxu0 0.0
    %2360 = vmatpush1.msra.mxu0 %v186
    %2361 = vmatprep.subr.mxu0 0.0
    %2362 = vmatpush1.msra.mxu0 %v189
    %2363 = vmatprep.subr.mxu0 0.0
    %2364 = vmatpush1.msra.mxu0 %v192
    %2365 = vmatprep.subr.mxu0 0.0
    %2366 = vmatpush1.msra.mxu0 %v195
    %2367 = vmatprep.subr.mxu0 0.0
    %2368 = vmatpush1.msra.mxu0 %v198
    %2369 = vmatprep.subr.mxu0 0.0
    %2370 = vmatpush1.msra.mxu0 %v201
    %2371 = vmatprep.subr.mxu0 0.0
    %2372 = vmatpush1.msra.mxu0 %v204
    %2373 = vmatprep.subr.mxu0 0.0
    %2374 = vmatpush1.msra.mxu0 %v207
    %2375 = vmatprep.subr.mxu0 0.0
    %2376 = vmatpush1.msra.mxu0 %v210
    %2377 = vmatprep.subr.mxu0 0.0
    %2378 = vmatpush1.msra.mxu0 0.0
    %2379 = vmatprep.subr.mxu0 0.0
    %2380 = vmatpush1.msra.mxu0 0.0
    %2381 = vmatprep.subr.mxu0 0.0
    %2382 = vmatpush1.msra.mxu0 0.0
    %2383 = vmatprep.subr.mxu0 0.0
    %2384 = vmatpush1.msra.mxu0 0.0
    %2385 = vmatprep.subr.mxu0 0.0
    %2386 = vmatpush1.msra.mxu0 0.0
    %2387 = vmatprep.subr.mxu0 0.0
    %2388 = vmatpush1.msra.mxu0 0.0
    %2389 = vmatprep.subr.mxu0 0.0
    %2390 = vmatpush1.msra.mxu0 0.0
    %2391 = vmatprep.subr.mxu0 0.0
    %2392 = vmatpush1.msra.mxu0 0.0
    %2393 = vmatprep.subr.mxu0 0.0
    %2394 = vmatpush1.msra.mxu0 0.0
    %2395 = vmatprep.subr.mxu0 0.0
    %2396 = vmatpush1.msra.mxu0 0.0
    %2397 = vmatprep.subr.mxu0 0.0
    %2398 = vmatpush1.msra.mxu0 0.0
    %2399 = vmatprep.subr.mxu0 0.0
    %2400 = vmatpush1.msra.mxu0 0.0
    %2401 = vmatprep.subr.mxu0 0.0
    %2402 = vmatpush1.msra.mxu0 0.0
    %2403 = vmatprep.subr.mxu0 0.0
    %2404 = vmatpush1.msra.mxu0 0.0
    %2405 = vmatprep.subr.mxu0 0.0
    %2406 = vmatpush1.msra.mxu0 0.0
    %2407 = vmatprep.subr.mxu0 0.0
    %2408 = vmatpush1.msra.mxu0 0.0
    %2409 = vmatprep.mubr.f32.mxu0 0.0
    %2410 = vmatmul.mubr.f32.gmra.mrb[0].mxu0 %v2273
    %v2411 = vpop.f32.mrb[0].mxu0
    %v2412 = vadd.f32 %v224, %v2411
    %v2413 = vpop.f32.mrb[0].mxu0
    %2414 = vdwg.mxu0
    %2415 = vmatprep.subr.mxu0 %v370
    %2416 = vmatpush1.msra.mxu0 %v369
    %2417 = vmatprep.subr.mxu0 %v373
    %2418 = vmatpush1.msra.mxu0 %v372
    %2419 = vmatprep.subr.mxu0 %v376
    %2420 = vmatpush1.msra.mxu0 %v375
    %2421 = vmatprep.subr.mxu0 %v379
    %2422 = vmatpush1.msra.mxu0 %v378
    %2423 = vmatprep.subr.mxu0 %v382
    %2424 = vmatpush1.msra.mxu0 %v381
    %2425 = vmatprep.subr.mxu0 %v385
    %2426 = vmatpush1.msra.mxu0 %v384
    %2427 = vmatprep.subr.mxu0 %v388
    %2428 = vmatpush1.msra.mxu0 %v387
    %2429 = vmatprep.subr.mxu0 %v391
    %2430 = vmatpush1.msra.mxu0 %v390
    %2431 = vmatprep.subr.mxu0 %v394
    %2432 = vmatpush1.msra.mxu0 %v393
    %2433 = vmatprep.subr.mxu0 %v397
    %2434 = vmatpush1.msra.mxu0 %v396
    %2435 = vmatprep.subr.mxu0 %v400
    %2436 = vmatpush1.msra.mxu0 %v399
    %2437 = vmatprep.subr.mxu0 %v403
    %2438 = vmatpush1.msra.mxu0 %v402
    %2439 = vmatprep.subr.mxu0 %v406
    %2440 = vmatpush1.msra.mxu0 %v405
    %2441 = vmatprep.subr.mxu0 %v409
    %2442 = vmatpush1.msra.mxu0 %v408
    %2443 = vmatprep.subr.mxu0 %v412
    %2444 = vmatpush1.msra.mxu0 %v411
    %2445 = vmatprep.subr.mxu0 %v415
    %2446 = vmatpush1.msra.mxu0 %v414
    %2447 = vmatprep.subr.mxu0 0.0
    %2448 = vmatpush1.msra.mxu0 0.0
    %2449 = vmatprep.subr.mxu0 0.0
    %2450 = vmatpush1.msra.mxu0 0.0
    %2451 = vmatprep.subr.mxu0 0.0
    %2452 = vmatpush1.msra.mxu0 0.0
    %2453 = vmatprep.subr.mxu0 0.0
    %2454 = vmatpush1.msra.mxu0 0.0
    %2455 = vmatprep.subr.mxu0 0.0
    %2456 = vmatpush1.msra.mxu0 0.0
    %2457 = vmatprep.subr.mxu0 0.0
    %2458 = vmatpush1.msra.mxu0 0.0
    %2459 = vmatprep.subr.mxu0 0.0
    %2460 = vmatpush1.msra.mxu0 0.0
    %2461 = vmatprep.subr.mxu0 0.0
    %2462 = vmatpush1.msra.mxu0 0.0
    %2463 = vmatprep.subr.mxu0 0.0
    %2464 = vmatpush1.msra.mxu0 0.0
    %2465 = vmatprep.subr.mxu0 0.0
    %2466 = vmatpush1.msra.mxu0 0.0
    %2467 = vmatprep.subr.mxu0 0.0
    %2468 = vmatpush1.msra.mxu0 0.0
    %2469 = vmatprep.subr.mxu0 0.0
    %2470 = vmatpush1.msra.mxu0 0.0
    %2471 = vmatprep.subr.mxu0 0.0
    %2472 = vmatpush1.msra.mxu0 0.0
    %2473 = vmatprep.subr.mxu0 0.0
    %2474 = vmatpush1.msra.mxu0 0.0
    %2475 = vmatprep.subr.mxu0 0.0
    %2476 = vmatpush1.msra.mxu0 0.0
    %2477 = vmatprep.subr.mxu0 0.0
    %2478 = vmatpush1.msra.mxu0 0.0
    %2479 = vmatprep.mubr.f32.mxu0 0.0
    %2480 = vmatmul.mubr.f32.gmra.mrb[0].mxu0 %v2263
    %v2481 = vpop.f32.mrb[0].mxu0
    %v2482 = vadd.f32 %v422, %v2481
    %v2483 = vpop.f32.mrb[0].mxu0
    %v2484 = vadd.f32 %v426, %v2483
    %2485 = vdwg.mxu0
    %2486 = vmatprep.subr.mxu0 0.0
    %2487 = vmatpush1.msra.mxu0 %v371
    %2488 = vmatprep.subr.mxu0 0.0
    %2489 = vmatpush1.msra.mxu0 %v374
    %2490 = vmatprep.subr.mxu0 0.0
    %2491 = vmatpush1.msra.mxu0 %v377
    %2492 = vmatprep.subr.mxu0 0.0
    %2493 = vmatpush1.msra.mxu0 %v380
    %2494 = vmatprep.subr.mxu0 0.0
    %2495 = vmatpush1.msra.mxu0 %v383
    %2496 = vmatprep.subr.mxu0 0.0
    %2497 = vmatpush1.msra.mxu0 %v386
    %2498 = vmatprep.subr.mxu0 0.0
    %2499 = vmatpush1.msra.mxu0 %v389
    %2500 = vmatprep.subr.mxu0 0.0
    %2501 = vmatpush1.msra.mxu0 %v392
    %2502 = vmatprep.subr.mxu0 0.0
    %2503 = vmatpush1.msra.mxu0 %v395
    %2504 = vmatprep.subr.mxu0 0.0
    %2505 = vmatpush1.msra.mxu0 %v398
    %2506 = vmatprep.subr.mxu0 0.0
    %2507 = vmatpush1.msra.mxu0 %v401
    %2508 = vmatprep.subr.mxu0 0.0
    %2509 = vmatpush1.msra.mxu0 %v404
    %2510 = vmatprep.subr.mxu0 0.0
    %2511 = vmatpush1.msra.mxu0 %v407
    %2512 = vmatprep.subr.mxu0 0.0
    %2513 = vmatpush1.msra.mxu0 %v410
    %2514 = vmatprep.subr.mxu0 0.0
    %2515 = vmatpush1.msra.mxu0 %v413
    %2516 = vmatprep.subr.mxu0 0.0
    %2517 = vmatpush1.msra.mxu0 %v416
    %2518 = vmatprep.subr.mxu0 0.0
    %2519 = vmatpush1.msra.mxu0 0.0
    %2520 = vmatprep.subr.mxu0 0.0
    %2521 = vmatpush1.msra.mxu0 0.0
    %2522 = vmatprep.subr.mxu0 0.0
    %2523 = vmatpush1.msra.mxu0 0.0
    %2524 = vmatprep.subr.mxu0 0.0
    %2525 = vmatpush1.msra.mxu0 0.0
    %2526 = vmatprep.subr.mxu0 0.0
    %2527 = vmatpush1.msra.mxu0 0.0
    %2528 = vmatprep.subr.mxu0 0.0
    %2529 = vmatpush1.msra.mxu0 0.0
    %2530 = vmatprep.subr.mxu0 0.0
    %2531 = vmatpush1.msra.mxu0 0.0
    %2532 = vmatprep.subr.mxu0 0.0
    %2533 = vmatpush1.msra.mxu0 0.0
    %2534 = vmatprep.subr.mxu0 0.0
    %2535 = vmatpush1.msra.mxu0 0.0
    %2536 = vmatprep.subr.mxu0 0.0
    %2537 = vmatpush1.msra.mxu0 0.0
    %2538 = vmatprep.subr.mxu0 0.0
    %2539 = vmatpush1.msra.mxu0 0.0
    %2540 = vmatprep.subr.mxu0 0.0
    %2541 = vmatpush1.msra.mxu0 0.0
    %2542 = vmatprep.subr.mxu0 0.0
    %2543 = vmatpush1.msra.mxu0 0.0
    %2544 = vmatprep.subr.mxu0 0.0
    %2545 = vmatpush1.msra.mxu0 0.0
    %2546 = vmatprep.subr.mxu0 0.0
    %2547 = vmatpush1.msra.mxu0 0.0
    %2548 = vmatprep.subr.mxu0 0.0
    %2549 = vmatpush1.msra.mxu0 0.0
    %2550 = vmatprep.mubr.f32.mxu0 0.0
    %2551 = vmatmul.mubr.f32.gmra.mrb[0].mxu0 %v2263
    %v2552 = vpop.f32.mrb[0].mxu0
    %v2553 = vadd.f32 %v430, %v2552
    %v2554 = vpop.f32.mrb[0].mxu0
    %2555 = vdwg.mxu0
    %v2556 = vadd.f32 %v2341, %v2482
    %v2557 = vxor.u32 %v2556, 2147483648
    %v2558 = vmul.f32 %v2557, 1.442695
    %v2559 = vpow.pop %v2558
    %v2560 = vadd.f32 %v2559, 1.0
    %v2561 = vrcp.pop %v2560
    %v2562 = vmul.f32 1.0, %v2561
    %v2563 = vadd.f32 %v2343, %v2484
    %v2564 = vxor.u32 %v2563, 2147483648
    %v2565 = vmul.f32 %v2564, 1.442695
    %v2566 = vpow.pop %v2565
    %v2567 = vadd.f32 %v2566, 1.0
    %v2568 = vrcp.pop %v2567
    %v2569 = vmul.f32 1.0, %v2568
    %v2570 = vmul.f32 %v2562, %v2553
    %v2571 = vadd.f32 %v2412, %v2570
    %v2572 = vtanh.pop %v2571
    %v2573 = vsub.f32 1.0, %v2569
    %v2574 = vmul.f32 %v2573, %v2572
    %v2575 = vmul.f32 %v2569, %v2263
    %v2576 = vadd.f32 %v2574, %v2575
    %vm2577 = vcmp.gt.s32.totalorder %v596, 6
    %v2578 = vsel %vm2577, 1, 0
    %v2579 = vcvt.s32.f32 %v2578
    %2581 = vset.pattern.permute.xlu0 0
    %2582 = vperm.xlu0 %2581, %v2579
    %v2583 = vpop.permute.xlu0 %2582
    %v2585 = vmul.f32 %v2583, %v2576
    %v2586 = vsub.f32 1.0, %v2579
    %2588 = vset.pattern.permute.xlu0 0
    %2589 = vperm.xlu0 %2588, %v2586
    %v2590 = vpop.permute.xlu0 %2589
    %v2592 = vmul.f32 %v2590, %v2263
    %v2593 = vadd.f32 %v2585, %v2592
    %s2594 = sld [smem:[#allocation3 + $0x380]]
    %s2595 = scalar_lea.vmem [#allocation5], %s2594
    %v2596 = vld [vmem:[%s2595] sm:$0x1]
    %s2597 = sld [smem:[#allocation3 + $0x381]]
    %s2598 = scalar_lea.vmem [#allocation5], %s2597
    %v2599 = vld [vmem:[%s2598] sm:$0x1]
    %v2601 = vrot.slane %v2599, 7
    %v2603 = vsel %vm161, %v2596, %v2601
    %2604 = vmatprep.subr.mxu0 %v164
    %2605 = vmatpush1.msra.mxu0 %v163
    %2606 = vmatprep.subr.mxu0 %v167
    %2607 = vmatpush1.msra.mxu0 %v166
    %2608 = vmatprep.subr.mxu0 %v170
    %2609 = vmatpush1.msra.mxu0 %v169
    %2610 = vmatprep.subr.mxu0 %v173
    %2611 = vmatpush1.msra.mxu0 %v172
    %2612 = vmatprep.subr.mxu0 %v176
    %2613 = vmatpush1.msra.mxu0 %v175
    %2614 = vmatprep.subr.mxu0 %v179
    %2615 = vmatpush1.msra.mxu0 %v178
    %2616 = vmatprep.subr.mxu0 %v182
    %2617 = vmatpush1.msra.mxu0 %v181
    %2618 = vmatprep.subr.mxu0 %v185
    %2619 = vmatpush1.msra.mxu0 %v184
    %2620 = vmatprep.subr.mxu0 %v188
    %2621 = vmatpush1.msra.mxu0 %v187
    %2622 = vmatprep.subr.mxu0 %v191
    %2623 = vmatpush1.msra.mxu0 %v190
    %2624 = vmatprep.subr.mxu0 %v194
    %2625 = vmatpush1.msra.mxu0 %v193
    %2626 = vmatprep.subr.mxu0 %v197
    %2627 = vmatpush1.msra.mxu0 %v196
    %2628 = vmatprep.subr.mxu0 %v200
    %2629 = vmatpush1.msra.mxu0 %v199
    %2630 = vmatprep.subr.mxu0 %v203
    %2631 = vmatpush1.msra.mxu0 %v202
    %2632 = vmatprep.subr.mxu0 %v206
    %2633 = vmatpush1.msra.mxu0 %v205
    %2634 = vmatprep.subr.mxu0 %v209
    %2635 = vmatpush1.msra.mxu0 %v208
    %2636 = vmatprep.subr.mxu0 0.0
    %2637 = vmatpush1.msra.mxu0 0.0
    %2638 = vmatprep.subr.mxu0 0.0
    %2639 = vmatpush1.msra.mxu0 0.0
    %2640 = vmatprep.subr.mxu0 0.0
    %2641 = vmatpush1.msra.mxu0 0.0
    %2642 = vmatprep.subr.mxu0 0.0
    %2643 = vmatpush1.msra.mxu0 0.0
    %2644 = vmatprep.subr.mxu0 0.0
    %2645 = vmatpush1.msra.mxu0 0.0
    %2646 = vmatprep.subr.mxu0 0.0
    %2647 = vmatpush1.msra.mxu0 0.0
    %2648 = vmatprep.subr.mxu0 0.0
    %2649 = vmatpush1.msra.mxu0 0.0
    %2650 = vmatprep.subr.mxu0 0.0
    %2651 = vmatpush1.msra.mxu0 0.0
    %2652 = vmatprep.subr.mxu0 0.0
    %2653 = vmatpush1.msra.mxu0 0.0
    %2654 = vmatprep.subr.mxu0 0.0
    %2655 = vmatpush1.msra.mxu0 0.0
    %2656 = vmatprep.subr.mxu0 0.0
    %2657 = vmatpush1.msra.mxu0 0.0
    %2658 = vmatprep.subr.mxu0 0.0
    %2659 = vmatpush1.msra.mxu0 0.0
    %2660 = vmatprep.subr.mxu0 0.0
    %2661 = vmatpush1.msra.mxu0 0.0
    %2662 = vmatprep.subr.mxu0 0.0
    %2663 = vmatpush1.msra.mxu0 0.0
    %2664 = vmatprep.subr.mxu0 0.0
    %2665 = vmatpush1.msra.mxu0 0.0
    %2666 = vmatprep.subr.mxu0 0.0
    %2667 = vmatpush1.msra.mxu0 0.0
    %2668 = vmatprep.mubr.f32.mxu0 0.0
    %2669 = vmatmul.mubr.f32.gmra.mrb[0].mxu0 %v2603
    %v2670 = vpop.f32.mrb[0].mxu0
    %v2671 = vadd.f32 %v216, %v2670
    %v2672 = vpop.f32.mrb[0].mxu0
    %v2673 = vadd.f32 %v220, %v2672
    %2674 = vdwg.mxu0
    %2675 = vmatprep.subr.mxu0 0.0
    %2676 = vmatpush1.msra.mxu0 %v165
    %2677 = vmatprep.subr.mxu0 0.0
    %2678 = vmatpush1.msra.mxu0 %v168
    %2679 = vmatprep.subr.mxu0 0.0
    %2680 = vmatpush1.msra.mxu0 %v171
    %2681 = vmatprep.subr.mxu0 0.0
    %2682 = vmatpush1.msra.mxu0 %v174
    %2683 = vmatprep.subr.mxu0 0.0
    %2684 = vmatpush1.msra.mxu0 %v177
    %2685 = vmatprep.subr.mxu0 0.0
    %2686 = vmatpush1.msra.mxu0 %v180
    %2687 = vmatprep.subr.mxu0 0.0
    %2688 = vmatpush1.msra.mxu0 %v183
    %2689 = vmatprep.subr.mxu0 0.0
    %2690 = vmatpush1.msra.mxu0 %v186
    %2691 = vmatprep.subr.mxu0 0.0
    %2692 = vmatpush1.msra.mxu0 %v189
    %2693 = vmatprep.subr.mxu0 0.0
    %2694 = vmatpush1.msra.mxu0 %v192
    %2695 = vmatprep.subr.mxu0 0.0
    %2696 = vmatpush1.msra.mxu0 %v195
    %2697 = vmatprep.subr.mxu0 0.0
    %2698 = vmatpush1.msra.mxu0 %v198
    %2699 = vmatprep.subr.mxu0 0.0
    %2700 = vmatpush1.msra.mxu0 %v201
    %2701 = vmatprep.subr.mxu0 0.0
    %2702 = vmatpush1.msra.mxu0 %v204
    %2703 = vmatprep.subr.mxu0 0.0
    %2704 = vmatpush1.msra.mxu0 %v207
    %2705 = vmatprep.subr.mxu0 0.0
    %2706 = vmatpush1.msra.mxu0 %v210
    %2707 = vmatprep.subr.mxu0 0.0
    %2708 = vmatpush1.msra.mxu0 0.0
    %2709 = vmatprep.subr.mxu0 0.0
    %2710 = vmatpush1.msra.mxu0 0.0
    %2711 = vmatprep.subr.mxu0 0.0
    %2712 = vmatpush1.msra.mxu0 0.0
    %2713 = vmatprep.subr.mxu0 0.0
    %2714 = vmatpush1.msra.mxu0 0.0
    %2715 = vmatprep.subr.mxu0 0.0
    %2716 = vmatpush1.msra.mxu0 0.0
    %2717 = vmatprep.subr.mxu0 0.0
    %2718 = vmatpush1.msra.mxu0 0.0
    %2719 = vmatprep.subr.mxu0 0.0
    %2720 = vmatpush1.msra.mxu0 0.0
    %2721 = vmatprep.subr.mxu0 0.0
    %2722 = vmatpush1.msra.mxu0 0.0
    %2723 = vmatprep.subr.mxu0 0.0
    %2724 = vmatpush1.msra.mxu0 0.0
    %2725 = vmatprep.subr.mxu0 0.0
    %2726 = vmatpush1.msra.mxu0 0.0
    %2727 = vmatprep.subr.mxu0 0.0
    %2728 = vmatpush1.msra.mxu0 0.0
    %2729 = vmatprep.subr.mxu0 0.0
    %2730 = vmatpush1.msra.mxu0 0.0
    %2731 = vmatprep.subr.mxu0 0.0
    %2732 = vmatpush1.msra.mxu0 0.0
    %2733 = vmatprep.subr.mxu0 0.0
    %2734 = vmatpush1.msra.mxu0 0.0
    %2735 = vmatprep.subr.mxu0 0.0
    %2736 = vmatpush1.msra.mxu0 0.0
    %2737 = vmatprep.subr.mxu0 0.0
    %2738 = vmatpush1.msra.mxu0 0.0
    %2739 = vmatprep.mubr.f32.mxu0 0.0
    %2740 = vmatmul.mubr.f32.gmra.mrb[0].mxu0 %v2603
    %v2741 = vpop.f32.mrb[0].mxu0
    %v2742 = vadd.f32 %v224, %v2741
    %v2743 = vpop.f32.mrb[0].mxu0
    %2744 = vdwg.mxu0
    %2745 = vmatprep.subr.mxu0 %v370
    %2746 = vmatpush1.msra.mxu0 %v369
    %2747 = vmatprep.subr.mxu0 %v373
    %2748 = vmatpush1.msra.mxu0 %v372
    %2749 = vmatprep.subr.mxu0 %v376
    %2750 = vmatpush1.msra.mxu0 %v375
    %2751 = vmatprep.subr.mxu0 %v379
    %2752 = vmatpush1.msra.mxu0 %v378
    %2753 = vmatprep.subr.mxu0 %v382
    %2754 = vmatpush1.msra.mxu0 %v381
    %2755 = vmatprep.subr.mxu0 %v385
    %2756 = vmatpush1.msra.mxu0 %v384
    %2757 = vmatprep.subr.mxu0 %v388
    %2758 = vmatpush1.msra.mxu0 %v387
    %2759 = vmatprep.subr.mxu0 %v391
    %2760 = vmatpush1.msra.mxu0 %v390
    %2761 = vmatprep.subr.mxu0 %v394
    %2762 = vmatpush1.msra.mxu0 %v393
    %2763 = vmatprep.subr.mxu0 %v397
    %2764 = vmatpush1.msra.mxu0 %v396
    %2765 = vmatprep.subr.mxu0 %v400
    %2766 = vmatpush1.msra.mxu0 %v399
    %2767 = vmatprep.subr.mxu0 %v403
    %2768 = vmatpush1.msra.mxu0 %v402
    %2769 = vmatprep.subr.mxu0 %v406
    %2770 = vmatpush1.msra.mxu0 %v405
    %2771 = vmatprep.subr.mxu0 %v409
    %2772 = vmatpush1.msra.mxu0 %v408
    %2773 = vmatprep.subr.mxu0 %v412
    %2774 = vmatpush1.msra.mxu0 %v411
    %2775 = vmatprep.subr.mxu0 %v415
    %2776 = vmatpush1.msra.mxu0 %v414
    %2777 = vmatprep.subr.mxu0 0.0
    %2778 = vmatpush1.msra.mxu0 0.0
    %2779 = vmatprep.subr.mxu0 0.0
    %2780 = vmatpush1.msra.mxu0 0.0
    %2781 = vmatprep.subr.mxu0 0.0
    %2782 = vmatpush1.msra.mxu0 0.0
    %2783 = vmatprep.subr.mxu0 0.0
    %2784 = vmatpush1.msra.mxu0 0.0
    %2785 = vmatprep.subr.mxu0 0.0
    %2786 = vmatpush1.msra.mxu0 0.0
    %2787 = vmatprep.subr.mxu0 0.0
    %2788 = vmatpush1.msra.mxu0 0.0
    %2789 = vmatprep.subr.mxu0 0.0
    %2790 = vmatpush1.msra.mxu0 0.0
    %2791 = vmatprep.subr.mxu0 0.0
    %2792 = vmatpush1.msra.mxu0 0.0
    %2793 = vmatprep.subr.mxu0 0.0
    %2794 = vmatpush1.msra.mxu0 0.0
    %2795 = vmatprep.subr.mxu0 0.0
    %2796 = vmatpush1.msra.mxu0 0.0
    %2797 = vmatprep.subr.mxu0 0.0
    %2798 = vmatpush1.msra.mxu0 0.0
    %2799 = vmatprep.subr.mxu0 0.0
    %2800 = vmatpush1.msra.mxu0 0.0
    %2801 = vmatprep.subr.mxu0 0.0
    %2802 = vmatpush1.msra.mxu0 0.0
    %2803 = vmatprep.subr.mxu0 0.0
    %2804 = vmatpush1.msra.mxu0 0.0
    %2805 = vmatprep.subr.mxu0 0.0
    %2806 = vmatpush1.msra.mxu0 0.0
    %2807 = vmatprep.subr.mxu0 0.0
    %2808 = vmatpush1.msra.mxu0 0.0
    %2809 = vmatprep.mubr.f32.mxu0 0.0
    %2810 = vmatmul.mubr.f32.gmra.mrb[0].mxu0 %v2593
    %v2811 = vpop.f32.mrb[0].mxu0
    %v2812 = vadd.f32 %v422, %v2811
    %v2813 = vpop.f32.mrb[0].mxu0
    %v2814 = vadd.f32 %v426, %v2813
    %2815 = vdwg.mxu0
    %2816 = vmatprep.subr.mxu0 0.0
    %2817 = vmatpush1.msra.mxu0 %v371
    %2818 = vmatprep.subr.mxu0 0.0
    %2819 = vmatpush1.msra.mxu0 %v374
    %2820 = vmatprep.subr.mxu0 0.0
    %2821 = vmatpush1.msra.mxu0 %v377
    %2822 = vmatprep.subr.mxu0 0.0
    %2823 = vmatpush1.msra.mxu0 %v380
    %2824 = vmatprep.subr.mxu0 0.0
    %2825 = vmatpush1.msra.mxu0 %v383
    %2826 = vmatprep.subr.mxu0 0.0
    %2827 = vmatpush1.msra.mxu0 %v386
    %2828 = vmatprep.subr.mxu0 0.0
    %2829 = vmatpush1.msra.mxu0 %v389
    %2830 = vmatprep.subr.mxu0 0.0
    %2831 = vmatpush1.msra.mxu0 %v392
    %2832 = vmatprep.subr.mxu0 0.0
    %2833 = vmatpush1.msra.mxu0 %v395
    %2834 = vmatprep.subr.mxu0 0.0
    %2835 = vmatpush1.msra.mxu0 %v398
    %2836 = vmatprep.subr.mxu0 0.0
    %2837 = vmatpush1.msra.mxu0 %v401
    %2838 = vmatprep.subr.mxu0 0.0
    %2839 = vmatpush1.msra.mxu0 %v404
    %2840 = vmatprep.subr.mxu0 0.0
    %2841 = vmatpush1.msra.mxu0 %v407
    %2842 = vmatprep.subr.mxu0 0.0
    %2843 = vmatpush1.msra.mxu0 %v410
    %2844 = vmatprep.subr.mxu0 0.0
    %2845 = vmatpush1.msra.mxu0 %v413
    %2846 = vmatprep.subr.mxu0 0.0
    %2847 = vmatpush1.msra.mxu0 %v416
    %2848 = vmatprep.subr.mxu0 0.0
    %2849 = vmatpush1.msra.mxu0 0.0
    %2850 = vmatprep.subr.mxu0 0.0
    %2851 = vmatpush1.msra.mxu0 0.0
    %2852 = vmatprep.subr.mxu0 0.0
    %2853 = vmatpush1.msra.mxu0 0.0
    %2854 = vmatprep.subr.mxu0 0.0
    %2855 = vmatpush1.msra.mxu0 0.0
    %2856 = vmatprep.subr.mxu0 0.0
    %2857 = vmatpush1.msra.mxu0 0.0
    %2858 = vmatprep.subr.mxu0 0.0
    %2859 = vmatpush1.msra.mxu0 0.0
    %2860 = vmatprep.subr.mxu0 0.0
    %2861 = vmatpush1.msra.mxu0 0.0
    %2862 = vmatprep.subr.mxu0 0.0
    %2863 = vmatpush1.msra.mxu0 0.0
    %2864 = vmatprep.subr.mxu0 0.0
    %2865 = vmatpush1.msra.mxu0 0.0
    %2866 = vmatprep.subr.mxu0 0.0
    %2867 = vmatpush1.msra.mxu0 0.0
    %2868 = vmatprep.subr.mxu0 0.0
    %2869 = vmatpush1.msra.mxu0 0.0
    %2870 = vmatprep.subr.mxu0 0.0
    %2871 = vmatpush1.msra.mxu0 0.0
    %2872 = vmatprep.subr.mxu0 0.0
    %2873 = vmatpush1.msra.mxu0 0.0
    %2874 = vmatprep.subr.mxu0 0.0
    %2875 = vmatpush1.msra.mxu0 0.0
    %2876 = vmatprep.subr.mxu0 0.0
    %2877 = vmatpush1.msra.mxu0 0.0
    %2878 = vmatprep.subr.mxu0 0.0
    %2879 = vmatpush1.msra.mxu0 0.0
    %2880 = vmatprep.mubr.f32.mxu0 0.0
    %2881 = vmatmul.mubr.f32.gmra.mrb[0].mxu0 %v2593
    %v2882 = vpop.f32.mrb[0].mxu0
    %v2883 = vadd.f32 %v430, %v2882
    %v2884 = vpop.f32.mrb[0].mxu0
    %2885 = vdwg.mxu0
    %v2886 = vadd.f32 %v2671, %v2812
    %v2887 = vxor.u32 %v2886, 2147483648
    %v2888 = vmul.f32 %v2887, 1.442695
    %v2889 = vpow.pop %v2888
    %v2890 = vadd.f32 %v2889, 1.0
    %v2891 = vrcp.pop %v2890
    %v2892 = vmul.f32 1.0, %v2891
    %v2893 = vadd.f32 %v2673, %v2814
    %v2894 = vxor.u32 %v2893, 2147483648
    %v2895 = vmul.f32 %v2894, 1.442695
    %v2896 = vpow.pop %v2895
    %v2897 = vadd.f32 %v2896, 1.0
    %v2898 = vrcp.pop %v2897
    %v2899 = vmul.f32 1.0, %v2898
    %v2900 = vmul.f32 %v2892, %v2883
    %v2901 = vadd.f32 %v2742, %v2900
    %v2902 = vtanh.pop %v2901
    %v2903 = vsub.f32 1.0, %v2899
    %v2904 = vmul.f32 %v2903, %v2902
    %v2905 = vmul.f32 %v2899, %v2593
    %v2906 = vadd.f32 %v2904, %v2905
    %vm2907 = vcmp.gt.s32.totalorder %v596, 7
    %v2908 = vsel %vm2907, 1, 0
    %v2909 = vcvt.s32.f32 %v2908
    %2911 = vset.pattern.permute.xlu0 0
    %2912 = vperm.xlu0 %2911, %v2909
    %v2913 = vpop.permute.xlu0 %2912
    %v2915 = vmul.f32 %v2913, %v2906
    %v2916 = vsub.f32 1.0, %v2909
    %2918 = vset.pattern.permute.xlu0 0
    %2919 = vperm.xlu0 %2918, %v2916
    %v2920 = vpop.permute.xlu0 %2919
    %v2922 = vmul.f32 %v2920, %v2593
    %v2923 = vadd.f32 %v2915, %v2922
    %v2924 = vlaneseq
    %v2925 = vand.u32 %v2924, 127
    %v2926 = vld [vmem:[#allocation11 + $0x2] sm:$0x1]
    %v2927 = vlaneseq
    %v2928 = vshrl.u32 %v2927, 7
    %v2929 = vsub.s32 0, %v2928
    %v2930 = vrot.slane %v2926, %v2929
    %v2931 = vld [vmem:[#allocation13] sm:$0xff]
    %v2932 = vld [vmem:[#allocation13 + $0x8] sm:$0xff]
    %v2933 = vld [vmem:[#allocation13 + $0x10] sm:$0xff]
    %v2934 = vld [vmem:[#allocation13 + $0x18] sm:$0xff]
    %v2935 = vld [vmem:[#allocation13 + $0x20] sm:$0xff]
    %v2936 = vld [vmem:[#allocation13 + $0x28] sm:$0xff]
    %v2937 = vld [vmem:[#allocation13 + $0x30] sm:$0xff]
    %v2938 = vld [vmem:[#allocation13 + $0x38] sm:$0xff]
    %v2939 = vld [vmem:[#allocation13 + $0x40] sm:$0xff]
    %v2940 = vld [vmem:[#allocation13 + $0x48] sm:$0xff]
    %v2941 = vld [vmem:[#allocation13 + $0x50] sm:$0xff]
    %v2942 = vld [vmem:[#allocation13 + $0x58] sm:$0xff]
    %v2943 = vld [vmem:[#allocation13 + $0x60] sm:$0xff]
    %v2944 = vld [vmem:[#allocation13 + $0x68] sm:$0xff]
    %v2945 = vld [vmem:[#allocation13 + $0x70] sm:$0xff]
    %v2946 = vld [vmem:[#allocation13 + $0x78] sm:$0xff]
    %v2947 = vld [vmem:[#allocation13 + $0x80] sm:$0xff]
    %v2948 = vld [vmem:[#allocation13 + $0x88] sm:$0xff]
    %v2949 = vld [vmem:[#allocation13 + $0x90] sm:$0xff]
    %v2950 = vld [vmem:[#allocation13 + $0x98] sm:$0xff]
    %v2951 = vld [vmem:[#allocation13 + $0xa0] sm:$0xff]
    %v2952 = vld [vmem:[#allocation13 + $0xa8] sm:$0xff]
    %v2953 = vld [vmem:[#allocation13 + $0xb0] sm:$0xff]
    %v2954 = vld [vmem:[#allocation13 + $0xb8] sm:$0xff]
    %v2955 = vld [vmem:[#allocation13 + $0xc0] sm:$0xff]
    %v2956 = vld [vmem:[#allocation13 + $0xc8] sm:$0xff]
    %v2957 = vld [vmem:[#allocation13 + $0xd0] sm:$0xff]
    %v2958 = vld [vmem:[#allocation13 + $0xd8] sm:$0xff]
    %v2959 = vld [vmem:[#allocation13 + $0xe0] sm:$0xff]
    %v2960 = vld [vmem:[#allocation13 + $0xe8] sm:$0xff]
    %v2961 = vld [vmem:[#allocation13 + $0xf0] sm:$0xff]
    %v2962 = vld [vmem:[#allocation13 + $0xf8] sm:$0xff]
    %v2963 = vld [vmem:[#allocation13 + $0x100] sm:$0xff]
    %v2964 = vld [vmem:[#allocation13 + $0x108] sm:$0xff]
    %v2965 = vld [vmem:[#allocation13 + $0x110] sm:$0xff]
    %v2966 = vld [vmem:[#allocation13 + $0x118] sm:$0xff]
    %v2967 = vld [vmem:[#allocation13 + $0x120] sm:$0xff]
    %v2968 = vld [vmem:[#allocation13 + $0x128] sm:$0xff]
    %v2969 = vld [vmem:[#allocation13 + $0x130] sm:$0xff]
    %v2970 = vld [vmem:[#allocation13 + $0x138] sm:$0xff]
    %v2971 = vld [vmem:[#allocation13 + $0x140] sm:$0xff]
    %v2972 = vld [vmem:[#allocation13 + $0x148] sm:$0xff]
    %v2973 = vld [vmem:[#allocation13 + $0x150] sm:$0xff]
    %v2974 = vld [vmem:[#allocation13 + $0x158] sm:$0xff]
    %v2975 = vld [vmem:[#allocation13 + $0x160] sm:$0xff]
    %v2976 = vld [vmem:[#allocation13 + $0x168] sm:$0xff]
    %v2977 = vld [vmem:[#allocation13 + $0x170] sm:$0xff]
    %v2978 = vld [vmem:[#allocation13 + $0x178] sm:$0xff]
    %v2979 = vld [vmem:[%s11] sm:$0x7]
    %v2981 = vlaneseq
    %v2982 = vshrl.u32 %v2981, 7
    %v2983 = vsub.s32 0, %v2982
    %v2984 = vrot.slane %v2979, %v2983
    %v2985 = vlaneseq
    %v2986 = vshrl.u32 %v2985, 7
    %v2987 = vsub.s32 1, %v2986
    %v2988 = vrot.slane %v2979, %v2987
    %v2989 = vlaneseq
    %v2990 = vshrl.u32 %v2989, 7
    %v2991 = vsub.s32 2, %v2990
    %v2992 = vrot.slane %v2979, %v2991
    %2996 = vmatprep.subr.mxu0 %v2932
    %2997 = vmatpush1.msra.mxu0 %v2931
    %2998 = vmatprep.subr.mxu0 %v2935
    %2999 = vmatpush1.msra.mxu0 %v2934
    %3000 = vmatprep.subr.mxu0 %v2938
    %3001 = vmatpush1.msra.mxu0 %v2937
    %3002 = vmatprep.subr.mxu0 %v2941
    %3003 = vmatpush1.msra.mxu0 %v2940
    %3004 = vmatprep.subr.mxu0 %v2944
    %3005 = vmatpush1.msra.mxu0 %v2943
    %3006 = vmatprep.subr.mxu0 %v2947
    %3007 = vmatpush1.msra.mxu0 %v2946
    %3008 = vmatprep.subr.mxu0 %v2950
    %3009 = vmatpush1.msra.mxu0 %v2949
    %3010 = vmatprep.subr.mxu0 %v2953
    %3011 = vmatpush1.msra.mxu0 %v2952
    %3012 = vmatprep.subr.mxu0 %v2956
    %3013 = vmatpush1.msra.mxu0 %v2955
    %3014 = vmatprep.subr.mxu0 %v2959
    %3015 = vmatpush1.msra.mxu0 %v2958
    %3016 = vmatprep.subr.mxu0 %v2962
    %3017 = vmatpush1.msra.mxu0 %v2961
    %3018 = vmatprep.subr.mxu0 %v2965
    %3019 = vmatpush1.msra.mxu0 %v2964
    %3020 = vmatprep.subr.mxu0 %v2968
    %3021 = vmatpush1.msra.mxu0 %v2967
    %3022 = vmatprep.subr.mxu0 %v2971
    %3023 = vmatpush1.msra.mxu0 %v2970
    %3024 = vmatprep.subr.mxu0 %v2974
    %3025 = vmatpush1.msra.mxu0 %v2973
    %3026 = vmatprep.subr.mxu0 %v2977
    %3027 = vmatpush1.msra.mxu0 %v2976
    %3028 = vmatprep.subr.mxu0 0.0
    %3029 = vmatpush1.msra.mxu0 0.0
    %3030 = vmatprep.subr.mxu0 0.0
    %3031 = vmatpush1.msra.mxu0 0.0
    %3032 = vmatprep.subr.mxu0 0.0
    %3033 = vmatpush1.msra.mxu0 0.0
    %3034 = vmatprep.subr.mxu0 0.0
    %3035 = vmatpush1.msra.mxu0 0.0
    %3036 = vmatprep.subr.mxu0 0.0
    %3037 = vmatpush1.msra.mxu0 0.0
    %3038 = vmatprep.subr.mxu0 0.0
    %3039 = vmatpush1.msra.mxu0 0.0
    %3040 = vmatprep.subr.mxu0 0.0
    %3041 = vmatpush1.msra.mxu0 0.0
    %3042 = vmatprep.subr.mxu0 0.0
    %3043 = vmatpush1.msra.mxu0 0.0
    %3044 = vmatprep.subr.mxu0 0.0
    %3045 = vmatpush1.msra.mxu0 0.0
    %3046 = vmatprep.subr.mxu0 0.0
    %3047 = vmatpush1.msra.mxu0 0.0
    %3048 = vmatprep.subr.mxu0 0.0
    %3049 = vmatpush1.msra.mxu0 0.0
    %3050 = vmatprep.subr.mxu0 0.0
    %3051 = vmatpush1.msra.mxu0 0.0
    %3052 = vmatprep.subr.mxu0 0.0
    %3053 = vmatpush1.msra.mxu0 0.0
    %3054 = vmatprep.subr.mxu0 0.0
    %3055 = vmatpush1.msra.mxu0 0.0
    %3056 = vmatprep.subr.mxu0 0.0
    %3057 = vmatpush1.msra.mxu0 0.0
    %3058 = vmatprep.subr.mxu0 0.0
    %3059 = vmatpush1.msra.mxu0 0.0
    %3060 = vmatprep.mubr.f32.mxu0 0.0
    %3061 = vmatmul.mubr.f32.gmra.mrb[0].mxu0 %v2930
    %v3062 = vpop.f32.mrb[0].mxu0
    %v3063 = vadd.f32 %v2984, %v3062
    %v3064 = vpop.f32.mrb[0].mxu0
    %v3065 = vadd.f32 %v2988, %v3064
    %3066 = vdwg.mxu0
    %3067 = vmatprep.subr.mxu0 0.0
    %3068 = vmatpush1.msra.mxu0 %v2933
    %3069 = vmatprep.subr.mxu0 0.0
    %3070 = vmatpush1.msra.mxu0 %v2936
    %3071 = vmatprep.subr.mxu0 0.0
    %3072 = vmatpush1.msra.mxu0 %v2939
    %3073 = vmatprep.subr.mxu0 0.0
    %3074 = vmatpush1.msra.mxu0 %v2942
    %3075 = vmatprep.subr.mxu0 0.0
    %3076 = vmatpush1.msra.mxu0 %v2945
    %3077 = vmatprep.subr.mxu0 0.0
    %3078 = vmatpush1.msra.mxu0 %v2948
    %3079 = vmatprep.subr.mxu0 0.0
    %3080 = vmatpush1.msra.mxu0 %v2951
    %3081 = vmatprep.subr.mxu0 0.0
    %3082 = vmatpush1.msra.mxu0 %v2954
    %3083 = vmatprep.subr.mxu0 0.0
    %3084 = vmatpush1.msra.mxu0 %v2957
    %3085 = vmatprep.subr.mxu0 0.0
    %3086 = vmatpush1.msra.mxu0 %v2960
    %3087 = vmatprep.subr.mxu0 0.0
    %3088 = vmatpush1.msra.mxu0 %v2963
    %3089 = vmatprep.subr.mxu0 0.0
    %3090 = vmatpush1.msra.mxu0 %v2966
    %3091 = vmatprep.subr.mxu0 0.0
    %3092 = vmatpush1.msra.mxu0 %v2969
    %3093 = vmatprep.subr.mxu0 0.0
    %3094 = vmatpush1.msra.mxu0 %v2972
    %3095 = vmatprep.subr.mxu0 0.0
    %3096 = vmatpush1.msra.mxu0 %v2975
    %3097 = vmatprep.subr.mxu0 0.0
    %3098 = vmatpush1.msra.mxu0 %v2978
    %3099 = vmatprep.subr.mxu0 0.0
    %3100 = vmatpush1.msra.mxu0 0.0
    %3101 = vmatprep.subr.mxu0 0.0
    %3102 = vmatpush1.msra.mxu0 0.0
    %3103 = vmatprep.subr.mxu0 0.0
    %3104 = vmatpush1.msra.mxu0 0.0
    %3105 = vmatprep.subr.mxu0 0.0
    %3106 = vmatpush1.msra.mxu0 0.0
    %3107 = vmatprep.subr.mxu0 0.0
    %3108 = vmatpush1.msra.mxu0 0.0
    %3109 = vmatprep.subr.mxu0 0.0
    %3110 = vmatpush1.msra.mxu0 0.0
    %3111 = vmatprep.subr.mxu0 0.0
    %3112 = vmatpush1.msra.mxu0 0.0
    %3113 = vmatprep.subr.mxu0 0.0
    %3114 = vmatpush1.msra.mxu0 0.0
    %3115 = vmatprep.subr.mxu0 0.0
    %3116 = vmatpush1.msra.mxu0 0.0
    %3117 = vmatprep.subr.mxu0 0.0
    %3118 = vmatpush1.msra.mxu0 0.0
    %3119 = vmatprep.subr.mxu0 0.0
    %3120 = vmatpush1.msra.mxu0 0.0
    %3121 = vmatprep.subr.mxu0 0.0
    %3122 = vmatpush1.msra.mxu0 0.0
    %3123 = vmatprep.subr.mxu0 0.0
    %3124 = vmatpush1.msra.mxu0 0.0
    %3125 = vmatprep.subr.mxu0 0.0
    %3126 = vmatpush1.msra.mxu0 0.0
    %3127 = vmatprep.subr.mxu0 0.0
    %3128 = vmatpush1.msra.mxu0 0.0
    %3129 = vmatprep.subr.mxu0 0.0
    %3130 = vmatpush1.msra.mxu0 0.0
    %3131 = vmatprep.mubr.f32.mxu0 0.0
    %3132 = vmatmul.mubr.f32.gmra.mrb[0].mxu0 %v2930
    %v3133 = vpop.f32.mrb[0].mxu0
    %v3134 = vadd.f32 %v2992, %v3133
    %v3135 = vpop.f32.mrb[0].mxu0
    %3136 = vdwg.mxu0
    %v3137 = vld [vmem:[#allocation14] sm:$0xff]
    %v3138 = vld [vmem:[#allocation14 + $0x8] sm:$0xff]
    %v3139 = vld [vmem:[#allocation14 + $0x10] sm:$0xff]
    %v3140 = vld [vmem:[#allocation14 + $0x18] sm:$0xff]
    %v3141 = vld [vmem:[#allocation14 + $0x20] sm:$0xff]
    %v3142 = vld [vmem:[#allocation14 + $0x28] sm:$0xff]
    %v3143 = vld [vmem:[#allocation14 + $0x30] sm:$0xff]
    %v3144 = vld [vmem:[#allocation14 + $0x38] sm:$0xff]
    %v3145 = vld [vmem:[#allocation14 + $0x40] sm:$0xff]
    %v3146 = vld [vmem:[#allocation14 + $0x48] sm:$0xff]
    %v3147 = vld [vmem:[#allocation14 + $0x50] sm:$0xff]
    %v3148 = vld [vmem:[#allocation14 + $0x58] sm:$0xff]
    %v3149 = vld [vmem:[#allocation14 + $0x60] sm:$0xff]
    %v3150 = vld [vmem:[#allocation14 + $0x68] sm:$0xff]
    %v3151 = vld [vmem:[#allocation14 + $0x70] sm:$0xff]
    %v3152 = vld [vmem:[#allocation14 + $0x78] sm:$0xff]
    %v3153 = vld [vmem:[#allocation14 + $0x80] sm:$0xff]
    %v3154 = vld [vmem:[#allocation14 + $0x88] sm:$0xff]
    %v3155 = vld [vmem:[#allocation14 + $0x90] sm:$0xff]
    %v3156 = vld [vmem:[#allocation14 + $0x98] sm:$0xff]
    %v3157 = vld [vmem:[#allocation14 + $0xa0] sm:$0xff]
    %v3158 = vld [vmem:[#allocation14 + $0xa8] sm:$0xff]
    %v3159 = vld [vmem:[#allocation14 + $0xb0] sm:$0xff]
    %v3160 = vld [vmem:[#allocation14 + $0xb8] sm:$0xff]
    %v3161 = vld [vmem:[#allocation14 + $0xc0] sm:$0xff]
    %v3162 = vld [vmem:[#allocation14 + $0xc8] sm:$0xff]
    %v3163 = vld [vmem:[#allocation14 + $0xd0] sm:$0xff]
    %v3164 = vld [vmem:[#allocation14 + $0xd8] sm:$0xff]
    %v3165 = vld [vmem:[#allocation14 + $0xe0] sm:$0xff]
    %v3166 = vld [vmem:[#allocation14 + $0xe8] sm:$0xff]
    %v3167 = vld [vmem:[#allocation14 + $0xf0] sm:$0xff]
    %v3168 = vld [vmem:[#allocation14 + $0xf8] sm:$0xff]
    %v3169 = vld [vmem:[#allocation14 + $0x100] sm:$0xff]
    %v3170 = vld [vmem:[#allocation14 + $0x108] sm:$0xff]
    %v3171 = vld [vmem:[#allocation14 + $0x110] sm:$0xff]
    %v3172 = vld [vmem:[#allocation14 + $0x118] sm:$0xff]
    %v3173 = vld [vmem:[#allocation14 + $0x120] sm:$0xff]
    %v3174 = vld [vmem:[#allocation14 + $0x128] sm:$0xff]
    %v3175 = vld [vmem:[#allocation14 + $0x130] sm:$0xff]
    %v3176 = vld [vmem:[#allocation14 + $0x138] sm:$0xff]
    %v3177 = vld [vmem:[#allocation14 + $0x140] sm:$0xff]
    %v3178 = vld [vmem:[#allocation14 + $0x148] sm:$0xff]
    %v3179 = vld [vmem:[#allocation14 + $0x150] sm:$0xff]
    %v3180 = vld [vmem:[#allocation14 + $0x158] sm:$0xff]
    %v3181 = vld [vmem:[#allocation14 + $0x160] sm:$0xff]
    %v3182 = vld [vmem:[#allocation14 + $0x168] sm:$0xff]
    %v3183 = vld [vmem:[#allocation14 + $0x170] sm:$0xff]
    %v3184 = vld [vmem:[#allocation14 + $0x178] sm:$0xff]
    %v3185 = vld [vmem:[%s12] sm:$0x7]
    %v3187 = vlaneseq
    %v3188 = vshrl.u32 %v3187, 7
    %v3189 = vsub.s32 0, %v3188
    %v3190 = vrot.slane %v3185, %v3189
    %v3191 = vlaneseq
    %v3192 = vshrl.u32 %v3191, 7
    %v3193 = vsub.s32 1, %v3192
    %v3194 = vrot.slane %v3185, %v3193
    %v3195 = vlaneseq
    %v3196 = vshrl.u32 %v3195, 7
    %v3197 = vsub.s32 2, %v3196
    %v3198 = vrot.slane %v3185, %v3197
    %3202 = vmatprep.subr.mxu0 %v3138
    %3203 = vmatpush1.msra.mxu0 %v3137
    %3204 = vmatprep.subr.mxu0 %v3141
    %3205 = vmatpush1.msra.mxu0 %v3140
    %3206 = vmatprep.subr.mxu0 %v3144
    %3207 = vmatpush1.msra.mxu0 %v3143
    %3208 = vmatprep.subr.mxu0 %v3147
    %3209 = vmatpush1.msra.mxu0 %v3146
    %3210 = vmatprep.subr.mxu0 %v3150
    %3211 = vmatpush1.msra.mxu0 %v3149
    %3212 = vmatprep.subr.mxu0 %v3153
    %3213 = vmatpush1.msra.mxu0 %v3152
    %3214 = vmatprep.subr.mxu0 %v3156
    %3215 = vmatpush1.msra.mxu0 %v3155
    %3216 = vmatprep.subr.mxu0 %v3159
    %3217 = vmatpush1.msra.mxu0 %v3158
    %3218 = vmatprep.subr.mxu0 %v3162
    %3219 = vmatpush1.msra.mxu0 %v3161
    %3220 = vmatprep.subr.mxu0 %v3165
    %3221 = vmatpush1.msra.mxu0 %v3164
    %3222 = vmatprep.subr.mxu0 %v3168
    %3223 = vmatpush1.msra.mxu0 %v3167
    %3224 = vmatprep.subr.mxu0 %v3171
    %3225 = vmatpush1.msra.mxu0 %v3170
    %3226 = vmatprep.subr.mxu0 %v3174
    %3227 = vmatpush1.msra.mxu0 %v3173
    %3228 = vmatprep.subr.mxu0 %v3177
    %3229 = vmatpush1.msra.mxu0 %v3176
    %3230 = vmatprep.subr.mxu0 %v3180
    %3231 = vmatpush1.msra.mxu0 %v3179
    %3232 = vmatprep.subr.mxu0 %v3183
    %3233 = vmatpush1.msra.mxu0 %v3182
    %3234 = vmatprep.subr.mxu0 0.0
    %3235 = vmatpush1.msra.mxu0 0.0
    %3236 = vmatprep.subr.mxu0 0.0
    %3237 = vmatpush1.msra.mxu0 0.0
    %3238 = vmatprep.subr.mxu0 0.0
    %3239 = vmatpush1.msra.mxu0 0.0
    %3240 = vmatprep.subr.mxu0 0.0
    %3241 = vmatpush1.msra.mxu0 0.0
    %3242 = vmatprep.subr.mxu0 0.0
    %3243 = vmatpush1.msra.mxu0 0.0
    %3244 = vmatprep.subr.mxu0 0.0
    %3245 = vmatpush1.msra.mxu0 0.0
    %3246 = vmatprep.subr.mxu0 0.0
    %3247 = vmatpush1.msra.mxu0 0.0
    %3248 = vmatprep.subr.mxu0 0.0
    %3249 = vmatpush1.msra.mxu0 0.0
    %3250 = vmatprep.subr.mxu0 0.0
    %3251 = vmatpush1.msra.mxu0 0.0
    %3252 = vmatprep.subr.mxu0 0.0
    %3253 = vmatpush1.msra.mxu0 0.0
    %3254 = vmatprep.subr.mxu0 0.0
    %3255 = vmatpush1.msra.mxu0 0.0
    %3256 = vmatprep.subr.mxu0 0.0
    %3257 = vmatpush1.msra.mxu0 0.0
    %3258 = vmatprep.subr.mxu0 0.0
    %3259 = vmatpush1.msra.mxu0 0.0
    %3260 = vmatprep.subr.mxu0 0.0
    %3261 = vmatpush1.msra.mxu0 0.0
    %3262 = vmatprep.subr.mxu0 0.0
    %3263 = vmatpush1.msra.mxu0 0.0
    %3264 = vmatprep.subr.mxu0 0.0
    %3265 = vmatpush1.msra.mxu0 0.0
    %3266 = vmatprep.mubr.f32.mxu0 0.0
    %3267 = vmatmul.mubr.f32.gmra.mrb[0].mxu0 %v2923
    %v3268 = vpop.f32.mrb[0].mxu0
    %v3269 = vadd.f32 %v3190, %v3268
    %v3270 = vpop.f32.mrb[0].mxu0
    %v3271 = vadd.f32 %v3194, %v3270
    %3272 = vdwg.mxu0
    %3273 = vmatprep.subr.mxu0 0.0
    %3274 = vmatpush1.msra.mxu0 %v3139
    %3275 = vmatprep.subr.mxu0 0.0
    %3276 = vmatpush1.msra.mxu0 %v3142
    %3277 = vmatprep.subr.mxu0 0.0
    %3278 = vmatpush1.msra.mxu0 %v3145
    %3279 = vmatprep.subr.mxu0 0.0
    %3280 = vmatpush1.msra.mxu0 %v3148
    %3281 = vmatprep.subr.mxu0 0.0
    %3282 = vmatpush1.msra.mxu0 %v3151
    %3283 = vmatprep.subr.mxu0 0.0
    %3284 = vmatpush1.msra.mxu0 %v3154
    %3285 = vmatprep.subr.mxu0 0.0
    %3286 = vmatpush1.msra.mxu0 %v3157
    %3287 = vmatprep.subr.mxu0 0.0
    %3288 = vmatpush1.msra.mxu0 %v3160
    %3289 = vmatprep.subr.mxu0 0.0
    %3290 = vmatpush1.msra.mxu0 %v3163
    %3291 = vmatprep.subr.mxu0 0.0
    %3292 = vmatpush1.msra.mxu0 %v3166
    %3293 = vmatprep.subr.mxu0 0.0
    %3294 = vmatpush1.msra.mxu0 %v3169
    %3295 = vmatprep.subr.mxu0 0.0
    %3296 = vmatpush1.msra.mxu0 %v3172
    %3297 = vmatprep.subr.mxu0 0.0
    %3298 = vmatpush1.msra.mxu0 %v3175
    %3299 = vmatprep.subr.mxu0 0.0
    %3300 = vmatpush1.msra.mxu0 %v3178
    %3301 = vmatprep.subr.mxu0 0.0
    %3302 = vmatpush1.msra.mxu0 %v3181
    %3303 = vmatprep.subr.mxu0 0.0
    %3304 = vmatpush1.msra.mxu0 %v3184
    %3305 = vmatprep.subr.mxu0 0.0
    %3306 = vmatpush1.msra.mxu0 0.0
    %3307 = vmatprep.subr.mxu0 0.0
    %3308 = vmatpush1.msra.mxu0 0.0
    %3309 = vmatprep.subr.mxu0 0.0
    %3310 = vmatpush1.msra.mxu0 0.0
    %3311 = vmatprep.subr.mxu0 0.0
    %3312 = vmatpush1.msra.mxu0 0.0
    %3313 = vmatprep.subr.mxu0 0.0
    %3314 = vmatpush1.msra.mxu0 0.0
    %3315 = vmatprep.subr.mxu0 0.0
    %3316 = vmatpush1.msra.mxu0 0.0
    %3317 = vmatprep.subr.mxu0 0.0
    %3318 = vmatpush1.msra.mxu0 0.0
    %3319 = vmatprep.subr.mxu0 0.0
    %3320 = vmatpush1.msra.mxu0 0.0
    %3321 = vmatprep.subr.mxu0 0.0
    %3322 = vmatpush1.msra.mxu0 0.0
    %3323 = vmatprep.subr.mxu0 0.0
    %3324 = vmatpush1.msra.mxu0 0.0
    %3325 = vmatprep.subr.mxu0 0.0
    %3326 = vmatpush1.msra.mxu0 0.0
    %3327 = vmatprep.subr.mxu0 0.0
    %3328 = vmatpush1.msra.mxu0 0.0
    %3329 = vmatprep.subr.mxu0 0.0
    %3330 = vmatpush1.msra.mxu0 0.0
    %3331 = vmatprep.subr.mxu0 0.0
    %3332 = vmatpush1.msra.mxu0 0.0
    %3333 = vmatprep.subr.mxu0 0.0
    %3334 = vmatpush1.msra.mxu0 0.0
    %3335 = vmatprep.subr.mxu0 0.0
    %3336 = vmatpush1.msra.mxu0 0.0
    %3337 = vmatprep.mubr.f32.mxu0 0.0
    %3338 = vmatmul.mubr.f32.gmra.mrb[0].mxu0 %v2923
    %v3339 = vpop.f32.mrb[0].mxu0
    %v3340 = vadd.f32 %v3198, %v3339
    %v3341 = vpop.f32.mrb[0].mxu0
    %3342 = vdwg.mxu0
    %v3343 = vadd.f32 %v3063, %v3269
    %v3344 = vxor.u32 %v3343, 2147483648
    %v3345 = vmul.f32 %v3344, 1.442695
    %v3346 = vpow.pop %v3345
    %v3347 = vadd.f32 %v3346, 1.0
    %v3348 = vrcp.pop %v3347
    %v3349 = vmul.f32 1.0, %v3348
    %v3350 = vadd.f32 %v3065, %v3271
    %v3351 = vxor.u32 %v3350, 2147483648
    %v3352 = vmul.f32 %v3351, 1.442695
    %v3353 = vpow.pop %v3352
    %v3354 = vadd.f32 %v3353, 1.0
    %v3355 = vrcp.pop %v3354
    %v3356 = vmul.f32 1.0, %v3355
    %v3357 = vmul.f32 %v3349, %v3340
    %v3358 = vadd.f32 %v3134, %v3357
    %v3359 = vtanh.pop %v3358
    %v3360 = vsub.f32 1.0, %v3356
    %v3361 = vmul.f32 %v3360, %v3359
    %v3362 = vmul.f32 %v3356, %v2923
    %v3363 = vadd.f32 %v3361, %v3362
    %v3364 = vld [vmem:[#allocation16] sm:$0xff]
    %v3365 = vld [vmem:[#allocation16 + $0x8] sm:$0xff]
    %v3366 = vld [vmem:[#allocation16 + $0x10] sm:$0xff]
    %v3367 = vld [vmem:[#allocation16 + $0x18] sm:$0xff]
    %v3368 = vld [vmem:[#allocation16 + $0x20] sm:$0xff]
    %v3369 = vld [vmem:[#allocation16 + $0x28] sm:$0xff]
    %v3370 = vld [vmem:[#allocation16 + $0x30] sm:$0xff]
    %v3371 = vld [vmem:[#allocation16 + $0x38] sm:$0xff]
    %v3372 = vld [vmem:[#allocation16 + $0x40] sm:$0xff]
    %v3373 = vld [vmem:[#allocation16 + $0x48] sm:$0xff]
    %v3374 = vld [vmem:[#allocation16 + $0x50] sm:$0xff]
    %v3375 = vld [vmem:[#allocation16 + $0x58] sm:$0xff]
    %v3376 = vld [vmem:[#allocation16 + $0x60] sm:$0xff]
    %v3377 = vld [vmem:[#allocation16 + $0x68] sm:$0xff]
    %v3378 = vld [vmem:[#allocation16 + $0x70] sm:$0xff]
    %v3379 = vld [vmem:[#allocation16 + $0x78] sm:$0xff]
    %v3380 = vld [vmem:[%s14] sm:$0x1]
    %v3382 = vlaneseq
    %v3383 = vshrl.u32 %v3382, 7
    %v3384 = vsub.s32 0, %v3383
    %v3385 = vrot.slane %v3380, %v3384
    %3387 = vmatprep.subr.mxu0 0.0
    %3388 = vmatpush1.msra.mxu0 %v3364
    %3389 = vmatprep.subr.mxu0 0.0
    %3390 = vmatpush1.msra.mxu0 %v3365
    %3391 = vmatprep.subr.mxu0 0.0
    %3392 = vmatpush1.msra.mxu0 %v3366
    %3393 = vmatprep.subr.mxu0 0.0
    %3394 = vmatpush1.msra.mxu0 %v3367
    %3395 = vmatprep.subr.mxu0 0.0
    %3396 = vmatpush1.msra.mxu0 %v3368
    %3397 = vmatprep.subr.mxu0 0.0
    %3398 = vmatpush1.msra.mxu0 %v3369
    %3399 = vmatprep.subr.mxu0 0.0
    %3400 = vmatpush1.msra.mxu0 %v3370
    %3401 = vmatprep.subr.mxu0 0.0
    %3402 = vmatpush1.msra.mxu0 %v3371
    %3403 = vmatprep.subr.mxu0 0.0
    %3404 = vmatpush1.msra.mxu0 %v3372
    %3405 = vmatprep.subr.mxu0 0.0
    %3406 = vmatpush1.msra.mxu0 %v3373
    %3407 = vmatprep.subr.mxu0 0.0
    %3408 = vmatpush1.msra.mxu0 %v3374
    %3409 = vmatprep.subr.mxu0 0.0
    %3410 = vmatpush1.msra.mxu0 %v3375
    %3411 = vmatprep.subr.mxu0 0.0
    %3412 = vmatpush1.msra.mxu0 %v3376
    %3413 = vmatprep.subr.mxu0 0.0
    %3414 = vmatpush1.msra.mxu0 %v3377
    %3415 = vmatprep.subr.mxu0 0.0
    %3416 = vmatpush1.msra.mxu0 %v3378
    %3417 = vmatprep.subr.mxu0 0.0
    %3418 = vmatpush1.msra.mxu0 %v3379
    %3419 = vmatprep.subr.mxu0 0.0
    %3420 = vmatpush1.msra.mxu0 0.0
    %3421 = vmatprep.subr.mxu0 0.0
    %3422 = vmatpush1.msra.mxu0 0.0
    %3423 = vmatprep.subr.mxu0 0.0
    %3424 = vmatpush1.msra.mxu0 0.0
    %3425 = vmatprep.subr.mxu0 0.0
    %3426 = vmatpush1.msra.mxu0 0.0
    %3427 = vmatprep.subr.mxu0 0.0
    %3428 = vmatpush1.msra.mxu0 0.0
    %3429 = vmatprep.subr.mxu0 0.0
    %3430 = vmatpush1.msra.mxu0 0.0
    %3431 = vmatprep.subr.mxu0 0.0
    %3432 = vmatpush1.msra.mxu0 0.0
    %3433 = vmatprep.subr.mxu0 0.0
    %3434 = vmatpush1.msra.mxu0 0.0
    %3435 = vmatprep.subr.mxu0 0.0
    %3436 = vmatpush1.msra.mxu0 0.0
    %3437 = vmatprep.subr.mxu0 0.0
    %3438 = vmatpush1.msra.mxu0 0.0
    %3439 = vmatprep.subr.mxu0 0.0
    %3440 = vmatpush1.msra.mxu0 0.0
    %3441 = vmatprep.subr.mxu0 0.0
    %3442 = vmatpush1.msra.mxu0 0.0
    %3443 = vmatprep.subr.mxu0 0.0
    %3444 = vmatpush1.msra.mxu0 0.0
    %3445 = vmatprep.subr.mxu0 0.0
    %3446 = vmatpush1.msra.mxu0 0.0
    %3447 = vmatprep.subr.mxu0 0.0
    %3448 = vmatpush1.msra.mxu0 0.0
    %3449 = vmatprep.subr.mxu0 0.0
    %3450 = vmatpush1.msra.mxu0 0.0
    %3451 = vmatprep.mubr.f32.mxu0 0.0
    %3452 = vmatmul.mubr.f32.gmra.mrb[0].mxu0 %v3363
    %v3453 = vpop.f32.mrb[0].mxu0
    %v3454 = vadd.f32 %v3385, %v3453
    %v3455 = vpop.f32.mrb[0].mxu0
    %3456 = vdwg.mxu0
    %3457 = vst [vmem:[#allocation17] sm:$0x3] %v3454
    %vm3458 = vcmp.lt.s32.totalorder %v2925, 13
    %v3459 = vsel %vm3458, %v3454, -1e+30
    %vm3460 = vcmask 1041408
    %v3461 = vsel %vm3460, %v3459, -inf
    %3462 = vmax.xlane.f32.xlu0 %v3461
    %v3463 = vpop.xlane.xlu0 %3462
    %vm3464 = vcmp.eq.f32.partialorder %v3459, %v3463
    %v3465 = vsel %vm3464, %v2925, 128
    %v3466 = vsel %vm3460, %v3465, 2147483647
    %v3467 = vand.u32 %v3466, 65535
    %v3468 = vshra.s32 %v3466, 16
    %v3469 = vcvt.s32.f32 %v3467
    %v3470 = vcvt.s32.f32 %v3468
    %3471 = vmin.xlane.f32.xlu0 %v3470
    %v3472 = vpop.xlane.xlu0 %3471
    %vm3473 = vcmp.eq.f32.partialorder %v3470, %v3472
    %v3474 = vsel %vm3473, %v3469, inf
    %3475 = vmin.xlane.f32.xlu0 %v3474
    %v3476 = vpop.xlane.xlu0 %3475
    %v3477 = vcvt.f32.s32 %v3476
    %v3478 = vcvt.f32.s32 %v3472
    %v3479 = vshll.u32 %v3478, 16
    %v3480 = vadd.s32 %v3479, %v3477
    %vm3481 = vcmp.eq.s32.totalorder %v2925, %v3480
    %v3482 = vsel %vm3481, 1, 0
    %v3483 = vcvt.s32.f32 %v3482
    %v3484 = vld [vmem:[#allocation11] sm:$0xff]
    %v3485 = vld [vmem:[#allocation11 + $0x8] sm:$0xff]
    %v3486 = vld [vmem:[#allocation11 + $0x10] sm:$0xff]
    %v3487 = vld [vmem:[#allocation11 + $0x18] sm:$0xff]
    %v3488 = vld [vmem:[#allocation11 + $0x20] sm:$0xff]
    %v3489 = vld [vmem:[#allocation11 + $0x28] sm:$0xff]
    %v3490 = vld [vmem:[#allocation11 + $0x30] sm:$0xff]
    %v3491 = vld [vmem:[#allocation11 + $0x38] sm:$0xff]
    %v3492 = vld [vmem:[#allocation11 + $0x40] sm:$0xff]
    %v3493 = vld [vmem:[#allocation11 + $0x48] sm:$0xff]
    %v3494 = vld [vmem:[#allocation11 + $0x50] sm:$0xff]
    %v3495 = vld [vmem:[#allocation11 + $0x58] sm:$0xff]
    %v3496 = vld [vmem:[#allocation11 + $0x60] sm:$0xff]
    %v3497 = vld [vmem:[#allocation11 + $0x68] sm:$0xff]
    %v3498 = vld [vmem:[#allocation11 + $0x70] sm:$0xff]
    %v3499 = vld [vmem:[#allocation11 + $0x78] sm:$0xff]
    %3500 = vmatprep.subr.mxu0 0.0
    %3501 = vmatpush1.msra.mxu0 %v3484
    %3502 = vmatprep.subr.mxu0 0.0
    %3503 = vmatpush1.msra.mxu0 %v3485
    %3504 = vmatprep.subr.mxu0 0.0
    %3505 = vmatpush1.msra.mxu0 %v3486
    %3506 = vmatprep.subr.mxu0 0.0
    %3507 = vmatpush1.msra.mxu0 %v3487
    %3508 = vmatprep.subr.mxu0 0.0
    %3509 = vmatpush1.msra.mxu0 %v3488
    %3510 = vmatprep.subr.mxu0 0.0
    %3511 = vmatpush1.msra.mxu0 %v3489
    %3512 = vmatprep.subr.mxu0 0.0
    %3513 = vmatpush1.msra.mxu0 %v3490
    %3514 = vmatprep.subr.mxu0 0.0
    %3515 = vmatpush1.msra.mxu0 %v3491
    %3516 = vmatprep.subr.mxu0 0.0
    %3517 = vmatpush1.msra.mxu0 %v3492
    %3518 = vmatprep.subr.mxu0 0.0
    %3519 = vmatpush1.msra.mxu0 %v3493
    %3520 = vmatprep.subr.mxu0 0.0
    %3521 = vmatpush1.msra.mxu0 %v3494
    %3522 = vmatprep.subr.mxu0 0.0
    %3523 = vmatpush1.msra.mxu0 %v3495
    %3524 = vmatprep.subr.mxu0 0.0
    %3525 = vmatpush1.msra.mxu0 %v3496
    %3526 = vmatprep.subr.mxu0 0.0
    %3527 = vmatpush1.msra.mxu0 %v3497
    %3528 = vmatprep.subr.mxu0 0.0
    %3529 = vmatpush1.msra.mxu0 %v3498
    %3530 = vmatprep.subr.mxu0 0.0
    %3531 = vmatpush1.msra.mxu0 %v3499
    %3532 = vmatprep.subr.mxu0 0.0
    %3533 = vmatpush1.msra.mxu0 0.0
    %3534 = vmatprep.subr.mxu0 0.0
    %3535 = vmatpush1.msra.mxu0 0.0
    %3536 = vmatprep.subr.mxu0 0.0
    %3537 = vmatpush1.msra.mxu0 0.0
    %3538 = vmatprep.subr.mxu0 0.0
    %3539 = vmatpush1.msra.mxu0 0.0
    %3540 = vmatprep.subr.mxu0 0.0
    %3541 = vmatpush1.msra.mxu0 0.0
    %3542 = vmatprep.subr.mxu0 0.0
    %3543 = vmatpush1.msra.mxu0 0.0
    %3544 = vmatprep.subr.mxu0 0.0
    %3545 = vmatpush1.msra.mxu0 0.0
    %3546 = vmatprep.subr.mxu0 0.0
    %3547 = vmatpush1.msra.mxu0 0.0
    %3548 = vmatprep.subr.mxu0 0.0
    %3549 = vmatpush1.msra.mxu0 0.0
    %3550 = vmatprep.subr.mxu0 0.0
    %3551 = vmatpush1.msra.mxu0 0.0
    %3552 = vmatprep.subr.mxu0 0.0
    %3553 = vmatpush1.msra.mxu0 0.0
    %3554 = vmatprep.subr.mxu0 0.0
    %3555 = vmatpush1.msra.mxu0 0.0
    %3556 = vmatprep.subr.mxu0 0.0
    %3557 = vmatpush1.msra.mxu0 0.0
    %3558 = vmatprep.subr.mxu0 0.0
    %3559 = vmatpush1.msra.mxu0 0.0
    %3560 = vmatprep.subr.mxu0 0.0
    %3561 = vmatpush1.msra.mxu0 0.0
    %3562 = vmatprep.subr.mxu0 0.0
    %3563 = vmatpush1.msra.mxu0 0.0
    %3564 = vmatprep.mubr.f32.mxu0 0.0
    %3565 = vmatmul.mubr.f32.gmra.mrb[0].mxu0 %v3483
    %v3566 = vpop.f32.mrb[0].mxu0
    %v3567 = vadd.f32 0.0, %v3566
    %v3568 = vpop.f32.mrb[0].mxu0
    %3569 = vdwg.mxu0
    %v3570 = vld [vmem:[#allocation13] sm:$0xff]
    %v3571 = vld [vmem:[#allocation13 + $0x8] sm:$0xff]
    %v3572 = vld [vmem:[#allocation13 + $0x10] sm:$0xff]
    %v3573 = vld [vmem:[#allocation13 + $0x18] sm:$0xff]
    %v3574 = vld [vmem:[#allocation13 + $0x20] sm:$0xff]
    %v3575 = vld [vmem:[#allocation13 + $0x28] sm:$0xff]
    %v3576 = vld [vmem:[#allocation13 + $0x30] sm:$0xff]
    %v3577 = vld [vmem:[#allocation13 + $0x38] sm:$0xff]
    %v3578 = vld [vmem:[#allocation13 + $0x40] sm:$0xff]
    %v3579 = vld [vmem:[#allocation13 + $0x48] sm:$0xff]
    %v3580 = vld [vmem:[#allocation13 + $0x50] sm:$0xff]
    %v3581 = vld [vmem:[#allocation13 + $0x58] sm:$0xff]
    %v3582 = vld [vmem:[#allocation13 + $0x60] sm:$0xff]
    %v3583 = vld [vmem:[#allocation13 + $0x68] sm:$0xff]
    %v3584 = vld [vmem:[#allocation13 + $0x70] sm:$0xff]
    %v3585 = vld [vmem:[#allocation13 + $0x78] sm:$0xff]
    %v3586 = vld [vmem:[#allocation13 + $0x80] sm:$0xff]
    %v3587 = vld [vmem:[#allocation13 + $0x88] sm:$0xff]
    %v3588 = vld [vmem:[#allocation13 + $0x90] sm:$0xff]
    %v3589 = vld [vmem:[#allocation13 + $0x98] sm:$0xff]
    %v3590 = vld [vmem:[#allocation13 + $0xa0] sm:$0xff]
    %v3591 = vld [vmem:[#allocation13 + $0xa8] sm:$0xff]
    %v3592 = vld [vmem:[#allocation13 + $0xb0] sm:$0xff]
    %v3593 = vld [vmem:[#allocation13 + $0xb8] sm:$0xff]
    %v3594 = vld [vmem:[#allocation13 + $0xc0] sm:$0xff]
    %v3595 = vld [vmem:[#allocation13 + $0xc8] sm:$0xff]
    %v3596 = vld [vmem:[#allocation13 + $0xd0] sm:$0xff]
    %v3597 = vld [vmem:[#allocation13 + $0xd8] sm:$0xff]
    %v3598 = vld [vmem:[#allocation13 + $0xe0] sm:$0xff]
    %v3599 = vld [vmem:[#allocation13 + $0xe8] sm:$0xff]
    %v3600 = vld [vmem:[#allocation13 + $0xf0] sm:$0xff]
    %v3601 = vld [vmem:[#allocation13 + $0xf8] sm:$0xff]
    %v3602 = vld [vmem:[#allocation13 + $0x100] sm:$0xff]
    %v3603 = vld [vmem:[#allocation13 + $0x108] sm:$0xff]
    %v3604 = vld [vmem:[#allocation13 + $0x110] sm:$0xff]
    %v3605 = vld [vmem:[#allocation13 + $0x118] sm:$0xff]
    %v3606 = vld [vmem:[#allocation13 + $0x120] sm:$0xff]
    %v3607 = vld [vmem:[#allocation13 + $0x128] sm:$0xff]
    %v3608 = vld [vmem:[#allocation13 + $0x130] sm:$0xff]
    %v3609 = vld [vmem:[#allocation13 + $0x138] sm:$0xff]
    %v3610 = vld [vmem:[#allocation13 + $0x140] sm:$0xff]
    %v3611 = vld [vmem:[#allocation13 + $0x148] sm:$0xff]
    %v3612 = vld [vmem:[#allocation13 + $0x150] sm:$0xff]
    %v3613 = vld [vmem:[#allocation13 + $0x158] sm:$0xff]
    %v3614 = vld [vmem:[#allocation13 + $0x160] sm:$0xff]
    %v3615 = vld [vmem:[#allocation13 + $0x168] sm:$0xff]
    %v3616 = vld [vmem:[#allocation13 + $0x170] sm:$0xff]
    %v3617 = vld [vmem:[#allocation13 + $0x178] sm:$0xff]
    %v3618 = vld [vmem:[%s11] sm:$0x7]
    %v3620 = vlaneseq
    %v3621 = vshrl.u32 %v3620, 7
    %v3622 = vsub.s32 0, %v3621
    %v3623 = vrot.slane %v3618, %v3622
    %v3624 = vlaneseq
    %v3625 = vshrl.u32 %v3624, 7
    %v3626 = vsub.s32 1, %v3625
    %v3627 = vrot.slane %v3618, %v3626
    %v3628 = vlaneseq
    %v3629 = vshrl.u32 %v3628, 7
    %v3630 = vsub.s32 2, %v3629
    %v3631 = vrot.slane %v3618, %v3630
    %3635 = vmatprep.subr.mxu0 %v3571
    %3636 = vmatpush1.msra.mxu0 %v3570
    %3637 = vmatprep.subr.mxu0 %v3574
    %3638 = vmatpush1.msra.mxu0 %v3573
    %3639 = vmatprep.subr.mxu0 %v3577
    %3640 = vmatpush1.msra.mxu0 %v3576
    %3641 = vmatprep.subr.mxu0 %v3580
    %3642 = vmatpush1.msra.mxu0 %v3579
    %3643 = vmatprep.subr.mxu0 %v3583
    %3644 = vmatpush1.msra.mxu0 %v3582
    %3645 = vmatprep.subr.mxu0 %v3586
    %3646 = vmatpush1.msra.mxu0 %v3585
    %3647 = vmatprep.subr.mxu0 %v3589
    %3648 = vmatpush1.msra.mxu0 %v3588
    %3649 = vmatprep.subr.mxu0 %v3592
    %3650 = vmatpush1.msra.mxu0 %v3591
    %3651 = vmatprep.subr.mxu0 %v3595
    %3652 = vmatpush1.msra.mxu0 %v3594
    %3653 = vmatprep.subr.mxu0 %v3598
    %3654 = vmatpush1.msra.mxu0 %v3597
    %3655 = vmatprep.subr.mxu0 %v3601
    %3656 = vmatpush1.msra.mxu0 %v3600
    %3657 = vmatprep.subr.mxu0 %v3604
    %3658 = vmatpush1.msra.mxu0 %v3603
    %3659 = vmatprep.subr.mxu0 %v3607
    %3660 = vmatpush1.msra.mxu0 %v3606
    %3661 = vmatprep.subr.mxu0 %v3610
    %3662 = vmatpush1.msra.mxu0 %v3609
    %3663 = vmatprep.subr.mxu0 %v3613
    %3664 = vmatpush1.msra.mxu0 %v3612
    %3665 = vmatprep.subr.mxu0 %v3616
    %3666 = vmatpush1.msra.mxu0 %v3615
    %3667 = vmatprep.subr.mxu0 0.0
    %3668 = vmatpush1.msra.mxu0 0.0
    %3669 = vmatprep.subr.mxu0 0.0
    %3670 = vmatpush1.msra.mxu0 0.0
    %3671 = vmatprep.subr.mxu0 0.0
    %3672 = vmatpush1.msra.mxu0 0.0
    %3673 = vmatprep.subr.mxu0 0.0
    %3674 = vmatpush1.msra.mxu0 0.0
    %3675 = vmatprep.subr.mxu0 0.0
    %3676 = vmatpush1.msra.mxu0 0.0
    %3677 = vmatprep.subr.mxu0 0.0
    %3678 = vmatpush1.msra.mxu0 0.0
    %3679 = vmatprep.subr.mxu0 0.0
    %3680 = vmatpush1.msra.mxu0 0.0
    %3681 = vmatprep.subr.mxu0 0.0
    %3682 = vmatpush1.msra.mxu0 0.0
    %3683 = vmatprep.subr.mxu0 0.0
    %3684 = vmatpush1.msra.mxu0 0.0
    %3685 = vmatprep.subr.mxu0 0.0
    %3686 = vmatpush1.msra.mxu0 0.0
    %3687 = vmatprep.subr.mxu0 0.0
    %3688 = vmatpush1.msra.mxu0 0.0
    %3689 = vmatprep.subr.mxu0 0.0
    %3690 = vmatpush1.msra.mxu0 0.0
    %3691 = vmatprep.subr.mxu0 0.0
    %3692 = vmatpush1.msra.mxu0 0.0
    %3693 = vmatprep.subr.mxu0 0.0
    %3694 = vmatpush1.msra.mxu0 0.0
    %3695 = vmatprep.subr.mxu0 0.0
    %3696 = vmatpush1.msra.mxu0 0.0
    %3697 = vmatprep.subr.mxu0 0.0
    %3698 = vmatpush1.msra.mxu0 0.0
    %3699 = vmatprep.mubr.f32.mxu0 0.0
    %3700 = vmatmul.mubr.f32.gmra.mrb[0].mxu0 %v3567
    %v3701 = vpop.f32.mrb[0].mxu0
    %v3702 = vadd.f32 %v3623, %v3701
    %v3703 = vpop.f32.mrb[0].mxu0
    %v3704 = vadd.f32 %v3627, %v3703
    %3705 = vdwg.mxu0
    %3706 = vmatprep.subr.mxu0 0.0
    %3707 = vmatpush1.msra.mxu0 %v3572
    %3708 = vmatprep.subr.mxu0 0.0
    %3709 = vmatpush1.msra.mxu0 %v3575
    %3710 = vmatprep.subr.mxu0 0.0
    %3711 = vmatpush1.msra.mxu0 %v3578
    %3712 = vmatprep.subr.mxu0 0.0
    %3713 = vmatpush1.msra.mxu0 %v3581
    %3714 = vmatprep.subr.mxu0 0.0
    %3715 = vmatpush1.msra.mxu0 %v3584
    %3716 = vmatprep.subr.mxu0 0.0
    %3717 = vmatpush1.msra.mxu0 %v3587
    %3718 = vmatprep.subr.mxu0 0.0
    %3719 = vmatpush1.msra.mxu0 %v3590
    %3720 = vmatprep.subr.mxu0 0.0
    %3721 = vmatpush1.msra.mxu0 %v3593
    %3722 = vmatprep.subr.mxu0 0.0
    %3723 = vmatpush1.msra.mxu0 %v3596
    %3724 = vmatprep.subr.mxu0 0.0
    %3725 = vmatpush1.msra.mxu0 %v3599
    %3726 = vmatprep.subr.mxu0 0.0
    %3727 = vmatpush1.msra.mxu0 %v3602
    %3728 = vmatprep.subr.mxu0 0.0
    %3729 = vmatpush1.msra.mxu0 %v3605
    %3730 = vmatprep.subr.mxu0 0.0
    %3731 = vmatpush1.msra.mxu0 %v3608
    %3732 = vmatprep.subr.mxu0 0.0
    %3733 = vmatpush1.msra.mxu0 %v3611
    %3734 = vmatprep.subr.mxu0 0.0
    %3735 = vmatpush1.msra.mxu0 %v3614
    %3736 = vmatprep.subr.mxu0 0.0
    %3737 = vmatpush1.msra.mxu0 %v3617
    %3738 = vmatprep.subr.mxu0 0.0
    %3739 = vmatpush1.msra.mxu0 0.0
    %3740 = vmatprep.subr.mxu0 0.0
    %3741 = vmatpush1.msra.mxu0 0.0
    %3742 = vmatprep.subr.mxu0 0.0
    %3743 = vmatpush1.msra.mxu0 0.0
    %3744 = vmatprep.subr.mxu0 0.0
    %3745 = vmatpush1.msra.mxu0 0.0
    %3746 = vmatprep.subr.mxu0 0.0
    %3747 = vmatpush1.msra.mxu0 0.0
    %3748 = vmatprep.subr.mxu0 0.0
    %3749 = vmatpush1.msra.mxu0 0.0
    %3750 = vmatprep.subr.mxu0 0.0
    %3751 = vmatpush1.msra.mxu0 0.0
    %3752 = vmatprep.subr.mxu0 0.0
    %3753 = vmatpush1.msra.mxu0 0.0
    %3754 = vmatprep.subr.mxu0 0.0
    %3755 = vmatpush1.msra.mxu0 0.0
    %3756 = vmatprep.subr.mxu0 0.0
    %3757 = vmatpush1.msra.mxu0 0.0
    %3758 = vmatprep.subr.mxu0 0.0
    %3759 = vmatpush1.msra.mxu0 0.0
    %3760 = vmatprep.subr.mxu0 0.0
    %3761 = vmatpush1.msra.mxu0 0.0
    %3762 = vmatprep.subr.mxu0 0.0
    %3763 = vmatpush1.msra.mxu0 0.0
    %3764 = vmatprep.subr.mxu0 0.0
    %3765 = vmatpush1.msra.mxu0 0.0
    %3766 = vmatprep.subr.mxu0 0.0
    %3767 = vmatpush1.msra.mxu0 0.0
    %3768 = vmatprep.subr.mxu0 0.0
    %3769 = vmatpush1.msra.mxu0 0.0
    %3770 = vmatprep.mubr.f32.mxu0 0.0
    %3771 = vmatmul.mubr.f32.gmra.mrb[0].mxu0 %v3567
    %v3772 = vpop.f32.mrb[0].mxu0
    %v3773 = vadd.f32 %v3631, %v3772
    %v3774 = vpop.f32.mrb[0].mxu0
    %3775 = vdwg.mxu0
    %v3776 = vld [vmem:[#allocation14] sm:$0xff]
    %v3777 = vld [vmem:[#allocation14 + $0x8] sm:$0xff]
    %v3778 = vld [vmem:[#allocation14 + $0x10] sm:$0xff]
    %v3779 = vld [vmem:[#allocation14 + $0x18] sm:$0xff]
    %v3780 = vld [vmem:[#allocation14 + $0x20] sm:$0xff]
    %v3781 = vld [vmem:[#allocation14 + $0x28] sm:$0xff]
    %v3782 = vld [vmem:[#allocation14 + $0x30] sm:$0xff]
    %v3783 = vld [vmem:[#allocation14 + $0x38] sm:$0xff]
    %v3784 = vld [vmem:[#allocation14 + $0x40] sm:$0xff]
    %v3785 = vld [vmem:[#allocation14 + $0x48] sm:$0xff]
    %v3786 = vld [vmem:[#allocation14 + $0x50] sm:$0xff]
    %v3787 = vld [vmem:[#allocation14 + $0x58] sm:$0xff]
    %v3788 = vld [vmem:[#allocation14 + $0x60] sm:$0xff]
    %v3789 = vld [vmem:[#allocation14 + $0x68] sm:$0xff]
    %v3790 = vld [vmem:[#allocation14 + $0x70] sm:$0xff]
    %v3791 = vld [vmem:[#allocation14 + $0x78] sm:$0xff]
    %v3792 = vld [vmem:[#allocation14 + $0x80] sm:$0xff]
    %v3793 = vld [vmem:[#allocation14 + $0x88] sm:$0xff]
    %v3794 = vld [vmem:[#allocation14 + $0x90] sm:$0xff]
    %v3795 = vld [vmem:[#allocation14 + $0x98] sm:$0xff]
    %v3796 = vld [vmem:[#allocation14 + $0xa0] sm:$0xff]
    %v3797 = vld [vmem:[#allocation14 + $0xa8] sm:$0xff]
    %v3798 = vld [vmem:[#allocation14 + $0xb0] sm:$0xff]
    %v3799 = vld [vmem:[#allocation14 + $0xb8] sm:$0xff]
    %v3800 = vld [vmem:[#allocation14 + $0xc0] sm:$0xff]
    %v3801 = vld [vmem:[#allocation14 + $0xc8] sm:$0xff]
    %v3802 = vld [vmem:[#allocation14 + $0xd0] sm:$0xff]
    %v3803 = vld [vmem:[#allocation14 + $0xd8] sm:$0xff]
    %v3804 = vld [vmem:[#allocation14 + $0xe0] sm:$0xff]
    %v3805 = vld [vmem:[#allocation14 + $0xe8] sm:$0xff]
    %v3806 = vld [vmem:[#allocation14 + $0xf0] sm:$0xff]
    %v3807 = vld [vmem:[#allocation14 + $0xf8] sm:$0xff]
    %v3808 = vld [vmem:[#allocation14 + $0x100] sm:$0xff]
    %v3809 = vld [vmem:[#allocation14 + $0x108] sm:$0xff]
    %v3810 = vld [vmem:[#allocation14 + $0x110] sm:$0xff]
    %v3811 = vld [vmem:[#allocation14 + $0x118] sm:$0xff]
    %v3812 = vld [vmem:[#allocation14 + $0x120] sm:$0xff]
    %v3813 = vld [vmem:[#allocation14 + $0x128] sm:$0xff]
    %v3814 = vld [vmem:[#allocation14 + $0x130] sm:$0xff]
    %v3815 = vld [vmem:[#allocation14 + $0x138] sm:$0xff]
    %v3816 = vld [vmem:[#allocation14 + $0x140] sm:$0xff]
    %v3817 = vld [vmem:[#allocation14 + $0x148] sm:$0xff]
    %v3818 = vld [vmem:[#allocation14 + $0x150] sm:$0xff]
    %v3819 = vld [vmem:[#allocation14 + $0x158] sm:$0xff]
    %v3820 = vld [vmem:[#allocation14 + $0x160] sm:$0xff]
    %v3821 = vld [vmem:[#allocation14 + $0x168] sm:$0xff]
    %v3822 = vld [vmem:[#allocation14 + $0x170] sm:$0xff]
    %v3823 = vld [vmem:[#allocation14 + $0x178] sm:$0xff]
    %v3824 = vld [vmem:[%s12] sm:$0x7]
    %v3826 = vlaneseq
    %v3827 = vshrl.u32 %v3826, 7
    %v3828 = vsub.s32 0, %v3827
    %v3829 = vrot.slane %v3824, %v3828
    %v3830 = vlaneseq
    %v3831 = vshrl.u32 %v3830, 7
    %v3832 = vsub.s32 1, %v3831
    %v3833 = vrot.slane %v3824, %v3832
    %v3834 = vlaneseq
    %v3835 = vshrl.u32 %v3834, 7
    %v3836 = vsub.s32 2, %v3835
    %v3837 = vrot.slane %v3824, %v3836
    %3841 = vmatprep.subr.mxu0 %v3777
    %3842 = vmatpush1.msra.mxu0 %v3776
    %3843 = vmatprep.subr.mxu0 %v3780
    %3844 = vmatpush1.msra.mxu0 %v3779
    %3845 = vmatprep.subr.mxu0 %v3783
    %3846 = vmatpush1.msra.mxu0 %v3782
    %3847 = vmatprep.subr.mxu0 %v3786
    %3848 = vmatpush1.msra.mxu0 %v3785
    %3849 = vmatprep.subr.mxu0 %v3789
    %3850 = vmatpush1.msra.mxu0 %v3788
    %3851 = vmatprep.subr.mxu0 %v3792
    %3852 = vmatpush1.msra.mxu0 %v3791
    %3853 = vmatprep.subr.mxu0 %v3795
    %3854 = vmatpush1.msra.mxu0 %v3794
    %3855 = vmatprep.subr.mxu0 %v3798
    %3856 = vmatpush1.msra.mxu0 %v3797
    %3857 = vmatprep.subr.mxu0 %v3801
    %3858 = vmatpush1.msra.mxu0 %v3800
    %3859 = vmatprep.subr.mxu0 %v3804
    %3860 = vmatpush1.msra.mxu0 %v3803
    %3861 = vmatprep.subr.mxu0 %v3807
    %3862 = vmatpush1.msra.mxu0 %v3806
    %3863 = vmatprep.subr.mxu0 %v3810
    %3864 = vmatpush1.msra.mxu0 %v3809
    %3865 = vmatprep.subr.mxu0 %v3813
    %3866 = vmatpush1.msra.mxu0 %v3812
    %3867 = vmatprep.subr.mxu0 %v3816
    %3868 = vmatpush1.msra.mxu0 %v3815
    %3869 = vmatprep.subr.mxu0 %v3819
    %3870 = vmatpush1.msra.mxu0 %v3818
    %3871 = vmatprep.subr.mxu0 %v3822
    %3872 = vmatpush1.msra.mxu0 %v3821
    %3873 = vmatprep.subr.mxu0 0.0
    %3874 = vmatpush1.msra.mxu0 0.0
    %3875 = vmatprep.subr.mxu0 0.0
    %3876 = vmatpush1.msra.mxu0 0.0
    %3877 = vmatprep.subr.mxu0 0.0
    %3878 = vmatpush1.msra.mxu0 0.0
    %3879 = vmatprep.subr.mxu0 0.0
    %3880 = vmatpush1.msra.mxu0 0.0
    %3881 = vmatprep.subr.mxu0 0.0
    %3882 = vmatpush1.msra.mxu0 0.0
    %3883 = vmatprep.subr.mxu0 0.0
    %3884 = vmatpush1.msra.mxu0 0.0
    %3885 = vmatprep.subr.mxu0 0.0
    %3886 = vmatpush1.msra.mxu0 0.0
    %3887 = vmatprep.subr.mxu0 0.0
    %3888 = vmatpush1.msra.mxu0 0.0
    %3889 = vmatprep.subr.mxu0 0.0
    %3890 = vmatpush1.msra.mxu0 0.0
    %3891 = vmatprep.subr.mxu0 0.0
    %3892 = vmatpush1.msra.mxu0 0.0
    %3893 = vmatprep.subr.mxu0 0.0
    %3894 = vmatpush1.msra.mxu0 0.0
    %3895 = vmatprep.subr.mxu0 0.0
    %3896 = vmatpush1.msra.mxu0 0.0
    %3897 = vmatprep.subr.mxu0 0.0
    %3898 = vmatpush1.msra.mxu0 0.0
    %3899 = vmatprep.subr.mxu0 0.0
    %3900 = vmatpush1.msra.mxu0 0.0
    %3901 = vmatprep.subr.mxu0 0.0
    %3902 = vmatpush1.msra.mxu0 0.0
    %3903 = vmatprep.subr.mxu0 0.0
    %3904 = vmatpush1.msra.mxu0 0.0
    %3905 = vmatprep.mubr.f32.mxu0 0.0
    %3906 = vmatmul.mubr.f32.gmra.mrb[0].mxu0 %v3363
    %v3907 = vpop.f32.mrb[0].mxu0
    %v3908 = vadd.f32 %v3829, %v3907
    %v3909 = vpop.f32.mrb[0].mxu0
    %v3910 = vadd.f32 %v3833, %v3909
    %3911 = vdwg.mxu0
    %3912 = vmatprep.subr.mxu0 0.0
    %3913 = vmatpush1.msra.mxu0 %v3778
    %3914 = vmatprep.subr.mxu0 0.0
    %3915 = vmatpush1.msra.mxu0 %v3781
    %3916 = vmatprep.subr.mxu0 0.0
    %3917 = vmatpush1.msra.mxu0 %v3784
    %3918 = vmatprep.subr.mxu0 0.0
    %3919 = vmatpush1.msra.mxu0 %v3787
    %3920 = vmatprep.subr.mxu0 0.0
    %3921 = vmatpush1.msra.mxu0 %v3790
    %3922 = vmatprep.subr.mxu0 0.0
    %3923 = vmatpush1.msra.mxu0 %v3793
    %3924 = vmatprep.subr.mxu0 0.0
    %3925 = vmatpush1.msra.mxu0 %v3796
    %3926 = vmatprep.subr.mxu0 0.0
    %3927 = vmatpush1.msra.mxu0 %v3799
    %3928 = vmatprep.subr.mxu0 0.0
    %3929 = vmatpush1.msra.mxu0 %v3802
    %3930 = vmatprep.subr.mxu0 0.0
    %3931 = vmatpush1.msra.mxu0 %v3805
    %3932 = vmatprep.subr.mxu0 0.0
    %3933 = vmatpush1.msra.mxu0 %v3808
    %3934 = vmatprep.subr.mxu0 0.0
    %3935 = vmatpush1.msra.mxu0 %v3811
    %3936 = vmatprep.subr.mxu0 0.0
    %3937 = vmatpush1.msra.mxu0 %v3814
    %3938 = vmatprep.subr.mxu0 0.0
    %3939 = vmatpush1.msra.mxu0 %v3817
    %3940 = vmatprep.subr.mxu0 0.0
    %3941 = vmatpush1.msra.mxu0 %v3820
    %3942 = vmatprep.subr.mxu0 0.0
    %3943 = vmatpush1.msra.mxu0 %v3823
    %3944 = vmatprep.subr.mxu0 0.0
    %3945 = vmatpush1.msra.mxu0 0.0
    %3946 = vmatprep.subr.mxu0 0.0
    %3947 = vmatpush1.msra.mxu0 0.0
    %3948 = vmatprep.subr.mxu0 0.0
    %3949 = vmatpush1.msra.mxu0 0.0
    %3950 = vmatprep.subr.mxu0 0.0
    %3951 = vmatpush1.msra.mxu0 0.0
    %3952 = vmatprep.subr.mxu0 0.0
    %3953 = vmatpush1.msra.mxu0 0.0
    %3954 = vmatprep.subr.mxu0 0.0
    %3955 = vmatpush1.msra.mxu0 0.0
    %3956 = vmatprep.subr.mxu0 0.0
    %3957 = vmatpush1.msra.mxu0 0.0
    %3958 = vmatprep.subr.mxu0 0.0
    %3959 = vmatpush1.msra.mxu0 0.0
    %3960 = vmatprep.subr.mxu0 0.0
    %3961 = vmatpush1.msra.mxu0 0.0
    %3962 = vmatprep.subr.mxu0 0.0
    %3963 = vmatpush1.msra.mxu0 0.0
    %3964 = vmatprep.subr.mxu0 0.0
    %3965 = vmatpush1.msra.mxu0 0.0
    %3966 = vmatprep.subr.mxu0 0.0
    %3967 = vmatpush1.msra.mxu0 0.0
    %3968 = vmatprep.subr.mxu0 0.0
    %3969 = vmatpush1.msra.mxu0 0.0
    %3970 = vmatprep.subr.mxu0 0.0
    %3971 = vmatpush1.msra.mxu0 0.0
    %3972 = vmatprep.subr.mxu0 0.0
    %3973 = vmatpush1.msra.mxu0 0.0
    %3974 = vmatprep.subr.mxu0 0.0
    %3975 = vmatpush1.msra.mxu0 0.0
    %3976 = vmatprep.mubr.f32.mxu0 0.0
    %3977 = vmatmul.mubr.f32.gmra.mrb[0].mxu0 %v3363
    %v3978 = vpop.f32.mrb[0].mxu0
    %v3979 = vadd.f32 %v3837, %v3978
    %v3980 = vpop.f32.mrb[0].mxu0
    %3981 = vdwg.mxu0
    %v3982 = vadd.f32 %v3702, %v3908
    %v3983 = vxor.u32 %v3982, 2147483648
    %v3984 = vmul.f32 %v3983, 1.442695
    %v3985 = vpow.pop %v3984
    %v3986 = vadd.f32 %v3985, 1.0
    %v3987 = vrcp.pop %v3986
    %v3988 = vmul.f32 1.0, %v3987
    %v3989 = vadd.f32 %v3704, %v3910
    %v3990 = vxor.u32 %v3989, 2147483648
    %v3991 = vmul.f32 %v3990, 1.442695
    %v3992 = vpow.pop %v3991
    %v3993 = vadd.f32 %v3992, 1.0
    %v3994 = vrcp.pop %v3993
    %v3995 = vmul.f32 1.0, %v3994
    %v3996 = vmul.f32 %v3988, %v3979
    %v3997 = vadd.f32 %v3773, %v3996
    %v3998 = vtanh.pop %v3997
    %v3999 = vsub.f32 1.0, %v3995
    %v4000 = vmul.f32 %v3999, %v3998
    %v4001 = vmul.f32 %v3995, %v3363
    %v4002 = vadd.f32 %v4000, %v4001
    %v4003 = vld [vmem:[#allocation16] sm:$0xff]
    %v4004 = vld [vmem:[#allocation16 + $0x8] sm:$0xff]
    %v4005 = vld [vmem:[#allocation16 + $0x10] sm:$0xff]
    %v4006 = vld [vmem:[#allocation16 + $0x18] sm:$0xff]
    %v4007 = vld [vmem:[#allocation16 + $0x20] sm:$0xff]
    %v4008 = vld [vmem:[#allocation16 + $0x28] sm:$0xff]
    %v4009 = vld [vmem:[#allocation16 + $0x30] sm:$0xff]
    %v4010 = vld [vmem:[#allocation16 + $0x38] sm:$0xff]
    %v4011 = vld [vmem:[#allocation16 + $0x40] sm:$0xff]
    %v4012 = vld [vmem:[#allocation16 + $0x48] sm:$0xff]
    %v4013 = vld [vmem:[#allocation16 + $0x50] sm:$0xff]
    %v4014 = vld [vmem:[#allocation16 + $0x58] sm:$0xff]
    %v4015 = vld [vmem:[#allocation16 + $0x60] sm:$0xff]
    %v4016 = vld [vmem:[#allocation16 + $0x68] sm:$0xff]
    %v4017 = vld [vmem:[#allocation16 + $0x70] sm:$0xff]
    %v4018 = vld [vmem:[#allocation16 + $0x78] sm:$0xff]
    %v4019 = vld [vmem:[%s14] sm:$0x1]
    %v4021 = vlaneseq
    %v4022 = vshrl.u32 %v4021, 7
    %v4023 = vsub.s32 0, %v4022
    %v4024 = vrot.slane %v4019, %v4023
    %4026 = vmatprep.subr.mxu0 0.0
    %4027 = vmatpush1.msra.mxu0 %v4003
    %4028 = vmatprep.subr.mxu0 0.0
    %4029 = vmatpush1.msra.mxu0 %v4004
    %4030 = vmatprep.subr.mxu0 0.0
    %4031 = vmatpush1.msra.mxu0 %v4005
    %4032 = vmatprep.subr.mxu0 0.0
    %4033 = vmatpush1.msra.mxu0 %v4006
    %4034 = vmatprep.subr.mxu0 0.0
    %4035 = vmatpush1.msra.mxu0 %v4007
    %4036 = vmatprep.subr.mxu0 0.0
    %4037 = vmatpush1.msra.mxu0 %v4008
    %4038 = vmatprep.subr.mxu0 0.0
    %4039 = vmatpush1.msra.mxu0 %v4009
    %4040 = vmatprep.subr.mxu0 0.0
    %4041 = vmatpush1.msra.mxu0 %v4010
    %4042 = vmatprep.subr.mxu0 0.0
    %4043 = vmatpush1.msra.mxu0 %v4011
    %4044 = vmatprep.subr.mxu0 0.0
    %4045 = vmatpush1.msra.mxu0 %v4012
    %4046 = vmatprep.subr.mxu0 0.0
    %4047 = vmatpush1.msra.mxu0 %v4013
    %4048 = vmatprep.subr.mxu0 0.0
    %4049 = vmatpush1.msra.mxu0 %v4014
    %4050 = vmatprep.subr.mxu0 0.0
    %4051 = vmatpush1.msra.mxu0 %v4015
    %4052 = vmatprep.subr.mxu0 0.0
    %4053 = vmatpush1.msra.mxu0 %v4016
    %4054 = vmatprep.subr.mxu0 0.0
    %4055 = vmatpush1.msra.mxu0 %v4017
    %4056 = vmatprep.subr.mxu0 0.0
    %4057 = vmatpush1.msra.mxu0 %v4018
    %4058 = vmatprep.subr.mxu0 0.0
    %4059 = vmatpush1.msra.mxu0 0.0
    %4060 = vmatprep.subr.mxu0 0.0
    %4061 = vmatpush1.msra.mxu0 0.0
    %4062 = vmatprep.subr.mxu0 0.0
    %4063 = vmatpush1.msra.mxu0 0.0
    %4064 = vmatprep.subr.mxu0 0.0
    %4065 = vmatpush1.msra.mxu0 0.0
    %4066 = vmatprep.subr.mxu0 0.0
    %4067 = vmatpush1.msra.mxu0 0.0
    %4068 = vmatprep.subr.mxu0 0.0
    %4069 = vmatpush1.msra.mxu0 0.0
    %4070 = vmatprep.subr.mxu0 0.0
    %4071 = vmatpush1.msra.mxu0 0.0
    %4072 = vmatprep.subr.mxu0 0.0
    %4073 = vmatpush1.msra.mxu0 0.0
    %4074 = vmatprep.subr.mxu0 0.0
    %4075 = vmatpush1.msra.mxu0 0.0
    %4076 = vmatprep.subr.mxu0 0.0
    %4077 = vmatpush1.msra.mxu0 0.0
    %4078 = vmatprep.subr.mxu0 0.0
    %4079 = vmatpush1.msra.mxu0 0.0
    %4080 = vmatprep.subr.mxu0 0.0
    %4081 = vmatpush1.msra.mxu0 0.0
    %4082 = vmatprep.subr.mxu0 0.0
    %4083 = vmatpush1.msra.mxu0 0.0
    %4084 = vmatprep.subr.mxu0 0.0
    %4085 = vmatpush1.msra.mxu0 0.0
    %4086 = vmatprep.subr.mxu0 0.0
    %4087 = vmatpush1.msra.mxu0 0.0
    %4088 = vmatprep.subr.mxu0 0.0
    %4089 = vmatpush1.msra.mxu0 0.0
    %4090 = vmatprep.mubr.f32.mxu0 0.0
    %4091 = vmatmul.mubr.f32.gmra.mrb[0].mxu0 %v4002
    %v4092 = vpop.f32.mrb[0].mxu0
    %v4093 = vadd.f32 %v4024, %v4092
    %v4094 = vpop.f32.mrb[0].mxu0
    %4095 = vdwg.mxu0
    %s4096 = scalar_lea.vmem [#allocation17], 2
    %4097 = vst [vmem:[%s4096] sm:$0x3] %v4093
    %v4098 = vsel %vm3458, %v4093, -1e+30
    %v4099 = vsel %vm3460, %v4098, -inf
    %4100 = vmax.xlane.f32.xlu0 %v4099
    %v4101 = vpop.xlane.xlu0 %4100
    %vm4102 = vcmp.eq.f32.partialorder %v4098, %v4101
    %v4103 = vsel %vm4102, %v2925, 128
    %v4104 = vsel %vm3460, %v4103, 2147483647
    %v4105 = vand.u32 %v4104, 65535
    %v4106 = vshra.s32 %v4104, 16
    %v4107 = vcvt.s32.f32 %v4105
    %v4108 = vcvt.s32.f32 %v4106
    %4109 = vmin.xlane.f32.xlu0 %v4108
    %v4110 = vpop.xlane.xlu0 %4109
    %vm4111 = vcmp.eq.f32.partialorder %v4108, %v4110
    %v4112 = vsel %vm4111, %v4107, inf
    %4113 = vmin.xlane.f32.xlu0 %v4112
    %v4114 = vpop.xlane.xlu0 %4113
    %v4115 = vcvt.f32.s32 %v4114
    %v4116 = vcvt.f32.s32 %v4110
    %v4117 = vshll.u32 %v4116, 16
    %v4118 = vadd.s32 %v4117, %v4115
    %vm4119 = vcmp.eq.s32.totalorder %v2925, %v4118
    %v4120 = vsel %vm4119, 1, 0
    %v4121 = vcvt.s32.f32 %v4120
    %v4122 = vld [vmem:[#allocation11] sm:$0xff]
    %v4123 = vld [vmem:[#allocation11 + $0x8] sm:$0xff]
    %v4124 = vld [vmem:[#allocation11 + $0x10] sm:$0xff]
    %v4125 = vld [vmem:[#allocation11 + $0x18] sm:$0xff]
    %v4126 = vld [vmem:[#allocation11 + $0x20] sm:$0xff]
    %v4127 = vld [vmem:[#allocation11 + $0x28] sm:$0xff]
    %v4128 = vld [vmem:[#allocation11 + $0x30] sm:$0xff]
    %v4129 = vld [vmem:[#allocation11 + $0x38] sm:$0xff]
    %v4130 = vld [vmem:[#allocation11 + $0x40] sm:$0xff]
    %v4131 = vld [vmem:[#allocation11 + $0x48] sm:$0xff]
    %v4132 = vld [vmem:[#allocation11 + $0x50] sm:$0xff]
    %v4133 = vld [vmem:[#allocation11 + $0x58] sm:$0xff]
    %v4134 = vld [vmem:[#allocation11 + $0x60] sm:$0xff]
    %v4135 = vld [vmem:[#allocation11 + $0x68] sm:$0xff]
    %v4136 = vld [vmem:[#allocation11 + $0x70] sm:$0xff]
    %v4137 = vld [vmem:[#allocation11 + $0x78] sm:$0xff]
    %4138 = vmatprep.subr.mxu0 0.0
    %4139 = vmatpush1.msra.mxu0 %v4122
    %4140 = vmatprep.subr.mxu0 0.0
    %4141 = vmatpush1.msra.mxu0 %v4123
    %4142 = vmatprep.subr.mxu0 0.0
    %4143 = vmatpush1.msra.mxu0 %v4124
    %4144 = vmatprep.subr.mxu0 0.0
    %4145 = vmatpush1.msra.mxu0 %v4125
    %4146 = vmatprep.subr.mxu0 0.0
    %4147 = vmatpush1.msra.mxu0 %v4126
    %4148 = vmatprep.subr.mxu0 0.0
    %4149 = vmatpush1.msra.mxu0 %v4127
    %4150 = vmatprep.subr.mxu0 0.0
    %4151 = vmatpush1.msra.mxu0 %v4128
    %4152 = vmatprep.subr.mxu0 0.0
    %4153 = vmatpush1.msra.mxu0 %v4129
    %4154 = vmatprep.subr.mxu0 0.0
    %4155 = vmatpush1.msra.mxu0 %v4130
    %4156 = vmatprep.subr.mxu0 0.0
    %4157 = vmatpush1.msra.mxu0 %v4131
    %4158 = vmatprep.subr.mxu0 0.0
    %4159 = vmatpush1.msra.mxu0 %v4132
    %4160 = vmatprep.subr.mxu0 0.0
    %4161 = vmatpush1.msra.mxu0 %v4133
    %4162 = vmatprep.subr.mxu0 0.0
    %4163 = vmatpush1.msra.mxu0 %v4134
    %4164 = vmatprep.subr.mxu0 0.0
    %4165 = vmatpush1.msra.mxu0 %v4135
    %4166 = vmatprep.subr.mxu0 0.0
    %4167 = vmatpush1.msra.mxu0 %v4136
    %4168 = vmatprep.subr.mxu0 0.0
    %4169 = vmatpush1.msra.mxu0 %v4137
    %4170 = vmatprep.subr.mxu0 0.0
    %4171 = vmatpush1.msra.mxu0 0.0
    %4172 = vmatprep.subr.mxu0 0.0
    %4173 = vmatpush1.msra.mxu0 0.0
    %4174 = vmatprep.subr.mxu0 0.0
    %4175 = vmatpush1.msra.mxu0 0.0
    %4176 = vmatprep.subr.mxu0 0.0
    %4177 = vmatpush1.msra.mxu0 0.0
    %4178 = vmatprep.subr.mxu0 0.0
    %4179 = vmatpush1.msra.mxu0 0.0
    %4180 = vmatprep.subr.mxu0 0.0
    %4181 = vmatpush1.msra.mxu0 0.0
    %4182 = vmatprep.subr.mxu0 0.0
    %4183 = vmatpush1.msra.mxu0 0.0
    %4184 = vmatprep.subr.mxu0 0.0
    %4185 = vmatpush1.msra.mxu0 0.0
    %4186 = vmatprep.subr.mxu0 0.0
    %4187 = vmatpush1.msra.mxu0 0.0
    %4188 = vmatprep.subr.mxu0 0.0
    %4189 = vmatpush1.msra.mxu0 0.0
    %4190 = vmatprep.subr.mxu0 0.0
    %4191 = vmatpush1.msra.mxu0 0.0
    %4192 = vmatprep.subr.mxu0 0.0
    %4193 = vmatpush1.msra.mxu0 0.0
    %4194 = vmatprep.subr.mxu0 0.0
    %4195 = vmatpush1.msra.mxu0 0.0
    %4196 = vmatprep.subr.mxu0 0.0
    %4197 = vmatpush1.msra.mxu0 0.0
    %4198 = vmatprep.subr.mxu0 0.0
    %4199 = vmatpush1.msra.mxu0 0.0
    %4200 = vmatprep.subr.mxu0 0.0
    %4201 = vmatpush1.msra.mxu0 0.0
    %4202 = vmatprep.mubr.f32.mxu0 0.0
    %4203 = vmatmul.mubr.f32.gmra.mrb[0].mxu0 %v4121
    %v4204 = vpop.f32.mrb[0].mxu0
    %v4205 = vadd.f32 0.0, %v4204
    %v4206 = vpop.f32.mrb[0].mxu0
    %4207 = vdwg.mxu0
    %v4208 = vld [vmem:[#allocation13] sm:$0xff]
    %v4209 = vld [vmem:[#allocation13 + $0x8] sm:$0xff]
    %v4210 = vld [vmem:[#allocation13 + $0x10] sm:$0xff]
    %v4211 = vld [vmem:[#allocation13 + $0x18] sm:$0xff]
    %v4212 = vld [vmem:[#allocation13 + $0x20] sm:$0xff]
    %v4213 = vld [vmem:[#allocation13 + $0x28] sm:$0xff]
    %v4214 = vld [vmem:[#allocation13 + $0x30] sm:$0xff]
    %v4215 = vld [vmem:[#allocation13 + $0x38] sm:$0xff]
    %v4216 = vld [vmem:[#allocation13 + $0x40] sm:$0xff]
    %v4217 = vld [vmem:[#allocation13 + $0x48] sm:$0xff]
    %v4218 = vld [vmem:[#allocation13 + $0x50] sm:$0xff]
    %v4219 = vld [vmem:[#allocation13 + $0x58] sm:$0xff]
    %v4220 = vld [vmem:[#allocation13 + $0x60] sm:$0xff]
    %v4221 = vld [vmem:[#allocation13 + $0x68] sm:$0xff]
    %v4222 = vld [vmem:[#allocation13 + $0x70] sm:$0xff]
    %v4223 = vld [vmem:[#allocation13 + $0x78] sm:$0xff]
    %v4224 = vld [vmem:[#allocation13 + $0x80] sm:$0xff]
    %v4225 = vld [vmem:[#allocation13 + $0x88] sm:$0xff]
    %v4226 = vld [vmem:[#allocation13 + $0x90] sm:$0xff]
    %v4227 = vld [vmem:[#allocation13 + $0x98] sm:$0xff]
    %v4228 = vld [vmem:[#allocation13 + $0xa0] sm:$0xff]
    %v4229 = vld [vmem:[#allocation13 + $0xa8] sm:$0xff]
    %v4230 = vld [vmem:[#allocation13 + $0xb0] sm:$0xff]
    %v4231 = vld [vmem:[#allocation13 + $0xb8] sm:$0xff]
    %v4232 = vld [vmem:[#allocation13 + $0xc0] sm:$0xff]
    %v4233 = vld [vmem:[#allocation13 + $0xc8] sm:$0xff]
    %v4234 = vld [vmem:[#allocation13 + $0xd0] sm:$0xff]
    %v4235 = vld [vmem:[#allocation13 + $0xd8] sm:$0xff]
    %v4236 = vld [vmem:[#allocation13 + $0xe0] sm:$0xff]
    %v4237 = vld [vmem:[#allocation13 + $0xe8] sm:$0xff]
    %v4238 = vld [vmem:[#allocation13 + $0xf0] sm:$0xff]
    %v4239 = vld [vmem:[#allocation13 + $0xf8] sm:$0xff]
    %v4240 = vld [vmem:[#allocation13 + $0x100] sm:$0xff]
    %v4241 = vld [vmem:[#allocation13 + $0x108] sm:$0xff]
    %v4242 = vld [vmem:[#allocation13 + $0x110] sm:$0xff]
    %v4243 = vld [vmem:[#allocation13 + $0x118] sm:$0xff]
    %v4244 = vld [vmem:[#allocation13 + $0x120] sm:$0xff]
    %v4245 = vld [vmem:[#allocation13 + $0x128] sm:$0xff]
    %v4246 = vld [vmem:[#allocation13 + $0x130] sm:$0xff]
    %v4247 = vld [vmem:[#allocation13 + $0x138] sm:$0xff]
    %v4248 = vld [vmem:[#allocation13 + $0x140] sm:$0xff]
    %v4249 = vld [vmem:[#allocation13 + $0x148] sm:$0xff]
    %v4250 = vld [vmem:[#allocation13 + $0x150] sm:$0xff]
    %v4251 = vld [vmem:[#allocation13 + $0x158] sm:$0xff]
    %v4252 = vld [vmem:[#allocation13 + $0x160] sm:$0xff]
    %v4253 = vld [vmem:[#allocation13 + $0x168] sm:$0xff]
    %v4254 = vld [vmem:[#allocation13 + $0x170] sm:$0xff]
    %v4255 = vld [vmem:[#allocation13 + $0x178] sm:$0xff]
    %v4256 = vld [vmem:[%s11] sm:$0x7]
    %v4258 = vlaneseq
    %v4259 = vshrl.u32 %v4258, 7
    %v4260 = vsub.s32 0, %v4259
    %v4261 = vrot.slane %v4256, %v4260
    %v4262 = vlaneseq
    %v4263 = vshrl.u32 %v4262, 7
    %v4264 = vsub.s32 1, %v4263
    %v4265 = vrot.slane %v4256, %v4264
    %v4266 = vlaneseq
    %v4267 = vshrl.u32 %v4266, 7
    %v4268 = vsub.s32 2, %v4267
    %v4269 = vrot.slane %v4256, %v4268
    %4273 = vmatprep.subr.mxu0 %v4209
    %4274 = vmatpush1.msra.mxu0 %v4208
    %4275 = vmatprep.subr.mxu0 %v4212
    %4276 = vmatpush1.msra.mxu0 %v4211
    %4277 = vmatprep.subr.mxu0 %v4215
    %4278 = vmatpush1.msra.mxu0 %v4214
    %4279 = vmatprep.subr.mxu0 %v4218
    %4280 = vmatpush1.msra.mxu0 %v4217
    %4281 = vmatprep.subr.mxu0 %v4221
    %4282 = vmatpush1.msra.mxu0 %v4220
    %4283 = vmatprep.subr.mxu0 %v4224
    %4284 = vmatpush1.msra.mxu0 %v4223
    %4285 = vmatprep.subr.mxu0 %v4227
    %4286 = vmatpush1.msra.mxu0 %v4226
    %4287 = vmatprep.subr.mxu0 %v4230
    %4288 = vmatpush1.msra.mxu0 %v4229
    %4289 = vmatprep.subr.mxu0 %v4233
    %4290 = vmatpush1.msra.mxu0 %v4232
    %4291 = vmatprep.subr.mxu0 %v4236
    %4292 = vmatpush1.msra.mxu0 %v4235
    %4293 = vmatprep.subr.mxu0 %v4239
    %4294 = vmatpush1.msra.mxu0 %v4238
    %4295 = vmatprep.subr.mxu0 %v4242
    %4296 = vmatpush1.msra.mxu0 %v4241
    %4297 = vmatprep.subr.mxu0 %v4245
    %4298 = vmatpush1.msra.mxu0 %v4244
    %4299 = vmatprep.subr.mxu0 %v4248
    %4300 = vmatpush1.msra.mxu0 %v4247
    %4301 = vmatprep.subr.mxu0 %v4251
    %4302 = vmatpush1.msra.mxu0 %v4250
    %4303 = vmatprep.subr.mxu0 %v4254
    %4304 = vmatpush1.msra.mxu0 %v4253
    %4305 = vmatprep.subr.mxu0 0.0
    %4306 = vmatpush1.msra.mxu0 0.0
    %4307 = vmatprep.subr.mxu0 0.0
    %4308 = vmatpush1.msra.mxu0 0.0
    %4309 = vmatprep.subr.mxu0 0.0
    %4310 = vmatpush1.msra.mxu0 0.0
    %4311 = vmatprep.subr.mxu0 0.0
    %4312 = vmatpush1.msra.mxu0 0.0
    %4313 = vmatprep.subr.mxu0 0.0
    %4314 = vmatpush1.msra.mxu0 0.0
    %4315 = vmatprep.subr.mxu0 0.0
    %4316 = vmatpush1.msra.mxu0 0.0
    %4317 = vmatprep.subr.mxu0 0.0
    %4318 = vmatpush1.msra.mxu0 0.0
    %4319 = vmatprep.subr.mxu0 0.0
    %4320 = vmatpush1.msra.mxu0 0.0
    %4321 = vmatprep.subr.mxu0 0.0
    %4322 = vmatpush1.msra.mxu0 0.0
    %4323 = vmatprep.subr.mxu0 0.0
    %4324 = vmatpush1.msra.mxu0 0.0
    %4325 = vmatprep.subr.mxu0 0.0
    %4326 = vmatpush1.msra.mxu0 0.0
    %4327 = vmatprep.subr.mxu0 0.0
    %4328 = vmatpush1.msra.mxu0 0.0
    %4329 = vmatprep.subr.mxu0 0.0
    %4330 = vmatpush1.msra.mxu0 0.0
    %4331 = vmatprep.subr.mxu0 0.0
    %4332 = vmatpush1.msra.mxu0 0.0
    %4333 = vmatprep.subr.mxu0 0.0
    %4334 = vmatpush1.msra.mxu0 0.0
    %4335 = vmatprep.subr.mxu0 0.0
    %4336 = vmatpush1.msra.mxu0 0.0
    %4337 = vmatprep.mubr.f32.mxu0 0.0
    %4338 = vmatmul.mubr.f32.gmra.mrb[0].mxu0 %v4205
    %v4339 = vpop.f32.mrb[0].mxu0
    %v4340 = vadd.f32 %v4261, %v4339
    %v4341 = vpop.f32.mrb[0].mxu0
    %v4342 = vadd.f32 %v4265, %v4341
    %4343 = vdwg.mxu0
    %4344 = vmatprep.subr.mxu0 0.0
    %4345 = vmatpush1.msra.mxu0 %v4210
    %4346 = vmatprep.subr.mxu0 0.0
    %4347 = vmatpush1.msra.mxu0 %v4213
    %4348 = vmatprep.subr.mxu0 0.0
    %4349 = vmatpush1.msra.mxu0 %v4216
    %4350 = vmatprep.subr.mxu0 0.0
    %4351 = vmatpush1.msra.mxu0 %v4219
    %4352 = vmatprep.subr.mxu0 0.0
    %4353 = vmatpush1.msra.mxu0 %v4222
    %4354 = vmatprep.subr.mxu0 0.0
    %4355 = vmatpush1.msra.mxu0 %v4225
    %4356 = vmatprep.subr.mxu0 0.0
    %4357 = vmatpush1.msra.mxu0 %v4228
    %4358 = vmatprep.subr.mxu0 0.0
    %4359 = vmatpush1.msra.mxu0 %v4231
    %4360 = vmatprep.subr.mxu0 0.0
    %4361 = vmatpush1.msra.mxu0 %v4234
    %4362 = vmatprep.subr.mxu0 0.0
    %4363 = vmatpush1.msra.mxu0 %v4237
    %4364 = vmatprep.subr.mxu0 0.0
    %4365 = vmatpush1.msra.mxu0 %v4240
    %4366 = vmatprep.subr.mxu0 0.0
    %4367 = vmatpush1.msra.mxu0 %v4243
    %4368 = vmatprep.subr.mxu0 0.0
    %4369 = vmatpush1.msra.mxu0 %v4246
    %4370 = vmatprep.subr.mxu0 0.0
    %4371 = vmatpush1.msra.mxu0 %v4249
    %4372 = vmatprep.subr.mxu0 0.0
    %4373 = vmatpush1.msra.mxu0 %v4252
    %4374 = vmatprep.subr.mxu0 0.0
    %4375 = vmatpush1.msra.mxu0 %v4255
    %4376 = vmatprep.subr.mxu0 0.0
    %4377 = vmatpush1.msra.mxu0 0.0
    %4378 = vmatprep.subr.mxu0 0.0
    %4379 = vmatpush1.msra.mxu0 0.0
    %4380 = vmatprep.subr.mxu0 0.0
    %4381 = vmatpush1.msra.mxu0 0.0
    %4382 = vmatprep.subr.mxu0 0.0
    %4383 = vmatpush1.msra.mxu0 0.0
    %4384 = vmatprep.subr.mxu0 0.0
    %4385 = vmatpush1.msra.mxu0 0.0
    %4386 = vmatprep.subr.mxu0 0.0
    %4387 = vmatpush1.msra.mxu0 0.0
    %4388 = vmatprep.subr.mxu0 0.0
    %4389 = vmatpush1.msra.mxu0 0.0
    %4390 = vmatprep.subr.mxu0 0.0
    %4391 = vmatpush1.msra.mxu0 0.0
    %4392 = vmatprep.subr.mxu0 0.0
    %4393 = vmatpush1.msra.mxu0 0.0
    %4394 = vmatprep.subr.mxu0 0.0
    %4395 = vmatpush1.msra.mxu0 0.0
    %4396 = vmatprep.subr.mxu0 0.0
    %4397 = vmatpush1.msra.mxu0 0.0
    %4398 = vmatprep.subr.mxu0 0.0
    %4399 = vmatpush1.msra.mxu0 0.0
    %4400 = vmatprep.subr.mxu0 0.0
    %4401 = vmatpush1.msra.mxu0 0.0
    %4402 = vmatprep.subr.mxu0 0.0
    %4403 = vmatpush1.msra.mxu0 0.0
    %4404 = vmatprep.subr.mxu0 0.0
    %4405 = vmatpush1.msra.mxu0 0.0
    %4406 = vmatprep.subr.mxu0 0.0
    %4407 = vmatpush1.msra.mxu0 0.0
    %4408 = vmatprep.mubr.f32.mxu0 0.0
    %4409 = vmatmul.mubr.f32.gmra.mrb[0].mxu0 %v4205
    %v4410 = vpop.f32.mrb[0].mxu0
    %v4411 = vadd.f32 %v4269, %v4410
    %v4412 = vpop.f32.mrb[0].mxu0
    %4413 = vdwg.mxu0
    %v4414 = vld [vmem:[#allocation14] sm:$0xff]
    %v4415 = vld [vmem:[#allocation14 + $0x8] sm:$0xff]
    %v4416 = vld [vmem:[#allocation14 + $0x10] sm:$0xff]
    %v4417 = vld [vmem:[#allocation14 + $0x18] sm:$0xff]
    %v4418 = vld [vmem:[#allocation14 + $0x20] sm:$0xff]
    %v4419 = vld [vmem:[#allocation14 + $0x28] sm:$0xff]
    %v4420 = vld [vmem:[#allocation14 + $0x30] sm:$0xff]
    %v4421 = vld [vmem:[#allocation14 + $0x38] sm:$0xff]
    %v4422 = vld [vmem:[#allocation14 + $0x40] sm:$0xff]
    %v4423 = vld [vmem:[#allocation14 + $0x48] sm:$0xff]
    %v4424 = vld [vmem:[#allocation14 + $0x50] sm:$0xff]
    %v4425 = vld [vmem:[#allocation14 + $0x58] sm:$0xff]
    %v4426 = vld [vmem:[#allocation14 + $0x60] sm:$0xff]
    %v4427 = vld [vmem:[#allocation14 + $0x68] sm:$0xff]
    %v4428 = vld [vmem:[#allocation14 + $0x70] sm:$0xff]
    %v4429 = vld [vmem:[#allocation14 + $0x78] sm:$0xff]
    %v4430 = vld [vmem:[#allocation14 + $0x80] sm:$0xff]
    %v4431 = vld [vmem:[#allocation14 + $0x88] sm:$0xff]
    %v4432 = vld [vmem:[#allocation14 + $0x90] sm:$0xff]
    %v4433 = vld [vmem:[#allocation14 + $0x98] sm:$0xff]
    %v4434 = vld [vmem:[#allocation14 + $0xa0] sm:$0xff]
    %v4435 = vld [vmem:[#allocation14 + $0xa8] sm:$0xff]
    %v4436 = vld [vmem:[#allocation14 + $0xb0] sm:$0xff]
    %v4437 = vld [vmem:[#allocation14 + $0xb8] sm:$0xff]
    %v4438 = vld [vmem:[#allocation14 + $0xc0] sm:$0xff]
    %v4439 = vld [vmem:[#allocation14 + $0xc8] sm:$0xff]
    %v4440 = vld [vmem:[#allocation14 + $0xd0] sm:$0xff]
    %v4441 = vld [vmem:[#allocation14 + $0xd8] sm:$0xff]
    %v4442 = vld [vmem:[#allocation14 + $0xe0] sm:$0xff]
    %v4443 = vld [vmem:[#allocation14 + $0xe8] sm:$0xff]
    %v4444 = vld [vmem:[#allocation14 + $0xf0] sm:$0xff]
    %v4445 = vld [vmem:[#allocation14 + $0xf8] sm:$0xff]
    %v4446 = vld [vmem:[#allocation14 + $0x100] sm:$0xff]
    %v4447 = vld [vmem:[#allocation14 + $0x108] sm:$0xff]
    %v4448 = vld [vmem:[#allocation14 + $0x110] sm:$0xff]
    %v4449 = vld [vmem:[#allocation14 + $0x118] sm:$0xff]
    %v4450 = vld [vmem:[#allocation14 + $0x120] sm:$0xff]
    %v4451 = vld [vmem:[#allocation14 + $0x128] sm:$0xff]
    %v4452 = vld [vmem:[#allocation14 + $0x130] sm:$0xff]
    %v4453 = vld [vmem:[#allocation14 + $0x138] sm:$0xff]
    %v4454 = vld [vmem:[#allocation14 + $0x140] sm:$0xff]
    %v4455 = vld [vmem:[#allocation14 + $0x148] sm:$0xff]
    %v4456 = vld [vmem:[#allocation14 + $0x150] sm:$0xff]
    %v4457 = vld [vmem:[#allocation14 + $0x158] sm:$0xff]
    %v4458 = vld [vmem:[#allocation14 + $0x160] sm:$0xff]
    %v4459 = vld [vmem:[#allocation14 + $0x168] sm:$0xff]
    %v4460 = vld [vmem:[#allocation14 + $0x170] sm:$0xff]
    %v4461 = vld [vmem:[#allocation14 + $0x178] sm:$0xff]
    %v4462 = vld [vmem:[%s12] sm:$0x7]
    %v4464 = vlaneseq
    %v4465 = vshrl.u32 %v4464, 7
    %v4466 = vsub.s32 0, %v4465
    %v4467 = vrot.slane %v4462, %v4466
    %v4468 = vlaneseq
    %v4469 = vshrl.u32 %v4468, 7
    %v4470 = vsub.s32 1, %v4469
    %v4471 = vrot.slane %v4462, %v4470
    %v4472 = vlaneseq
    %v4473 = vshrl.u32 %v4472, 7
    %v4474 = vsub.s32 2, %v4473
    %v4475 = vrot.slane %v4462, %v4474
    %4479 = vmatprep.subr.mxu0 %v4415
    %4480 = vmatpush1.msra.mxu0 %v4414
    %4481 = vmatprep.subr.mxu0 %v4418
    %4482 = vmatpush1.msra.mxu0 %v4417
    %4483 = vmatprep.subr.mxu0 %v4421
    %4484 = vmatpush1.msra.mxu0 %v4420
    %4485 = vmatprep.subr.mxu0 %v4424
    %4486 = vmatpush1.msra.mxu0 %v4423
    %4487 = vmatprep.subr.mxu0 %v4427
    %4488 = vmatpush1.msra.mxu0 %v4426
    %4489 = vmatprep.subr.mxu0 %v4430
    %4490 = vmatpush1.msra.mxu0 %v4429
    %4491 = vmatprep.subr.mxu0 %v4433
    %4492 = vmatpush1.msra.mxu0 %v4432
    %4493 = vmatprep.subr.mxu0 %v4436
    %4494 = vmatpush1.msra.mxu0 %v4435
    %4495 = vmatprep.subr.mxu0 %v4439
    %4496 = vmatpush1.msra.mxu0 %v4438
    %4497 = vmatprep.subr.mxu0 %v4442
    %4498 = vmatpush1.msra.mxu0 %v4441
    %4499 = vmatprep.subr.mxu0 %v4445
    %4500 = vmatpush1.msra.mxu0 %v4444
    %4501 = vmatprep.subr.mxu0 %v4448
    %4502 = vmatpush1.msra.mxu0 %v4447
    %4503 = vmatprep.subr.mxu0 %v4451
    %4504 = vmatpush1.msra.mxu0 %v4450
    %4505 = vmatprep.subr.mxu0 %v4454
    %4506 = vmatpush1.msra.mxu0 %v4453
    %4507 = vmatprep.subr.mxu0 %v4457
    %4508 = vmatpush1.msra.mxu0 %v4456
    %4509 = vmatprep.subr.mxu0 %v4460
    %4510 = vmatpush1.msra.mxu0 %v4459
    %4511 = vmatprep.subr.mxu0 0.0
    %4512 = vmatpush1.msra.mxu0 0.0
    %4513 = vmatprep.subr.mxu0 0.0
    %4514 = vmatpush1.msra.mxu0 0.0
    %4515 = vmatprep.subr.mxu0 0.0
    %4516 = vmatpush1.msra.mxu0 0.0
    %4517 = vmatprep.subr.mxu0 0.0
    %4518 = vmatpush1.msra.mxu0 0.0
    %4519 = vmatprep.subr.mxu0 0.0
    %4520 = vmatpush1.msra.mxu0 0.0
    %4521 = vmatprep.subr.mxu0 0.0
    %4522 = vmatpush1.msra.mxu0 0.0
    %4523 = vmatprep.subr.mxu0 0.0
    %4524 = vmatpush1.msra.mxu0 0.0
    %4525 = vmatprep.subr.mxu0 0.0
    %4526 = vmatpush1.msra.mxu0 0.0
    %4527 = vmatprep.subr.mxu0 0.0
    %4528 = vmatpush1.msra.mxu0 0.0
    %4529 = vmatprep.subr.mxu0 0.0
    %4530 = vmatpush1.msra.mxu0 0.0
    %4531 = vmatprep.subr.mxu0 0.0
    %4532 = vmatpush1.msra.mxu0 0.0
    %4533 = vmatprep.subr.mxu0 0.0
    %4534 = vmatpush1.msra.mxu0 0.0
    %4535 = vmatprep.subr.mxu0 0.0
    %4536 = vmatpush1.msra.mxu0 0.0
    %4537 = vmatprep.subr.mxu0 0.0
    %4538 = vmatpush1.msra.mxu0 0.0
    %4539 = vmatprep.subr.mxu0 0.0
    %4540 = vmatpush1.msra.mxu0 0.0
    %4541 = vmatprep.subr.mxu0 0.0
    %4542 = vmatpush1.msra.mxu0 0.0
    %4543 = vmatprep.mubr.f32.mxu0 0.0
    %4544 = vmatmul.mubr.f32.gmra.mrb[0].mxu0 %v4002
    %v4545 = vpop.f32.mrb[0].mxu0
    %v4546 = vadd.f32 %v4467, %v4545
    %v4547 = vpop.f32.mrb[0].mxu0
    %v4548 = vadd.f32 %v4471, %v4547
    %4549 = vdwg.mxu0
    %4550 = vmatprep.subr.mxu0 0.0
    %4551 = vmatpush1.msra.mxu0 %v4416
    %4552 = vmatprep.subr.mxu0 0.0
    %4553 = vmatpush1.msra.mxu0 %v4419
    %4554 = vmatprep.subr.mxu0 0.0
    %4555 = vmatpush1.msra.mxu0 %v4422
    %4556 = vmatprep.subr.mxu0 0.0
    %4557 = vmatpush1.msra.mxu0 %v4425
    %4558 = vmatprep.subr.mxu0 0.0
    %4559 = vmatpush1.msra.mxu0 %v4428
    %4560 = vmatprep.subr.mxu0 0.0
    %4561 = vmatpush1.msra.mxu0 %v4431
    %4562 = vmatprep.subr.mxu0 0.0
    %4563 = vmatpush1.msra.mxu0 %v4434
    %4564 = vmatprep.subr.mxu0 0.0
    %4565 = vmatpush1.msra.mxu0 %v4437
    %4566 = vmatprep.subr.mxu0 0.0
    %4567 = vmatpush1.msra.mxu0 %v4440
    %4568 = vmatprep.subr.mxu0 0.0
    %4569 = vmatpush1.msra.mxu0 %v4443
    %4570 = vmatprep.subr.mxu0 0.0
    %4571 = vmatpush1.msra.mxu0 %v4446
    %4572 = vmatprep.subr.mxu0 0.0
    %4573 = vmatpush1.msra.mxu0 %v4449
    %4574 = vmatprep.subr.mxu0 0.0
    %4575 = vmatpush1.msra.mxu0 %v4452
    %4576 = vmatprep.subr.mxu0 0.0
    %4577 = vmatpush1.msra.mxu0 %v4455
    %4578 = vmatprep.subr.mxu0 0.0
    %4579 = vmatpush1.msra.mxu0 %v4458
    %4580 = vmatprep.subr.mxu0 0.0
    %4581 = vmatpush1.msra.mxu0 %v4461
    %4582 = vmatprep.subr.mxu0 0.0
    %4583 = vmatpush1.msra.mxu0 0.0
    %4584 = vmatprep.subr.mxu0 0.0
    %4585 = vmatpush1.msra.mxu0 0.0
    %4586 = vmatprep.subr.mxu0 0.0
    %4587 = vmatpush1.msra.mxu0 0.0
    %4588 = vmatprep.subr.mxu0 0.0
    %4589 = vmatpush1.msra.mxu0 0.0
    %4590 = vmatprep.subr.mxu0 0.0
    %4591 = vmatpush1.msra.mxu0 0.0
    %4592 = vmatprep.subr.mxu0 0.0
    %4593 = vmatpush1.msra.mxu0 0.0
    %4594 = vmatprep.subr.mxu0 0.0
    %4595 = vmatpush1.msra.mxu0 0.0
    %4596 = vmatprep.subr.mxu0 0.0
    %4597 = vmatpush1.msra.mxu0 0.0
    %4598 = vmatprep.subr.mxu0 0.0
    %4599 = vmatpush1.msra.mxu0 0.0
    %4600 = vmatprep.subr.mxu0 0.0
    %4601 = vmatpush1.msra.mxu0 0.0
    %4602 = vmatprep.subr.mxu0 0.0
    %4603 = vmatpush1.msra.mxu0 0.0
    %4604 = vmatprep.subr.mxu0 0.0
    %4605 = vmatpush1.msra.mxu0 0.0
    %4606 = vmatprep.subr.mxu0 0.0
    %4607 = vmatpush1.msra.mxu0 0.0
    %4608 = vmatprep.subr.mxu0 0.0
    %4609 = vmatpush1.msra.mxu0 0.0
    %4610 = vmatprep.subr.mxu0 0.0
    %4611 = vmatpush1.msra.mxu0 0.0
    %4612 = vmatprep.subr.mxu0 0.0
    %4613 = vmatpush1.msra.mxu0 0.0
    %4614 = vmatprep.mubr.f32.mxu0 0.0
    %4615 = vmatmul.mubr.f32.gmra.mrb[0].mxu0 %v4002
    %v4616 = vpop.f32.mrb[0].mxu0
    %v4617 = vadd.f32 %v4475, %v4616
    %v4618 = vpop.f32.mrb[0].mxu0
    %4619 = vdwg.mxu0
    %v4620 = vadd.f32 %v4340, %v4546
    %v4621 = vxor.u32 %v4620, 2147483648
    %v4622 = vmul.f32 %v4621, 1.442695
    %v4623 = vpow.pop %v4622
    %v4624 = vadd.f32 %v4623, 1.0
    %v4625 = vrcp.pop %v4624
    %v4626 = vmul.f32 1.0, %v4625
    %v4627 = vadd.f32 %v4342, %v4548
    %v4628 = vxor.u32 %v4627, 2147483648
    %v4629 = vmul.f32 %v4628, 1.442695
    %v4630 = vpow.pop %v4629
    %v4631 = vadd.f32 %v4630, 1.0
    %v4632 = vrcp.pop %v4631
    %v4633 = vmul.f32 1.0, %v4632
    %v4634 = vmul.f32 %v4626, %v4617
    %v4635 = vadd.f32 %v4411, %v4634
    %v4636 = vtanh.pop %v4635
    %v4637 = vsub.f32 1.0, %v4633
    %v4638 = vmul.f32 %v4637, %v4636
    %v4639 = vmul.f32 %v4633, %v4002
    %v4640 = vadd.f32 %v4638, %v4639
    %v4641 = vld [vmem:[#allocation16] sm:$0xff]
    %v4642 = vld [vmem:[#allocation16 + $0x8] sm:$0xff]
    %v4643 = vld [vmem:[#allocation16 + $0x10] sm:$0xff]
    %v4644 = vld [vmem:[#allocation16 + $0x18] sm:$0xff]
    %v4645 = vld [vmem:[#allocation16 + $0x20] sm:$0xff]
    %v4646 = vld [vmem:[#allocation16 + $0x28] sm:$0xff]
    %v4647 = vld [vmem:[#allocation16 + $0x30] sm:$0xff]
    %v4648 = vld [vmem:[#allocation16 + $0x38] sm:$0xff]
    %v4649 = vld [vmem:[#allocation16 + $0x40] sm:$0xff]
    %v4650 = vld [vmem:[#allocation16 + $0x48] sm:$0xff]
    %v4651 = vld [vmem:[#allocation16 + $0x50] sm:$0xff]
    %v4652 = vld [vmem:[#allocation16 + $0x58] sm:$0xff]
    %v4653 = vld [vmem:[#allocation16 + $0x60] sm:$0xff]
    %v4654 = vld [vmem:[#allocation16 + $0x68] sm:$0xff]
    %v4655 = vld [vmem:[#allocation16 + $0x70] sm:$0xff]
    %v4656 = vld [vmem:[#allocation16 + $0x78] sm:$0xff]
    %v4657 = vld [vmem:[%s14] sm:$0x1]
    %v4659 = vlaneseq
    %v4660 = vshrl.u32 %v4659, 7
    %v4661 = vsub.s32 0, %v4660
    %v4662 = vrot.slane %v4657, %v4661
    %4664 = vmatprep.subr.mxu0 0.0
    %4665 = vmatpush1.msra.mxu0 %v4641
    %4666 = vmatprep.subr.mxu0 0.0
    %4667 = vmatpush1.msra.mxu0 %v4642
    %4668 = vmatprep.subr.mxu0 0.0
    %4669 = vmatpush1.msra.mxu0 %v4643
    %4670 = vmatprep.subr.mxu0 0.0
    %4671 = vmatpush1.msra.mxu0 %v4644
    %4672 = vmatprep.subr.mxu0 0.0
    %4673 = vmatpush1.msra.mxu0 %v4645
    %4674 = vmatprep.subr.mxu0 0.0
    %4675 = vmatpush1.msra.mxu0 %v4646
    %4676 = vmatprep.subr.mxu0 0.0
    %4677 = vmatpush1.msra.mxu0 %v4647
    %4678 = vmatprep.subr.mxu0 0.0
    %4679 = vmatpush1.msra.mxu0 %v4648
    %4680 = vmatprep.subr.mxu0 0.0
    %4681 = vmatpush1.msra.mxu0 %v4649
    %4682 = vmatprep.subr.mxu0 0.0
    %4683 = vmatpush1.msra.mxu0 %v4650
    %4684 = vmatprep.subr.mxu0 0.0
    %4685 = vmatpush1.msra.mxu0 %v4651
    %4686 = vmatprep.subr.mxu0 0.0
    %4687 = vmatpush1.msra.mxu0 %v4652
    %4688 = vmatprep.subr.mxu0 0.0
    %4689 = vmatpush1.msra.mxu0 %v4653
    %4690 = vmatprep.subr.mxu0 0.0
    %4691 = vmatpush1.msra.mxu0 %v4654
    %4692 = vmatprep.subr.mxu0 0.0
    %4693 = vmatpush1.msra.mxu0 %v4655
    %4694 = vmatprep.subr.mxu0 0.0
    %4695 = vmatpush1.msra.mxu0 %v4656
    %4696 = vmatprep.subr.mxu0 0.0
    %4697 = vmatpush1.msra.mxu0 0.0
    %4698 = vmatprep.subr.mxu0 0.0
    %4699 = vmatpush1.msra.mxu0 0.0
    %4700 = vmatprep.subr.mxu0 0.0
    %4701 = vmatpush1.msra.mxu0 0.0
    %4702 = vmatprep.subr.mxu0 0.0
    %4703 = vmatpush1.msra.mxu0 0.0
    %4704 = vmatprep.subr.mxu0 0.0
    %4705 = vmatpush1.msra.mxu0 0.0
    %4706 = vmatprep.subr.mxu0 0.0
    %4707 = vmatpush1.msra.mxu0 0.0
    %4708 = vmatprep.subr.mxu0 0.0
    %4709 = vmatpush1.msra.mxu0 0.0
    %4710 = vmatprep.subr.mxu0 0.0
    %4711 = vmatpush1.msra.mxu0 0.0
    %4712 = vmatprep.subr.mxu0 0.0
    %4713 = vmatpush1.msra.mxu0 0.0
    %4714 = vmatprep.subr.mxu0 0.0
    %4715 = vmatpush1.msra.mxu0 0.0
    %4716 = vmatprep.subr.mxu0 0.0
    %4717 = vmatpush1.msra.mxu0 0.0
    %4718 = vmatprep.subr.mxu0 0.0
    %4719 = vmatpush1.msra.mxu0 0.0
    %4720 = vmatprep.subr.mxu0 0.0
    %4721 = vmatpush1.msra.mxu0 0.0
    %4722 = vmatprep.subr.mxu0 0.0
    %4723 = vmatpush1.msra.mxu0 0.0
    %4724 = vmatprep.subr.mxu0 0.0
    %4725 = vmatpush1.msra.mxu0 0.0
    %4726 = vmatprep.subr.mxu0 0.0
    %4727 = vmatpush1.msra.mxu0 0.0
    %4728 = vmatprep.mubr.f32.mxu0 0.0
    %4729 = vmatmul.mubr.f32.gmra.mrb[0].mxu0 %v4640
    %v4730 = vpop.f32.mrb[0].mxu0
    %v4731 = vadd.f32 %v4662, %v4730
    %v4732 = vpop.f32.mrb[0].mxu0
    %4733 = vdwg.mxu0
    %s4734 = scalar_lea.vmem [#allocation17], 4
    %4735 = vst [vmem:[%s4734] sm:$0x3] %v4731
    %v4736 = vsel %vm3458, %v4731, -1e+30
    %v4737 = vsel %vm3460, %v4736, -inf
    %4738 = vmax.xlane.f32.xlu0 %v4737
    %v4739 = vpop.xlane.xlu0 %4738
    %vm4740 = vcmp.eq.f32.partialorder %v4736, %v4739
    %v4741 = vsel %vm4740, %v2925, 128
    %v4742 = vsel %vm3460, %v4741, 2147483647
    %v4743 = vand.u32 %v4742, 65535
    %v4744 = vshra.s32 %v4742, 16
    %v4745 = vcvt.s32.f32 %v4743
    %v4746 = vcvt.s32.f32 %v4744
    %4747 = vmin.xlane.f32.xlu0 %v4746
    %v4748 = vpop.xlane.xlu0 %4747
    %vm4749 = vcmp.eq.f32.partialorder %v4746, %v4748
    %v4750 = vsel %vm4749, %v4745, inf
    %4751 = vmin.xlane.f32.xlu0 %v4750
    %v4752 = vpop.xlane.xlu0 %4751
    %v4753 = vcvt.f32.s32 %v4752
    %v4754 = vcvt.f32.s32 %v4748
    %v4755 = vshll.u32 %v4754, 16
    %v4756 = vadd.s32 %v4755, %v4753
    %vm4757 = vcmp.eq.s32.totalorder %v2925, %v4756
    %v4758 = vsel %vm4757, 1, 0
    %v4759 = vcvt.s32.f32 %v4758
    %v4760 = vld [vmem:[#allocation11] sm:$0xff]
    %v4761 = vld [vmem:[#allocation11 + $0x8] sm:$0xff]
    %v4762 = vld [vmem:[#allocation11 + $0x10] sm:$0xff]
    %v4763 = vld [vmem:[#allocation11 + $0x18] sm:$0xff]
    %v4764 = vld [vmem:[#allocation11 + $0x20] sm:$0xff]
    %v4765 = vld [vmem:[#allocation11 + $0x28] sm:$0xff]
    %v4766 = vld [vmem:[#allocation11 + $0x30] sm:$0xff]
    %v4767 = vld [vmem:[#allocation11 + $0x38] sm:$0xff]
    %v4768 = vld [vmem:[#allocation11 + $0x40] sm:$0xff]
    %v4769 = vld [vmem:[#allocation11 + $0x48] sm:$0xff]
    %v4770 = vld [vmem:[#allocation11 + $0x50] sm:$0xff]
    %v4771 = vld [vmem:[#allocation11 + $0x58] sm:$0xff]
    %v4772 = vld [vmem:[#allocation11 + $0x60] sm:$0xff]
    %v4773 = vld [vmem:[#allocation11 + $0x68] sm:$0xff]
    %v4774 = vld [vmem:[#allocation11 + $0x70] sm:$0xff]
    %v4775 = vld [vmem:[#allocation11 + $0x78] sm:$0xff]
    %4776 = vmatprep.subr.mxu0 0.0
    %4777 = vmatpush1.msra.mxu0 %v4760
    %4778 = vmatprep.subr.mxu0 0.0
    %4779 = vmatpush1.msra.mxu0 %v4761
    %4780 = vmatprep.subr.mxu0 0.0
    %4781 = vmatpush1.msra.mxu0 %v4762
    %4782 = vmatprep.subr.mxu0 0.0
    %4783 = vmatpush1.msra.mxu0 %v4763
    %4784 = vmatprep.subr.mxu0 0.0
    %4785 = vmatpush1.msra.mxu0 %v4764
    %4786 = vmatprep.subr.mxu0 0.0
    %4787 = vmatpush1.msra.mxu0 %v4765
    %4788 = vmatprep.subr.mxu0 0.0
    %4789 = vmatpush1.msra.mxu0 %v4766
    %4790 = vmatprep.subr.mxu0 0.0
    %4791 = vmatpush1.msra.mxu0 %v4767
    %4792 = vmatprep.subr.mxu0 0.0
    %4793 = vmatpush1.msra.mxu0 %v4768
    %4794 = vmatprep.subr.mxu0 0.0
    %4795 = vmatpush1.msra.mxu0 %v4769
    %4796 = vmatprep.subr.mxu0 0.0
    %4797 = vmatpush1.msra.mxu0 %v4770
    %4798 = vmatprep.subr.mxu0 0.0
    %4799 = vmatpush1.msra.mxu0 %v4771
    %4800 = vmatprep.subr.mxu0 0.0
    %4801 = vmatpush1.msra.mxu0 %v4772
    %4802 = vmatprep.subr.mxu0 0.0
    %4803 = vmatpush1.msra.mxu0 %v4773
    %4804 = vmatprep.subr.mxu0 0.0
    %4805 = vmatpush1.msra.mxu0 %v4774
    %4806 = vmatprep.subr.mxu0 0.0
    %4807 = vmatpush1.msra.mxu0 %v4775
    %4808 = vmatprep.subr.mxu0 0.0
    %4809 = vmatpush1.msra.mxu0 0.0
    %4810 = vmatprep.subr.mxu0 0.0
    %4811 = vmatpush1.msra.mxu0 0.0
    %4812 = vmatprep.subr.mxu0 0.0
    %4813 = vmatpush1.msra.mxu0 0.0
    %4814 = vmatprep.subr.mxu0 0.0
    %4815 = vmatpush1.msra.mxu0 0.0
    %4816 = vmatprep.subr.mxu0 0.0
    %4817 = vmatpush1.msra.mxu0 0.0
    %4818 = vmatprep.subr.mxu0 0.0
    %4819 = vmatpush1.msra.mxu0 0.0
    %4820 = vmatprep.subr.mxu0 0.0
    %4821 = vmatpush1.msra.mxu0 0.0
    %4822 = vmatprep.subr.mxu0 0.0
    %4823 = vmatpush1.msra.mxu0 0.0
    %4824 = vmatprep.subr.mxu0 0.0
    %4825 = vmatpush1.msra.mxu0 0.0
    %4826 = vmatprep.subr.mxu0 0.0
    %4827 = vmatpush1.msra.mxu0 0.0
    %4828 = vmatprep.subr.mxu0 0.0
    %4829 = vmatpush1.msra.mxu0 0.0
    %4830 = vmatprep.subr.mxu0 0.0
    %4831 = vmatpush1.msra.mxu0 0.0
    %4832 = vmatprep.subr.mxu0 0.0
    %4833 = vmatpush1.msra.mxu0 0.0
    %4834 = vmatprep.subr.mxu0 0.0
    %4835 = vmatpush1.msra.mxu0 0.0
    %4836 = vmatprep.subr.mxu0 0.0
    %4837 = vmatpush1.msra.mxu0 0.0
    %4838 = vmatprep.subr.mxu0 0.0
    %4839 = vmatpush1.msra.mxu0 0.0
    %4840 = vmatprep.mubr.f32.mxu0 0.0
    %4841 = vmatmul.mubr.f32.gmra.mrb[0].mxu0 %v4759
    %v4842 = vpop.f32.mrb[0].mxu0
    %v4843 = vadd.f32 0.0, %v4842
    %v4844 = vpop.f32.mrb[0].mxu0
    %4845 = vdwg.mxu0
    %v4846 = vld [vmem:[#allocation13] sm:$0xff]
    %v4847 = vld [vmem:[#allocation13 + $0x8] sm:$0xff]
    %v4848 = vld [vmem:[#allocation13 + $0x10] sm:$0xff]
    %v4849 = vld [vmem:[#allocation13 + $0x18] sm:$0xff]
    %v4850 = vld [vmem:[#allocation13 + $0x20] sm:$0xff]
    %v4851 = vld [vmem:[#allocation13 + $0x28] sm:$0xff]
    %v4852 = vld [vmem:[#allocation13 + $0x30] sm:$0xff]
    %v4853 = vld [vmem:[#allocation13 + $0x38] sm:$0xff]
    %v4854 = vld [vmem:[#allocation13 + $0x40] sm:$0xff]
    %v4855 = vld [vmem:[#allocation13 + $0x48] sm:$0xff]
    %v4856 = vld [vmem:[#allocation13 + $0x50] sm:$0xff]
    %v4857 = vld [vmem:[#allocation13 + $0x58] sm:$0xff]
    %v4858 = vld [vmem:[#allocation13 + $0x60] sm:$0xff]
    %v4859 = vld [vmem:[#allocation13 + $0x68] sm:$0xff]
    %v4860 = vld [vmem:[#allocation13 + $0x70] sm:$0xff]
    %v4861 = vld [vmem:[#allocation13 + $0x78] sm:$0xff]
    %v4862 = vld [vmem:[#allocation13 + $0x80] sm:$0xff]
    %v4863 = vld [vmem:[#allocation13 + $0x88] sm:$0xff]
    %v4864 = vld [vmem:[#allocation13 + $0x90] sm:$0xff]
    %v4865 = vld [vmem:[#allocation13 + $0x98] sm:$0xff]
    %v4866 = vld [vmem:[#allocation13 + $0xa0] sm:$0xff]
    %v4867 = vld [vmem:[#allocation13 + $0xa8] sm:$0xff]
    %v4868 = vld [vmem:[#allocation13 + $0xb0] sm:$0xff]
    %v4869 = vld [vmem:[#allocation13 + $0xb8] sm:$0xff]
    %v4870 = vld [vmem:[#allocation13 + $0xc0] sm:$0xff]
    %v4871 = vld [vmem:[#allocation13 + $0xc8] sm:$0xff]
    %v4872 = vld [vmem:[#allocation13 + $0xd0] sm:$0xff]
    %v4873 = vld [vmem:[#allocation13 + $0xd8] sm:$0xff]
    %v4874 = vld [vmem:[#allocation13 + $0xe0] sm:$0xff]
    %v4875 = vld [vmem:[#allocation13 + $0xe8] sm:$0xff]
    %v4876 = vld [vmem:[#allocation13 + $0xf0] sm:$0xff]
    %v4877 = vld [vmem:[#allocation13 + $0xf8] sm:$0xff]
    %v4878 = vld [vmem:[#allocation13 + $0x100] sm:$0xff]
    %v4879 = vld [vmem:[#allocation13 + $0x108] sm:$0xff]
    %v4880 = vld [vmem:[#allocation13 + $0x110] sm:$0xff]
    %v4881 = vld [vmem:[#allocation13 + $0x118] sm:$0xff]
    %v4882 = vld [vmem:[#allocation13 + $0x120] sm:$0xff]
    %v4883 = vld [vmem:[#allocation13 + $0x128] sm:$0xff]
    %v4884 = vld [vmem:[#allocation13 + $0x130] sm:$0xff]
    %v4885 = vld [vmem:[#allocation13 + $0x138] sm:$0xff]
    %v4886 = vld [vmem:[#allocation13 + $0x140] sm:$0xff]
    %v4887 = vld [vmem:[#allocation13 + $0x148] sm:$0xff]
    %v4888 = vld [vmem:[#allocation13 + $0x150] sm:$0xff]
    %v4889 = vld [vmem:[#allocation13 + $0x158] sm:$0xff]
    %v4890 = vld [vmem:[#allocation13 + $0x160] sm:$0xff]
    %v4891 = vld [vmem:[#allocation13 + $0x168] sm:$0xff]
    %v4892 = vld [vmem:[#allocation13 + $0x170] sm:$0xff]
    %v4893 = vld [vmem:[#allocation13 + $0x178] sm:$0xff]
    %v4894 = vld [vmem:[%s11] sm:$0x7]
    %v4896 = vlaneseq
    %v4897 = vshrl.u32 %v4896, 7
    %v4898 = vsub.s32 0, %v4897
    %v4899 = vrot.slane %v4894, %v4898
    %v4900 = vlaneseq
    %v4901 = vshrl.u32 %v4900, 7
    %v4902 = vsub.s32 1, %v4901
    %v4903 = vrot.slane %v4894, %v4902
    %v4904 = vlaneseq
    %v4905 = vshrl.u32 %v4904, 7
    %v4906 = vsub.s32 2, %v4905
    %v4907 = vrot.slane %v4894, %v4906
    %4911 = vmatprep.subr.mxu0 %v4847
    %4912 = vmatpush1.msra.mxu0 %v4846
    %4913 = vmatprep.subr.mxu0 %v4850
    %4914 = vmatpush1.msra.mxu0 %v4849
    %4915 = vmatprep.subr.mxu0 %v4853
    %4916 = vmatpush1.msra.mxu0 %v4852
    %4917 = vmatprep.subr.mxu0 %v4856
    %4918 = vmatpush1.msra.mxu0 %v4855
    %4919 = vmatprep.subr.mxu0 %v4859
    %4920 = vmatpush1.msra.mxu0 %v4858
    %4921 = vmatprep.subr.mxu0 %v4862
    %4922 = vmatpush1.msra.mxu0 %v4861
    %4923 = vmatprep.subr.mxu0 %v4865
    %4924 = vmatpush1.msra.mxu0 %v4864
    %4925 = vmatprep.subr.mxu0 %v4868
    %4926 = vmatpush1.msra.mxu0 %v4867
    %4927 = vmatprep.subr.mxu0 %v4871
    %4928 = vmatpush1.msra.mxu0 %v4870
    %4929 = vmatprep.subr.mxu0 %v4874
    %4930 = vmatpush1.msra.mxu0 %v4873
    %4931 = vmatprep.subr.mxu0 %v4877
    %4932 = vmatpush1.msra.mxu0 %v4876
    %4933 = vmatprep.subr.mxu0 %v4880
    %4934 = vmatpush1.msra.mxu0 %v4879
    %4935 = vmatprep.subr.mxu0 %v4883
    %4936 = vmatpush1.msra.mxu0 %v4882
    %4937 = vmatprep.subr.mxu0 %v4886
    %4938 = vmatpush1.msra.mxu0 %v4885
    %4939 = vmatprep.subr.mxu0 %v4889
    %4940 = vmatpush1.msra.mxu0 %v4888
    %4941 = vmatprep.subr.mxu0 %v4892
    %4942 = vmatpush1.msra.mxu0 %v4891
    %4943 = vmatprep.subr.mxu0 0.0
    %4944 = vmatpush1.msra.mxu0 0.0
    %4945 = vmatprep.subr.mxu0 0.0
    %4946 = vmatpush1.msra.mxu0 0.0
    %4947 = vmatprep.subr.mxu0 0.0
    %4948 = vmatpush1.msra.mxu0 0.0
    %4949 = vmatprep.subr.mxu0 0.0
    %4950 = vmatpush1.msra.mxu0 0.0
    %4951 = vmatprep.subr.mxu0 0.0
    %4952 = vmatpush1.msra.mxu0 0.0
    %4953 = vmatprep.subr.mxu0 0.0
    %4954 = vmatpush1.msra.mxu0 0.0
    %4955 = vmatprep.subr.mxu0 0.0
    %4956 = vmatpush1.msra.mxu0 0.0
    %4957 = vmatprep.subr.mxu0 0.0
    %4958 = vmatpush1.msra.mxu0 0.0
    %4959 = vmatprep.subr.mxu0 0.0
    %4960 = vmatpush1.msra.mxu0 0.0
    %4961 = vmatprep.subr.mxu0 0.0
    %4962 = vmatpush1.msra.mxu0 0.0
    %4963 = vmatprep.subr.mxu0 0.0
    %4964 = vmatpush1.msra.mxu0 0.0
    %4965 = vmatprep.subr.mxu0 0.0
    %4966 = vmatpush1.msra.mxu0 0.0
    %4967 = vmatprep.subr.mxu0 0.0
    %4968 = vmatpush1.msra.mxu0 0.0
    %4969 = vmatprep.subr.mxu0 0.0
    %4970 = vmatpush1.msra.mxu0 0.0
    %4971 = vmatprep.subr.mxu0 0.0
    %4972 = vmatpush1.msra.mxu0 0.0
    %4973 = vmatprep.subr.mxu0 0.0
    %4974 = vmatpush1.msra.mxu0 0.0
    %4975 = vmatprep.mubr.f32.mxu0 0.0
    %4976 = vmatmul.mubr.f32.gmra.mrb[0].mxu0 %v4843
    %v4977 = vpop.f32.mrb[0].mxu0
    %v4978 = vadd.f32 %v4899, %v4977
    %v4979 = vpop.f32.mrb[0].mxu0
    %v4980 = vadd.f32 %v4903, %v4979
    %4981 = vdwg.mxu0
    %4982 = vmatprep.subr.mxu0 0.0
    %4983 = vmatpush1.msra.mxu0 %v4848
    %4984 = vmatprep.subr.mxu0 0.0
    %4985 = vmatpush1.msra.mxu0 %v4851
    %4986 = vmatprep.subr.mxu0 0.0
    %4987 = vmatpush1.msra.mxu0 %v4854
    %4988 = vmatprep.subr.mxu0 0.0
    %4989 = vmatpush1.msra.mxu0 %v4857
    %4990 = vmatprep.subr.mxu0 0.0
    %4991 = vmatpush1.msra.mxu0 %v4860
    %4992 = vmatprep.subr.mxu0 0.0
    %4993 = vmatpush1.msra.mxu0 %v4863
    %4994 = vmatprep.subr.mxu0 0.0
    %4995 = vmatpush1.msra.mxu0 %v4866
    %4996 = vmatprep.subr.mxu0 0.0
    %4997 = vmatpush1.msra.mxu0 %v4869
    %4998 = vmatprep.subr.mxu0 0.0
    %4999 = vmatpush1.msra.mxu0 %v4872
    %5000 = vmatprep.subr.mxu0 0.0
    %5001 = vmatpush1.msra.mxu0 %v4875
    %5002 = vmatprep.subr.mxu0 0.0
    %5003 = vmatpush1.msra.mxu0 %v4878
    %5004 = vmatprep.subr.mxu0 0.0
    %5005 = vmatpush1.msra.mxu0 %v4881
    %5006 = vmatprep.subr.mxu0 0.0
    %5007 = vmatpush1.msra.mxu0 %v4884
    %5008 = vmatprep.subr.mxu0 0.0
    %5009 = vmatpush1.msra.mxu0 %v4887
    %5010 = vmatprep.subr.mxu0 0.0
    %5011 = vmatpush1.msra.mxu0 %v4890
    %5012 = vmatprep.subr.mxu0 0.0
    %5013 = vmatpush1.msra.mxu0 %v4893
    %5014 = vmatprep.subr.mxu0 0.0
    %5015 = vmatpush1.msra.mxu0 0.0
    %5016 = vmatprep.subr.mxu0 0.0
    %5017 = vmatpush1.msra.mxu0 0.0
    %5018 = vmatprep.subr.mxu0 0.0
    %5019 = vmatpush1.msra.mxu0 0.0
    %5020 = vmatprep.subr.mxu0 0.0
    %5021 = vmatpush1.msra.mxu0 0.0
    %5022 = vmatprep.subr.mxu0 0.0
    %5023 = vmatpush1.msra.mxu0 0.0
    %5024 = vmatprep.subr.mxu0 0.0
    %5025 = vmatpush1.msra.mxu0 0.0
    %5026 = vmatprep.subr.mxu0 0.0
    %5027 = vmatpush1.msra.mxu0 0.0
    %5028 = vmatprep.subr.mxu0 0.0
    %5029 = vmatpush1.msra.mxu0 0.0
    %5030 = vmatprep.subr.mxu0 0.0
    %5031 = vmatpush1.msra.mxu0 0.0
    %5032 = vmatprep.subr.mxu0 0.0
    %5033 = vmatpush1.msra.mxu0 0.0
    %5034 = vmatprep.subr.mxu0 0.0
    %5035 = vmatpush1.msra.mxu0 0.0
    %5036 = vmatprep.subr.mxu0 0.0
    %5037 = vmatpush1.msra.mxu0 0.0
    %5038 = vmatprep.subr.mxu0 0.0
    %5039 = vmatpush1.msra.mxu0 0.0
    %5040 = vmatprep.subr.mxu0 0.0
    %5041 = vmatpush1.msra.mxu0 0.0
    %5042 = vmatprep.subr.mxu0 0.0
    %5043 = vmatpush1.msra.mxu0 0.0
    %5044 = vmatprep.subr.mxu0 0.0
    %5045 = vmatpush1.msra.mxu0 0.0
    %5046 = vmatprep.mubr.f32.mxu0 0.0
    %5047 = vmatmul.mubr.f32.gmra.mrb[0].mxu0 %v4843
    %v5048 = vpop.f32.mrb[0].mxu0
    %v5049 = vadd.f32 %v4907, %v5048
    %v5050 = vpop.f32.mrb[0].mxu0
    %5051 = vdwg.mxu0
    %v5052 = vld [vmem:[#allocation14] sm:$0xff]
    %v5053 = vld [vmem:[#allocation14 + $0x8] sm:$0xff]
    %v5054 = vld [vmem:[#allocation14 + $0x10] sm:$0xff]
    %v5055 = vld [vmem:[#allocation14 + $0x18] sm:$0xff]
    %v5056 = vld [vmem:[#allocation14 + $0x20] sm:$0xff]
    %v5057 = vld [vmem:[#allocation14 + $0x28] sm:$0xff]
    %v5058 = vld [vmem:[#allocation14 + $0x30] sm:$0xff]
    %v5059 = vld [vmem:[#allocation14 + $0x38] sm:$0xff]
    %v5060 = vld [vmem:[#allocation14 + $0x40] sm:$0xff]
    %v5061 = vld [vmem:[#allocation14 + $0x48] sm:$0xff]
    %v5062 = vld [vmem:[#allocation14 + $0x50] sm:$0xff]
    %v5063 = vld [vmem:[#allocation14 + $0x58] sm:$0xff]
    %v5064 = vld [vmem:[#allocation14 + $0x60] sm:$0xff]
    %v5065 = vld [vmem:[#allocation14 + $0x68] sm:$0xff]
    %v5066 = vld [vmem:[#allocation14 + $0x70] sm:$0xff]
    %v5067 = vld [vmem:[#allocation14 + $0x78] sm:$0xff]
    %v5068 = vld [vmem:[#allocation14 + $0x80] sm:$0xff]
    %v5069 = vld [vmem:[#allocation14 + $0x88] sm:$0xff]
    %v5070 = vld [vmem:[#allocation14 + $0x90] sm:$0xff]
    %v5071 = vld [vmem:[#allocation14 + $0x98] sm:$0xff]
    %v5072 = vld [vmem:[#allocation14 + $0xa0] sm:$0xff]
    %v5073 = vld [vmem:[#allocation14 + $0xa8] sm:$0xff]
    %v5074 = vld [vmem:[#allocation14 + $0xb0] sm:$0xff]
    %v5075 = vld [vmem:[#allocation14 + $0xb8] sm:$0xff]
    %v5076 = vld [vmem:[#allocation14 + $0xc0] sm:$0xff]
    %v5077 = vld [vmem:[#allocation14 + $0xc8] sm:$0xff]
    %v5078 = vld [vmem:[#allocation14 + $0xd0] sm:$0xff]
    %v5079 = vld [vmem:[#allocation14 + $0xd8] sm:$0xff]
    %v5080 = vld [vmem:[#allocation14 + $0xe0] sm:$0xff]
    %v5081 = vld [vmem:[#allocation14 + $0xe8] sm:$0xff]
    %v5082 = vld [vmem:[#allocation14 + $0xf0] sm:$0xff]
    %v5083 = vld [vmem:[#allocation14 + $0xf8] sm:$0xff]
    %v5084 = vld [vmem:[#allocation14 + $0x100] sm:$0xff]
    %v5085 = vld [vmem:[#allocation14 + $0x108] sm:$0xff]
    %v5086 = vld [vmem:[#allocation14 + $0x110] sm:$0xff]
    %v5087 = vld [vmem:[#allocation14 + $0x118] sm:$0xff]
    %v5088 = vld [vmem:[#allocation14 + $0x120] sm:$0xff]
    %v5089 = vld [vmem:[#allocation14 + $0x128] sm:$0xff]
    %v5090 = vld [vmem:[#allocation14 + $0x130] sm:$0xff]
    %v5091 = vld [vmem:[#allocation14 + $0x138] sm:$0xff]
    %v5092 = vld [vmem:[#allocation14 + $0x140] sm:$0xff]
    %v5093 = vld [vmem:[#allocation14 + $0x148] sm:$0xff]
    %v5094 = vld [vmem:[#allocation14 + $0x150] sm:$0xff]
    %v5095 = vld [vmem:[#allocation14 + $0x158] sm:$0xff]
    %v5096 = vld [vmem:[#allocation14 + $0x160] sm:$0xff]
    %v5097 = vld [vmem:[#allocation14 + $0x168] sm:$0xff]
    %v5098 = vld [vmem:[#allocation14 + $0x170] sm:$0xff]
    %v5099 = vld [vmem:[#allocation14 + $0x178] sm:$0xff]
    %v5100 = vld [vmem:[%s12] sm:$0x7]
    %v5102 = vlaneseq
    %v5103 = vshrl.u32 %v5102, 7
    %v5104 = vsub.s32 0, %v5103
    %v5105 = vrot.slane %v5100, %v5104
    %v5106 = vlaneseq
    %v5107 = vshrl.u32 %v5106, 7
    %v5108 = vsub.s32 1, %v5107
    %v5109 = vrot.slane %v5100, %v5108
    %v5110 = vlaneseq
    %v5111 = vshrl.u32 %v5110, 7
    %v5112 = vsub.s32 2, %v5111
    %v5113 = vrot.slane %v5100, %v5112
    %5117 = vmatprep.subr.mxu0 %v5053
    %5118 = vmatpush1.msra.mxu0 %v5052
    %5119 = vmatprep.subr.mxu0 %v5056
    %5120 = vmatpush1.msra.mxu0 %v5055
    %5121 = vmatprep.subr.mxu0 %v5059
    %5122 = vmatpush1.msra.mxu0 %v5058
    %5123 = vmatprep.subr.mxu0 %v5062
    %5124 = vmatpush1.msra.mxu0 %v5061
    %5125 = vmatprep.subr.mxu0 %v5065
    %5126 = vmatpush1.msra.mxu0 %v5064
    %5127 = vmatprep.subr.mxu0 %v5068
    %5128 = vmatpush1.msra.mxu0 %v5067
    %5129 = vmatprep.subr.mxu0 %v5071
    %5130 = vmatpush1.msra.mxu0 %v5070
    %5131 = vmatprep.subr.mxu0 %v5074
    %5132 = vmatpush1.msra.mxu0 %v5073
    %5133 = vmatprep.subr.mxu0 %v5077
    %5134 = vmatpush1.msra.mxu0 %v5076
    %5135 = vmatprep.subr.mxu0 %v5080
    %5136 = vmatpush1.msra.mxu0 %v5079
    %5137 = vmatprep.subr.mxu0 %v5083
    %5138 = vmatpush1.msra.mxu0 %v5082
    %5139 = vmatprep.subr.mxu0 %v5086
    %5140 = vmatpush1.msra.mxu0 %v5085
    %5141 = vmatprep.subr.mxu0 %v5089
    %5142 = vmatpush1.msra.mxu0 %v5088
    %5143 = vmatprep.subr.mxu0 %v5092
    %5144 = vmatpush1.msra.mxu0 %v5091
    %5145 = vmatprep.subr.mxu0 %v5095
    %5146 = vmatpush1.msra.mxu0 %v5094
    %5147 = vmatprep.subr.mxu0 %v5098
    %5148 = vmatpush1.msra.mxu0 %v5097
    %5149 = vmatprep.subr.mxu0 0.0
    %5150 = vmatpush1.msra.mxu0 0.0
    %5151 = vmatprep.subr.mxu0 0.0
    %5152 = vmatpush1.msra.mxu0 0.0
    %5153 = vmatprep.subr.mxu0 0.0
    %5154 = vmatpush1.msra.mxu0 0.0
    %5155 = vmatprep.subr.mxu0 0.0
    %5156 = vmatpush1.msra.mxu0 0.0
    %5157 = vmatprep.subr.mxu0 0.0
    %5158 = vmatpush1.msra.mxu0 0.0
    %5159 = vmatprep.subr.mxu0 0.0
    %5160 = vmatpush1.msra.mxu0 0.0
    %5161 = vmatprep.subr.mxu0 0.0
    %5162 = vmatpush1.msra.mxu0 0.0
    %5163 = vmatprep.subr.mxu0 0.0
    %5164 = vmatpush1.msra.mxu0 0.0
    %5165 = vmatprep.subr.mxu0 0.0
    %5166 = vmatpush1.msra.mxu0 0.0
    %5167 = vmatprep.subr.mxu0 0.0
    %5168 = vmatpush1.msra.mxu0 0.0
    %5169 = vmatprep.subr.mxu0 0.0
    %5170 = vmatpush1.msra.mxu0 0.0
    %5171 = vmatprep.subr.mxu0 0.0
    %5172 = vmatpush1.msra.mxu0 0.0
    %5173 = vmatprep.subr.mxu0 0.0
    %5174 = vmatpush1.msra.mxu0 0.0
    %5175 = vmatprep.subr.mxu0 0.0
    %5176 = vmatpush1.msra.mxu0 0.0
    %5177 = vmatprep.subr.mxu0 0.0
    %5178 = vmatpush1.msra.mxu0 0.0
    %5179 = vmatprep.subr.mxu0 0.0
    %5180 = vmatpush1.msra.mxu0 0.0
    %5181 = vmatprep.mubr.f32.mxu0 0.0
    %5182 = vmatmul.mubr.f32.gmra.mrb[0].mxu0 %v4640
    %v5183 = vpop.f32.mrb[0].mxu0
    %v5184 = vadd.f32 %v5105, %v5183
    %v5185 = vpop.f32.mrb[0].mxu0
    %v5186 = vadd.f32 %v5109, %v5185
    %5187 = vdwg.mxu0
    %5188 = vmatprep.subr.mxu0 0.0
    %5189 = vmatpush1.msra.mxu0 %v5054
    %5190 = vmatprep.subr.mxu0 0.0
    %5191 = vmatpush1.msra.mxu0 %v5057
    %5192 = vmatprep.subr.mxu0 0.0
    %5193 = vmatpush1.msra.mxu0 %v5060
    %5194 = vmatprep.subr.mxu0 0.0
    %5195 = vmatpush1.msra.mxu0 %v5063
    %5196 = vmatprep.subr.mxu0 0.0
    %5197 = vmatpush1.msra.mxu0 %v5066
    %5198 = vmatprep.subr.mxu0 0.0
    %5199 = vmatpush1.msra.mxu0 %v5069
    %5200 = vmatprep.subr.mxu0 0.0
    %5201 = vmatpush1.msra.mxu0 %v5072
    %5202 = vmatprep.subr.mxu0 0.0
    %5203 = vmatpush1.msra.mxu0 %v5075
    %5204 = vmatprep.subr.mxu0 0.0
    %5205 = vmatpush1.msra.mxu0 %v5078
    %5206 = vmatprep.subr.mxu0 0.0
    %5207 = vmatpush1.msra.mxu0 %v5081
    %5208 = vmatprep.subr.mxu0 0.0
    %5209 = vmatpush1.msra.mxu0 %v5084
    %5210 = vmatprep.subr.mxu0 0.0
    %5211 = vmatpush1.msra.mxu0 %v5087
    %5212 = vmatprep.subr.mxu0 0.0
    %5213 = vmatpush1.msra.mxu0 %v5090
    %5214 = vmatprep.subr.mxu0 0.0
    %5215 = vmatpush1.msra.mxu0 %v5093
    %5216 = vmatprep.subr.mxu0 0.0
    %5217 = vmatpush1.msra.mxu0 %v5096
    %5218 = vmatprep.subr.mxu0 0.0
    %5219 = vmatpush1.msra.mxu0 %v5099
    %5220 = vmatprep.subr.mxu0 0.0
    %5221 = vmatpush1.msra.mxu0 0.0
    %5222 = vmatprep.subr.mxu0 0.0
    %5223 = vmatpush1.msra.mxu0 0.0
    %5224 = vmatprep.subr.mxu0 0.0
    %5225 = vmatpush1.msra.mxu0 0.0
    %5226 = vmatprep.subr.mxu0 0.0
    %5227 = vmatpush1.msra.mxu0 0.0
    %5228 = vmatprep.subr.mxu0 0.0
    %5229 = vmatpush1.msra.mxu0 0.0
    %5230 = vmatprep.subr.mxu0 0.0
    %5231 = vmatpush1.msra.mxu0 0.0
    %5232 = vmatprep.subr.mxu0 0.0
    %5233 = vmatpush1.msra.mxu0 0.0
    %5234 = vmatprep.subr.mxu0 0.0
    %5235 = vmatpush1.msra.mxu0 0.0
    %5236 = vmatprep.subr.mxu0 0.0
    %5237 = vmatpush1.msra.mxu0 0.0
    %5238 = vmatprep.subr.mxu0 0.0
    %5239 = vmatpush1.msra.mxu0 0.0
    %5240 = vmatprep.subr.mxu0 0.0
    %5241 = vmatpush1.msra.mxu0 0.0
    %5242 = vmatprep.subr.mxu0 0.0
    %5243 = vmatpush1.msra.mxu0 0.0
    %5244 = vmatprep.subr.mxu0 0.0
    %5245 = vmatpush1.msra.mxu0 0.0
    %5246 = vmatprep.subr.mxu0 0.0
    %5247 = vmatpush1.msra.mxu0 0.0
    %5248 = vmatprep.subr.mxu0 0.0
    %5249 = vmatpush1.msra.mxu0 0.0
    %5250 = vmatprep.subr.mxu0 0.0
    %5251 = vmatpush1.msra.mxu0 0.0
    %5252 = vmatprep.mubr.f32.mxu0 0.0
    %5253 = vmatmul.mubr.f32.gmra.mrb[0].mxu0 %v4640
    %v5254 = vpop.f32.mrb[0].mxu0
    %v5255 = vadd.f32 %v5113, %v5254
    %v5256 = vpop.f32.mrb[0].mxu0
    %5257 = vdwg.mxu0
    %v5258 = vadd.f32 %v4978, %v5184
    %v5259 = vxor.u32 %v5258, 2147483648
    %v5260 = vmul.f32 %v5259, 1.442695
    %v5261 = vpow.pop %v5260
    %v5262 = vadd.f32 %v5261, 1.0
    %v5263 = vrcp.pop %v5262
    %v5264 = vmul.f32 1.0, %v5263
    %v5265 = vadd.f32 %v4980, %v5186
    %v5266 = vxor.u32 %v5265, 2147483648
    %v5267 = vmul.f32 %v5266, 1.442695
    %v5268 = vpow.pop %v5267
    %v5269 = vadd.f32 %v5268, 1.0
    %v5270 = vrcp.pop %v5269
    %v5271 = vmul.f32 1.0, %v5270
    %v5272 = vmul.f32 %v5264, %v5255
    %v5273 = vadd.f32 %v5049, %v5272
    %v5274 = vtanh.pop %v5273
    %v5275 = vsub.f32 1.0, %v5271
    %v5276 = vmul.f32 %v5275, %v5274
    %v5277 = vmul.f32 %v5271, %v4640
    %v5278 = vadd.f32 %v5276, %v5277
    %v5279 = vld [vmem:[#allocation16] sm:$0xff]
    %v5280 = vld [vmem:[#allocation16 + $0x8] sm:$0xff]
    %v5281 = vld [vmem:[#allocation16 + $0x10] sm:$0xff]
    %v5282 = vld [vmem:[#allocation16 + $0x18] sm:$0xff]
    %v5283 = vld [vmem:[#allocation16 + $0x20] sm:$0xff]
    %v5284 = vld [vmem:[#allocation16 + $0x28] sm:$0xff]
    %v5285 = vld [vmem:[#allocation16 + $0x30] sm:$0xff]
    %v5286 = vld [vmem:[#allocation16 + $0x38] sm:$0xff]
    %v5287 = vld [vmem:[#allocation16 + $0x40] sm:$0xff]
    %v5288 = vld [vmem:[#allocation16 + $0x48] sm:$0xff]
    %v5289 = vld [vmem:[#allocation16 + $0x50] sm:$0xff]
    %v5290 = vld [vmem:[#allocation16 + $0x58] sm:$0xff]
    %v5291 = vld [vmem:[#allocation16 + $0x60] sm:$0xff]
    %v5292 = vld [vmem:[#allocation16 + $0x68] sm:$0xff]
    %v5293 = vld [vmem:[#allocation16 + $0x70] sm:$0xff]
    %v5294 = vld [vmem:[#allocation16 + $0x78] sm:$0xff]
    %v5295 = vld [vmem:[%s14] sm:$0x1]
    %v5297 = vlaneseq
    %v5298 = vshrl.u32 %v5297, 7
    %v5299 = vsub.s32 0, %v5298
    %v5300 = vrot.slane %v5295, %v5299
    %5302 = vmatprep.subr.mxu0 0.0
    %5303 = vmatpush1.msra.mxu0 %v5279
    %5304 = vmatprep.subr.mxu0 0.0
    %5305 = vmatpush1.msra.mxu0 %v5280
    %5306 = vmatprep.subr.mxu0 0.0
    %5307 = vmatpush1.msra.mxu0 %v5281
    %5308 = vmatprep.subr.mxu0 0.0
    %5309 = vmatpush1.msra.mxu0 %v5282
    %5310 = vmatprep.subr.mxu0 0.0
    %5311 = vmatpush1.msra.mxu0 %v5283
    %5312 = vmatprep.subr.mxu0 0.0
    %5313 = vmatpush1.msra.mxu0 %v5284
    %5314 = vmatprep.subr.mxu0 0.0
    %5315 = vmatpush1.msra.mxu0 %v5285
    %5316 = vmatprep.subr.mxu0 0.0
    %5317 = vmatpush1.msra.mxu0 %v5286
    %5318 = vmatprep.subr.mxu0 0.0
    %5319 = vmatpush1.msra.mxu0 %v5287
    %5320 = vmatprep.subr.mxu0 0.0
    %5321 = vmatpush1.msra.mxu0 %v5288
    %5322 = vmatprep.subr.mxu0 0.0
    %5323 = vmatpush1.msra.mxu0 %v5289
    %5324 = vmatprep.subr.mxu0 0.0
    %5325 = vmatpush1.msra.mxu0 %v5290
    %5326 = vmatprep.subr.mxu0 0.0
    %5327 = vmatpush1.msra.mxu0 %v5291
    %5328 = vmatprep.subr.mxu0 0.0
    %5329 = vmatpush1.msra.mxu0 %v5292
    %5330 = vmatprep.subr.mxu0 0.0
    %5331 = vmatpush1.msra.mxu0 %v5293
    %5332 = vmatprep.subr.mxu0 0.0
    %5333 = vmatpush1.msra.mxu0 %v5294
    %5334 = vmatprep.subr.mxu0 0.0
    %5335 = vmatpush1.msra.mxu0 0.0
    %5336 = vmatprep.subr.mxu0 0.0
    %5337 = vmatpush1.msra.mxu0 0.0
    %5338 = vmatprep.subr.mxu0 0.0
    %5339 = vmatpush1.msra.mxu0 0.0
    %5340 = vmatprep.subr.mxu0 0.0
    %5341 = vmatpush1.msra.mxu0 0.0
    %5342 = vmatprep.subr.mxu0 0.0
    %5343 = vmatpush1.msra.mxu0 0.0
    %5344 = vmatprep.subr.mxu0 0.0
    %5345 = vmatpush1.msra.mxu0 0.0
    %5346 = vmatprep.subr.mxu0 0.0
    %5347 = vmatpush1.msra.mxu0 0.0
    %5348 = vmatprep.subr.mxu0 0.0
    %5349 = vmatpush1.msra.mxu0 0.0
    %5350 = vmatprep.subr.mxu0 0.0
    %5351 = vmatpush1.msra.mxu0 0.0
    %5352 = vmatprep.subr.mxu0 0.0
    %5353 = vmatpush1.msra.mxu0 0.0
    %5354 = vmatprep.subr.mxu0 0.0
    %5355 = vmatpush1.msra.mxu0 0.0
    %5356 = vmatprep.subr.mxu0 0.0
    %5357 = vmatpush1.msra.mxu0 0.0
    %5358 = vmatprep.subr.mxu0 0.0
    %5359 = vmatpush1.msra.mxu0 0.0
    %5360 = vmatprep.subr.mxu0 0.0
    %5361 = vmatpush1.msra.mxu0 0.0
    %5362 = vmatprep.subr.mxu0 0.0
    %5363 = vmatpush1.msra.mxu0 0.0
    %5364 = vmatprep.subr.mxu0 0.0
    %5365 = vmatpush1.msra.mxu0 0.0
    %5366 = vmatprep.mubr.f32.mxu0 0.0
    %5367 = vmatmul.mubr.f32.gmra.mrb[0].mxu0 %v5278
    %v5368 = vpop.f32.mrb[0].mxu0
    %v5369 = vadd.f32 %v5300, %v5368
    %v5370 = vpop.f32.mrb[0].mxu0
    %5371 = vdwg.mxu0
    %s5372 = scalar_lea.vmem [#allocation17], 6
    %5373 = vst [vmem:[%s5372] sm:$0x3] %v5369
    %v5374 = vsel %vm3458, %v5369, -1e+30
    %v5375 = vsel %vm3460, %v5374, -inf
    %5376 = vmax.xlane.f32.xlu0 %v5375
    %v5377 = vpop.xlane.xlu0 %5376
    %vm5378 = vcmp.eq.f32.partialorder %v5374, %v5377
    %v5379 = vsel %vm5378, %v2925, 128
    %v5380 = vsel %vm3460, %v5379, 2147483647
    %v5381 = vand.u32 %v5380, 65535
    %v5382 = vshra.s32 %v5380, 16
    %v5383 = vcvt.s32.f32 %v5381
    %v5384 = vcvt.s32.f32 %v5382
    %5385 = vmin.xlane.f32.xlu0 %v5384
    %v5386 = vpop.xlane.xlu0 %5385
    %vm5387 = vcmp.eq.f32.partialorder %v5384, %v5386
    %v5388 = vsel %vm5387, %v5383, inf
    %5389 = vmin.xlane.f32.xlu0 %v5388
    %v5390 = vpop.xlane.xlu0 %5389
    %v5391 = vcvt.f32.s32 %v5390
    %v5392 = vcvt.f32.s32 %v5386
    %v5393 = vshll.u32 %v5392, 16
    %v5394 = vadd.s32 %v5393, %v5391
    %vm5395 = vcmp.eq.s32.totalorder %v2925, %v5394
    %v5396 = vsel %vm5395, 1, 0
    %v5397 = vcvt.s32.f32 %v5396
    %v5398 = vld [vmem:[#allocation11] sm:$0xff]
    %v5399 = vld [vmem:[#allocation11 + $0x8] sm:$0xff]
    %v5400 = vld [vmem:[#allocation11 + $0x10] sm:$0xff]
    %v5401 = vld [vmem:[#allocation11 + $0x18] sm:$0xff]
    %v5402 = vld [vmem:[#allocation11 + $0x20] sm:$0xff]
    %v5403 = vld [vmem:[#allocation11 + $0x28] sm:$0xff]
    %v5404 = vld [vmem:[#allocation11 + $0x30] sm:$0xff]
    %v5405 = vld [vmem:[#allocation11 + $0x38] sm:$0xff]
    %v5406 = vld [vmem:[#allocation11 + $0x40] sm:$0xff]
    %v5407 = vld [vmem:[#allocation11 + $0x48] sm:$0xff]
    %v5408 = vld [vmem:[#allocation11 + $0x50] sm:$0xff]
    %v5409 = vld [vmem:[#allocation11 + $0x58] sm:$0xff]
    %v5410 = vld [vmem:[#allocation11 + $0x60] sm:$0xff]
    %v5411 = vld [vmem:[#allocation11 + $0x68] sm:$0xff]
    %v5412 = vld [vmem:[#allocation11 + $0x70] sm:$0xff]
    %v5413 = vld [vmem:[#allocation11 + $0x78] sm:$0xff]
    %5414 = vmatprep.subr.mxu0 0.0
    %5415 = vmatpush1.msra.mxu0 %v5398
    %5416 = vmatprep.subr.mxu0 0.0
    %5417 = vmatpush1.msra.mxu0 %v5399
    %5418 = vmatprep.subr.mxu0 0.0
    %5419 = vmatpush1.msra.mxu0 %v5400
    %5420 = vmatprep.subr.mxu0 0.0
    %5421 = vmatpush1.msra.mxu0 %v5401
    %5422 = vmatprep.subr.mxu0 0.0
    %5423 = vmatpush1.msra.mxu0 %v5402
    %5424 = vmatprep.subr.mxu0 0.0
    %5425 = vmatpush1.msra.mxu0 %v5403
    %5426 = vmatprep.subr.mxu0 0.0
    %5427 = vmatpush1.msra.mxu0 %v5404
    %5428 = vmatprep.subr.mxu0 0.0
    %5429 = vmatpush1.msra.mxu0 %v5405
    %5430 = vmatprep.subr.mxu0 0.0
    %5431 = vmatpush1.msra.mxu0 %v5406
    %5432 = vmatprep.subr.mxu0 0.0
    %5433 = vmatpush1.msra.mxu0 %v5407
    %5434 = vmatprep.subr.mxu0 0.0
    %5435 = vmatpush1.msra.mxu0 %v5408
    %5436 = vmatprep.subr.mxu0 0.0
    %5437 = vmatpush1.msra.mxu0 %v5409
    %5438 = vmatprep.subr.mxu0 0.0
    %5439 = vmatpush1.msra.mxu0 %v5410
    %5440 = vmatprep.subr.mxu0 0.0
    %5441 = vmatpush1.msra.mxu0 %v5411
    %5442 = vmatprep.subr.mxu0 0.0
    %5443 = vmatpush1.msra.mxu0 %v5412
    %5444 = vmatprep.subr.mxu0 0.0
    %5445 = vmatpush1.msra.mxu0 %v5413
    %5446 = vmatprep.subr.mxu0 0.0
    %5447 = vmatpush1.msra.mxu0 0.0
    %5448 = vmatprep.subr.mxu0 0.0
    %5449 = vmatpush1.msra.mxu0 0.0
    %5450 = vmatprep.subr.mxu0 0.0
    %5451 = vmatpush1.msra.mxu0 0.0
    %5452 = vmatprep.subr.mxu0 0.0
    %5453 = vmatpush1.msra.mxu0 0.0
    %5454 = vmatprep.subr.mxu0 0.0
    %5455 = vmatpush1.msra.mxu0 0.0
    %5456 = vmatprep.subr.mxu0 0.0
    %5457 = vmatpush1.msra.mxu0 0.0
    %5458 = vmatprep.subr.mxu0 0.0
    %5459 = vmatpush1.msra.mxu0 0.0
    %5460 = vmatprep.subr.mxu0 0.0
    %5461 = vmatpush1.msra.mxu0 0.0
    %5462 = vmatprep.subr.mxu0 0.0
    %5463 = vmatpush1.msra.mxu0 0.0
    %5464 = vmatprep.subr.mxu0 0.0
    %5465 = vmatpush1.msra.mxu0 0.0
    %5466 = vmatprep.subr.mxu0 0.0
    %5467 = vmatpush1.msra.mxu0 0.0
    %5468 = vmatprep.subr.mxu0 0.0
    %5469 = vmatpush1.msra.mxu0 0.0
    %5470 = vmatprep.subr.mxu0 0.0
    %5471 = vmatpush1.msra.mxu0 0.0
    %5472 = vmatprep.subr.mxu0 0.0
    %5473 = vmatpush1.msra.mxu0 0.0
    %5474 = vmatprep.subr.mxu0 0.0
    %5475 = vmatpush1.msra.mxu0 0.0
    %5476 = vmatprep.subr.mxu0 0.0
    %5477 = vmatpush1.msra.mxu0 0.0
    %5478 = vmatprep.mubr.f32.mxu0 0.0
    %5479 = vmatmul.mubr.f32.gmra.mrb[0].mxu0 %v5397
    %v5480 = vpop.f32.mrb[0].mxu0
    %v5481 = vadd.f32 0.0, %v5480
    %v5482 = vpop.f32.mrb[0].mxu0
    %5483 = vdwg.mxu0
    %v5484 = vld [vmem:[#allocation13] sm:$0xff]
    %v5485 = vld [vmem:[#allocation13 + $0x8] sm:$0xff]
    %v5486 = vld [vmem:[#allocation13 + $0x10] sm:$0xff]
    %v5487 = vld [vmem:[#allocation13 + $0x18] sm:$0xff]
    %v5488 = vld [vmem:[#allocation13 + $0x20] sm:$0xff]
    %v5489 = vld [vmem:[#allocation13 + $0x28] sm:$0xff]
    %v5490 = vld [vmem:[#allocation13 + $0x30] sm:$0xff]
    %v5491 = vld [vmem:[#allocation13 + $0x38] sm:$0xff]
    %v5492 = vld [vmem:[#allocation13 + $0x40] sm:$0xff]
    %v5493 = vld [vmem:[#allocation13 + $0x48] sm:$0xff]
    %v5494 = vld [vmem:[#allocation13 + $0x50] sm:$0xff]
    %v5495 = vld [vmem:[#allocation13 + $0x58] sm:$0xff]
    %v5496 = vld [vmem:[#allocation13 + $0x60] sm:$0xff]
    %v5497 = vld [vmem:[#allocation13 + $0x68] sm:$0xff]
    %v5498 = vld [vmem:[#allocation13 + $0x70] sm:$0xff]
    %v5499 = vld [vmem:[#allocation13 + $0x78] sm:$0xff]
    %v5500 = vld [vmem:[#allocation13 + $0x80] sm:$0xff]
    %v5501 = vld [vmem:[#allocation13 + $0x88] sm:$0xff]
    %v5502 = vld [vmem:[#allocation13 + $0x90] sm:$0xff]
    %v5503 = vld [vmem:[#allocation13 + $0x98] sm:$0xff]
    %v5504 = vld [vmem:[#allocation13 + $0xa0] sm:$0xff]
    %v5505 = vld [vmem:[#allocation13 + $0xa8] sm:$0xff]
    %v5506 = vld [vmem:[#allocation13 + $0xb0] sm:$0xff]
    %v5507 = vld [vmem:[#allocation13 + $0xb8] sm:$0xff]
    %v5508 = vld [vmem:[#allocation13 + $0xc0] sm:$0xff]
    %v5509 = vld [vmem:[#allocation13 + $0xc8] sm:$0xff]
    %v5510 = vld [vmem:[#allocation13 + $0xd0] sm:$0xff]
    %v5511 = vld [vmem:[#allocation13 + $0xd8] sm:$0xff]
    %v5512 = vld [vmem:[#allocation13 + $0xe0] sm:$0xff]
    %v5513 = vld [vmem:[#allocation13 + $0xe8] sm:$0xff]
    %v5514 = vld [vmem:[#allocation13 + $0xf0] sm:$0xff]
    %v5515 = vld [vmem:[#allocation13 + $0xf8] sm:$0xff]
    %v5516 = vld [vmem:[#allocation13 + $0x100] sm:$0xff]
    %v5517 = vld [vmem:[#allocation13 + $0x108] sm:$0xff]
    %v5518 = vld [vmem:[#allocation13 + $0x110] sm:$0xff]
    %v5519 = vld [vmem:[#allocation13 + $0x118] sm:$0xff]
    %v5520 = vld [vmem:[#allocation13 + $0x120] sm:$0xff]
    %v5521 = vld [vmem:[#allocation13 + $0x128] sm:$0xff]
    %v5522 = vld [vmem:[#allocation13 + $0x130] sm:$0xff]
    %v5523 = vld [vmem:[#allocation13 + $0x138] sm:$0xff]
    %v5524 = vld [vmem:[#allocation13 + $0x140] sm:$0xff]
    %v5525 = vld [vmem:[#allocation13 + $0x148] sm:$0xff]
    %v5526 = vld [vmem:[#allocation13 + $0x150] sm:$0xff]
    %v5527 = vld [vmem:[#allocation13 + $0x158] sm:$0xff]
    %v5528 = vld [vmem:[#allocation13 + $0x160] sm:$0xff]
    %v5529 = vld [vmem:[#allocation13 + $0x168] sm:$0xff]
    %v5530 = vld [vmem:[#allocation13 + $0x170] sm:$0xff]
    %v5531 = vld [vmem:[#allocation13 + $0x178] sm:$0xff]
    %v5532 = vld [vmem:[%s11] sm:$0x7]
    %v5534 = vlaneseq
    %v5535 = vshrl.u32 %v5534, 7
    %v5536 = vsub.s32 0, %v5535
    %v5537 = vrot.slane %v5532, %v5536
    %v5538 = vlaneseq
    %v5539 = vshrl.u32 %v5538, 7
    %v5540 = vsub.s32 1, %v5539
    %v5541 = vrot.slane %v5532, %v5540
    %v5542 = vlaneseq
    %v5543 = vshrl.u32 %v5542, 7
    %v5544 = vsub.s32 2, %v5543
    %v5545 = vrot.slane %v5532, %v5544
    %5549 = vmatprep.subr.mxu0 %v5485
    %5550 = vmatpush1.msra.mxu0 %v5484
    %5551 = vmatprep.subr.mxu0 %v5488
    %5552 = vmatpush1.msra.mxu0 %v5487
    %5553 = vmatprep.subr.mxu0 %v5491
    %5554 = vmatpush1.msra.mxu0 %v5490
    %5555 = vmatprep.subr.mxu0 %v5494
    %5556 = vmatpush1.msra.mxu0 %v5493
    %5557 = vmatprep.subr.mxu0 %v5497
    %5558 = vmatpush1.msra.mxu0 %v5496
    %5559 = vmatprep.subr.mxu0 %v5500
    %5560 = vmatpush1.msra.mxu0 %v5499
    %5561 = vmatprep.subr.mxu0 %v5503
    %5562 = vmatpush1.msra.mxu0 %v5502
    %5563 = vmatprep.subr.mxu0 %v5506
    %5564 = vmatpush1.msra.mxu0 %v5505
    %5565 = vmatprep.subr.mxu0 %v5509
    %5566 = vmatpush1.msra.mxu0 %v5508
    %5567 = vmatprep.subr.mxu0 %v5512
    %5568 = vmatpush1.msra.mxu0 %v5511
    %5569 = vmatprep.subr.mxu0 %v5515
    %5570 = vmatpush1.msra.mxu0 %v5514
    %5571 = vmatprep.subr.mxu0 %v5518
    %5572 = vmatpush1.msra.mxu0 %v5517
    %5573 = vmatprep.subr.mxu0 %v5521
    %5574 = vmatpush1.msra.mxu0 %v5520
    %5575 = vmatprep.subr.mxu0 %v5524
    %5576 = vmatpush1.msra.mxu0 %v5523
    %5577 = vmatprep.subr.mxu0 %v5527
    %5578 = vmatpush1.msra.mxu0 %v5526
    %5579 = vmatprep.subr.mxu0 %v5530
    %5580 = vmatpush1.msra.mxu0 %v5529
    %5581 = vmatprep.subr.mxu0 0.0
    %5582 = vmatpush1.msra.mxu0 0.0
    %5583 = vmatprep.subr.mxu0 0.0
    %5584 = vmatpush1.msra.mxu0 0.0
    %5585 = vmatprep.subr.mxu0 0.0
    %5586 = vmatpush1.msra.mxu0 0.0
    %5587 = vmatprep.subr.mxu0 0.0
    %5588 = vmatpush1.msra.mxu0 0.0
    %5589 = vmatprep.subr.mxu0 0.0
    %5590 = vmatpush1.msra.mxu0 0.0
    %5591 = vmatprep.subr.mxu0 0.0
    %5592 = vmatpush1.msra.mxu0 0.0
    %5593 = vmatprep.subr.mxu0 0.0
    %5594 = vmatpush1.msra.mxu0 0.0
    %5595 = vmatprep.subr.mxu0 0.0
    %5596 = vmatpush1.msra.mxu0 0.0
    %5597 = vmatprep.subr.mxu0 0.0
    %5598 = vmatpush1.msra.mxu0 0.0
    %5599 = vmatprep.subr.mxu0 0.0
    %5600 = vmatpush1.msra.mxu0 0.0
    %5601 = vmatprep.subr.mxu0 0.0
    %5602 = vmatpush1.msra.mxu0 0.0
    %5603 = vmatprep.subr.mxu0 0.0
    %5604 = vmatpush1.msra.mxu0 0.0
    %5605 = vmatprep.subr.mxu0 0.0
    %5606 = vmatpush1.msra.mxu0 0.0
    %5607 = vmatprep.subr.mxu0 0.0
    %5608 = vmatpush1.msra.mxu0 0.0
    %5609 = vmatprep.subr.mxu0 0.0
    %5610 = vmatpush1.msra.mxu0 0.0
    %5611 = vmatprep.subr.mxu0 0.0
    %5612 = vmatpush1.msra.mxu0 0.0
    %5613 = vmatprep.mubr.f32.mxu0 0.0
    %5614 = vmatmul.mubr.f32.gmra.mrb[0].mxu0 %v5481
    %v5615 = vpop.f32.mrb[0].mxu0
    %v5616 = vadd.f32 %v5537, %v5615
    %v5617 = vpop.f32.mrb[0].mxu0
    %v5618 = vadd.f32 %v5541, %v5617
    %5619 = vdwg.mxu0
    %5620 = vmatprep.subr.mxu0 0.0
    %5621 = vmatpush1.msra.mxu0 %v5486
    %5622 = vmatprep.subr.mxu0 0.0
    %5623 = vmatpush1.msra.mxu0 %v5489
    %5624 = vmatprep.subr.mxu0 0.0
    %5625 = vmatpush1.msra.mxu0 %v5492
    %5626 = vmatprep.subr.mxu0 0.0
    %5627 = vmatpush1.msra.mxu0 %v5495
    %5628 = vmatprep.subr.mxu0 0.0
    %5629 = vmatpush1.msra.mxu0 %v5498
    %5630 = vmatprep.subr.mxu0 0.0
    %5631 = vmatpush1.msra.mxu0 %v5501
    %5632 = vmatprep.subr.mxu0 0.0
    %5633 = vmatpush1.msra.mxu0 %v5504
    %5634 = vmatprep.subr.mxu0 0.0
    %5635 = vmatpush1.msra.mxu0 %v5507
    %5636 = vmatprep.subr.mxu0 0.0
    %5637 = vmatpush1.msra.mxu0 %v5510
    %5638 = vmatprep.subr.mxu0 0.0
    %5639 = vmatpush1.msra.mxu0 %v5513
    %5640 = vmatprep.subr.mxu0 0.0
    %5641 = vmatpush1.msra.mxu0 %v5516
    %5642 = vmatprep.subr.mxu0 0.0
    %5643 = vmatpush1.msra.mxu0 %v5519
    %5644 = vmatprep.subr.mxu0 0.0
    %5645 = vmatpush1.msra.mxu0 %v5522
    %5646 = vmatprep.subr.mxu0 0.0
    %5647 = vmatpush1.msra.mxu0 %v5525
    %5648 = vmatprep.subr.mxu0 0.0
    %5649 = vmatpush1.msra.mxu0 %v5528
    %5650 = vmatprep.subr.mxu0 0.0
    %5651 = vmatpush1.msra.mxu0 %v5531
    %5652 = vmatprep.subr.mxu0 0.0
    %5653 = vmatpush1.msra.mxu0 0.0
    %5654 = vmatprep.subr.mxu0 0.0
    %5655 = vmatpush1.msra.mxu0 0.0
    %5656 = vmatprep.subr.mxu0 0.0
    %5657 = vmatpush1.msra.mxu0 0.0
    %5658 = vmatprep.subr.mxu0 0.0
    %5659 = vmatpush1.msra.mxu0 0.0
    %5660 = vmatprep.subr.mxu0 0.0
    %5661 = vmatpush1.msra.mxu0 0.0
    %5662 = vmatprep.subr.mxu0 0.0
    %5663 = vmatpush1.msra.mxu0 0.0
    %5664 = vmatprep.subr.mxu0 0.0
    %5665 = vmatpush1.msra.mxu0 0.0
    %5666 = vmatprep.subr.mxu0 0.0
    %5667 = vmatpush1.msra.mxu0 0.0
    %5668 = vmatprep.subr.mxu0 0.0
    %5669 = vmatpush1.msra.mxu0 0.0
    %5670 = vmatprep.subr.mxu0 0.0
    %5671 = vmatpush1.msra.mxu0 0.0
    %5672 = vmatprep.subr.mxu0 0.0
    %5673 = vmatpush1.msra.mxu0 0.0
    %5674 = vmatprep.subr.mxu0 0.0
    %5675 = vmatpush1.msra.mxu0 0.0
    %5676 = vmatprep.subr.mxu0 0.0
    %5677 = vmatpush1.msra.mxu0 0.0
    %5678 = vmatprep.subr.mxu0 0.0
    %5679 = vmatpush1.msra.mxu0 0.0
    %5680 = vmatprep.subr.mxu0 0.0
    %5681 = vmatpush1.msra.mxu0 0.0
    %5682 = vmatprep.subr.mxu0 0.0
    %5683 = vmatpush1.msra.mxu0 0.0
    %5684 = vmatprep.mubr.f32.mxu0 0.0
    %5685 = vmatmul.mubr.f32.gmra.mrb[0].mxu0 %v5481
    %v5686 = vpop.f32.mrb[0].mxu0
    %v5687 = vadd.f32 %v5545, %v5686
    %v5688 = vpop.f32.mrb[0].mxu0
    %5689 = vdwg.mxu0
    %v5690 = vld [vmem:[#allocation14] sm:$0xff]
    %v5691 = vld [vmem:[#allocation14 + $0x8] sm:$0xff]
    %v5692 = vld [vmem:[#allocation14 + $0x10] sm:$0xff]
    %v5693 = vld [vmem:[#allocation14 + $0x18] sm:$0xff]
    %v5694 = vld [vmem:[#allocation14 + $0x20] sm:$0xff]
    %v5695 = vld [vmem:[#allocation14 + $0x28] sm:$0xff]
    %v5696 = vld [vmem:[#allocation14 + $0x30] sm:$0xff]
    %v5697 = vld [vmem:[#allocation14 + $0x38] sm:$0xff]
    %v5698 = vld [vmem:[#allocation14 + $0x40] sm:$0xff]
    %v5699 = vld [vmem:[#allocation14 + $0x48] sm:$0xff]
    %v5700 = vld [vmem:[#allocation14 + $0x50] sm:$0xff]
    %v5701 = vld [vmem:[#allocation14 + $0x58] sm:$0xff]
    %v5702 = vld [vmem:[#allocation14 + $0x60] sm:$0xff]
    %v5703 = vld [vmem:[#allocation14 + $0x68] sm:$0xff]
    %v5704 = vld [vmem:[#allocation14 + $0x70] sm:$0xff]
    %v5705 = vld [vmem:[#allocation14 + $0x78] sm:$0xff]
    %v5706 = vld [vmem:[#allocation14 + $0x80] sm:$0xff]
    %v5707 = vld [vmem:[#allocation14 + $0x88] sm:$0xff]
    %v5708 = vld [vmem:[#allocation14 + $0x90] sm:$0xff]
    %v5709 = vld [vmem:[#allocation14 + $0x98] sm:$0xff]
    %v5710 = vld [vmem:[#allocation14 + $0xa0] sm:$0xff]
    %v5711 = vld [vmem:[#allocation14 + $0xa8] sm:$0xff]
    %v5712 = vld [vmem:[#allocation14 + $0xb0] sm:$0xff]
    %v5713 = vld [vmem:[#allocation14 + $0xb8] sm:$0xff]
    %v5714 = vld [vmem:[#allocation14 + $0xc0] sm:$0xff]
    %v5715 = vld [vmem:[#allocation14 + $0xc8] sm:$0xff]
    %v5716 = vld [vmem:[#allocation14 + $0xd0] sm:$0xff]
    %v5717 = vld [vmem:[#allocation14 + $0xd8] sm:$0xff]
    %v5718 = vld [vmem:[#allocation14 + $0xe0] sm:$0xff]
    %v5719 = vld [vmem:[#allocation14 + $0xe8] sm:$0xff]
    %v5720 = vld [vmem:[#allocation14 + $0xf0] sm:$0xff]
    %v5721 = vld [vmem:[#allocation14 + $0xf8] sm:$0xff]
    %v5722 = vld [vmem:[#allocation14 + $0x100] sm:$0xff]
    %v5723 = vld [vmem:[#allocation14 + $0x108] sm:$0xff]
    %v5724 = vld [vmem:[#allocation14 + $0x110] sm:$0xff]
    %v5725 = vld [vmem:[#allocation14 + $0x118] sm:$0xff]
    %v5726 = vld [vmem:[#allocation14 + $0x120] sm:$0xff]
    %v5727 = vld [vmem:[#allocation14 + $0x128] sm:$0xff]
    %v5728 = vld [vmem:[#allocation14 + $0x130] sm:$0xff]
    %v5729 = vld [vmem:[#allocation14 + $0x138] sm:$0xff]
    %v5730 = vld [vmem:[#allocation14 + $0x140] sm:$0xff]
    %v5731 = vld [vmem:[#allocation14 + $0x148] sm:$0xff]
    %v5732 = vld [vmem:[#allocation14 + $0x150] sm:$0xff]
    %v5733 = vld [vmem:[#allocation14 + $0x158] sm:$0xff]
    %v5734 = vld [vmem:[#allocation14 + $0x160] sm:$0xff]
    %v5735 = vld [vmem:[#allocation14 + $0x168] sm:$0xff]
    %v5736 = vld [vmem:[#allocation14 + $0x170] sm:$0xff]
    %v5737 = vld [vmem:[#allocation14 + $0x178] sm:$0xff]
    %v5738 = vld [vmem:[%s12] sm:$0x7]
    %v5740 = vlaneseq
    %v5741 = vshrl.u32 %v5740, 7
    %v5742 = vsub.s32 0, %v5741
    %v5743 = vrot.slane %v5738, %v5742
    %v5744 = vlaneseq
    %v5745 = vshrl.u32 %v5744, 7
    %v5746 = vsub.s32 1, %v5745
    %v5747 = vrot.slane %v5738, %v5746
    %v5748 = vlaneseq
    %v5749 = vshrl.u32 %v5748, 7
    %v5750 = vsub.s32 2, %v5749
    %v5751 = vrot.slane %v5738, %v5750
    %5755 = vmatprep.subr.mxu0 %v5691
    %5756 = vmatpush1.msra.mxu0 %v5690
    %5757 = vmatprep.subr.mxu0 %v5694
    %5758 = vmatpush1.msra.mxu0 %v5693
    %5759 = vmatprep.subr.mxu0 %v5697
    %5760 = vmatpush1.msra.mxu0 %v5696
    %5761 = vmatprep.subr.mxu0 %v5700
    %5762 = vmatpush1.msra.mxu0 %v5699
    %5763 = vmatprep.subr.mxu0 %v5703
    %5764 = vmatpush1.msra.mxu0 %v5702
    %5765 = vmatprep.subr.mxu0 %v5706
    %5766 = vmatpush1.msra.mxu0 %v5705
    %5767 = vmatprep.subr.mxu0 %v5709
    %5768 = vmatpush1.msra.mxu0 %v5708
    %5769 = vmatprep.subr.mxu0 %v5712
    %5770 = vmatpush1.msra.mxu0 %v5711
    %5771 = vmatprep.subr.mxu0 %v5715
    %5772 = vmatpush1.msra.mxu0 %v5714
    %5773 = vmatprep.subr.mxu0 %v5718
    %5774 = vmatpush1.msra.mxu0 %v5717
    %5775 = vmatprep.subr.mxu0 %v5721
    %5776 = vmatpush1.msra.mxu0 %v5720
    %5777 = vmatprep.subr.mxu0 %v5724
    %5778 = vmatpush1.msra.mxu0 %v5723
    %5779 = vmatprep.subr.mxu0 %v5727
    %5780 = vmatpush1.msra.mxu0 %v5726
    %5781 = vmatprep.subr.mxu0 %v5730
    %5782 = vmatpush1.msra.mxu0 %v5729
    %5783 = vmatprep.subr.mxu0 %v5733
    %5784 = vmatpush1.msra.mxu0 %v5732
    %5785 = vmatprep.subr.mxu0 %v5736
    %5786 = vmatpush1.msra.mxu0 %v5735
    %5787 = vmatprep.subr.mxu0 0.0
    %5788 = vmatpush1.msra.mxu0 0.0
    %5789 = vmatprep.subr.mxu0 0.0
    %5790 = vmatpush1.msra.mxu0 0.0
    %5791 = vmatprep.subr.mxu0 0.0
    %5792 = vmatpush1.msra.mxu0 0.0
    %5793 = vmatprep.subr.mxu0 0.0
    %5794 = vmatpush1.msra.mxu0 0.0
    %5795 = vmatprep.subr.mxu0 0.0
    %5796 = vmatpush1.msra.mxu0 0.0
    %5797 = vmatprep.subr.mxu0 0.0
    %5798 = vmatpush1.msra.mxu0 0.0
    %5799 = vmatprep.subr.mxu0 0.0
    %5800 = vmatpush1.msra.mxu0 0.0
    %5801 = vmatprep.subr.mxu0 0.0
    %5802 = vmatpush1.msra.mxu0 0.0
    %5803 = vmatprep.subr.mxu0 0.0
    %5804 = vmatpush1.msra.mxu0 0.0
    %5805 = vmatprep.subr.mxu0 0.0
    %5806 = vmatpush1.msra.mxu0 0.0
    %5807 = vmatprep.subr.mxu0 0.0
    %5808 = vmatpush1.msra.mxu0 0.0
    %5809 = vmatprep.subr.mxu0 0.0
    %5810 = vmatpush1.msra.mxu0 0.0
    %5811 = vmatprep.subr.mxu0 0.0
    %5812 = vmatpush1.msra.mxu0 0.0
    %5813 = vmatprep.subr.mxu0 0.0
    %5814 = vmatpush1.msra.mxu0 0.0
    %5815 = vmatprep.subr.mxu0 0.0
    %5816 = vmatpush1.msra.mxu0 0.0
    %5817 = vmatprep.subr.mxu0 0.0
    %5818 = vmatpush1.msra.mxu0 0.0
    %5819 = vmatprep.mubr.f32.mxu0 0.0
    %5820 = vmatmul.mubr.f32.gmra.mrb[0].mxu0 %v5278
    %v5821 = vpop.f32.mrb[0].mxu0
    %v5822 = vadd.f32 %v5743, %v5821
    %v5823 = vpop.f32.mrb[0].mxu0
    %v5824 = vadd.f32 %v5747, %v5823
    %5825 = vdwg.mxu0
    %5826 = vmatprep.subr.mxu0 0.0
    %5827 = vmatpush1.msra.mxu0 %v5692
    %5828 = vmatprep.subr.mxu0 0.0
    %5829 = vmatpush1.msra.mxu0 %v5695
    %5830 = vmatprep.subr.mxu0 0.0
    %5831 = vmatpush1.msra.mxu0 %v5698
    %5832 = vmatprep.subr.mxu0 0.0
    %5833 = vmatpush1.msra.mxu0 %v5701
    %5834 = vmatprep.subr.mxu0 0.0
    %5835 = vmatpush1.msra.mxu0 %v5704
    %5836 = vmatprep.subr.mxu0 0.0
    %5837 = vmatpush1.msra.mxu0 %v5707
    %5838 = vmatprep.subr.mxu0 0.0
    %5839 = vmatpush1.msra.mxu0 %v5710
    %5840 = vmatprep.subr.mxu0 0.0
    %5841 = vmatpush1.msra.mxu0 %v5713
    %5842 = vmatprep.subr.mxu0 0.0
    %5843 = vmatpush1.msra.mxu0 %v5716
    %5844 = vmatprep.subr.mxu0 0.0
    %5845 = vmatpush1.msra.mxu0 %v5719
    %5846 = vmatprep.subr.mxu0 0.0
    %5847 = vmatpush1.msra.mxu0 %v5722
    %5848 = vmatprep.subr.mxu0 0.0
    %5849 = vmatpush1.msra.mxu0 %v5725
    %5850 = vmatprep.subr.mxu0 0.0
    %5851 = vmatpush1.msra.mxu0 %v5728
    %5852 = vmatprep.subr.mxu0 0.0
    %5853 = vmatpush1.msra.mxu0 %v5731
    %5854 = vmatprep.subr.mxu0 0.0
    %5855 = vmatpush1.msra.mxu0 %v5734
    %5856 = vmatprep.subr.mxu0 0.0
    %5857 = vmatpush1.msra.mxu0 %v5737
    %5858 = vmatprep.subr.mxu0 0.0
    %5859 = vmatpush1.msra.mxu0 0.0
    %5860 = vmatprep.subr.mxu0 0.0
    %5861 = vmatpush1.msra.mxu0 0.0
    %5862 = vmatprep.subr.mxu0 0.0
    %5863 = vmatpush1.msra.mxu0 0.0
    %5864 = vmatprep.subr.mxu0 0.0
    %5865 = vmatpush1.msra.mxu0 0.0
    %5866 = vmatprep.subr.mxu0 0.0
    %5867 = vmatpush1.msra.mxu0 0.0
    %5868 = vmatprep.subr.mxu0 0.0
    %5869 = vmatpush1.msra.mxu0 0.0
    %5870 = vmatprep.subr.mxu0 0.0
    %5871 = vmatpush1.msra.mxu0 0.0
    %5872 = vmatprep.subr.mxu0 0.0
    %5873 = vmatpush1.msra.mxu0 0.0
    %5874 = vmatprep.subr.mxu0 0.0
    %5875 = vmatpush1.msra.mxu0 0.0
    %5876 = vmatprep.subr.mxu0 0.0
    %5877 = vmatpush1.msra.mxu0 0.0
    %5878 = vmatprep.subr.mxu0 0.0
    %5879 = vmatpush1.msra.mxu0 0.0
    %5880 = vmatprep.subr.mxu0 0.0
    %5881 = vmatpush1.msra.mxu0 0.0
    %5882 = vmatprep.subr.mxu0 0.0
    %5883 = vmatpush1.msra.mxu0 0.0
    %5884 = vmatprep.subr.mxu0 0.0
    %5885 = vmatpush1.msra.mxu0 0.0
    %5886 = vmatprep.subr.mxu0 0.0
    %5887 = vmatpush1.msra.mxu0 0.0
    %5888 = vmatprep.subr.mxu0 0.0
    %5889 = vmatpush1.msra.mxu0 0.0
    %5890 = vmatprep.mubr.f32.mxu0 0.0
    %5891 = vmatmul.mubr.f32.gmra.mrb[0].mxu0 %v5278
    %v5892 = vpop.f32.mrb[0].mxu0
    %v5893 = vadd.f32 %v5751, %v5892
    %v5894 = vpop.f32.mrb[0].mxu0
    %5895 = vdwg.mxu0
    %v5896 = vadd.f32 %v5616, %v5822
    %v5897 = vxor.u32 %v5896, 2147483648
    %v5898 = vmul.f32 %v5897, 1.442695
    %v5899 = vpow.pop %v5898
    %v5900 = vadd.f32 %v5899, 1.0
    %v5901 = vrcp.pop %v5900
    %v5902 = vmul.f32 1.0, %v5901
    %v5903 = vadd.f32 %v5618, %v5824
    %v5904 = vxor.u32 %v5903, 2147483648
    %v5905 = vmul.f32 %v5904, 1.442695
    %v5906 = vpow.pop %v5905
    %v5907 = vadd.f32 %v5906, 1.0
    %v5908 = vrcp.pop %v5907
    %v5909 = vmul.f32 1.0, %v5908
    %v5910 = vmul.f32 %v5902, %v5893
    %v5911 = vadd.f32 %v5687, %v5910
    %v5912 = vtanh.pop %v5911
    %v5913 = vsub.f32 1.0, %v5909
    %v5914 = vmul.f32 %v5913, %v5912
    %v5915 = vmul.f32 %v5909, %v5278
    %v5916 = vadd.f32 %v5914, %v5915
    %v5917 = vld [vmem:[#allocation16] sm:$0xff]
    %v5918 = vld [vmem:[#allocation16 + $0x8] sm:$0xff]
    %v5919 = vld [vmem:[#allocation16 + $0x10] sm:$0xff]
    %v5920 = vld [vmem:[#allocation16 + $0x18] sm:$0xff]
    %v5921 = vld [vmem:[#allocation16 + $0x20] sm:$0xff]
    %v5922 = vld [vmem:[#allocation16 + $0x28] sm:$0xff]
    %v5923 = vld [vmem:[#allocation16 + $0x30] sm:$0xff]
    %v5924 = vld [vmem:[#allocation16 + $0x38] sm:$0xff]
    %v5925 = vld [vmem:[#allocation16 + $0x40] sm:$0xff]
    %v5926 = vld [vmem:[#allocation16 + $0x48] sm:$0xff]
    %v5927 = vld [vmem:[#allocation16 + $0x50] sm:$0xff]
    %v5928 = vld [vmem:[#allocation16 + $0x58] sm:$0xff]
    %v5929 = vld [vmem:[#allocation16 + $0x60] sm:$0xff]
    %v5930 = vld [vmem:[#allocation16 + $0x68] sm:$0xff]
    %v5931 = vld [vmem:[#allocation16 + $0x70] sm:$0xff]
    %v5932 = vld [vmem:[#allocation16 + $0x78] sm:$0xff]
    %v5933 = vld [vmem:[%s14] sm:$0x1]
    %v5935 = vlaneseq
    %v5936 = vshrl.u32 %v5935, 7
    %v5937 = vsub.s32 0, %v5936
    %v5938 = vrot.slane %v5933, %v5937
    %5940 = vmatprep.subr.mxu0 0.0
    %5941 = vmatpush1.msra.mxu0 %v5917
    %5942 = vmatprep.subr.mxu0 0.0
    %5943 = vmatpush1.msra.mxu0 %v5918
    %5944 = vmatprep.subr.mxu0 0.0
    %5945 = vmatpush1.msra.mxu0 %v5919
    %5946 = vmatprep.subr.mxu0 0.0
    %5947 = vmatpush1.msra.mxu0 %v5920
    %5948 = vmatprep.subr.mxu0 0.0
    %5949 = vmatpush1.msra.mxu0 %v5921
    %5950 = vmatprep.subr.mxu0 0.0
    %5951 = vmatpush1.msra.mxu0 %v5922
    %5952 = vmatprep.subr.mxu0 0.0
    %5953 = vmatpush1.msra.mxu0 %v5923
    %5954 = vmatprep.subr.mxu0 0.0
    %5955 = vmatpush1.msra.mxu0 %v5924
    %5956 = vmatprep.subr.mxu0 0.0
    %5957 = vmatpush1.msra.mxu0 %v5925
    %5958 = vmatprep.subr.mxu0 0.0
    %5959 = vmatpush1.msra.mxu0 %v5926
    %5960 = vmatprep.subr.mxu0 0.0
    %5961 = vmatpush1.msra.mxu0 %v5927
    %5962 = vmatprep.subr.mxu0 0.0
    %5963 = vmatpush1.msra.mxu0 %v5928
    %5964 = vmatprep.subr.mxu0 0.0
    %5965 = vmatpush1.msra.mxu0 %v5929
    %5966 = vmatprep.subr.mxu0 0.0
    %5967 = vmatpush1.msra.mxu0 %v5930
    %5968 = vmatprep.subr.mxu0 0.0
    %5969 = vmatpush1.msra.mxu0 %v5931
    %5970 = vmatprep.subr.mxu0 0.0
    %5971 = vmatpush1.msra.mxu0 %v5932
    %5972 = vmatprep.subr.mxu0 0.0
    %5973 = vmatpush1.msra.mxu0 0.0
    %5974 = vmatprep.subr.mxu0 0.0
    %5975 = vmatpush1.msra.mxu0 0.0
    %5976 = vmatprep.subr.mxu0 0.0
    %5977 = vmatpush1.msra.mxu0 0.0
    %5978 = vmatprep.subr.mxu0 0.0
    %5979 = vmatpush1.msra.mxu0 0.0
    %5980 = vmatprep.subr.mxu0 0.0
    %5981 = vmatpush1.msra.mxu0 0.0
    %5982 = vmatprep.subr.mxu0 0.0
    %5983 = vmatpush1.msra.mxu0 0.0
    %5984 = vmatprep.subr.mxu0 0.0
    %5985 = vmatpush1.msra.mxu0 0.0
    %5986 = vmatprep.subr.mxu0 0.0
    %5987 = vmatpush1.msra.mxu0 0.0
    %5988 = vmatprep.subr.mxu0 0.0
    %5989 = vmatpush1.msra.mxu0 0.0
    %5990 = vmatprep.subr.mxu0 0.0
    %5991 = vmatpush1.msra.mxu0 0.0
    %5992 = vmatprep.subr.mxu0 0.0
    %5993 = vmatpush1.msra.mxu0 0.0
    %5994 = vmatprep.subr.mxu0 0.0
    %5995 = vmatpush1.msra.mxu0 0.0
    %5996 = vmatprep.subr.mxu0 0.0
    %5997 = vmatpush1.msra.mxu0 0.0
    %5998 = vmatprep.subr.mxu0 0.0
    %5999 = vmatpush1.msra.mxu0 0.0
    %6000 = vmatprep.subr.mxu0 0.0
    %6001 = vmatpush1.msra.mxu0 0.0
    %6002 = vmatprep.subr.mxu0 0.0
    %6003 = vmatpush1.msra.mxu0 0.0
    %6004 = vmatprep.mubr.f32.mxu0 0.0
    %6005 = vmatmul.mubr.f32.gmra.mrb[0].mxu0 %v5916
    %v6006 = vpop.f32.mrb[0].mxu0
    %v6007 = vadd.f32 %v5938, %v6006
    %v6008 = vpop.f32.mrb[0].mxu0
    %6009 = vdwg.mxu0
    %s6010 = scalar_lea.vmem [#allocation17], 8
    %6011 = vst [vmem:[%s6010] sm:$0x3] %v6007
    // Predicated region
    $region82: #{encoder_decoder_forward.1} parent=1 // pred_check
      _
    $region83: #{encoder_decoder_forward.1} parent=1 // pred_check_branch
      %6013 = sbr.rel (0) target = $region85
    $region84: #{encoder_decoder_forward.1} parent=1 // pred_region
      %s6015 = ssub.s32 160, 160
      %6016 = vsyncadd [#allocation7], %s6015
      %s6017 = sshll.u32 [#allocation17], 4
      %s6018 = int_to_ptr.vmem [resolvable:$true] %s6017
      %6023 = dma.vmem_to_hbm [thread:$0]  %s6018, 160, %s15, [#allocation7], 32, 32, 2
    $region85: #{encoder_decoder_forward.1} parent=1 // pred_fallthru
      _
    // Predicated region
    $region86: #{encoder_decoder_forward.1} parent=1 // pred_check
      _
    $region87: #{encoder_decoder_forward.1} parent=1 // pred_check_branch
      %6025 = sbr.rel (0) target = $region89
    $region88: #{encoder_decoder_forward.1} parent=1 // pred_region
      %6026 = dma.done [#allocation7], 160
    $region89: #{encoder_decoder_forward.1} parent=1 // pred_fallthru
      _
    %6027 = vsyncpa [#allocation6], 1
    %6028 = vsyncpa [#allocation9], 1
    %6029 = vsyncpa [#allocation12], 1
    %6030 = vsyncpa [#allocation15], 1
    %6031 = vsyncpa [#allocation7], 1

</llo_original>
